<compile_context>
chip_gen: v5e
topology: v5e:2x2
jax: 0.10.0
libtpu: 0.0.40
codegen_flags: <defaults>
</compile_context>

<pallas_src>
import jax
import jax.numpy as jnp
from jax.experimental import pallas as pl
from jax.experimental.pallas import tpu as pltpu

BN_EPS = 1e-5

# Architecture constants (fixed by the module: fc1.in_features == 2544 => L0 == 1920).
K1, K2, K3 = 5, 3, 3
C1, C2, C3 = 32, 24, 16
L0 = 1920
L1 = (L0 - K1) // 3 + 1      # 639
L2 = (L1 - K2) // 2 + 1      # 319
L3 = (L2 - K3) // 2 + 1      # 159
FC1_IN = C3 * L3             # 2544
FC1_OUT = 20

NB = 8                       # samples per grid step (batch block)
L3P = L3 + 1                 # 160 row-groups per sample (group 159 is padding)
NBLK = 7                     # conv1 blocks: l1 = 4*m + b, b = 0..6
WIN = 23                     # raw input samples per row group: x[12m .. 12m+22]
PIN_W = WIN + 1              # + a constant-1 lane carrying the folded conv1/BN bias

assert FC1_IN == 2544


# ----------------------------------------------------------------------------
# The fused Pallas kernel (one grid step == NB samples)
# ----------------------------------------------------------------------------
def _convnet_kernel(pin_ref, w1_ref, w2_ref, s2_ref, w3_ref, s3_ref,
                    wk_ref, bfc1_ref, wfc2_ref, bfc2_ref, out_ref):
    f32 = jnp.float32

    # conv1 + BN + ReLU: one MXU matmul.  Rows are (position-group m, sample n)
    # pairs; lane 23 of pin is the constant 1 that injects the folded bias.
    a1 = jnp.maximum(
        jnp.dot(pin_ref[...], w1_ref[...], preferred_element_type=f32), 0.0)      # [NB*160, 224]

    # conv2 + BN + ReLU: one MXU matmul; output lanes hold three stride-2 rows
    # (l2 = 2m, 2m+1, 2m+2) of 24 channels each.
    a2 = jnp.maximum(
        jnp.dot(a1, w2_ref[...], preferred_element_type=f32) + s2_ref[...], 0.0)  # [NB*160, 72]

    # conv3 + BN + ReLU: one MXU matmul (its 3 taps are exactly the 3 groups above).
    a3 = jnp.maximum(
        jnp.dot(a2, w3_ref[...], preferred_element_type=f32) + s3_ref[...], 0.0)  # [NB*160, 16]

    # Dropout layers are identity in eval mode.
    # TODO(synk): training-mode dropout (pltpu.prng_seed / prng_random_bits) not implemented.

    # fc1 + ReLU: batched MXU matmul over the 160 row groups (one [NB,16]@[16,20]
    # per group; the fc1 weight is pre-packed per group, zero for the padding
    # row), then a cheap VPU reduction over groups.  The leading-dim split below
    # is layout-preserving (160 groups x 8-sublane tiles), no data movement.
    a3b = a3.reshape(L3P, NB, C3)
    t = jax.lax.dot_general(a3b, wk_ref[...],
                            dimension_numbers=(((2,), (1,)), ((0,), (0,))),
                            preferred_element_type=f32)                           # [160, NB, 20]
    h = jnp.maximum(jnp.sum(t, axis=0) + bfc1_ref[...], 0.0)                      # [NB, 20]

    # fc2 -> logits
    out_ref[...] = (jnp.dot(h, wfc2_ref[...], preferred_element_type=f32)
                    + bfc2_ref[...])


# ----------------------------------------------------------------------------
# Wrapper: BN folding, weight packing, window extraction, pallas_call
# ----------------------------------------------------------------------------
def _fold_bn(w, b, gamma, beta, mean, var):
    """Fold eval-mode BN into the conv weight; return (w[K, Cin, Cout], shift[1, Cout])."""
    inv = gamma / jnp.sqrt(var + BN_EPS)
    w_f = jnp.transpose(w, (2, 1, 0)) * inv[None, None, :]
    shift = ((b - mean) * inv + beta)[None, :]
    return w_f, shift


def _pack_weights(p):
    # conv1 (+BN) as [24, 224]: block b (b = 0..6) computes conv1 output position
    # l1 = 4m + b from input offsets 3b..3b+4; row 23 carries the BN shift.
    w1f, s1 = _fold_bn(p["w1"], p["b1"], p["g1"], p["be1"], p["m1"], p["v1"])
    w1f = w1f.reshape(K1, C1)
    w1big = jnp.zeros((PIN_W, NBLK * C1), jnp.float32)
    for b in range(NBLK):
        w1big = w1big.at[3 * b:3 * b + K1, b * C1:(b + 1) * C1].set(w1f)
    w1big = w1big.at[WIN, :].set(jnp.tile(s1[0], NBLK))

    # conv2 (+BN) as [224, 72]: per row group m, produce l2 = 2m+g (g = 0,1,2);
    # tap k of output group g reads conv1 block b = 2g + k.
    w2f, s2 = _fold_bn(p["w2"], p["b2"], p["g2"], p["be2"], p["m2"], p["v2"])  # [3, 32, 24]
    w2c = jnp.zeros((NBLK * C1, 3 * C2), jnp.float32)
    for g in range(3):
        for k in range(K2):
            blk = 2 * g + k
            w2c = w2c.at[blk * C1:(blk + 1) * C1, g * C2:(g + 1) * C2].set(w2f[k])
    s2rep = jnp.tile(s2, (1, 3))                                     # [1, 72]

    # conv3 (+BN): its 3 taps are exactly the three conv2 groups -> [72, 16].
    w3f, s3 = _fold_bn(p["w3"], p["b3"], p["g3"], p["be3"], p["m3"], p["v3"])  # [3, 24, 16]
    w3s = jnp.concatenate([w3f[0], w3f[1], w3f[2]], axis=0)          # [72, 16]

    # fc1 repacked to the kernel's (row-group m, channel c) order: one [16, 20]
    # tile per group; group 159 (padding row) gets zero weights so the garbage
    # row never contributes.  PyTorch flatten order is c*159 + l.
    wk = p["fc1_w"].reshape(FC1_OUT, C3, L3).transpose(2, 1, 0)      # [159, 16, 20]
    wk = jnp.pad(wk, ((0, 1), (0, 0), (0, 0)))                       # [160, 16, 20]
    bfc1 = p["fc1_b"][None, :]
    wfc2 = p["fc2_w"].T                                              # [20, n_cls]
    bfc2 = p["fc2_b"][None, :]
    return w1big, w2c, s2rep, w3s, s3, wk, bfc1, wfc2, bfc2


def convnet_forward(x, p):
    """x: [N, 1, 1920] -> logits [N, num_classes] (eval-mode semantics)."""
    n = x.shape[0]
    assert x.shape[1] == 1 and x.shape[2] == L0
    n_cls = p["fc2_w"].shape[0]

    n_pad = -(-n // NB) * NB
    x2d = x.reshape(n, L0).astype(jnp.float32)
    if n_pad != n:
        x2d = jnp.pad(x2d, ((0, n_pad - n), (0, 0)))
    n_blocks = n_pad // NB

    # Raw 23-sample windows x[12m : 12m+23] per row group m (strided slices, no
    # gather) plus a constant-1 lane; rows ordered (batch block, m, sample).
    xp = jnp.pad(x2d, ((0, 0), (0, 64)))
    cols = [xp[:, j: j + 12 * L3P: 12] for j in range(WIN)]          # each [n_pad, 160]
    win = jnp.stack(cols, axis=-1)                                   # [n_pad, 160, 23]
    win = jnp.concatenate([win, jnp.ones((n_pad, L3P, 1), jnp.float32)], axis=-1)
    pin = (win.reshape(n_blocks, NB, L3P, PIN_W)
              .transpose(0, 2, 1, 3)
              .reshape(n_blocks * L3P * NB, PIN_W))                  # [n_blocks*1280, 24]

    w1big, w2c, s2rep, w3s, s3, wk, bfc1, wfc2, bfc2 = _pack_weights(p)

    const2 = lambda b: (0, 0)
    out = pl.pallas_call(
        _convnet_kernel,
        out_shape=jax.ShapeDtypeStruct((n_pad, n_cls), jnp.float32),
        grid=(n_blocks,),
        in_specs=[
            pl.BlockSpec((L3P * NB, PIN_W), lambda b: (b, 0)),
            pl.BlockSpec(w1big.shape, const2),
            pl.BlockSpec(w2c.shape, const2),
            pl.BlockSpec(s2rep.shape, const2),
            pl.BlockSpec(w3s.shape, const2),
            pl.BlockSpec(s3.shape, const2),
            pl.BlockSpec(wk.shape, lambda b: (0, 0, 0)),
            pl.BlockSpec(bfc1.shape, const2),
            pl.BlockSpec(wfc2.shape, const2),
            pl.BlockSpec(bfc2.shape, const2),
        ],
        out_specs=pl.BlockSpec((NB, n_cls), lambda b: (b, 0)),
        compiler_params=pltpu.CompilerParams(
            dimension_semantics=("parallel",),
            vmem_limit_bytes=32 * 1024 * 1024),
    )(pin, w1big, w2c, s2rep, w3s, s3, wk, bfc1, wfc2, bfc2)
    return out[:n]


# ----------------------------------------------------------------------------
# Pure-JAX reference (for the correctness check)
# ----------------------------------------------------------------------------
def _ref_conv_bn_relu(x, w, b, gamma, beta, mean, var, *, stride):
    y = jax.lax.conv_general_dilated(
        x, w, (stride,), "VALID", dimension_numbers=("NCH", "OIH", "NCH"),
        precision=jax.lax.Precision.HIGHEST)
    y = y + b[None, :, None]
    y = gamma[None, :, None] * (y - mean[None, :, None]) / jnp.sqrt(
        var[None, :, None] + BN_EPS) + beta[None, :, None]
    return jnp.maximum(y, 0.0)


def reference_forward(x, p):
    hi = jax.lax.Precision.HIGHEST
    out = _ref_conv_bn_relu(x, p["w1"], p["b1"], p["g1"], p["be1"], p["m1"], p["v1"], stride=3)
    out = _ref_conv_bn_relu(out, p["w2"], p["b2"], p["g2"], p["be2"], p["m2"], p["v2"], stride=2)
    out = _ref_conv_bn_relu(out, p["w3"], p["b3"], p["g3"], p["be3"], p["m3"], p["v3"], stride=2)
    out = out.reshape(out.shape[0], -1)
    out = jnp.maximum(jnp.dot(out, p["fc1_w"].T, precision=hi) + p["fc1_b"], 0.0)
    out = jnp.dot(out, p["fc2_w"].T, precision=hi) + p["fc2_b"]
    return out


# ----------------------------------------------------------------------------
# Deterministic parameter initialization (shapes from ConvNet.__init__)
# ----------------------------------------------------------------------------
def init_params(key, num_classes=2):
    ks = iter(jax.random.split(key, 32))
    p = {}

    def conv_block(tag, c_out, c_in, k):
        fan_in = c_in * k
        p[f"w{tag}"] = jax.random.normal(next(ks), (c_out, c_in, k), jnp.float32) / jnp.sqrt(fan_in)
        p[f"b{tag}"] = 0.05 * jax.random.normal(next(ks), (c_out,), jnp.float32)
        p[f"g{tag}"] = 1.0 + 0.1 * jax.random.normal(next(ks), (c_out,), jnp.float32)
        p[f"be{tag}"] = 0.05 * jax.random.normal(next(ks), (c_out,), jnp.float32)
        p[f"m{tag}"] = 0.1 * jax.random.normal(next(ks), (c_out,), jnp.float32)
        p[f"v{tag}"] = 0.5 + jax.random.uniform(next(ks), (c_out,), jnp.float32)

    conv_block(1, C1, 1, K1)
    conv_block(2, C2, C1, K2)
    conv_block(3, C3, C2, K3)

    p["fc1_w"] = jax.random.normal(next(ks), (FC1_OUT, FC1_IN), jnp.float32) / jnp.sqrt(FC1_IN)
    p["fc1_b"] = 0.05 * jax.random.normal(next(ks), (FC1_OUT,), jnp.float32)
    p["fc2_w"] = jax.random.normal(next(ks), (num_classes, FC1_OUT), jnp.float32) / jnp.sqrt(FC1_OUT)
    p["fc2_b"] = 0.05 * jax.random.normal(next(ks), (num_classes,), jnp.float32)
    return p


if __name__ == "__main__":
    key = jax.random.PRNGKey(0)
    k_x, k_p = jax.random.split(key)

    # Input length 1920 is implied by fc1's in_features:
    # (1920-5)//3+1=639 -> (639-3)//2+1=319 -> (319-3)//2+1=159; 16*159 = 2544.
    x = jax.random.normal(k_x, (2, 1, L0), dtype=jnp.float32)
    params = init_params(k_p, num_classes=2)

    fwd = jax.jit(convnet_forward)
    out = jax.block_until_ready(fwd(x, params))
    assert out.shape == (2, 2), out.shape

    ref = jax.block_until_ready(reference_forward(x, params))
    assert jnp.allclose(out, ref, rtol=2e-2, atol=2e-2), (out, ref)

    print("KERNEL_OK")
</pallas_src>

<mosaic_0001>
module attributes {stable_mosaic.version = 11 : i64} {
  func.func @_convnet_kernel(%arg0: i32, %arg1: memref<1280x24xf32, #tpu.memory_space<vmem>>, %arg2: memref<24x224xf32, #tpu.memory_space<vmem>>, %arg3: memref<224x72xf32, #tpu.memory_space<vmem>>, %arg4: memref<1x72xf32, #tpu.memory_space<vmem>>, %arg5: memref<72x16xf32, #tpu.memory_space<vmem>>, %arg6: memref<1x16xf32, #tpu.memory_space<vmem>>, %arg7: memref<160x16x20xf32, #tpu.memory_space<vmem>>, %arg8: memref<1x20xf32, #tpu.memory_space<vmem>>, %arg9: memref<20x2xf32, #tpu.memory_space<vmem>>, %arg10: memref<1x2xf32, #tpu.memory_space<vmem>>, %arg11: memref<8x2xf32, #tpu.memory_space<vmem>>) attributes {dimension_semantics = [#tpu.dimension_semantics<parallel>], iteration_bounds = array<i64: 1>, scalar_prefetch = 0 : i64, scratch_operands = 0 : i64, tpu.core_type = #tpu.core_type<tc>, window_params = [{transform_indices = @transform_0, window_bounds = array<i64: 1280, 24>}, {pipeline_mode = #tpu.pipeline_mode<synchronous>, transform_indices = @transform_1, window_bounds = array<i64: 24, 224>}, {pipeline_mode = #tpu.pipeline_mode<synchronous>, transform_indices = @transform_2, window_bounds = array<i64: 224, 72>}, {pipeline_mode = #tpu.pipeline_mode<synchronous>, transform_indices = @transform_3, window_bounds = array<i64: 1, 72>}, {pipeline_mode = #tpu.pipeline_mode<synchronous>, transform_indices = @transform_4, window_bounds = array<i64: 72, 16>}, {pipeline_mode = #tpu.pipeline_mode<synchronous>, transform_indices = @transform_5, window_bounds = array<i64: 1, 16>}, {pipeline_mode = #tpu.pipeline_mode<synchronous>, transform_indices = @transform_6, window_bounds = array<i64: 160, 16, 20>}, {pipeline_mode = #tpu.pipeline_mode<synchronous>, transform_indices = @transform_7, window_bounds = array<i64: 1, 20>}, {pipeline_mode = #tpu.pipeline_mode<synchronous>, transform_indices = @transform_8, window_bounds = array<i64: 20, 2>}, {pipeline_mode = #tpu.pipeline_mode<synchronous>, transform_indices = @transform_9, window_bounds = array<i64: 1, 2>}, {transform_indices = @transform_10, window_bounds = array<i64: 8, 2>}]} {
    %c0 = arith.constant 0 : index
    %c0_0 = arith.constant 0 : index
    %0 = vector.load %arg1[%c0, %c0_0] : memref<1280x24xf32, #tpu.memory_space<vmem>>, vector<1280x24xf32>
    %c0_1 = arith.constant 0 : index
    %c0_2 = arith.constant 0 : index
    %1 = vector.load %arg2[%c0_1, %c0_2] : memref<24x224xf32, #tpu.memory_space<vmem>>, vector<24x224xf32>
    %cst = arith.constant dense<0.000000e+00> : vector<1280x224xf32>
    %2 = tpu.matmul %0, %1, %cst {dimension_numbers = #tpu.dot_dimension_numbers<[1], [0], [0], [1], [0, 0, 1, 1], [], []>} : vector<1280x24xf32>, vector<24x224xf32>, vector<1280x224xf32> -> vector<1280x224xf32>
    %cst_3 = arith.constant 0.000000e+00 : f32
    %3 = vector.broadcast %cst_3 : f32 to vector<1280x224xf32>
    %4 = arith.maximumf %2, %3 : vector<1280x224xf32>
    %c0_4 = arith.constant 0 : index
    %c0_5 = arith.constant 0 : index
    %5 = vector.load %arg3[%c0_4, %c0_5] : memref<224x72xf32, #tpu.memory_space<vmem>>, vector<224x72xf32>
    %cst_6 = arith.constant dense<0.000000e+00> : vector<1280x72xf32>
    %6 = tpu.matmul %4, %5, %cst_6 {dimension_numbers = #tpu.dot_dimension_numbers<[1], [0], [0], [1], [0, 0, 1, 1], [], []>} : vector<1280x224xf32>, vector<224x72xf32>, vector<1280x72xf32> -> vector<1280x72xf32>
    %c0_7 = arith.constant 0 : index
    %c0_8 = arith.constant 0 : index
    %7 = vector.load %arg4[%c0_7, %c0_8] : memref<1x72xf32, #tpu.memory_space<vmem>>, vector<1x72xf32>
    %8 = vector.broadcast %7 : vector<1x72xf32> to vector<1280x72xf32>
    %9 = arith.addf %6, %8 : vector<1280x72xf32>
    %cst_9 = arith.constant 0.000000e+00 : f32
    %10 = vector.broadcast %cst_9 : f32 to vector<1280x72xf32>
    %11 = arith.maximumf %9, %10 : vector<1280x72xf32>
    %c0_10 = arith.constant 0 : index
    %c0_11 = arith.constant 0 : index
    %12 = vector.load %arg5[%c0_10, %c0_11] : memref<72x16xf32, #tpu.memory_space<vmem>>, vector<72x16xf32>
    %cst_12 = arith.constant dense<0.000000e+00> : vector<1280x16xf32>
    %13 = tpu.matmul %11, %12, %cst_12 {dimension_numbers = #tpu.dot_dimension_numbers<[1], [0], [0], [1], [0, 0, 1, 1], [], []>} : vector<1280x72xf32>, vector<72x16xf32>, vector<1280x16xf32> -> vector<1280x16xf32>
    %c0_13 = arith.constant 0 : index
    %c0_14 = arith.constant 0 : index
    %14 = vector.load %arg6[%c0_13, %c0_14] : memref<1x16xf32, #tpu.memory_space<vmem>>, vector<1x16xf32>
    %15 = vector.broadcast %14 : vector<1x16xf32> to vector<1280x16xf32>
    %16 = arith.addf %13, %15 : vector<1280x16xf32>
    %cst_15 = arith.constant 0.000000e+00 : f32
    %17 = vector.broadcast %cst_15 : f32 to vector<1280x16xf32>
    %18 = arith.maximumf %16, %17 : vector<1280x16xf32>
    %19 = vector.shape_cast %18 : vector<1280x16xf32> to vector<160x8x16xf32>
    %c0_16 = arith.constant 0 : index
    %c0_17 = arith.constant 0 : index
    %c0_18 = arith.constant 0 : index
    %20 = vector.load %arg7[%c0_16, %c0_17, %c0_18] : memref<160x16x20xf32, #tpu.memory_space<vmem>>, vector<160x16x20xf32>
    %cst_19 = arith.constant dense<0.000000e+00> : vector<160x8x20xf32>
    %21 = tpu.matmul %19, %20, %cst_19 {dimension_numbers = #tpu.dot_dimension_numbers<[2], [1], [1], [2], [0, 0, 0, 1, 1, 2], [0], [0]>} : vector<160x8x16xf32>, vector<160x16x20xf32>, vector<160x8x20xf32> -> vector<160x8x20xf32>
    %cst_20 = arith.constant dense<0.000000e+00> : vector<8x20xf32>
    %22 = vector.multi_reduction <add>, %21, %cst_20 [0] : vector<160x8x20xf32> to vector<8x20xf32>
    %c0_21 = arith.constant 0 : index
    %c0_22 = arith.constant 0 : index
    %23 = vector.load %arg8[%c0_21, %c0_22] : memref<1x20xf32, #tpu.memory_space<vmem>>, vector<1x20xf32>
    %24 = vector.broadcast %23 : vector<1x20xf32> to vector<8x20xf32>
    %25 = arith.addf %22, %24 : vector<8x20xf32>
    %cst_23 = arith.constant 0.000000e+00 : f32
    %26 = vector.broadcast %cst_23 : f32 to vector<8x20xf32>
    %27 = arith.maximumf %25, %26 : vector<8x20xf32>
    %c0_24 = arith.constant 0 : index
    %c0_25 = arith.constant 0 : index
    %28 = vector.load %arg9[%c0_24, %c0_25] : memref<20x2xf32, #tpu.memory_space<vmem>>, vector<20x2xf32>
    %cst_26 = arith.constant dense<0.000000e+00> : vector<8x2xf32>
    %29 = tpu.matmul %27, %28, %cst_26 {dimension_numbers = #tpu.dot_dimension_numbers<[1], [0], [0], [1], [0, 0, 1, 1], [], []>} : vector<8x20xf32>, vector<20x2xf32>, vector<8x2xf32> -> vector<8x2xf32>
    %c0_27 = arith.constant 0 : index
    %c0_28 = arith.constant 0 : index
    %30 = vector.load %arg10[%c0_27, %c0_28] : memref<1x2xf32, #tpu.memory_space<vmem>>, vector<1x2xf32>
    %31 = vector.broadcast %30 : vector<1x2xf32> to vector<8x2xf32>
    %32 = arith.addf %29, %31 : vector<8x2xf32>
    %c0_29 = arith.constant 0 : index
    %c0_30 = arith.constant 0 : index
    %33 = vector.load %arg11[%c0_29, %c0_30] : memref<8x2xf32, #tpu.memory_space<vmem>>, vector<8x2xf32>
    tpu.vector_store %arg11[%c0_29, %c0_30], %32 {strides = array<i32>} : memref<8x2xf32, #tpu.memory_space<vmem>>, vector<8x2xf32>,
    return
  }
  func.func @transform_0(%arg0: i32) -> (i32, i32) {
    %c0_i32 = arith.constant 0 : i32
    %c0_i32_0 = arith.constant 0 : i32
    return %arg0, %c0_i32 : i32, i32
  }
  func.func @transform_1(%arg0: i32) -> (i32, i32) {
    %c0_i32 = arith.constant 0 : i32
    %c0_i32_0 = arith.constant 0 : i32
    %c0_i32_1 = arith.constant 0 : i32
    return %c0_i32, %c0_i32_0 : i32, i32
  }
  func.func @transform_2(%arg0: i32) -> (i32, i32) {
    %c0_i32 = arith.constant 0 : i32
    %c0_i32_0 = arith.constant 0 : i32
    %c0_i32_1 = arith.constant 0 : i32
    return %c0_i32, %c0_i32_0 : i32, i32
  }
  func.func @transform_3(%arg0: i32) -> (i32, i32) {
    %c0_i32 = arith.constant 0 : i32
    %c0_i32_0 = arith.constant 0 : i32
    %c0_i32_1 = arith.constant 0 : i32
    return %c0_i32, %c0_i32_0 : i32, i32
  }
  func.func @transform_4(%arg0: i32) -> (i32, i32) {
    %c0_i32 = arith.constant 0 : i32
    %c0_i32_0 = arith.constant 0 : i32
    %c0_i32_1 = arith.constant 0 : i32
    return %c0_i32, %c0_i32_0 : i32, i32
  }
  func.func @transform_5(%arg0: i32) -> (i32, i32) {
    %c0_i32 = arith.constant 0 : i32
    %c0_i32_0 = arith.constant 0 : i32
    %c0_i32_1 = arith.constant 0 : i32
    return %c0_i32, %c0_i32_0 : i32, i32
  }
  func.func @transform_6(%arg0: i32) -> (i32, i32, i32) {
    %c0_i32 = arith.constant 0 : i32
    %c0_i32_0 = arith.constant 0 : i32
    %c0_i32_1 = arith.constant 0 : i32
    %c0_i32_2 = arith.constant 0 : i32
    return %c0_i32, %c0_i32_0, %c0_i32_1 : i32, i32, i32
  }
  func.func @transform_7(%arg0: i32) -> (i32, i32) {
    %c0_i32 = arith.constant 0 : i32
    %c0_i32_0 = arith.constant 0 : i32
    %c0_i32_1 = arith.constant 0 : i32
    return %c0_i32, %c0_i32_0 : i32, i32
  }
  func.func @transform_8(%arg0: i32) -> (i32, i32) {
    %c0_i32 = arith.constant 0 : i32
    %c0_i32_0 = arith.constant 0 : i32
    %c0_i32_1 = arith.constant 0 : i32
    return %c0_i32, %c0_i32_0 : i32, i32
  }
  func.func @transform_9(%arg0: i32) -> (i32, i32) {
    %c0_i32 = arith.constant 0 : i32
    %c0_i32_0 = arith.constant 0 : i32
    %c0_i32_1 = arith.constant 0 : i32
    return %c0_i32, %c0_i32_0 : i32, i32
  }
  func.func @transform_10(%arg0: i32) -> (i32, i32) {
    %c0_i32 = arith.constant 0 : i32
    %c0_i32_0 = arith.constant 0 : i32
    return %arg0, %c0_i32 : i32, i32
  }
}

</mosaic_0001>

<llo_original>
// kernel: tile.10
$region0: #{tile.10}
  #allocation0 [shape = 's32[1]{0}', space=sflag, size = 0x4, scoped, tag = 'scoped memory for tile.10']
  %s0 = inlined_call_operand.vmem [shape: f32[32], index: 0, kind: input, shape index: {}]
  %s1 = inlined_call_operand.vmem [shape: f32[7,32], index: 1, kind: output, shape index: {}]
  // Predicated region
  $region2: #{tile.10} parent=0 // pred_check
    _
  $region3: #{tile.10} parent=0 // pred_check_branch
    %3 = sbr.rel (0) target = $region5
  $region4: #{tile.10} parent=0 // pred_region
    _
  $region5: #{tile.10} parent=0 // pred_fallthru
    _
  %v4 = vld [vmem:[%s0] ss:$0 sm:$0xff]
  %5 = vst [vmem:[%s1] sm:$0xff] %v4

// kernel: convnet_forward.1
$region0: #{convnet_forward.1}
  #allocation0 [shape = 'u32[]', space=smem, size = 0x4, offset = 0x4, fixed_abs, tag = 'smem constant byte address 0x4 - core index']
  #allocation1 [shape = 'u32[72,128]{1,0:T(1,128)}', space=vmem, size = 0x9000, scoped, tag = 'internal scratch']
  %s0 = inlined_call_operand.vmem [shape: f32[1280,24], index: 0, kind: input, shape index: {}]
  %s1 = inlined_call_operand.vmem [shape: f32[24,224], index: 1, kind: input, shape index: {}]
  %s2 = inlined_call_operand.vmem [shape: f32[224,72], index: 2, kind: input, shape index: {}]
  %s3 = inlined_call_operand.vmem [shape: f32[1,72], index: 3, kind: input, shape index: {}]
  %s4 = inlined_call_operand.vmem [shape: f32[72,16], index: 4, kind: input, shape index: {}]
  %s5 = inlined_call_operand.vmem [shape: f32[1,16], index: 5, kind: input, shape index: {}]
  %s6 = inlined_call_operand.vmem [shape: f32[160,16,20], index: 6, kind: input, shape index: {}]
  %s7 = inlined_call_operand.vmem [shape: f32[1,20], index: 7, kind: input, shape index: {}]
  %s8 = inlined_call_operand.vmem [shape: f32[20,2], index: 8, kind: input, shape index: {}]
  %s9 = inlined_call_operand.vmem [shape: f32[1,2], index: 9, kind: input, shape index: {}]
  %s10 = inlined_call_operand.vmem [shape: f32[8,2], index: 10, kind: output, shape index: {}]
  %s11 = sld [smem:[#allocation0]]
  $region50: #{convnet_forward.1} parent=0
    _
  %s13 = ssub.s32 1, %s11
  %s14 = scalar_select 0, %s13, %s11
  // Predicated region
  $region2: #{convnet_forward.1} parent=0 // pred_check
    _
  $region3: #{convnet_forward.1} parent=0 // pred_check_branch
    %16 = sbr.rel (0) target = $region5
  $region4: #{convnet_forward.1} parent=0 // pred_region
    _
  $region5: #{convnet_forward.1} parent=0 // pred_fallthru
    _
  // Predicated region
  $region6: #{convnet_forward.1} parent=0 // pred_check
    _
  $region7: #{convnet_forward.1} parent=0 // pred_check_branch
    %18 = sbr.rel (0) target = $region9
  $region8: #{convnet_forward.1} parent=0 // pred_region
    _
  $region9: #{convnet_forward.1} parent=0 // pred_fallthru
    _
  // Predicated region
  $region10: #{convnet_forward.1} parent=0 // pred_check
    _
  $region11: #{convnet_forward.1} parent=0 // pred_check_branch
    %20 = sbr.rel (0) target = $region13
  $region12: #{convnet_forward.1} parent=0 // pred_region
    _
  $region13: #{convnet_forward.1} parent=0 // pred_fallthru
    _
  // Predicated region
  $region14: #{convnet_forward.1} parent=0 // pred_check
    _
  $region15: #{convnet_forward.1} parent=0 // pred_check_branch
    %22 = sbr.rel (0) target = $region17
  $region16: #{convnet_forward.1} parent=0 // pred_region
    _
  $region17: #{convnet_forward.1} parent=0 // pred_fallthru
    _
  // Predicated region
  $region18: #{convnet_forward.1} parent=0 // pred_check
    _
  $region19: #{convnet_forward.1} parent=0 // pred_check_branch
    %24 = sbr.rel (0) target = $region21
  $region20: #{convnet_forward.1} parent=0 // pred_region
    _
  $region21: #{convnet_forward.1} parent=0 // pred_fallthru
    _
  // Predicated region
  $region22: #{convnet_forward.1} parent=0 // pred_check
    _
  $region23: #{convnet_forward.1} parent=0 // pred_check_branch
    %26 = sbr.rel (0) target = $region25
  $region24: #{convnet_forward.1} parent=0 // pred_region
    _
  $region25: #{convnet_forward.1} parent=0 // pred_fallthru
    _
  // Predicated region
  $region26: #{convnet_forward.1} parent=0 // pred_check
    _
  $region27: #{convnet_forward.1} parent=0 // pred_check_branch
    %28 = sbr.rel (0) target = $region29
  $region28: #{convnet_forward.1} parent=0 // pred_region
    _
  $region29: #{convnet_forward.1} parent=0 // pred_fallthru
    _
  // Predicated region
  $region30: #{convnet_forward.1} parent=0 // pred_check
    _
  $region31: #{convnet_forward.1} parent=0 // pred_check_branch
    %30 = sbr.rel (0) target = $region33
  $region32: #{convnet_forward.1} parent=0 // pred_region
    _
  $region33: #{convnet_forward.1} parent=0 // pred_fallthru
    _
  // Predicated region
  $region34: #{convnet_forward.1} parent=0 // pred_check
    _
  $region35: #{convnet_forward.1} parent=0 // pred_check_branch
    %32 = sbr.rel (0) target = $region37
  $region36: #{convnet_forward.1} parent=0 // pred_region
    _
  $region37: #{convnet_forward.1} parent=0 // pred_fallthru
    _
  // Predicated region
  $region38: #{convnet_forward.1} parent=0 // pred_check
    _
  $region39: #{convnet_forward.1} parent=0 // pred_check_branch
    %34 = sbr.rel (0) target = $region41
  $region40: #{convnet_forward.1} parent=0 // pred_region
    _
  $region41: #{convnet_forward.1} parent=0 // pred_fallthru
    _
  %v35 = vld [vmem:[%s0] sm:$0xff]
  %v36 = vld [vmem:[%s0 + $0x8] sm:$0xff]
  %v37 = vld [vmem:[%s0 + $0x10] sm:$0xff]
  %v38 = vld [vmem:[%s0 + $0x18] sm:$0xff]
  %v39 = vld [vmem:[%s0 + $0x20] sm:$0xff]
  %v40 = vld [vmem:[%s0 + $0x28] sm:$0xff]
  %v41 = vld [vmem:[%s0 + $0x30] sm:$0xff]
  %v42 = vld [vmem:[%s0 + $0x38] sm:$0xff]
  %v43 = vld [vmem:[%s0 + $0x40] sm:$0xff]
  %v44 = vld [vmem:[%s0 + $0x48] sm:$0xff]
  %v45 = vld [vmem:[%s0 + $0x50] sm:$0xff]
  %v46 = vld [vmem:[%s0 + $0x58] sm:$0xff]
  %v47 = vld [vmem:[%s0 + $0x60] sm:$0xff]
  %v48 = vld [vmem:[%s0 + $0x68] sm:$0xff]
  %v49 = vld [vmem:[%s0 + $0x70] sm:$0xff]
  %v50 = vld [vmem:[%s0 + $0x78] sm:$0xff]
  %v51 = vld [vmem:[%s0 + $0x80] sm:$0xff]
  %v52 = vld [vmem:[%s0 + $0x88] sm:$0xff]
  %v53 = vld [vmem:[%s0 + $0x90] sm:$0xff]
  %v54 = vld [vmem:[%s0 + $0x98] sm:$0xff]
  %v55 = vld [vmem:[%s0 + $0xa0] sm:$0xff]
  %v56 = vld [vmem:[%s0 + $0xa8] sm:$0xff]
  %v57 = vld [vmem:[%s0 + $0xb0] sm:$0xff]
  %v58 = vld [vmem:[%s0 + $0xb8] sm:$0xff]
  %v59 = vld [vmem:[%s0 + $0xc0] sm:$0xff]
  %v60 = vld [vmem:[%s0 + $0xc8] sm:$0xff]
  %v61 = vld [vmem:[%s0 + $0xd0] sm:$0xff]
  %v62 = vld [vmem:[%s0 + $0xd8] sm:$0xff]
  %v63 = vld [vmem:[%s0 + $0xe0] sm:$0xff]
  %v64 = vld [vmem:[%s0 + $0xe8] sm:$0xff]
  %v65 = vld [vmem:[%s0 + $0xf0] sm:$0xff]
  %v66 = vld [vmem:[%s0 + $0xf8] sm:$0xff]
  %v67 = vld [vmem:[%s0 + $0x100] sm:$0xff]
  %v68 = vld [vmem:[%s0 + $0x108] sm:$0xff]
  %v69 = vld [vmem:[%s0 + $0x110] sm:$0xff]
  %v70 = vld [vmem:[%s0 + $0x118] sm:$0xff]
  %v71 = vld [vmem:[%s0 + $0x120] sm:$0xff]
  %v72 = vld [vmem:[%s0 + $0x128] sm:$0xff]
  %v73 = vld [vmem:[%s0 + $0x130] sm:$0xff]
  %v74 = vld [vmem:[%s0 + $0x138] sm:$0xff]
  %v75 = vld [vmem:[%s0 + $0x140] sm:$0xff]
  %v76 = vld [vmem:[%s0 + $0x148] sm:$0xff]
  %v77 = vld [vmem:[%s0 + $0x150] sm:$0xff]
  %v78 = vld [vmem:[%s0 + $0x158] sm:$0xff]
  %v79 = vld [vmem:[%s0 + $0x160] sm:$0xff]
  %v80 = vld [vmem:[%s0 + $0x168] sm:$0xff]
  %v81 = vld [vmem:[%s0 + $0x170] sm:$0xff]
  %v82 = vld [vmem:[%s0 + $0x178] sm:$0xff]
  %v83 = vld [vmem:[%s0 + $0x180] sm:$0xff]
  %v84 = vld [vmem:[%s0 + $0x188] sm:$0xff]
  %v85 = vld [vmem:[%s0 + $0x190] sm:$0xff]
  %v86 = vld [vmem:[%s0 + $0x198] sm:$0xff]
  %v87 = vld [vmem:[%s0 + $0x1a0] sm:$0xff]
  %v88 = vld [vmem:[%s0 + $0x1a8] sm:$0xff]
  %v89 = vld [vmem:[%s0 + $0x1b0] sm:$0xff]
  %v90 = vld [vmem:[%s0 + $0x1b8] sm:$0xff]
  %v91 = vld [vmem:[%s0 + $0x1c0] sm:$0xff]
  %v92 = vld [vmem:[%s0 + $0x1c8] sm:$0xff]
  %v93 = vld [vmem:[%s0 + $0x1d0] sm:$0xff]
  %v94 = vld [vmem:[%s0 + $0x1d8] sm:$0xff]
  %v95 = vld [vmem:[%s0 + $0x1e0] sm:$0xff]
  %v96 = vld [vmem:[%s0 + $0x1e8] sm:$0xff]
  %v97 = vld [vmem:[%s0 + $0x1f0] sm:$0xff]
  %v98 = vld [vmem:[%s0 + $0x1f8] sm:$0xff]
  %v99 = vld [vmem:[%s0 + $0x200] sm:$0xff]
  %v100 = vld [vmem:[%s0 + $0x208] sm:$0xff]
  %v101 = vld [vmem:[%s0 + $0x210] sm:$0xff]
  %v102 = vld [vmem:[%s0 + $0x218] sm:$0xff]
  %v103 = vld [vmem:[%s0 + $0x220] sm:$0xff]
  %v104 = vld [vmem:[%s0 + $0x228] sm:$0xff]
  %v105 = vld [vmem:[%s0 + $0x230] sm:$0xff]
  %v106 = vld [vmem:[%s0 + $0x238] sm:$0xff]
  %v107 = vld [vmem:[%s0 + $0x240] sm:$0xff]
  %v108 = vld [vmem:[%s0 + $0x248] sm:$0xff]
  %v109 = vld [vmem:[%s0 + $0x250] sm:$0xff]
  %v110 = vld [vmem:[%s0 + $0x258] sm:$0xff]
  %v111 = vld [vmem:[%s0 + $0x260] sm:$0xff]
  %v112 = vld [vmem:[%s0 + $0x268] sm:$0xff]
  %v113 = vld [vmem:[%s0 + $0x270] sm:$0xff]
  %v114 = vld [vmem:[%s0 + $0x278] sm:$0xff]
  %v115 = vld [vmem:[%s0 + $0x280] sm:$0xff]
  %v116 = vld [vmem:[%s0 + $0x288] sm:$0xff]
  %v117 = vld [vmem:[%s0 + $0x290] sm:$0xff]
  %v118 = vld [vmem:[%s0 + $0x298] sm:$0xff]
  %v119 = vld [vmem:[%s0 + $0x2a0] sm:$0xff]
  %v120 = vld [vmem:[%s0 + $0x2a8] sm:$0xff]
  %v121 = vld [vmem:[%s0 + $0x2b0] sm:$0xff]
  %v122 = vld [vmem:[%s0 + $0x2b8] sm:$0xff]
  %v123 = vld [vmem:[%s0 + $0x2c0] sm:$0xff]
  %v124 = vld [vmem:[%s0 + $0x2c8] sm:$0xff]
  %v125 = vld [vmem:[%s0 + $0x2d0] sm:$0xff]
  %v126 = vld [vmem:[%s0 + $0x2d8] sm:$0xff]
  %v127 = vld [vmem:[%s0 + $0x2e0] sm:$0xff]
  %v128 = vld [vmem:[%s0 + $0x2e8] sm:$0xff]
  %v129 = vld [vmem:[%s0 + $0x2f0] sm:$0xff]
  %v130 = vld [vmem:[%s0 + $0x2f8] sm:$0xff]
  %v131 = vld [vmem:[%s0 + $0x300] sm:$0xff]
  %v132 = vld [vmem:[%s0 + $0x308] sm:$0xff]
  %v133 = vld [vmem:[%s0 + $0x310] sm:$0xff]
  %v134 = vld [vmem:[%s0 + $0x318] sm:$0xff]
  %v135 = vld [vmem:[%s0 + $0x320] sm:$0xff]
  %v136 = vld [vmem:[%s0 + $0x328] sm:$0xff]
  %v137 = vld [vmem:[%s0 + $0x330] sm:$0xff]
  %v138 = vld [vmem:[%s0 + $0x338] sm:$0xff]
  %v139 = vld [vmem:[%s0 + $0x340] sm:$0xff]
  %v140 = vld [vmem:[%s0 + $0x348] sm:$0xff]
  %v141 = vld [vmem:[%s0 + $0x350] sm:$0xff]
  %v142 = vld [vmem:[%s0 + $0x358] sm:$0xff]
  %v143 = vld [vmem:[%s0 + $0x360] sm:$0xff]
  %v144 = vld [vmem:[%s0 + $0x368] sm:$0xff]
  %v145 = vld [vmem:[%s0 + $0x370] sm:$0xff]
  %v146 = vld [vmem:[%s0 + $0x378] sm:$0xff]
  %v147 = vld [vmem:[%s0 + $0x380] sm:$0xff]
  %v148 = vld [vmem:[%s0 + $0x388] sm:$0xff]
  %v149 = vld [vmem:[%s0 + $0x390] sm:$0xff]
  %v150 = vld [vmem:[%s0 + $0x398] sm:$0xff]
  %v151 = vld [vmem:[%s0 + $0x3a0] sm:$0xff]
  %v152 = vld [vmem:[%s0 + $0x3a8] sm:$0xff]
  %v153 = vld [vmem:[%s0 + $0x3b0] sm:$0xff]
  %v154 = vld [vmem:[%s0 + $0x3b8] sm:$0xff]
  %v155 = vld [vmem:[%s0 + $0x3c0] sm:$0xff]
  %v156 = vld [vmem:[%s0 + $0x3c8] sm:$0xff]
  %v157 = vld [vmem:[%s0 + $0x3d0] sm:$0xff]
  %v158 = vld [vmem:[%s0 + $0x3d8] sm:$0xff]
  %v159 = vld [vmem:[%s0 + $0x3e0] sm:$0xff]
  %v160 = vld [vmem:[%s0 + $0x3e8] sm:$0xff]
  %v161 = vld [vmem:[%s0 + $0x3f0] sm:$0xff]
  %v162 = vld [vmem:[%s0 + $0x3f8] sm:$0xff]
  %v163 = vld [vmem:[%s0 + $0x400] sm:$0xff]
  %v164 = vld [vmem:[%s0 + $0x408] sm:$0xff]
  %v165 = vld [vmem:[%s0 + $0x410] sm:$0xff]
  %v166 = vld [vmem:[%s0 + $0x418] sm:$0xff]
  %v167 = vld [vmem:[%s0 + $0x420] sm:$0xff]
  %v168 = vld [vmem:[%s0 + $0x428] sm:$0xff]
  %v169 = vld [vmem:[%s0 + $0x430] sm:$0xff]
  %v170 = vld [vmem:[%s0 + $0x438] sm:$0xff]
  %v171 = vld [vmem:[%s0 + $0x440] sm:$0xff]
  %v172 = vld [vmem:[%s0 + $0x448] sm:$0xff]
  %v173 = vld [vmem:[%s0 + $0x450] sm:$0xff]
  %v174 = vld [vmem:[%s0 + $0x458] sm:$0xff]
  %v175 = vld [vmem:[%s0 + $0x460] sm:$0xff]
  %v176 = vld [vmem:[%s0 + $0x468] sm:$0xff]
  %v177 = vld [vmem:[%s0 + $0x470] sm:$0xff]
  %v178 = vld [vmem:[%s0 + $0x478] sm:$0xff]
  %v179 = vld [vmem:[%s0 + $0x480] sm:$0xff]
  %v180 = vld [vmem:[%s0 + $0x488] sm:$0xff]
  %v181 = vld [vmem:[%s0 + $0x490] sm:$0xff]
  %v182 = vld [vmem:[%s0 + $0x498] sm:$0xff]
  %v183 = vld [vmem:[%s0 + $0x4a0] sm:$0xff]
  %v184 = vld [vmem:[%s0 + $0x4a8] sm:$0xff]
  %v185 = vld [vmem:[%s0 + $0x4b0] sm:$0xff]
  %v186 = vld [vmem:[%s0 + $0x4b8] sm:$0xff]
  %v187 = vld [vmem:[%s0 + $0x4c0] sm:$0xff]
  %v188 = vld [vmem:[%s0 + $0x4c8] sm:$0xff]
  %v189 = vld [vmem:[%s0 + $0x4d0] sm:$0xff]
  %v190 = vld [vmem:[%s0 + $0x4d8] sm:$0xff]
  %v191 = vld [vmem:[%s0 + $0x4e0] sm:$0xff]
  %v192 = vld [vmem:[%s0 + $0x4e8] sm:$0xff]
  %v193 = vld [vmem:[%s0 + $0x4f0] sm:$0xff]
  %v194 = vld [vmem:[%s0 + $0x4f8] sm:$0xff]
  %v195 = vld [vmem:[%s1] sm:$0xff]
  %v196 = vld [vmem:[%s1 + $0x8] sm:$0xff]
  %v197 = vld [vmem:[%s1 + $0x10] sm:$0xff]
  %v198 = vld [vmem:[%s1 + $0x18] sm:$0xff]
  %v199 = vld [vmem:[%s1 + $0x20] sm:$0xff]
  %v200 = vld [vmem:[%s1 + $0x28] sm:$0xff]
  %vm201 = vcmask 195584
  %v203 = vsel %vm201, %v35, 0
  %v206 = vsel %vm201, %v36, 0
  %v209 = vsel %vm201, %v37, 0
  %v212 = vsel %vm201, %v38, 0
  %v215 = vsel %vm201, %v39, 0
  %v218 = vsel %vm201, %v40, 0
  %v221 = vsel %vm201, %v41, 0
  %v224 = vsel %vm201, %v42, 0
  %v227 = vsel %vm201, %v43, 0
  %v230 = vsel %vm201, %v44, 0
  %v233 = vsel %vm201, %v45, 0
  %v236 = vsel %vm201, %v46, 0
  %v239 = vsel %vm201, %v47, 0
  %v242 = vsel %vm201, %v48, 0
  %v245 = vsel %vm201, %v49, 0
  %v248 = vsel %vm201, %v50, 0
  %v251 = vsel %vm201, %v51, 0
  %v254 = vsel %vm201, %v52, 0
  %v257 = vsel %vm201, %v53, 0
  %v260 = vsel %vm201, %v54, 0
  %v263 = vsel %vm201, %v55, 0
  %v266 = vsel %vm201, %v56, 0
  %v269 = vsel %vm201, %v57, 0
  %v272 = vsel %vm201, %v58, 0
  %v275 = vsel %vm201, %v59, 0
  %v278 = vsel %vm201, %v60, 0
  %v281 = vsel %vm201, %v61, 0
  %v284 = vsel %vm201, %v62, 0
  %v287 = vsel %vm201, %v63, 0
  %v290 = vsel %vm201, %v64, 0
  %v293 = vsel %vm201, %v65, 0
  %v296 = vsel %vm201, %v66, 0
  %v299 = vsel %vm201, %v67, 0
  %v302 = vsel %vm201, %v68, 0
  %v305 = vsel %vm201, %v69, 0
  %v308 = vsel %vm201, %v70, 0
  %v311 = vsel %vm201, %v71, 0
  %v314 = vsel %vm201, %v72, 0
  %v317 = vsel %vm201, %v73, 0
  %v320 = vsel %vm201, %v74, 0
  %v323 = vsel %vm201, %v75, 0
  %v326 = vsel %vm201, %v76, 0
  %v329 = vsel %vm201, %v77, 0
  %v332 = vsel %vm201, %v78, 0
  %v335 = vsel %vm201, %v79, 0
  %v338 = vsel %vm201, %v80, 0
  %v341 = vsel %vm201, %v81, 0
  %v344 = vsel %vm201, %v82, 0
  %v347 = vsel %vm201, %v83, 0
  %v350 = vsel %vm201, %v84, 0
  %v353 = vsel %vm201, %v85, 0
  %v356 = vsel %vm201, %v86, 0
  %v359 = vsel %vm201, %v87, 0
  %v362 = vsel %vm201, %v88, 0
  %v365 = vsel %vm201, %v89, 0
  %v368 = vsel %vm201, %v90, 0
  %v371 = vsel %vm201, %v91, 0
  %v374 = vsel %vm201, %v92, 0
  %v377 = vsel %vm201, %v93, 0
  %v380 = vsel %vm201, %v94, 0
  %v383 = vsel %vm201, %v95, 0
  %v386 = vsel %vm201, %v96, 0
  %v389 = vsel %vm201, %v97, 0
  %v392 = vsel %vm201, %v98, 0
  %v395 = vsel %vm201, %v99, 0
  %v398 = vsel %vm201, %v100, 0
  %v401 = vsel %vm201, %v101, 0
  %v404 = vsel %vm201, %v102, 0
  %v407 = vsel %vm201, %v103, 0
  %v410 = vsel %vm201, %v104, 0
  %v413 = vsel %vm201, %v105, 0
  %v416 = vsel %vm201, %v106, 0
  %v419 = vsel %vm201, %v107, 0
  %v422 = vsel %vm201, %v108, 0
  %v425 = vsel %vm201, %v109, 0
  %v428 = vsel %vm201, %v110, 0
  %v431 = vsel %vm201, %v111, 0
  %v434 = vsel %vm201, %v112, 0
  %v437 = vsel %vm201, %v113, 0
  %v440 = vsel %vm201, %v114, 0
  %v443 = vsel %vm201, %v115, 0
  %v446 = vsel %vm201, %v116, 0
  %v449 = vsel %vm201, %v117, 0
  %v452 = vsel %vm201, %v118, 0
  %v455 = vsel %vm201, %v119, 0
  %v458 = vsel %vm201, %v120, 0
  %v461 = vsel %vm201, %v121, 0
  %v464 = vsel %vm201, %v122, 0
  %v467 = vsel %vm201, %v123, 0
  %v470 = vsel %vm201, %v124, 0
  %v473 = vsel %vm201, %v125, 0
  %v476 = vsel %vm201, %v126, 0
  %v479 = vsel %vm201, %v127, 0
  %v482 = vsel %vm201, %v128, 0
  %v485 = vsel %vm201, %v129, 0
  %v488 = vsel %vm201, %v130, 0
  %v491 = vsel %vm201, %v131, 0
  %v494 = vsel %vm201, %v132, 0
  %v497 = vsel %vm201, %v133, 0
  %v500 = vsel %vm201, %v134, 0
  %v503 = vsel %vm201, %v135, 0
  %v506 = vsel %vm201, %v136, 0
  %v509 = vsel %vm201, %v137, 0
  %v512 = vsel %vm201, %v138, 0
  %v515 = vsel %vm201, %v139, 0
  %v518 = vsel %vm201, %v140, 0
  %v521 = vsel %vm201, %v141, 0
  %v524 = vsel %vm201, %v142, 0
  %v527 = vsel %vm201, %v143, 0
  %v530 = vsel %vm201, %v144, 0
  %v533 = vsel %vm201, %v145, 0
  %v536 = vsel %vm201, %v146, 0
  %v539 = vsel %vm201, %v147, 0
  %v542 = vsel %vm201, %v148, 0
  %v545 = vsel %vm201, %v149, 0
  %v548 = vsel %vm201, %v150, 0
  %v551 = vsel %vm201, %v151, 0
  %v554 = vsel %vm201, %v152, 0
  %v557 = vsel %vm201, %v153, 0
  %v560 = vsel %vm201, %v154, 0
  %v563 = vsel %vm201, %v155, 0
  %v566 = vsel %vm201, %v156, 0
  %v569 = vsel %vm201, %v157, 0
  %v572 = vsel %vm201, %v158, 0
  %v575 = vsel %vm201, %v159, 0
  %v578 = vsel %vm201, %v160, 0
  %v581 = vsel %vm201, %v161, 0
  %v584 = vsel %vm201, %v162, 0
  %v587 = vsel %vm201, %v163, 0
  %v590 = vsel %vm201, %v164, 0
  %v593 = vsel %vm201, %v165, 0
  %v596 = vsel %vm201, %v166, 0
  %v599 = vsel %vm201, %v167, 0
  %v602 = vsel %vm201, %v168, 0
  %v605 = vsel %vm201, %v169, 0
  %v608 = vsel %vm201, %v170, 0
  %v611 = vsel %vm201, %v171, 0
  %v614 = vsel %vm201, %v172, 0
  %v617 = vsel %vm201, %v173, 0
  %v620 = vsel %vm201, %v174, 0
  %v623 = vsel %vm201, %v175, 0
  %v626 = vsel %vm201, %v176, 0
  %v629 = vsel %vm201, %v177, 0
  %v632 = vsel %vm201, %v178, 0
  %v635 = vsel %vm201, %v179, 0
  %v638 = vsel %vm201, %v180, 0
  %v641 = vsel %vm201, %v181, 0
  %v644 = vsel %vm201, %v182, 0
  %v647 = vsel %vm201, %v183, 0
  %v650 = vsel %vm201, %v184, 0
  %v653 = vsel %vm201, %v185, 0
  %v656 = vsel %vm201, %v186, 0
  %v659 = vsel %vm201, %v187, 0
  %v662 = vsel %vm201, %v188, 0
  %v665 = vsel %vm201, %v189, 0
  %v668 = vsel %vm201, %v190, 0
  %v671 = vsel %vm201, %v191, 0
  %v674 = vsel %vm201, %v192, 0
  %v677 = vsel %vm201, %v193, 0
  %v680 = vsel %vm201, %v194, 0
  %682 = vmatpush.msra.mxu0 0.0
  %683 = vmatpush.msra.mxu0 0.0
  %684 = vmatpush.msra.mxu0 0.0
  %685 = vmatpush.msra.mxu0 0.0
  %686 = vmatpush.msra.mxu0 0.0
  %687 = vmatpush.msra.mxu0 0.0
  %688 = vmatpush.msra.mxu0 0.0
  %689 = vmatpush.msra.mxu0 0.0
  %690 = vmatpush.msra.mxu0 0.0
  %691 = vmatpush.msra.mxu0 0.0
  %692 = vmatpush.msra.mxu0 0.0
  %693 = vmatpush.msra.mxu0 0.0
  %694 = vmatpush.msra.mxu0 0.0
  %695 = vmatpush.msra.mxu0 %v199
  %696 = vmatpush.msra.mxu0 %v197
  %697 = vmatpush.msra.mxu0 %v195
  %698 = vmatmul.f32.gmra.mxu0 %v203
  %v699 = vpop.f32.mrf.mxu0
  %v700 = vadd.f32 0.0, %v699
  %701 = vmatmul.f32.gmra.mxu0 %v206
  %v702 = vpop.f32.mrf.mxu0
  %v703 = vadd.f32 0.0, %v702
  %704 = vmatmul.f32.gmra.mxu0 %v209
  %v705 = vpop.f32.mrf.mxu0
  %v706 = vadd.f32 0.0, %v705
  %707 = vmatmul.f32.gmra.mxu0 %v212
  %v708 = vpop.f32.mrf.mxu0
  %v709 = vadd.f32 0.0, %v708
  %710 = vmatmul.f32.gmra.mxu0 %v215
  %v711 = vpop.f32.mrf.mxu0
  %v712 = vadd.f32 0.0, %v711
  %713 = vmatmul.f32.gmra.mxu0 %v218
  %v714 = vpop.f32.mrf.mxu0
  %v715 = vadd.f32 0.0, %v714
  %716 = vmatmul.f32.gmra.mxu0 %v221
  %v717 = vpop.f32.mrf.mxu0
  %v718 = vadd.f32 0.0, %v717
  %719 = vmatmul.f32.gmra.mxu0 %v224
  %v720 = vpop.f32.mrf.mxu0
  %v721 = vadd.f32 0.0, %v720
  %722 = vmatmul.f32.gmra.mxu0 %v227
  %v723 = vpop.f32.mrf.mxu0
  %v724 = vadd.f32 0.0, %v723
  %725 = vmatmul.f32.gmra.mxu0 %v230
  %v726 = vpop.f32.mrf.mxu0
  %v727 = vadd.f32 0.0, %v726
  %728 = vmatmul.f32.gmra.mxu0 %v233
  %v729 = vpop.f32.mrf.mxu0
  %v730 = vadd.f32 0.0, %v729
  %731 = vmatmul.f32.gmra.mxu0 %v236
  %v732 = vpop.f32.mrf.mxu0
  %v733 = vadd.f32 0.0, %v732
  %734 = vmatmul.f32.gmra.mxu0 %v239
  %v735 = vpop.f32.mrf.mxu0
  %v736 = vadd.f32 0.0, %v735
  %737 = vmatmul.f32.gmra.mxu0 %v242
  %v738 = vpop.f32.mrf.mxu0
  %v739 = vadd.f32 0.0, %v738
  %740 = vmatmul.f32.gmra.mxu0 %v245
  %v741 = vpop.f32.mrf.mxu0
  %v742 = vadd.f32 0.0, %v741
  %743 = vmatmul.f32.gmra.mxu0 %v248
  %v744 = vpop.f32.mrf.mxu0
  %v745 = vadd.f32 0.0, %v744
  %746 = vmatmul.f32.gmra.mxu0 %v251
  %v747 = vpop.f32.mrf.mxu0
  %v748 = vadd.f32 0.0, %v747
  %749 = vmatmul.f32.gmra.mxu0 %v254
  %v750 = vpop.f32.mrf.mxu0
  %v751 = vadd.f32 0.0, %v750
  %752 = vmatmul.f32.gmra.mxu0 %v257
  %v753 = vpop.f32.mrf.mxu0
  %v754 = vadd.f32 0.0, %v753
  %755 = vmatmul.f32.gmra.mxu0 %v260
  %v756 = vpop.f32.mrf.mxu0
  %v757 = vadd.f32 0.0, %v756
  %758 = vmatmul.f32.gmra.mxu0 %v263
  %v759 = vpop.f32.mrf.mxu0
  %v760 = vadd.f32 0.0, %v759
  %761 = vmatmul.f32.gmra.mxu0 %v266
  %v762 = vpop.f32.mrf.mxu0
  %v763 = vadd.f32 0.0, %v762
  %764 = vmatmul.f32.gmra.mxu0 %v269
  %v765 = vpop.f32.mrf.mxu0
  %v766 = vadd.f32 0.0, %v765
  %767 = vmatmul.f32.gmra.mxu0 %v272
  %v768 = vpop.f32.mrf.mxu0
  %v769 = vadd.f32 0.0, %v768
  %770 = vmatmul.f32.gmra.mxu0 %v275
  %v771 = vpop.f32.mrf.mxu0
  %v772 = vadd.f32 0.0, %v771
  %773 = vmatmul.f32.gmra.mxu0 %v278
  %v774 = vpop.f32.mrf.mxu0
  %v775 = vadd.f32 0.0, %v774
  %776 = vmatmul.f32.gmra.mxu0 %v281
  %v777 = vpop.f32.mrf.mxu0
  %v778 = vadd.f32 0.0, %v777
  %779 = vmatmul.f32.gmra.mxu0 %v284
  %v780 = vpop.f32.mrf.mxu0
  %v781 = vadd.f32 0.0, %v780
  %782 = vmatmul.f32.gmra.mxu0 %v287
  %v783 = vpop.f32.mrf.mxu0
  %v784 = vadd.f32 0.0, %v783
  %785 = vmatmul.f32.gmra.mxu0 %v290
  %v786 = vpop.f32.mrf.mxu0
  %v787 = vadd.f32 0.0, %v786
  %788 = vmatmul.f32.gmra.mxu0 %v293
  %v789 = vpop.f32.mrf.mxu0
  %v790 = vadd.f32 0.0, %v789
  %791 = vmatmul.f32.gmra.mxu0 %v296
  %v792 = vpop.f32.mrf.mxu0
  %v793 = vadd.f32 0.0, %v792
  %794 = vmatmul.f32.gmra.mxu0 %v299
  %v795 = vpop.f32.mrf.mxu0
  %v796 = vadd.f32 0.0, %v795
  %797 = vmatmul.f32.gmra.mxu0 %v302
  %v798 = vpop.f32.mrf.mxu0
  %v799 = vadd.f32 0.0, %v798
  %800 = vmatmul.f32.gmra.mxu0 %v305
  %v801 = vpop.f32.mrf.mxu0
  %v802 = vadd.f32 0.0, %v801
  %803 = vmatmul.f32.gmra.mxu0 %v308
  %v804 = vpop.f32.mrf.mxu0
  %v805 = vadd.f32 0.0, %v804
  %806 = vmatmul.f32.gmra.mxu0 %v311
  %v807 = vpop.f32.mrf.mxu0
  %v808 = vadd.f32 0.0, %v807
  %809 = vmatmul.f32.gmra.mxu0 %v314
  %v810 = vpop.f32.mrf.mxu0
  %v811 = vadd.f32 0.0, %v810
  %812 = vmatmul.f32.gmra.mxu0 %v317
  %v813 = vpop.f32.mrf.mxu0
  %v814 = vadd.f32 0.0, %v813
  %815 = vmatmul.f32.gmra.mxu0 %v320
  %v816 = vpop.f32.mrf.mxu0
  %v817 = vadd.f32 0.0, %v816
  %818 = vmatmul.f32.gmra.mxu0 %v323
  %v819 = vpop.f32.mrf.mxu0
  %v820 = vadd.f32 0.0, %v819
  %821 = vmatmul.f32.gmra.mxu0 %v326
  %v822 = vpop.f32.mrf.mxu0
  %v823 = vadd.f32 0.0, %v822
  %824 = vmatmul.f32.gmra.mxu0 %v329
  %v825 = vpop.f32.mrf.mxu0
  %v826 = vadd.f32 0.0, %v825
  %827 = vmatmul.f32.gmra.mxu0 %v332
  %v828 = vpop.f32.mrf.mxu0
  %v829 = vadd.f32 0.0, %v828
  %830 = vmatmul.f32.gmra.mxu0 %v335
  %v831 = vpop.f32.mrf.mxu0
  %v832 = vadd.f32 0.0, %v831
  %833 = vmatmul.f32.gmra.mxu0 %v338
  %v834 = vpop.f32.mrf.mxu0
  %v835 = vadd.f32 0.0, %v834
  %836 = vmatmul.f32.gmra.mxu0 %v341
  %v837 = vpop.f32.mrf.mxu0
  %v838 = vadd.f32 0.0, %v837
  %839 = vmatmul.f32.gmra.mxu0 %v344
  %v840 = vpop.f32.mrf.mxu0
  %v841 = vadd.f32 0.0, %v840
  %842 = vmatmul.f32.gmra.mxu0 %v347
  %v843 = vpop.f32.mrf.mxu0
  %v844 = vadd.f32 0.0, %v843
  %845 = vmatmul.f32.gmra.mxu0 %v350
  %v846 = vpop.f32.mrf.mxu0
  %v847 = vadd.f32 0.0, %v846
  %848 = vmatmul.f32.gmra.mxu0 %v353
  %v849 = vpop.f32.mrf.mxu0
  %v850 = vadd.f32 0.0, %v849
  %851 = vmatmul.f32.gmra.mxu0 %v356
  %v852 = vpop.f32.mrf.mxu0
  %v853 = vadd.f32 0.0, %v852
  %854 = vmatmul.f32.gmra.mxu0 %v359
  %v855 = vpop.f32.mrf.mxu0
  %v856 = vadd.f32 0.0, %v855
  %857 = vmatmul.f32.gmra.mxu0 %v362
  %v858 = vpop.f32.mrf.mxu0
  %v859 = vadd.f32 0.0, %v858
  %860 = vmatmul.f32.gmra.mxu0 %v365
  %v861 = vpop.f32.mrf.mxu0
  %v862 = vadd.f32 0.0, %v861
  %863 = vmatmul.f32.gmra.mxu0 %v368
  %v864 = vpop.f32.mrf.mxu0
  %v865 = vadd.f32 0.0, %v864
  %866 = vmatmul.f32.gmra.mxu0 %v371
  %v867 = vpop.f32.mrf.mxu0
  %v868 = vadd.f32 0.0, %v867
  %869 = vmatmul.f32.gmra.mxu0 %v374
  %v870 = vpop.f32.mrf.mxu0
  %v871 = vadd.f32 0.0, %v870
  %872 = vmatmul.f32.gmra.mxu0 %v377
  %v873 = vpop.f32.mrf.mxu0
  %v874 = vadd.f32 0.0, %v873
  %875 = vmatmul.f32.gmra.mxu0 %v380
  %v876 = vpop.f32.mrf.mxu0
  %v877 = vadd.f32 0.0, %v876
  %878 = vmatmul.f32.gmra.mxu0 %v383
  %v879 = vpop.f32.mrf.mxu0
  %v880 = vadd.f32 0.0, %v879
  %881 = vmatmul.f32.gmra.mxu0 %v386
  %v882 = vpop.f32.mrf.mxu0
  %v883 = vadd.f32 0.0, %v882
  %884 = vmatmul.f32.gmra.mxu0 %v389
  %v885 = vpop.f32.mrf.mxu0
  %v886 = vadd.f32 0.0, %v885
  %887 = vmatmul.f32.gmra.mxu0 %v392
  %v888 = vpop.f32.mrf.mxu0
  %v889 = vadd.f32 0.0, %v888
  %890 = vmatmul.f32.gmra.mxu0 %v395
  %v891 = vpop.f32.mrf.mxu0
  %v892 = vadd.f32 0.0, %v891
  %893 = vmatmul.f32.gmra.mxu0 %v398
  %v894 = vpop.f32.mrf.mxu0
  %v895 = vadd.f32 0.0, %v894
  %896 = vmatmul.f32.gmra.mxu0 %v401
  %v897 = vpop.f32.mrf.mxu0
  %v898 = vadd.f32 0.0, %v897
  %899 = vmatmul.f32.gmra.mxu0 %v404
  %v900 = vpop.f32.mrf.mxu0
  %v901 = vadd.f32 0.0, %v900
  %902 = vmatmul.f32.gmra.mxu0 %v407
  %v903 = vpop.f32.mrf.mxu0
  %v904 = vadd.f32 0.0, %v903
  %905 = vmatmul.f32.gmra.mxu0 %v410
  %v906 = vpop.f32.mrf.mxu0
  %v907 = vadd.f32 0.0, %v906
  %908 = vmatmul.f32.gmra.mxu0 %v413
  %v909 = vpop.f32.mrf.mxu0
  %v910 = vadd.f32 0.0, %v909
  %911 = vmatmul.f32.gmra.mxu0 %v416
  %v912 = vpop.f32.mrf.mxu0
  %v913 = vadd.f32 0.0, %v912
  %914 = vmatmul.f32.gmra.mxu0 %v419
  %v915 = vpop.f32.mrf.mxu0
  %v916 = vadd.f32 0.0, %v915
  %917 = vmatmul.f32.gmra.mxu0 %v422
  %v918 = vpop.f32.mrf.mxu0
  %v919 = vadd.f32 0.0, %v918
  %920 = vmatmul.f32.gmra.mxu0 %v425
  %v921 = vpop.f32.mrf.mxu0
  %v922 = vadd.f32 0.0, %v921
  %923 = vmatmul.f32.gmra.mxu0 %v428
  %v924 = vpop.f32.mrf.mxu0
  %v925 = vadd.f32 0.0, %v924
  %926 = vmatmul.f32.gmra.mxu0 %v431
  %v927 = vpop.f32.mrf.mxu0
  %v928 = vadd.f32 0.0, %v927
  %929 = vmatmul.f32.gmra.mxu0 %v434
  %v930 = vpop.f32.mrf.mxu0
  %v931 = vadd.f32 0.0, %v930
  %932 = vmatmul.f32.gmra.mxu0 %v437
  %v933 = vpop.f32.mrf.mxu0
  %v934 = vadd.f32 0.0, %v933
  %935 = vmatmul.f32.gmra.mxu0 %v440
  %v936 = vpop.f32.mrf.mxu0
  %v937 = vadd.f32 0.0, %v936
  %938 = vmatmul.f32.gmra.mxu0 %v443
  %v939 = vpop.f32.mrf.mxu0
  %v940 = vadd.f32 0.0, %v939
  %941 = vmatmul.f32.gmra.mxu0 %v446
  %v942 = vpop.f32.mrf.mxu0
  %v943 = vadd.f32 0.0, %v942
  %944 = vmatmul.f32.gmra.mxu0 %v449
  %v945 = vpop.f32.mrf.mxu0
  %v946 = vadd.f32 0.0, %v945
  %947 = vmatmul.f32.gmra.mxu0 %v452
  %v948 = vpop.f32.mrf.mxu0
  %v949 = vadd.f32 0.0, %v948
  %950 = vmatmul.f32.gmra.mxu0 %v455
  %v951 = vpop.f32.mrf.mxu0
  %v952 = vadd.f32 0.0, %v951
  %953 = vmatmul.f32.gmra.mxu0 %v458
  %v954 = vpop.f32.mrf.mxu0
  %v955 = vadd.f32 0.0, %v954
  %956 = vmatmul.f32.gmra.mxu0 %v461
  %v957 = vpop.f32.mrf.mxu0
  %v958 = vadd.f32 0.0, %v957
  %959 = vmatmul.f32.gmra.mxu0 %v464
  %v960 = vpop.f32.mrf.mxu0
  %v961 = vadd.f32 0.0, %v960
  %962 = vmatmul.f32.gmra.mxu0 %v467
  %v963 = vpop.f32.mrf.mxu0
  %v964 = vadd.f32 0.0, %v963
  %965 = vmatmul.f32.gmra.mxu0 %v470
  %v966 = vpop.f32.mrf.mxu0
  %v967 = vadd.f32 0.0, %v966
  %968 = vmatmul.f32.gmra.mxu0 %v473
  %v969 = vpop.f32.mrf.mxu0
  %v970 = vadd.f32 0.0, %v969
  %971 = vmatmul.f32.gmra.mxu0 %v476
  %v972 = vpop.f32.mrf.mxu0
  %v973 = vadd.f32 0.0, %v972
  %974 = vmatmul.f32.gmra.mxu0 %v479
  %v975 = vpop.f32.mrf.mxu0
  %v976 = vadd.f32 0.0, %v975
  %977 = vmatmul.f32.gmra.mxu0 %v482
  %v978 = vpop.f32.mrf.mxu0
  %v979 = vadd.f32 0.0, %v978
  %980 = vmatmul.f32.gmra.mxu0 %v485
  %v981 = vpop.f32.mrf.mxu0
  %v982 = vadd.f32 0.0, %v981
  %983 = vmatmul.f32.gmra.mxu0 %v488
  %v984 = vpop.f32.mrf.mxu0
  %v985 = vadd.f32 0.0, %v984
  %986 = vmatmul.f32.gmra.mxu0 %v491
  %v987 = vpop.f32.mrf.mxu0
  %v988 = vadd.f32 0.0, %v987
  %989 = vmatmul.f32.gmra.mxu0 %v494
  %v990 = vpop.f32.mrf.mxu0
  %v991 = vadd.f32 0.0, %v990
  %992 = vmatmul.f32.gmra.mxu0 %v497
  %v993 = vpop.f32.mrf.mxu0
  %v994 = vadd.f32 0.0, %v993
  %995 = vmatmul.f32.gmra.mxu0 %v500
  %v996 = vpop.f32.mrf.mxu0
  %v997 = vadd.f32 0.0, %v996
  %998 = vmatmul.f32.gmra.mxu0 %v503
  %v999 = vpop.f32.mrf.mxu0
  %v1000 = vadd.f32 0.0, %v999
  %1001 = vmatmul.f32.gmra.mxu0 %v506
  %v1002 = vpop.f32.mrf.mxu0
  %v1003 = vadd.f32 0.0, %v1002
  %1004 = vmatmul.f32.gmra.mxu0 %v509
  %v1005 = vpop.f32.mrf.mxu0
  %v1006 = vadd.f32 0.0, %v1005
  %1007 = vmatmul.f32.gmra.mxu0 %v512
  %v1008 = vpop.f32.mrf.mxu0
  %v1009 = vadd.f32 0.0, %v1008
  %1010 = vmatmul.f32.gmra.mxu0 %v515
  %v1011 = vpop.f32.mrf.mxu0
  %v1012 = vadd.f32 0.0, %v1011
  %1013 = vmatmul.f32.gmra.mxu0 %v518
  %v1014 = vpop.f32.mrf.mxu0
  %v1015 = vadd.f32 0.0, %v1014
  %1016 = vmatmul.f32.gmra.mxu0 %v521
  %v1017 = vpop.f32.mrf.mxu0
  %v1018 = vadd.f32 0.0, %v1017
  %1019 = vmatmul.f32.gmra.mxu0 %v524
  %v1020 = vpop.f32.mrf.mxu0
  %v1021 = vadd.f32 0.0, %v1020
  %1022 = vmatmul.f32.gmra.mxu0 %v527
  %v1023 = vpop.f32.mrf.mxu0
  %v1024 = vadd.f32 0.0, %v1023
  %1025 = vmatmul.f32.gmra.mxu0 %v530
  %v1026 = vpop.f32.mrf.mxu0
  %v1027 = vadd.f32 0.0, %v1026
  %1028 = vmatmul.f32.gmra.mxu0 %v533
  %v1029 = vpop.f32.mrf.mxu0
  %v1030 = vadd.f32 0.0, %v1029
  %1031 = vmatmul.f32.gmra.mxu0 %v536
  %v1032 = vpop.f32.mrf.mxu0
  %v1033 = vadd.f32 0.0, %v1032
  %1034 = vmatmul.f32.gmra.mxu0 %v539
  %v1035 = vpop.f32.mrf.mxu0
  %v1036 = vadd.f32 0.0, %v1035
  %1037 = vmatmul.f32.gmra.mxu0 %v542
  %v1038 = vpop.f32.mrf.mxu0
  %v1039 = vadd.f32 0.0, %v1038
  %1040 = vmatmul.f32.gmra.mxu0 %v545
  %v1041 = vpop.f32.mrf.mxu0
  %v1042 = vadd.f32 0.0, %v1041
  %1043 = vmatmul.f32.gmra.mxu0 %v548
  %v1044 = vpop.f32.mrf.mxu0
  %v1045 = vadd.f32 0.0, %v1044
  %1046 = vmatmul.f32.gmra.mxu0 %v551
  %v1047 = vpop.f32.mrf.mxu0
  %v1048 = vadd.f32 0.0, %v1047
  %1049 = vmatmul.f32.gmra.mxu0 %v554
  %v1050 = vpop.f32.mrf.mxu0
  %v1051 = vadd.f32 0.0, %v1050
  %1052 = vmatmul.f32.gmra.mxu0 %v557
  %v1053 = vpop.f32.mrf.mxu0
  %v1054 = vadd.f32 0.0, %v1053
  %1055 = vmatmul.f32.gmra.mxu0 %v560
  %v1056 = vpop.f32.mrf.mxu0
  %v1057 = vadd.f32 0.0, %v1056
  %1058 = vmatmul.f32.gmra.mxu0 %v563
  %v1059 = vpop.f32.mrf.mxu0
  %v1060 = vadd.f32 0.0, %v1059
  %1061 = vmatmul.f32.gmra.mxu0 %v566
  %v1062 = vpop.f32.mrf.mxu0
  %v1063 = vadd.f32 0.0, %v1062
  %1064 = vmatmul.f32.gmra.mxu0 %v569
  %v1065 = vpop.f32.mrf.mxu0
  %v1066 = vadd.f32 0.0, %v1065
  %1067 = vmatmul.f32.gmra.mxu0 %v572
  %v1068 = vpop.f32.mrf.mxu0
  %v1069 = vadd.f32 0.0, %v1068
  %1070 = vmatmul.f32.gmra.mxu0 %v575
  %v1071 = vpop.f32.mrf.mxu0
  %v1072 = vadd.f32 0.0, %v1071
  %1073 = vmatmul.f32.gmra.mxu0 %v578
  %v1074 = vpop.f32.mrf.mxu0
  %v1075 = vadd.f32 0.0, %v1074
  %1076 = vmatmul.f32.gmra.mxu0 %v581
  %v1077 = vpop.f32.mrf.mxu0
  %v1078 = vadd.f32 0.0, %v1077
  %1079 = vmatmul.f32.gmra.mxu0 %v584
  %v1080 = vpop.f32.mrf.mxu0
  %v1081 = vadd.f32 0.0, %v1080
  %1082 = vmatmul.f32.gmra.mxu0 %v587
  %v1083 = vpop.f32.mrf.mxu0
  %v1084 = vadd.f32 0.0, %v1083
  %1085 = vmatmul.f32.gmra.mxu0 %v590
  %v1086 = vpop.f32.mrf.mxu0
  %v1087 = vadd.f32 0.0, %v1086
  %1088 = vmatmul.f32.gmra.mxu0 %v593
  %v1089 = vpop.f32.mrf.mxu0
  %v1090 = vadd.f32 0.0, %v1089
  %1091 = vmatmul.f32.gmra.mxu0 %v596
  %v1092 = vpop.f32.mrf.mxu0
  %v1093 = vadd.f32 0.0, %v1092
  %1094 = vmatmul.f32.gmra.mxu0 %v599
  %v1095 = vpop.f32.mrf.mxu0
  %v1096 = vadd.f32 0.0, %v1095
  %1097 = vmatmul.f32.gmra.mxu0 %v602
  %v1098 = vpop.f32.mrf.mxu0
  %v1099 = vadd.f32 0.0, %v1098
  %1100 = vmatmul.f32.gmra.mxu0 %v605
  %v1101 = vpop.f32.mrf.mxu0
  %v1102 = vadd.f32 0.0, %v1101
  %1103 = vmatmul.f32.gmra.mxu0 %v608
  %v1104 = vpop.f32.mrf.mxu0
  %v1105 = vadd.f32 0.0, %v1104
  %1106 = vmatmul.f32.gmra.mxu0 %v611
  %v1107 = vpop.f32.mrf.mxu0
  %v1108 = vadd.f32 0.0, %v1107
  %1109 = vmatmul.f32.gmra.mxu0 %v614
  %v1110 = vpop.f32.mrf.mxu0
  %v1111 = vadd.f32 0.0, %v1110
  %1112 = vmatmul.f32.gmra.mxu0 %v617
  %v1113 = vpop.f32.mrf.mxu0
  %v1114 = vadd.f32 0.0, %v1113
  %1115 = vmatmul.f32.gmra.mxu0 %v620
  %v1116 = vpop.f32.mrf.mxu0
  %v1117 = vadd.f32 0.0, %v1116
  %1118 = vmatmul.f32.gmra.mxu0 %v623
  %v1119 = vpop.f32.mrf.mxu0
  %v1120 = vadd.f32 0.0, %v1119
  %1121 = vmatmul.f32.gmra.mxu0 %v626
  %v1122 = vpop.f32.mrf.mxu0
  %v1123 = vadd.f32 0.0, %v1122
  %1124 = vmatmul.f32.gmra.mxu0 %v629
  %v1125 = vpop.f32.mrf.mxu0
  %v1126 = vadd.f32 0.0, %v1125
  %1127 = vmatmul.f32.gmra.mxu0 %v632
  %v1128 = vpop.f32.mrf.mxu0
  %v1129 = vadd.f32 0.0, %v1128
  %1130 = vmatmul.f32.gmra.mxu0 %v635
  %v1131 = vpop.f32.mrf.mxu0
  %v1132 = vadd.f32 0.0, %v1131
  %1133 = vmatmul.f32.gmra.mxu0 %v638
  %v1134 = vpop.f32.mrf.mxu0
  %v1135 = vadd.f32 0.0, %v1134
  %1136 = vmatmul.f32.gmra.mxu0 %v641
  %v1137 = vpop.f32.mrf.mxu0
  %v1138 = vadd.f32 0.0, %v1137
  %1139 = vmatmul.f32.gmra.mxu0 %v644
  %v1140 = vpop.f32.mrf.mxu0
  %v1141 = vadd.f32 0.0, %v1140
  %1142 = vmatmul.f32.gmra.mxu0 %v647
  %v1143 = vpop.f32.mrf.mxu0
  %v1144 = vadd.f32 0.0, %v1143
  %1145 = vmatmul.f32.gmra.mxu0 %v650
  %v1146 = vpop.f32.mrf.mxu0
  %v1147 = vadd.f32 0.0, %v1146
  %1148 = vmatmul.f32.gmra.mxu0 %v653
  %v1149 = vpop.f32.mrf.mxu0
  %v1150 = vadd.f32 0.0, %v1149
  %1151 = vmatmul.f32.gmra.mxu0 %v656
  %v1152 = vpop.f32.mrf.mxu0
  %v1153 = vadd.f32 0.0, %v1152
  %1154 = vmatmul.f32.gmra.mxu0 %v659
  %v1155 = vpop.f32.mrf.mxu0
  %v1156 = vadd.f32 0.0, %v1155
  %1157 = vmatmul.f32.gmra.mxu0 %v662
  %v1158 = vpop.f32.mrf.mxu0
  %v1159 = vadd.f32 0.0, %v1158
  %1160 = vmatmul.f32.gmra.mxu0 %v665
  %v1161 = vpop.f32.mrf.mxu0
  %v1162 = vadd.f32 0.0, %v1161
  %1163 = vmatmul.f32.gmra.mxu0 %v668
  %v1164 = vpop.f32.mrf.mxu0
  %v1165 = vadd.f32 0.0, %v1164
  %1166 = vmatmul.f32.gmra.mxu0 %v671
  %v1167 = vpop.f32.mrf.mxu0
  %v1168 = vadd.f32 0.0, %v1167
  %1169 = vmatmul.f32.gmra.mxu0 %v674
  %v1170 = vpop.f32.mrf.mxu0
  %v1171 = vadd.f32 0.0, %v1170
  %1172 = vmatmul.f32.gmra.mxu0 %v677
  %v1173 = vpop.f32.mrf.mxu0
  %v1174 = vadd.f32 0.0, %v1173
  %1175 = vmatmul.f32.gmra.mxu0 %v680
  %v1176 = vpop.f32.mrf.mxu0
  %v1177 = vadd.f32 0.0, %v1176
  %1178 = vdwg.mxu0
  %1179 = vmatpush.msra.mxu0 0.0
  %1180 = vmatpush.msra.mxu0 0.0
  %1181 = vmatpush.msra.mxu0 0.0
  %1182 = vmatpush.msra.mxu0 0.0
  %1183 = vmatpush.msra.mxu0 0.0
  %1184 = vmatpush.msra.mxu0 0.0
  %1185 = vmatpush.msra.mxu0 0.0
  %1186 = vmatpush.msra.mxu0 0.0
  %1187 = vmatpush.msra.mxu0 0.0
  %1188 = vmatpush.msra.mxu0 0.0
  %1189 = vmatpush.msra.mxu0 0.0
  %1190 = vmatpush.msra.mxu0 0.0
  %1191 = vmatpush.msra.mxu0 0.0
  %1192 = vmatpush.msra.mxu0 %v200
  %1193 = vmatpush.msra.mxu0 %v198
  %1194 = vmatpush.msra.mxu0 %v196
  %1195 = vmatmul.f32.gmra.mxu0 %v203
  %v1196 = vpop.f32.mrf.mxu0
  %v1197 = vadd.f32 0.0, %v1196
  %1198 = vmatmul.f32.gmra.mxu0 %v206
  %v1199 = vpop.f32.mrf.mxu0
  %v1200 = vadd.f32 0.0, %v1199
  %1201 = vmatmul.f32.gmra.mxu0 %v209
  %v1202 = vpop.f32.mrf.mxu0
  %v1203 = vadd.f32 0.0, %v1202
  %1204 = vmatmul.f32.gmra.mxu0 %v212
  %v1205 = vpop.f32.mrf.mxu0
  %v1206 = vadd.f32 0.0, %v1205
  %1207 = vmatmul.f32.gmra.mxu0 %v215
  %v1208 = vpop.f32.mrf.mxu0
  %v1209 = vadd.f32 0.0, %v1208
  %1210 = vmatmul.f32.gmra.mxu0 %v218
  %v1211 = vpop.f32.mrf.mxu0
  %v1212 = vadd.f32 0.0, %v1211
  %1213 = vmatmul.f32.gmra.mxu0 %v221
  %v1214 = vpop.f32.mrf.mxu0
  %v1215 = vadd.f32 0.0, %v1214
  %1216 = vmatmul.f32.gmra.mxu0 %v224
  %v1217 = vpop.f32.mrf.mxu0
  %v1218 = vadd.f32 0.0, %v1217
  %1219 = vmatmul.f32.gmra.mxu0 %v227
  %v1220 = vpop.f32.mrf.mxu0
  %v1221 = vadd.f32 0.0, %v1220
  %1222 = vmatmul.f32.gmra.mxu0 %v230
  %v1223 = vpop.f32.mrf.mxu0
  %v1224 = vadd.f32 0.0, %v1223
  %1225 = vmatmul.f32.gmra.mxu0 %v233
  %v1226 = vpop.f32.mrf.mxu0
  %v1227 = vadd.f32 0.0, %v1226
  %1228 = vmatmul.f32.gmra.mxu0 %v236
  %v1229 = vpop.f32.mrf.mxu0
  %v1230 = vadd.f32 0.0, %v1229
  %1231 = vmatmul.f32.gmra.mxu0 %v239
  %v1232 = vpop.f32.mrf.mxu0
  %v1233 = vadd.f32 0.0, %v1232
  %1234 = vmatmul.f32.gmra.mxu0 %v242
  %v1235 = vpop.f32.mrf.mxu0
  %v1236 = vadd.f32 0.0, %v1235
  %1237 = vmatmul.f32.gmra.mxu0 %v245
  %v1238 = vpop.f32.mrf.mxu0
  %v1239 = vadd.f32 0.0, %v1238
  %1240 = vmatmul.f32.gmra.mxu0 %v248
  %v1241 = vpop.f32.mrf.mxu0
  %v1242 = vadd.f32 0.0, %v1241
  %1243 = vmatmul.f32.gmra.mxu0 %v251
  %v1244 = vpop.f32.mrf.mxu0
  %v1245 = vadd.f32 0.0, %v1244
  %1246 = vmatmul.f32.gmra.mxu0 %v254
  %v1247 = vpop.f32.mrf.mxu0
  %v1248 = vadd.f32 0.0, %v1247
  %1249 = vmatmul.f32.gmra.mxu0 %v257
  %v1250 = vpop.f32.mrf.mxu0
  %v1251 = vadd.f32 0.0, %v1250
  %1252 = vmatmul.f32.gmra.mxu0 %v260
  %v1253 = vpop.f32.mrf.mxu0
  %v1254 = vadd.f32 0.0, %v1253
  %1255 = vmatmul.f32.gmra.mxu0 %v263
  %v1256 = vpop.f32.mrf.mxu0
  %v1257 = vadd.f32 0.0, %v1256
  %1258 = vmatmul.f32.gmra.mxu0 %v266
  %v1259 = vpop.f32.mrf.mxu0
  %v1260 = vadd.f32 0.0, %v1259
  %1261 = vmatmul.f32.gmra.mxu0 %v269
  %v1262 = vpop.f32.mrf.mxu0
  %v1263 = vadd.f32 0.0, %v1262
  %1264 = vmatmul.f32.gmra.mxu0 %v272
  %v1265 = vpop.f32.mrf.mxu0
  %v1266 = vadd.f32 0.0, %v1265
  %1267 = vmatmul.f32.gmra.mxu0 %v275
  %v1268 = vpop.f32.mrf.mxu0
  %v1269 = vadd.f32 0.0, %v1268
  %1270 = vmatmul.f32.gmra.mxu0 %v278
  %v1271 = vpop.f32.mrf.mxu0
  %v1272 = vadd.f32 0.0, %v1271
  %1273 = vmatmul.f32.gmra.mxu0 %v281
  %v1274 = vpop.f32.mrf.mxu0
  %v1275 = vadd.f32 0.0, %v1274
  %1276 = vmatmul.f32.gmra.mxu0 %v284
  %v1277 = vpop.f32.mrf.mxu0
  %v1278 = vadd.f32 0.0, %v1277
  %1279 = vmatmul.f32.gmra.mxu0 %v287
  %v1280 = vpop.f32.mrf.mxu0
  %v1281 = vadd.f32 0.0, %v1280
  %1282 = vmatmul.f32.gmra.mxu0 %v290
  %v1283 = vpop.f32.mrf.mxu0
  %v1284 = vadd.f32 0.0, %v1283
  %1285 = vmatmul.f32.gmra.mxu0 %v293
  %v1286 = vpop.f32.mrf.mxu0
  %v1287 = vadd.f32 0.0, %v1286
  %1288 = vmatmul.f32.gmra.mxu0 %v296
  %v1289 = vpop.f32.mrf.mxu0
  %v1290 = vadd.f32 0.0, %v1289
  %1291 = vmatmul.f32.gmra.mxu0 %v299
  %v1292 = vpop.f32.mrf.mxu0
  %v1293 = vadd.f32 0.0, %v1292
  %1294 = vmatmul.f32.gmra.mxu0 %v302
  %v1295 = vpop.f32.mrf.mxu0
  %v1296 = vadd.f32 0.0, %v1295
  %1297 = vmatmul.f32.gmra.mxu0 %v305
  %v1298 = vpop.f32.mrf.mxu0
  %v1299 = vadd.f32 0.0, %v1298
  %1300 = vmatmul.f32.gmra.mxu0 %v308
  %v1301 = vpop.f32.mrf.mxu0
  %v1302 = vadd.f32 0.0, %v1301
  %1303 = vmatmul.f32.gmra.mxu0 %v311
  %v1304 = vpop.f32.mrf.mxu0
  %v1305 = vadd.f32 0.0, %v1304
  %1306 = vmatmul.f32.gmra.mxu0 %v314
  %v1307 = vpop.f32.mrf.mxu0
  %v1308 = vadd.f32 0.0, %v1307
  %1309 = vmatmul.f32.gmra.mxu0 %v317
  %v1310 = vpop.f32.mrf.mxu0
  %v1311 = vadd.f32 0.0, %v1310
  %1312 = vmatmul.f32.gmra.mxu0 %v320
  %v1313 = vpop.f32.mrf.mxu0
  %v1314 = vadd.f32 0.0, %v1313
  %1315 = vmatmul.f32.gmra.mxu0 %v323
  %v1316 = vpop.f32.mrf.mxu0
  %v1317 = vadd.f32 0.0, %v1316
  %1318 = vmatmul.f32.gmra.mxu0 %v326
  %v1319 = vpop.f32.mrf.mxu0
  %v1320 = vadd.f32 0.0, %v1319
  %1321 = vmatmul.f32.gmra.mxu0 %v329
  %v1322 = vpop.f32.mrf.mxu0
  %v1323 = vadd.f32 0.0, %v1322
  %1324 = vmatmul.f32.gmra.mxu0 %v332
  %v1325 = vpop.f32.mrf.mxu0
  %v1326 = vadd.f32 0.0, %v1325
  %1327 = vmatmul.f32.gmra.mxu0 %v335
  %v1328 = vpop.f32.mrf.mxu0
  %v1329 = vadd.f32 0.0, %v1328
  %1330 = vmatmul.f32.gmra.mxu0 %v338
  %v1331 = vpop.f32.mrf.mxu0
  %v1332 = vadd.f32 0.0, %v1331
  %1333 = vmatmul.f32.gmra.mxu0 %v341
  %v1334 = vpop.f32.mrf.mxu0
  %v1335 = vadd.f32 0.0, %v1334
  %1336 = vmatmul.f32.gmra.mxu0 %v344
  %v1337 = vpop.f32.mrf.mxu0
  %v1338 = vadd.f32 0.0, %v1337
  %1339 = vmatmul.f32.gmra.mxu0 %v347
  %v1340 = vpop.f32.mrf.mxu0
  %v1341 = vadd.f32 0.0, %v1340
  %1342 = vmatmul.f32.gmra.mxu0 %v350
  %v1343 = vpop.f32.mrf.mxu0
  %v1344 = vadd.f32 0.0, %v1343
  %1345 = vmatmul.f32.gmra.mxu0 %v353
  %v1346 = vpop.f32.mrf.mxu0
  %v1347 = vadd.f32 0.0, %v1346
  %1348 = vmatmul.f32.gmra.mxu0 %v356
  %v1349 = vpop.f32.mrf.mxu0
  %v1350 = vadd.f32 0.0, %v1349
  %1351 = vmatmul.f32.gmra.mxu0 %v359
  %v1352 = vpop.f32.mrf.mxu0
  %v1353 = vadd.f32 0.0, %v1352
  %1354 = vmatmul.f32.gmra.mxu0 %v362
  %v1355 = vpop.f32.mrf.mxu0
  %v1356 = vadd.f32 0.0, %v1355
  %1357 = vmatmul.f32.gmra.mxu0 %v365
  %v1358 = vpop.f32.mrf.mxu0
  %v1359 = vadd.f32 0.0, %v1358
  %1360 = vmatmul.f32.gmra.mxu0 %v368
  %v1361 = vpop.f32.mrf.mxu0
  %v1362 = vadd.f32 0.0, %v1361
  %1363 = vmatmul.f32.gmra.mxu0 %v371
  %v1364 = vpop.f32.mrf.mxu0
  %v1365 = vadd.f32 0.0, %v1364
  %1366 = vmatmul.f32.gmra.mxu0 %v374
  %v1367 = vpop.f32.mrf.mxu0
  %v1368 = vadd.f32 0.0, %v1367
  %1369 = vmatmul.f32.gmra.mxu0 %v377
  %v1370 = vpop.f32.mrf.mxu0
  %v1371 = vadd.f32 0.0, %v1370
  %1372 = vmatmul.f32.gmra.mxu0 %v380
  %v1373 = vpop.f32.mrf.mxu0
  %v1374 = vadd.f32 0.0, %v1373
  %1375 = vmatmul.f32.gmra.mxu0 %v383
  %v1376 = vpop.f32.mrf.mxu0
  %v1377 = vadd.f32 0.0, %v1376
  %1378 = vmatmul.f32.gmra.mxu0 %v386
  %v1379 = vpop.f32.mrf.mxu0
  %v1380 = vadd.f32 0.0, %v1379
  %1381 = vmatmul.f32.gmra.mxu0 %v389
  %v1382 = vpop.f32.mrf.mxu0
  %v1383 = vadd.f32 0.0, %v1382
  %1384 = vmatmul.f32.gmra.mxu0 %v392
  %v1385 = vpop.f32.mrf.mxu0
  %v1386 = vadd.f32 0.0, %v1385
  %1387 = vmatmul.f32.gmra.mxu0 %v395
  %v1388 = vpop.f32.mrf.mxu0
  %v1389 = vadd.f32 0.0, %v1388
  %1390 = vmatmul.f32.gmra.mxu0 %v398
  %v1391 = vpop.f32.mrf.mxu0
  %v1392 = vadd.f32 0.0, %v1391
  %1393 = vmatmul.f32.gmra.mxu0 %v401
  %v1394 = vpop.f32.mrf.mxu0
  %v1395 = vadd.f32 0.0, %v1394
  %1396 = vmatmul.f32.gmra.mxu0 %v404
  %v1397 = vpop.f32.mrf.mxu0
  %v1398 = vadd.f32 0.0, %v1397
  %1399 = vmatmul.f32.gmra.mxu0 %v407
  %v1400 = vpop.f32.mrf.mxu0
  %v1401 = vadd.f32 0.0, %v1400
  %1402 = vmatmul.f32.gmra.mxu0 %v410
  %v1403 = vpop.f32.mrf.mxu0
  %v1404 = vadd.f32 0.0, %v1403
  %1405 = vmatmul.f32.gmra.mxu0 %v413
  %v1406 = vpop.f32.mrf.mxu0
  %v1407 = vadd.f32 0.0, %v1406
  %1408 = vmatmul.f32.gmra.mxu0 %v416
  %v1409 = vpop.f32.mrf.mxu0
  %v1410 = vadd.f32 0.0, %v1409
  %1411 = vmatmul.f32.gmra.mxu0 %v419
  %v1412 = vpop.f32.mrf.mxu0
  %v1413 = vadd.f32 0.0, %v1412
  %1414 = vmatmul.f32.gmra.mxu0 %v422
  %v1415 = vpop.f32.mrf.mxu0
  %v1416 = vadd.f32 0.0, %v1415
  %1417 = vmatmul.f32.gmra.mxu0 %v425
  %v1418 = vpop.f32.mrf.mxu0
  %v1419 = vadd.f32 0.0, %v1418
  %1420 = vmatmul.f32.gmra.mxu0 %v428
  %v1421 = vpop.f32.mrf.mxu0
  %v1422 = vadd.f32 0.0, %v1421
  %1423 = vmatmul.f32.gmra.mxu0 %v431
  %v1424 = vpop.f32.mrf.mxu0
  %v1425 = vadd.f32 0.0, %v1424
  %1426 = vmatmul.f32.gmra.mxu0 %v434
  %v1427 = vpop.f32.mrf.mxu0
  %v1428 = vadd.f32 0.0, %v1427
  %1429 = vmatmul.f32.gmra.mxu0 %v437
  %v1430 = vpop.f32.mrf.mxu0
  %v1431 = vadd.f32 0.0, %v1430
  %1432 = vmatmul.f32.gmra.mxu0 %v440
  %v1433 = vpop.f32.mrf.mxu0
  %v1434 = vadd.f32 0.0, %v1433
  %1435 = vmatmul.f32.gmra.mxu0 %v443
  %v1436 = vpop.f32.mrf.mxu0
  %v1437 = vadd.f32 0.0, %v1436
  %1438 = vmatmul.f32.gmra.mxu0 %v446
  %v1439 = vpop.f32.mrf.mxu0
  %v1440 = vadd.f32 0.0, %v1439
  %1441 = vmatmul.f32.gmra.mxu0 %v449
  %v1442 = vpop.f32.mrf.mxu0
  %v1443 = vadd.f32 0.0, %v1442
  %1444 = vmatmul.f32.gmra.mxu0 %v452
  %v1445 = vpop.f32.mrf.mxu0
  %v1446 = vadd.f32 0.0, %v1445
  %1447 = vmatmul.f32.gmra.mxu0 %v455
  %v1448 = vpop.f32.mrf.mxu0
  %v1449 = vadd.f32 0.0, %v1448
  %1450 = vmatmul.f32.gmra.mxu0 %v458
  %v1451 = vpop.f32.mrf.mxu0
  %v1452 = vadd.f32 0.0, %v1451
  %1453 = vmatmul.f32.gmra.mxu0 %v461
  %v1454 = vpop.f32.mrf.mxu0
  %v1455 = vadd.f32 0.0, %v1454
  %1456 = vmatmul.f32.gmra.mxu0 %v464
  %v1457 = vpop.f32.mrf.mxu0
  %v1458 = vadd.f32 0.0, %v1457
  %1459 = vmatmul.f32.gmra.mxu0 %v467
  %v1460 = vpop.f32.mrf.mxu0
  %v1461 = vadd.f32 0.0, %v1460
  %1462 = vmatmul.f32.gmra.mxu0 %v470
  %v1463 = vpop.f32.mrf.mxu0
  %v1464 = vadd.f32 0.0, %v1463
  %1465 = vmatmul.f32.gmra.mxu0 %v473
  %v1466 = vpop.f32.mrf.mxu0
  %v1467 = vadd.f32 0.0, %v1466
  %1468 = vmatmul.f32.gmra.mxu0 %v476
  %v1469 = vpop.f32.mrf.mxu0
  %v1470 = vadd.f32 0.0, %v1469
  %1471 = vmatmul.f32.gmra.mxu0 %v479
  %v1472 = vpop.f32.mrf.mxu0
  %v1473 = vadd.f32 0.0, %v1472
  %1474 = vmatmul.f32.gmra.mxu0 %v482
  %v1475 = vpop.f32.mrf.mxu0
  %v1476 = vadd.f32 0.0, %v1475
  %1477 = vmatmul.f32.gmra.mxu0 %v485
  %v1478 = vpop.f32.mrf.mxu0
  %v1479 = vadd.f32 0.0, %v1478
  %1480 = vmatmul.f32.gmra.mxu0 %v488
  %v1481 = vpop.f32.mrf.mxu0
  %v1482 = vadd.f32 0.0, %v1481
  %1483 = vmatmul.f32.gmra.mxu0 %v491
  %v1484 = vpop.f32.mrf.mxu0
  %v1485 = vadd.f32 0.0, %v1484
  %1486 = vmatmul.f32.gmra.mxu0 %v494
  %v1487 = vpop.f32.mrf.mxu0
  %v1488 = vadd.f32 0.0, %v1487
  %1489 = vmatmul.f32.gmra.mxu0 %v497
  %v1490 = vpop.f32.mrf.mxu0
  %v1491 = vadd.f32 0.0, %v1490
  %1492 = vmatmul.f32.gmra.mxu0 %v500
  %v1493 = vpop.f32.mrf.mxu0
  %v1494 = vadd.f32 0.0, %v1493
  %1495 = vmatmul.f32.gmra.mxu0 %v503
  %v1496 = vpop.f32.mrf.mxu0
  %v1497 = vadd.f32 0.0, %v1496
  %1498 = vmatmul.f32.gmra.mxu0 %v506
  %v1499 = vpop.f32.mrf.mxu0
  %v1500 = vadd.f32 0.0, %v1499
  %1501 = vmatmul.f32.gmra.mxu0 %v509
  %v1502 = vpop.f32.mrf.mxu0
  %v1503 = vadd.f32 0.0, %v1502
  %1504 = vmatmul.f32.gmra.mxu0 %v512
  %v1505 = vpop.f32.mrf.mxu0
  %v1506 = vadd.f32 0.0, %v1505
  %1507 = vmatmul.f32.gmra.mxu0 %v515
  %v1508 = vpop.f32.mrf.mxu0
  %v1509 = vadd.f32 0.0, %v1508
  %1510 = vmatmul.f32.gmra.mxu0 %v518
  %v1511 = vpop.f32.mrf.mxu0
  %v1512 = vadd.f32 0.0, %v1511
  %1513 = vmatmul.f32.gmra.mxu0 %v521
  %v1514 = vpop.f32.mrf.mxu0
  %v1515 = vadd.f32 0.0, %v1514
  %1516 = vmatmul.f32.gmra.mxu0 %v524
  %v1517 = vpop.f32.mrf.mxu0
  %v1518 = vadd.f32 0.0, %v1517
  %1519 = vmatmul.f32.gmra.mxu0 %v527
  %v1520 = vpop.f32.mrf.mxu0
  %v1521 = vadd.f32 0.0, %v1520
  %1522 = vmatmul.f32.gmra.mxu0 %v530
  %v1523 = vpop.f32.mrf.mxu0
  %v1524 = vadd.f32 0.0, %v1523
  %1525 = vmatmul.f32.gmra.mxu0 %v533
  %v1526 = vpop.f32.mrf.mxu0
  %v1527 = vadd.f32 0.0, %v1526
  %1528 = vmatmul.f32.gmra.mxu0 %v536
  %v1529 = vpop.f32.mrf.mxu0
  %v1530 = vadd.f32 0.0, %v1529
  %1531 = vmatmul.f32.gmra.mxu0 %v539
  %v1532 = vpop.f32.mrf.mxu0
  %v1533 = vadd.f32 0.0, %v1532
  %1534 = vmatmul.f32.gmra.mxu0 %v542
  %v1535 = vpop.f32.mrf.mxu0
  %v1536 = vadd.f32 0.0, %v1535
  %1537 = vmatmul.f32.gmra.mxu0 %v545
  %v1538 = vpop.f32.mrf.mxu0
  %v1539 = vadd.f32 0.0, %v1538
  %1540 = vmatmul.f32.gmra.mxu0 %v548
  %v1541 = vpop.f32.mrf.mxu0
  %v1542 = vadd.f32 0.0, %v1541
  %1543 = vmatmul.f32.gmra.mxu0 %v551
  %v1544 = vpop.f32.mrf.mxu0
  %v1545 = vadd.f32 0.0, %v1544
  %1546 = vmatmul.f32.gmra.mxu0 %v554
  %v1547 = vpop.f32.mrf.mxu0
  %v1548 = vadd.f32 0.0, %v1547
  %1549 = vmatmul.f32.gmra.mxu0 %v557
  %v1550 = vpop.f32.mrf.mxu0
  %v1551 = vadd.f32 0.0, %v1550
  %1552 = vmatmul.f32.gmra.mxu0 %v560
  %v1553 = vpop.f32.mrf.mxu0
  %v1554 = vadd.f32 0.0, %v1553
  %1555 = vmatmul.f32.gmra.mxu0 %v563
  %v1556 = vpop.f32.mrf.mxu0
  %v1557 = vadd.f32 0.0, %v1556
  %1558 = vmatmul.f32.gmra.mxu0 %v566
  %v1559 = vpop.f32.mrf.mxu0
  %v1560 = vadd.f32 0.0, %v1559
  %1561 = vmatmul.f32.gmra.mxu0 %v569
  %v1562 = vpop.f32.mrf.mxu0
  %v1563 = vadd.f32 0.0, %v1562
  %1564 = vmatmul.f32.gmra.mxu0 %v572
  %v1565 = vpop.f32.mrf.mxu0
  %v1566 = vadd.f32 0.0, %v1565
  %1567 = vmatmul.f32.gmra.mxu0 %v575
  %v1568 = vpop.f32.mrf.mxu0
  %v1569 = vadd.f32 0.0, %v1568
  %1570 = vmatmul.f32.gmra.mxu0 %v578
  %v1571 = vpop.f32.mrf.mxu0
  %v1572 = vadd.f32 0.0, %v1571
  %1573 = vmatmul.f32.gmra.mxu0 %v581
  %v1574 = vpop.f32.mrf.mxu0
  %v1575 = vadd.f32 0.0, %v1574
  %1576 = vmatmul.f32.gmra.mxu0 %v584
  %v1577 = vpop.f32.mrf.mxu0
  %v1578 = vadd.f32 0.0, %v1577
  %1579 = vmatmul.f32.gmra.mxu0 %v587
  %v1580 = vpop.f32.mrf.mxu0
  %v1581 = vadd.f32 0.0, %v1580
  %1582 = vmatmul.f32.gmra.mxu0 %v590
  %v1583 = vpop.f32.mrf.mxu0
  %v1584 = vadd.f32 0.0, %v1583
  %1585 = vmatmul.f32.gmra.mxu0 %v593
  %v1586 = vpop.f32.mrf.mxu0
  %v1587 = vadd.f32 0.0, %v1586
  %1588 = vmatmul.f32.gmra.mxu0 %v596
  %v1589 = vpop.f32.mrf.mxu0
  %v1590 = vadd.f32 0.0, %v1589
  %1591 = vmatmul.f32.gmra.mxu0 %v599
  %v1592 = vpop.f32.mrf.mxu0
  %v1593 = vadd.f32 0.0, %v1592
  %1594 = vmatmul.f32.gmra.mxu0 %v602
  %v1595 = vpop.f32.mrf.mxu0
  %v1596 = vadd.f32 0.0, %v1595
  %1597 = vmatmul.f32.gmra.mxu0 %v605
  %v1598 = vpop.f32.mrf.mxu0
  %v1599 = vadd.f32 0.0, %v1598
  %1600 = vmatmul.f32.gmra.mxu0 %v608
  %v1601 = vpop.f32.mrf.mxu0
  %v1602 = vadd.f32 0.0, %v1601
  %1603 = vmatmul.f32.gmra.mxu0 %v611
  %v1604 = vpop.f32.mrf.mxu0
  %v1605 = vadd.f32 0.0, %v1604
  %1606 = vmatmul.f32.gmra.mxu0 %v614
  %v1607 = vpop.f32.mrf.mxu0
  %v1608 = vadd.f32 0.0, %v1607
  %1609 = vmatmul.f32.gmra.mxu0 %v617
  %v1610 = vpop.f32.mrf.mxu0
  %v1611 = vadd.f32 0.0, %v1610
  %1612 = vmatmul.f32.gmra.mxu0 %v620
  %v1613 = vpop.f32.mrf.mxu0
  %v1614 = vadd.f32 0.0, %v1613
  %1615 = vmatmul.f32.gmra.mxu0 %v623
  %v1616 = vpop.f32.mrf.mxu0
  %v1617 = vadd.f32 0.0, %v1616
  %1618 = vmatmul.f32.gmra.mxu0 %v626
  %v1619 = vpop.f32.mrf.mxu0
  %v1620 = vadd.f32 0.0, %v1619
  %1621 = vmatmul.f32.gmra.mxu0 %v629
  %v1622 = vpop.f32.mrf.mxu0
  %v1623 = vadd.f32 0.0, %v1622
  %1624 = vmatmul.f32.gmra.mxu0 %v632
  %v1625 = vpop.f32.mrf.mxu0
  %v1626 = vadd.f32 0.0, %v1625
  %1627 = vmatmul.f32.gmra.mxu0 %v635
  %v1628 = vpop.f32.mrf.mxu0
  %v1629 = vadd.f32 0.0, %v1628
  %1630 = vmatmul.f32.gmra.mxu0 %v638
  %v1631 = vpop.f32.mrf.mxu0
  %v1632 = vadd.f32 0.0, %v1631
  %1633 = vmatmul.f32.gmra.mxu0 %v641
  %v1634 = vpop.f32.mrf.mxu0
  %v1635 = vadd.f32 0.0, %v1634
  %1636 = vmatmul.f32.gmra.mxu0 %v644
  %v1637 = vpop.f32.mrf.mxu0
  %v1638 = vadd.f32 0.0, %v1637
  %1639 = vmatmul.f32.gmra.mxu0 %v647
  %v1640 = vpop.f32.mrf.mxu0
  %v1641 = vadd.f32 0.0, %v1640
  %1642 = vmatmul.f32.gmra.mxu0 %v650
  %v1643 = vpop.f32.mrf.mxu0
  %v1644 = vadd.f32 0.0, %v1643
  %1645 = vmatmul.f32.gmra.mxu0 %v653
  %v1646 = vpop.f32.mrf.mxu0
  %v1647 = vadd.f32 0.0, %v1646
  %1648 = vmatmul.f32.gmra.mxu0 %v656
  %v1649 = vpop.f32.mrf.mxu0
  %v1650 = vadd.f32 0.0, %v1649
  %1651 = vmatmul.f32.gmra.mxu0 %v659
  %v1652 = vpop.f32.mrf.mxu0
  %v1653 = vadd.f32 0.0, %v1652
  %1654 = vmatmul.f32.gmra.mxu0 %v662
  %v1655 = vpop.f32.mrf.mxu0
  %v1656 = vadd.f32 0.0, %v1655
  %1657 = vmatmul.f32.gmra.mxu0 %v665
  %v1658 = vpop.f32.mrf.mxu0
  %v1659 = vadd.f32 0.0, %v1658
  %1660 = vmatmul.f32.gmra.mxu0 %v668
  %v1661 = vpop.f32.mrf.mxu0
  %v1662 = vadd.f32 0.0, %v1661
  %1663 = vmatmul.f32.gmra.mxu0 %v671
  %v1664 = vpop.f32.mrf.mxu0
  %v1665 = vadd.f32 0.0, %v1664
  %1666 = vmatmul.f32.gmra.mxu0 %v674
  %v1667 = vpop.f32.mrf.mxu0
  %v1668 = vadd.f32 0.0, %v1667
  %1669 = vmatmul.f32.gmra.mxu0 %v677
  %v1670 = vpop.f32.mrf.mxu0
  %v1671 = vadd.f32 0.0, %v1670
  %1672 = vmatmul.f32.gmra.mxu0 %v680
  %v1673 = vpop.f32.mrf.mxu0
  %v1674 = vadd.f32 0.0, %v1673
  %1675 = vdwg.mxu0
  %v1676 = vmax.f32 %v700, 0.0
  %v1677 = vmax.f32 %v1197, 0.0
  %v1678 = vmax.f32 %v703, 0.0
  %v1679 = vmax.f32 %v1200, 0.0
  %v1680 = vmax.f32 %v706, 0.0
  %v1681 = vmax.f32 %v1203, 0.0
  %v1682 = vmax.f32 %v709, 0.0
  %v1683 = vmax.f32 %v1206, 0.0
  %v1684 = vmax.f32 %v712, 0.0
  %v1685 = vmax.f32 %v1209, 0.0
  %v1686 = vmax.f32 %v715, 0.0
  %v1687 = vmax.f32 %v1212, 0.0
  %v1688 = vmax.f32 %v718, 0.0
  %v1689 = vmax.f32 %v1215, 0.0
  %v1690 = vmax.f32 %v721, 0.0
  %v1691 = vmax.f32 %v1218, 0.0
  %v1692 = vmax.f32 %v724, 0.0
  %v1693 = vmax.f32 %v1221, 0.0
  %v1694 = vmax.f32 %v727, 0.0
  %v1695 = vmax.f32 %v1224, 0.0
  %v1696 = vmax.f32 %v730, 0.0
  %v1697 = vmax.f32 %v1227, 0.0
  %v1698 = vmax.f32 %v733, 0.0
  %v1699 = vmax.f32 %v1230, 0.0
  %v1700 = vmax.f32 %v736, 0.0
  %v1701 = vmax.f32 %v1233, 0.0
  %v1702 = vmax.f32 %v739, 0.0
  %v1703 = vmax.f32 %v1236, 0.0
  %v1704 = vmax.f32 %v742, 0.0
  %v1705 = vmax.f32 %v1239, 0.0
  %v1706 = vmax.f32 %v745, 0.0
  %v1707 = vmax.f32 %v1242, 0.0
  %v1708 = vmax.f32 %v748, 0.0
  %v1709 = vmax.f32 %v1245, 0.0
  %v1710 = vmax.f32 %v751, 0.0
  %v1711 = vmax.f32 %v1248, 0.0
  %v1712 = vmax.f32 %v754, 0.0
  %v1713 = vmax.f32 %v1251, 0.0
  %v1714 = vmax.f32 %v757, 0.0
  %v1715 = vmax.f32 %v1254, 0.0
  %v1716 = vmax.f32 %v760, 0.0
  %v1717 = vmax.f32 %v1257, 0.0
  %v1718 = vmax.f32 %v763, 0.0
  %v1719 = vmax.f32 %v1260, 0.0
  %v1720 = vmax.f32 %v766, 0.0
  %v1721 = vmax.f32 %v1263, 0.0
  %v1722 = vmax.f32 %v769, 0.0
  %v1723 = vmax.f32 %v1266, 0.0
  %v1724 = vmax.f32 %v772, 0.0
  %v1725 = vmax.f32 %v1269, 0.0
  %v1726 = vmax.f32 %v775, 0.0
  %v1727 = vmax.f32 %v1272, 0.0
  %v1728 = vmax.f32 %v778, 0.0
  %v1729 = vmax.f32 %v1275, 0.0
  %v1730 = vmax.f32 %v781, 0.0
  %v1731 = vmax.f32 %v1278, 0.0
  %v1732 = vmax.f32 %v784, 0.0
  %v1733 = vmax.f32 %v1281, 0.0
  %v1734 = vmax.f32 %v787, 0.0
  %v1735 = vmax.f32 %v1284, 0.0
  %v1736 = vmax.f32 %v790, 0.0
  %v1737 = vmax.f32 %v1287, 0.0
  %v1738 = vmax.f32 %v793, 0.0
  %v1739 = vmax.f32 %v1290, 0.0
  %v1740 = vmax.f32 %v796, 0.0
  %v1741 = vmax.f32 %v1293, 0.0
  %v1742 = vmax.f32 %v799, 0.0
  %v1743 = vmax.f32 %v1296, 0.0
  %v1744 = vmax.f32 %v802, 0.0
  %v1745 = vmax.f32 %v1299, 0.0
  %v1746 = vmax.f32 %v805, 0.0
  %v1747 = vmax.f32 %v1302, 0.0
  %v1748 = vmax.f32 %v808, 0.0
  %v1749 = vmax.f32 %v1305, 0.0
  %v1750 = vmax.f32 %v811, 0.0
  %v1751 = vmax.f32 %v1308, 0.0
  %v1752 = vmax.f32 %v814, 0.0
  %v1753 = vmax.f32 %v1311, 0.0
  %v1754 = vmax.f32 %v817, 0.0
  %v1755 = vmax.f32 %v1314, 0.0
  %v1756 = vmax.f32 %v820, 0.0
  %v1757 = vmax.f32 %v1317, 0.0
  %v1758 = vmax.f32 %v823, 0.0
  %v1759 = vmax.f32 %v1320, 0.0
  %v1760 = vmax.f32 %v826, 0.0
  %v1761 = vmax.f32 %v1323, 0.0
  %v1762 = vmax.f32 %v829, 0.0
  %v1763 = vmax.f32 %v1326, 0.0
  %v1764 = vmax.f32 %v832, 0.0
  %v1765 = vmax.f32 %v1329, 0.0
  %v1766 = vmax.f32 %v835, 0.0
  %v1767 = vmax.f32 %v1332, 0.0
  %v1768 = vmax.f32 %v838, 0.0
  %v1769 = vmax.f32 %v1335, 0.0
  %v1770 = vmax.f32 %v841, 0.0
  %v1771 = vmax.f32 %v1338, 0.0
  %v1772 = vmax.f32 %v844, 0.0
  %v1773 = vmax.f32 %v1341, 0.0
  %v1774 = vmax.f32 %v847, 0.0
  %v1775 = vmax.f32 %v1344, 0.0
  %v1776 = vmax.f32 %v850, 0.0
  %v1777 = vmax.f32 %v1347, 0.0
  %v1778 = vmax.f32 %v853, 0.0
  %v1779 = vmax.f32 %v1350, 0.0
  %v1780 = vmax.f32 %v856, 0.0
  %v1781 = vmax.f32 %v1353, 0.0
  %v1782 = vmax.f32 %v859, 0.0
  %v1783 = vmax.f32 %v1356, 0.0
  %v1784 = vmax.f32 %v862, 0.0
  %v1785 = vmax.f32 %v1359, 0.0
  %v1786 = vmax.f32 %v865, 0.0
  %v1787 = vmax.f32 %v1362, 0.0
  %v1788 = vmax.f32 %v868, 0.0
  %v1789 = vmax.f32 %v1365, 0.0
  %v1790 = vmax.f32 %v871, 0.0
  %v1791 = vmax.f32 %v1368, 0.0
  %v1792 = vmax.f32 %v874, 0.0
  %v1793 = vmax.f32 %v1371, 0.0
  %v1794 = vmax.f32 %v877, 0.0
  %v1795 = vmax.f32 %v1374, 0.0
  %v1796 = vmax.f32 %v880, 0.0
  %v1797 = vmax.f32 %v1377, 0.0
  %v1798 = vmax.f32 %v883, 0.0
  %v1799 = vmax.f32 %v1380, 0.0
  %v1800 = vmax.f32 %v886, 0.0
  %v1801 = vmax.f32 %v1383, 0.0
  %v1802 = vmax.f32 %v889, 0.0
  %v1803 = vmax.f32 %v1386, 0.0
  %v1804 = vmax.f32 %v892, 0.0
  %v1805 = vmax.f32 %v1389, 0.0
  %v1806 = vmax.f32 %v895, 0.0
  %v1807 = vmax.f32 %v1392, 0.0
  %v1808 = vmax.f32 %v898, 0.0
  %v1809 = vmax.f32 %v1395, 0.0
  %v1810 = vmax.f32 %v901, 0.0
  %v1811 = vmax.f32 %v1398, 0.0
  %v1812 = vmax.f32 %v904, 0.0
  %v1813 = vmax.f32 %v1401, 0.0
  %v1814 = vmax.f32 %v907, 0.0
  %v1815 = vmax.f32 %v1404, 0.0
  %v1816 = vmax.f32 %v910, 0.0
  %v1817 = vmax.f32 %v1407, 0.0
  %v1818 = vmax.f32 %v913, 0.0
  %v1819 = vmax.f32 %v1410, 0.0
  %v1820 = vmax.f32 %v916, 0.0
  %v1821 = vmax.f32 %v1413, 0.0
  %v1822 = vmax.f32 %v919, 0.0
  %v1823 = vmax.f32 %v1416, 0.0
  %v1824 = vmax.f32 %v922, 0.0
  %v1825 = vmax.f32 %v1419, 0.0
  %v1826 = vmax.f32 %v925, 0.0
  %v1827 = vmax.f32 %v1422, 0.0
  %v1828 = vmax.f32 %v928, 0.0
  %v1829 = vmax.f32 %v1425, 0.0
  %v1830 = vmax.f32 %v931, 0.0
  %v1831 = vmax.f32 %v1428, 0.0
  %v1832 = vmax.f32 %v934, 0.0
  %v1833 = vmax.f32 %v1431, 0.0
  %v1834 = vmax.f32 %v937, 0.0
  %v1835 = vmax.f32 %v1434, 0.0
  %v1836 = vmax.f32 %v940, 0.0
  %v1837 = vmax.f32 %v1437, 0.0
  %v1838 = vmax.f32 %v943, 0.0
  %v1839 = vmax.f32 %v1440, 0.0
  %v1840 = vmax.f32 %v946, 0.0
  %v1841 = vmax.f32 %v1443, 0.0
  %v1842 = vmax.f32 %v949, 0.0
  %v1843 = vmax.f32 %v1446, 0.0
  %v1844 = vmax.f32 %v952, 0.0
  %v1845 = vmax.f32 %v1449, 0.0
  %v1846 = vmax.f32 %v955, 0.0
  %v1847 = vmax.f32 %v1452, 0.0
  %v1848 = vmax.f32 %v958, 0.0
  %v1849 = vmax.f32 %v1455, 0.0
  %v1850 = vmax.f32 %v961, 0.0
  %v1851 = vmax.f32 %v1458, 0.0
  %v1852 = vmax.f32 %v964, 0.0
  %v1853 = vmax.f32 %v1461, 0.0
  %v1854 = vmax.f32 %v967, 0.0
  %v1855 = vmax.f32 %v1464, 0.0
  %v1856 = vmax.f32 %v970, 0.0
  %v1857 = vmax.f32 %v1467, 0.0
  %v1858 = vmax.f32 %v973, 0.0
  %v1859 = vmax.f32 %v1470, 0.0
  %v1860 = vmax.f32 %v976, 0.0
  %v1861 = vmax.f32 %v1473, 0.0
  %v1862 = vmax.f32 %v979, 0.0
  %v1863 = vmax.f32 %v1476, 0.0
  %v1864 = vmax.f32 %v982, 0.0
  %v1865 = vmax.f32 %v1479, 0.0
  %v1866 = vmax.f32 %v985, 0.0
  %v1867 = vmax.f32 %v1482, 0.0
  %v1868 = vmax.f32 %v988, 0.0
  %v1869 = vmax.f32 %v1485, 0.0
  %v1870 = vmax.f32 %v991, 0.0
  %v1871 = vmax.f32 %v1488, 0.0
  %v1872 = vmax.f32 %v994, 0.0
  %v1873 = vmax.f32 %v1491, 0.0
  %v1874 = vmax.f32 %v997, 0.0
  %v1875 = vmax.f32 %v1494, 0.0
  %v1876 = vmax.f32 %v1000, 0.0
  %v1877 = vmax.f32 %v1497, 0.0
  %v1878 = vmax.f32 %v1003, 0.0
  %v1879 = vmax.f32 %v1500, 0.0
  %v1880 = vmax.f32 %v1006, 0.0
  %v1881 = vmax.f32 %v1503, 0.0
  %v1882 = vmax.f32 %v1009, 0.0
  %v1883 = vmax.f32 %v1506, 0.0
  %v1884 = vmax.f32 %v1012, 0.0
  %v1885 = vmax.f32 %v1509, 0.0
  %v1886 = vmax.f32 %v1015, 0.0
  %v1887 = vmax.f32 %v1512, 0.0
  %v1888 = vmax.f32 %v1018, 0.0
  %v1889 = vmax.f32 %v1515, 0.0
  %v1890 = vmax.f32 %v1021, 0.0
  %v1891 = vmax.f32 %v1518, 0.0
  %v1892 = vmax.f32 %v1024, 0.0
  %v1893 = vmax.f32 %v1521, 0.0
  %v1894 = vmax.f32 %v1027, 0.0
  %v1895 = vmax.f32 %v1524, 0.0
  %v1896 = vmax.f32 %v1030, 0.0
  %v1897 = vmax.f32 %v1527, 0.0
  %v1898 = vmax.f32 %v1033, 0.0
  %v1899 = vmax.f32 %v1530, 0.0
  %v1900 = vmax.f32 %v1036, 0.0
  %v1901 = vmax.f32 %v1533, 0.0
  %v1902 = vmax.f32 %v1039, 0.0
  %v1903 = vmax.f32 %v1536, 0.0
  %v1904 = vmax.f32 %v1042, 0.0
  %v1905 = vmax.f32 %v1539, 0.0
  %v1906 = vmax.f32 %v1045, 0.0
  %v1907 = vmax.f32 %v1542, 0.0
  %v1908 = vmax.f32 %v1048, 0.0
  %v1909 = vmax.f32 %v1545, 0.0
  %v1910 = vmax.f32 %v1051, 0.0
  %v1911 = vmax.f32 %v1548, 0.0
  %v1912 = vmax.f32 %v1054, 0.0
  %v1913 = vmax.f32 %v1551, 0.0
  %v1914 = vmax.f32 %v1057, 0.0
  %v1915 = vmax.f32 %v1554, 0.0
  %v1916 = vmax.f32 %v1060, 0.0
  %v1917 = vmax.f32 %v1557, 0.0
  %v1918 = vmax.f32 %v1063, 0.0
  %v1919 = vmax.f32 %v1560, 0.0
  %v1920 = vmax.f32 %v1066, 0.0
  %v1921 = vmax.f32 %v1563, 0.0
  %v1922 = vmax.f32 %v1069, 0.0
  %v1923 = vmax.f32 %v1566, 0.0
  %v1924 = vmax.f32 %v1072, 0.0
  %v1925 = vmax.f32 %v1569, 0.0
  %v1926 = vmax.f32 %v1075, 0.0
  %v1927 = vmax.f32 %v1572, 0.0
  %v1928 = vmax.f32 %v1078, 0.0
  %v1929 = vmax.f32 %v1575, 0.0
  %v1930 = vmax.f32 %v1081, 0.0
  %v1931 = vmax.f32 %v1578, 0.0
  %v1932 = vmax.f32 %v1084, 0.0
  %v1933 = vmax.f32 %v1581, 0.0
  %v1934 = vmax.f32 %v1087, 0.0
  %v1935 = vmax.f32 %v1584, 0.0
  %v1936 = vmax.f32 %v1090, 0.0
  %v1937 = vmax.f32 %v1587, 0.0
  %v1938 = vmax.f32 %v1093, 0.0
  %v1939 = vmax.f32 %v1590, 0.0
  %v1940 = vmax.f32 %v1096, 0.0
  %v1941 = vmax.f32 %v1593, 0.0
  %v1942 = vmax.f32 %v1099, 0.0
  %v1943 = vmax.f32 %v1596, 0.0
  %v1944 = vmax.f32 %v1102, 0.0
  %v1945 = vmax.f32 %v1599, 0.0
  %v1946 = vmax.f32 %v1105, 0.0
  %v1947 = vmax.f32 %v1602, 0.0
  %v1948 = vmax.f32 %v1108, 0.0
  %v1949 = vmax.f32 %v1605, 0.0
  %v1950 = vmax.f32 %v1111, 0.0
  %v1951 = vmax.f32 %v1608, 0.0
  %v1952 = vmax.f32 %v1114, 0.0
  %v1953 = vmax.f32 %v1611, 0.0
  %v1954 = vmax.f32 %v1117, 0.0
  %v1955 = vmax.f32 %v1614, 0.0
  %v1956 = vmax.f32 %v1120, 0.0
  %v1957 = vmax.f32 %v1617, 0.0
  %v1958 = vmax.f32 %v1123, 0.0
  %v1959 = vmax.f32 %v1620, 0.0
  %v1960 = vmax.f32 %v1126, 0.0
  %v1961 = vmax.f32 %v1623, 0.0
  %v1962 = vmax.f32 %v1129, 0.0
  %v1963 = vmax.f32 %v1626, 0.0
  %v1964 = vmax.f32 %v1132, 0.0
  %v1965 = vmax.f32 %v1629, 0.0
  %v1966 = vmax.f32 %v1135, 0.0
  %v1967 = vmax.f32 %v1632, 0.0
  %v1968 = vmax.f32 %v1138, 0.0
  %v1969 = vmax.f32 %v1635, 0.0
  %v1970 = vmax.f32 %v1141, 0.0
  %v1971 = vmax.f32 %v1638, 0.0
  %v1972 = vmax.f32 %v1144, 0.0
  %v1973 = vmax.f32 %v1641, 0.0
  %v1974 = vmax.f32 %v1147, 0.0
  %v1975 = vmax.f32 %v1644, 0.0
  %v1976 = vmax.f32 %v1150, 0.0
  %v1977 = vmax.f32 %v1647, 0.0
  %v1978 = vmax.f32 %v1153, 0.0
  %v1979 = vmax.f32 %v1650, 0.0
  %v1980 = vmax.f32 %v1156, 0.0
  %v1981 = vmax.f32 %v1653, 0.0
  %v1982 = vmax.f32 %v1159, 0.0
  %v1983 = vmax.f32 %v1656, 0.0
  %v1984 = vmax.f32 %v1162, 0.0
  %v1985 = vmax.f32 %v1659, 0.0
  %v1986 = vmax.f32 %v1165, 0.0
  %v1987 = vmax.f32 %v1662, 0.0
  %v1988 = vmax.f32 %v1168, 0.0
  %v1989 = vmax.f32 %v1665, 0.0
  %v1990 = vmax.f32 %v1171, 0.0
  %v1991 = vmax.f32 %v1668, 0.0
  %v1992 = vmax.f32 %v1174, 0.0
  %v1993 = vmax.f32 %v1671, 0.0
  %v1994 = vmax.f32 %v1177, 0.0
  %v1995 = vmax.f32 %v1674, 0.0
  %v1996 = vld [vmem:[%s2] sm:$0xff]
  %v1997 = vld [vmem:[%s2 + $0x8] sm:$0xff]
  %v1998 = vld [vmem:[%s2 + $0x10] sm:$0xff]
  %v1999 = vld [vmem:[%s2 + $0x18] sm:$0xff]
  %v2000 = vld [vmem:[%s2 + $0x20] sm:$0xff]
  %v2001 = vld [vmem:[%s2 + $0x28] sm:$0xff]
  %v2002 = vld [vmem:[%s2 + $0x30] sm:$0xff]
  %v2003 = vld [vmem:[%s2 + $0x38] sm:$0xff]
  %v2004 = vld [vmem:[%s2 + $0x40] sm:$0xff]
  %v2005 = vld [vmem:[%s2 + $0x48] sm:$0xff]
  %v2006 = vld [vmem:[%s2 + $0x50] sm:$0xff]
  %v2007 = vld [vmem:[%s2 + $0x58] sm:$0xff]
  %v2008 = vld [vmem:[%s2 + $0x60] sm:$0xff]
  %v2009 = vld [vmem:[%s2 + $0x68] sm:$0xff]
  %v2010 = vld [vmem:[%s2 + $0x70] sm:$0xff]
  %v2011 = vld [vmem:[%s2 + $0x78] sm:$0xff]
  %v2012 = vld [vmem:[%s2 + $0x80] sm:$0xff]
  %v2013 = vld [vmem:[%s2 + $0x88] sm:$0xff]
  %v2014 = vld [vmem:[%s2 + $0x90] sm:$0xff]
  %v2015 = vld [vmem:[%s2 + $0x98] sm:$0xff]
  %v2016 = vld [vmem:[%s2 + $0xa0] sm:$0xff]
  %v2017 = vld [vmem:[%s2 + $0xa8] sm:$0xff]
  %v2018 = vld [vmem:[%s2 + $0xb0] sm:$0xff]
  %v2019 = vld [vmem:[%s2 + $0xb8] sm:$0xff]
  %v2020 = vld [vmem:[%s2 + $0xc0] sm:$0xff]
  %v2021 = vld [vmem:[%s2 + $0xc8] sm:$0xff]
  %v2022 = vld [vmem:[%s2 + $0xd0] sm:$0xff]
  %v2023 = vld [vmem:[%s2 + $0xd8] sm:$0xff]
  %v2024 = vld [vmem:[%s3] sm:$0x1]
  %v2026 = vperm.slane %v2024, 0
  %vm2028 = vcmask 785408
  %v2030 = vsel %vm2028, %v1677, 0
  %v2033 = vsel %vm2028, %v1679, 0
  %v2036 = vsel %vm2028, %v1681, 0
  %v2039 = vsel %vm2028, %v1683, 0
  %v2042 = vsel %vm2028, %v1685, 0
  %v2045 = vsel %vm2028, %v1687, 0
  %v2048 = vsel %vm2028, %v1689, 0
  %v2051 = vsel %vm2028, %v1691, 0
  %v2054 = vsel %vm2028, %v1693, 0
  %v2057 = vsel %vm2028, %v1695, 0
  %v2060 = vsel %vm2028, %v1697, 0
  %v2063 = vsel %vm2028, %v1699, 0
  %v2066 = vsel %vm2028, %v1701, 0
  %v2069 = vsel %vm2028, %v1703, 0
  %v2072 = vsel %vm2028, %v1705, 0
  %v2075 = vsel %vm2028, %v1707, 0
  %v2078 = vsel %vm2028, %v1709, 0
  %v2081 = vsel %vm2028, %v1711, 0
  %v2084 = vsel %vm2028, %v1713, 0
  %v2087 = vsel %vm2028, %v1715, 0
  %v2090 = vsel %vm2028, %v1717, 0
  %v2093 = vsel %vm2028, %v1719, 0
  %v2096 = vsel %vm2028, %v1721, 0
  %v2099 = vsel %vm2028, %v1723, 0
  %v2102 = vsel %vm2028, %v1725, 0
  %v2105 = vsel %vm2028, %v1727, 0
  %v2108 = vsel %vm2028, %v1729, 0
  %v2111 = vsel %vm2028, %v1731, 0
  %v2114 = vsel %vm2028, %v1733, 0
  %v2117 = vsel %vm2028, %v1735, 0
  %v2120 = vsel %vm2028, %v1737, 0
  %v2123 = vsel %vm2028, %v1739, 0
  %v2126 = vsel %vm2028, %v1741, 0
  %v2129 = vsel %vm2028, %v1743, 0
  %v2132 = vsel %vm2028, %v1745, 0
  %v2135 = vsel %vm2028, %v1747, 0
  %v2138 = vsel %vm2028, %v1749, 0
  %v2141 = vsel %vm2028, %v1751, 0
  %v2144 = vsel %vm2028, %v1753, 0
  %v2147 = vsel %vm2028, %v1755, 0
  %v2150 = vsel %vm2028, %v1757, 0
  %v2153 = vsel %vm2028, %v1759, 0
  %v2156 = vsel %vm2028, %v1761, 0
  %v2159 = vsel %vm2028, %v1763, 0
  %v2162 = vsel %vm2028, %v1765, 0
  %v2165 = vsel %vm2028, %v1767, 0
  %v2168 = vsel %vm2028, %v1769, 0
  %v2171 = vsel %vm2028, %v1771, 0
  %v2174 = vsel %vm2028, %v1773, 0
  %v2177 = vsel %vm2028, %v1775, 0
  %v2180 = vsel %vm2028, %v1777, 0
  %v2183 = vsel %vm2028, %v1779, 0
  %v2186 = vsel %vm2028, %v1781, 0
  %v2189 = vsel %vm2028, %v1783, 0
  %v2192 = vsel %vm2028, %v1785, 0
  %v2195 = vsel %vm2028, %v1787, 0
  %v2198 = vsel %vm2028, %v1789, 0
  %v2201 = vsel %vm2028, %v1791, 0
  %v2204 = vsel %vm2028, %v1793, 0
  %v2207 = vsel %vm2028, %v1795, 0
  %v2210 = vsel %vm2028, %v1797, 0
  %v2213 = vsel %vm2028, %v1799, 0
  %v2216 = vsel %vm2028, %v1801, 0
  %v2219 = vsel %vm2028, %v1803, 0
  %v2222 = vsel %vm2028, %v1805, 0
  %v2225 = vsel %vm2028, %v1807, 0
  %v2228 = vsel %vm2028, %v1809, 0
  %v2231 = vsel %vm2028, %v1811, 0
  %v2234 = vsel %vm2028, %v1813, 0
  %v2237 = vsel %vm2028, %v1815, 0
  %v2240 = vsel %vm2028, %v1817, 0
  %v2243 = vsel %vm2028, %v1819, 0
  %v2246 = vsel %vm2028, %v1821, 0
  %v2249 = vsel %vm2028, %v1823, 0
  %v2252 = vsel %vm2028, %v1825, 0
  %v2255 = vsel %vm2028, %v1827, 0
  %v2258 = vsel %vm2028, %v1829, 0
  %v2261 = vsel %vm2028, %v1831, 0
  %v2264 = vsel %vm2028, %v1833, 0
  %v2267 = vsel %vm2028, %v1835, 0
  %v2270 = vsel %vm2028, %v1837, 0
  %v2273 = vsel %vm2028, %v1839, 0
  %v2276 = vsel %vm2028, %v1841, 0
  %v2279 = vsel %vm2028, %v1843, 0
  %v2282 = vsel %vm2028, %v1845, 0
  %v2285 = vsel %vm2028, %v1847, 0
  %v2288 = vsel %vm2028, %v1849, 0
  %v2291 = vsel %vm2028, %v1851, 0
  %v2294 = vsel %vm2028, %v1853, 0
  %v2297 = vsel %vm2028, %v1855, 0
  %v2300 = vsel %vm2028, %v1857, 0
  %v2303 = vsel %vm2028, %v1859, 0
  %v2306 = vsel %vm2028, %v1861, 0
  %v2309 = vsel %vm2028, %v1863, 0
  %v2312 = vsel %vm2028, %v1865, 0
  %v2315 = vsel %vm2028, %v1867, 0
  %v2318 = vsel %vm2028, %v1869, 0
  %v2321 = vsel %vm2028, %v1871, 0
  %v2324 = vsel %vm2028, %v1873, 0
  %v2327 = vsel %vm2028, %v1875, 0
  %v2330 = vsel %vm2028, %v1877, 0
  %v2333 = vsel %vm2028, %v1879, 0
  %v2336 = vsel %vm2028, %v1881, 0
  %v2339 = vsel %vm2028, %v1883, 0
  %v2342 = vsel %vm2028, %v1885, 0
  %v2345 = vsel %vm2028, %v1887, 0
  %v2348 = vsel %vm2028, %v1889, 0
  %v2351 = vsel %vm2028, %v1891, 0
  %v2354 = vsel %vm2028, %v1893, 0
  %v2357 = vsel %vm2028, %v1895, 0
  %v2360 = vsel %vm2028, %v1897, 0
  %v2363 = vsel %vm2028, %v1899, 0
  %v2366 = vsel %vm2028, %v1901, 0
  %v2369 = vsel %vm2028, %v1903, 0
  %v2372 = vsel %vm2028, %v1905, 0
  %v2375 = vsel %vm2028, %v1907, 0
  %v2378 = vsel %vm2028, %v1909, 0
  %v2381 = vsel %vm2028, %v1911, 0
  %v2384 = vsel %vm2028, %v1913, 0
  %v2387 = vsel %vm2028, %v1915, 0
  %v2390 = vsel %vm2028, %v1917, 0
  %v2393 = vsel %vm2028, %v1919, 0
  %v2396 = vsel %vm2028, %v1921, 0
  %v2399 = vsel %vm2028, %v1923, 0
  %v2402 = vsel %vm2028, %v1925, 0
  %v2405 = vsel %vm2028, %v1927, 0
  %v2408 = vsel %vm2028, %v1929, 0
  %v2411 = vsel %vm2028, %v1931, 0
  %v2414 = vsel %vm2028, %v1933, 0
  %v2417 = vsel %vm2028, %v1935, 0
  %v2420 = vsel %vm2028, %v1937, 0
  %v2423 = vsel %vm2028, %v1939, 0
  %v2426 = vsel %vm2028, %v1941, 0
  %v2429 = vsel %vm2028, %v1943, 0
  %v2432 = vsel %vm2028, %v1945, 0
  %v2435 = vsel %vm2028, %v1947, 0
  %v2438 = vsel %vm2028, %v1949, 0
  %v2441 = vsel %vm2028, %v1951, 0
  %v2444 = vsel %vm2028, %v1953, 0
  %v2447 = vsel %vm2028, %v1955, 0
  %v2450 = vsel %vm2028, %v1957, 0
  %v2453 = vsel %vm2028, %v1959, 0
  %v2456 = vsel %vm2028, %v1961, 0
  %v2459 = vsel %vm2028, %v1963, 0
  %v2462 = vsel %vm2028, %v1965, 0
  %v2465 = vsel %vm2028, %v1967, 0
  %v2468 = vsel %vm2028, %v1969, 0
  %v2471 = vsel %vm2028, %v1971, 0
  %v2474 = vsel %vm2028, %v1973, 0
  %v2477 = vsel %vm2028, %v1975, 0
  %v2480 = vsel %vm2028, %v1977, 0
  %v2483 = vsel %vm2028, %v1979, 0
  %v2486 = vsel %vm2028, %v1981, 0
  %v2489 = vsel %vm2028, %v1983, 0
  %v2492 = vsel %vm2028, %v1985, 0
  %v2495 = vsel %vm2028, %v1987, 0
  %v2498 = vsel %vm2028, %v1989, 0
  %v2501 = vsel %vm2028, %v1991, 0
  %v2504 = vsel %vm2028, %v1993, 0
  %v2507 = vsel %vm2028, %v1995, 0
  %2509 = vmatpush.msra.mxu0 %v2011
  %2510 = vmatpush.msra.mxu0 %v2010
  %2511 = vmatpush.msra.mxu0 %v2009
  %2512 = vmatpush.msra.mxu0 %v2008
  %2513 = vmatpush.msra.mxu0 %v2007
  %2514 = vmatpush.msra.mxu0 %v2006
  %2515 = vmatpush.msra.mxu0 %v2005
  %2516 = vmatpush.msra.mxu0 %v2004
  %2517 = vmatpush.msra.mxu0 %v2003
  %2518 = vmatpush.msra.mxu0 %v2002
  %2519 = vmatpush.msra.mxu0 %v2001
  %2520 = vmatpush.msra.mxu0 %v2000
  %2521 = vmatpush.msra.mxu0 %v1999
  %2522 = vmatpush.msra.mxu0 %v1998
  %2523 = vmatpush.msra.mxu0 %v1997
  %2524 = vmatpush.msra.mxu0 %v1996
  %2525 = vmatmul.f32.gmra.mxu0 %v1676
  %v2526 = vpop.f32.mrf.mxu0
  %v2527 = vadd.f32 %v2026, %v2526
  %2528 = vmatmul.f32.gmra.mxu0 %v1678
  %v2529 = vpop.f32.mrf.mxu0
  %v2530 = vadd.f32 %v2026, %v2529
  %2531 = vmatmul.f32.gmra.mxu0 %v1680
  %v2532 = vpop.f32.mrf.mxu0
  %v2533 = vadd.f32 %v2026, %v2532
  %2534 = vmatmul.f32.gmra.mxu0 %v1682
  %v2535 = vpop.f32.mrf.mxu0
  %v2536 = vadd.f32 %v2026, %v2535
  %2537 = vmatmul.f32.gmra.mxu0 %v1684
  %v2538 = vpop.f32.mrf.mxu0
  %v2539 = vadd.f32 %v2026, %v2538
  %2540 = vmatmul.f32.gmra.mxu0 %v1686
  %v2541 = vpop.f32.mrf.mxu0
  %v2542 = vadd.f32 %v2026, %v2541
  %2543 = vmatmul.f32.gmra.mxu0 %v1688
  %v2544 = vpop.f32.mrf.mxu0
  %v2545 = vadd.f32 %v2026, %v2544
  %2546 = vmatmul.f32.gmra.mxu0 %v1690
  %v2547 = vpop.f32.mrf.mxu0
  %v2548 = vadd.f32 %v2026, %v2547
  %2549 = vmatmul.f32.gmra.mxu0 %v1692
  %v2550 = vpop.f32.mrf.mxu0
  %v2551 = vadd.f32 %v2026, %v2550
  %2552 = vmatmul.f32.gmra.mxu0 %v1694
  %v2553 = vpop.f32.mrf.mxu0
  %v2554 = vadd.f32 %v2026, %v2553
  %2555 = vmatmul.f32.gmra.mxu0 %v1696
  %v2556 = vpop.f32.mrf.mxu0
  %v2557 = vadd.f32 %v2026, %v2556
  %2558 = vmatmul.f32.gmra.mxu0 %v1698
  %v2559 = vpop.f32.mrf.mxu0
  %v2560 = vadd.f32 %v2026, %v2559
  %2561 = vmatmul.f32.gmra.mxu0 %v1700
  %v2562 = vpop.f32.mrf.mxu0
  %v2563 = vadd.f32 %v2026, %v2562
  %2564 = vmatmul.f32.gmra.mxu0 %v1702
  %v2565 = vpop.f32.mrf.mxu0
  %v2566 = vadd.f32 %v2026, %v2565
  %2567 = vmatmul.f32.gmra.mxu0 %v1704
  %v2568 = vpop.f32.mrf.mxu0
  %v2569 = vadd.f32 %v2026, %v2568
  %2570 = vmatmul.f32.gmra.mxu0 %v1706
  %v2571 = vpop.f32.mrf.mxu0
  %v2572 = vadd.f32 %v2026, %v2571
  %2573 = vmatmul.f32.gmra.mxu0 %v1708
  %v2574 = vpop.f32.mrf.mxu0
  %v2575 = vadd.f32 %v2026, %v2574
  %2576 = vmatmul.f32.gmra.mxu0 %v1710
  %v2577 = vpop.f32.mrf.mxu0
  %v2578 = vadd.f32 %v2026, %v2577
  %2579 = vmatmul.f32.gmra.mxu0 %v1712
  %v2580 = vpop.f32.mrf.mxu0
  %v2581 = vadd.f32 %v2026, %v2580
  %2582 = vmatmul.f32.gmra.mxu0 %v1714
  %v2583 = vpop.f32.mrf.mxu0
  %v2584 = vadd.f32 %v2026, %v2583
  %2585 = vmatmul.f32.gmra.mxu0 %v1716
  %v2586 = vpop.f32.mrf.mxu0
  %v2587 = vadd.f32 %v2026, %v2586
  %2588 = vmatmul.f32.gmra.mxu0 %v1718
  %v2589 = vpop.f32.mrf.mxu0
  %v2590 = vadd.f32 %v2026, %v2589
  %2591 = vmatmul.f32.gmra.mxu0 %v1720
  %v2592 = vpop.f32.mrf.mxu0
  %v2593 = vadd.f32 %v2026, %v2592
  %2594 = vmatmul.f32.gmra.mxu0 %v1722
  %v2595 = vpop.f32.mrf.mxu0
  %v2596 = vadd.f32 %v2026, %v2595
  %2597 = vmatmul.f32.gmra.mxu0 %v1724
  %v2598 = vpop.f32.mrf.mxu0
  %v2599 = vadd.f32 %v2026, %v2598
  %2600 = vmatmul.f32.gmra.mxu0 %v1726
  %v2601 = vpop.f32.mrf.mxu0
  %v2602 = vadd.f32 %v2026, %v2601
  %2603 = vmatmul.f32.gmra.mxu0 %v1728
  %v2604 = vpop.f32.mrf.mxu0
  %v2605 = vadd.f32 %v2026, %v2604
  %2606 = vmatmul.f32.gmra.mxu0 %v1730
  %v2607 = vpop.f32.mrf.mxu0
  %v2608 = vadd.f32 %v2026, %v2607
  %2609 = vmatmul.f32.gmra.mxu0 %v1732
  %v2610 = vpop.f32.mrf.mxu0
  %v2611 = vadd.f32 %v2026, %v2610
  %2612 = vmatmul.f32.gmra.mxu0 %v1734
  %v2613 = vpop.f32.mrf.mxu0
  %v2614 = vadd.f32 %v2026, %v2613
  %2615 = vmatmul.f32.gmra.mxu0 %v1736
  %v2616 = vpop.f32.mrf.mxu0
  %v2617 = vadd.f32 %v2026, %v2616
  %2618 = vmatmul.f32.gmra.mxu0 %v1738
  %v2619 = vpop.f32.mrf.mxu0
  %v2620 = vadd.f32 %v2026, %v2619
  %2621 = vmatmul.f32.gmra.mxu0 %v1740
  %v2622 = vpop.f32.mrf.mxu0
  %v2623 = vadd.f32 %v2026, %v2622
  %2624 = vmatmul.f32.gmra.mxu0 %v1742
  %v2625 = vpop.f32.mrf.mxu0
  %v2626 = vadd.f32 %v2026, %v2625
  %2627 = vmatmul.f32.gmra.mxu0 %v1744
  %v2628 = vpop.f32.mrf.mxu0
  %v2629 = vadd.f32 %v2026, %v2628
  %2630 = vmatmul.f32.gmra.mxu0 %v1746
  %v2631 = vpop.f32.mrf.mxu0
  %v2632 = vadd.f32 %v2026, %v2631
  %2633 = vmatmul.f32.gmra.mxu0 %v1748
  %v2634 = vpop.f32.mrf.mxu0
  %v2635 = vadd.f32 %v2026, %v2634
  %2636 = vmatmul.f32.gmra.mxu0 %v1750
  %v2637 = vpop.f32.mrf.mxu0
  %v2638 = vadd.f32 %v2026, %v2637
  %2639 = vmatmul.f32.gmra.mxu0 %v1752
  %v2640 = vpop.f32.mrf.mxu0
  %v2641 = vadd.f32 %v2026, %v2640
  %2642 = vmatmul.f32.gmra.mxu0 %v1754
  %v2643 = vpop.f32.mrf.mxu0
  %v2644 = vadd.f32 %v2026, %v2643
  %2645 = vmatmul.f32.gmra.mxu0 %v1756
  %v2646 = vpop.f32.mrf.mxu0
  %v2647 = vadd.f32 %v2026, %v2646
  %2648 = vmatmul.f32.gmra.mxu0 %v1758
  %v2649 = vpop.f32.mrf.mxu0
  %v2650 = vadd.f32 %v2026, %v2649
  %2651 = vmatmul.f32.gmra.mxu0 %v1760
  %v2652 = vpop.f32.mrf.mxu0
  %v2653 = vadd.f32 %v2026, %v2652
  %2654 = vmatmul.f32.gmra.mxu0 %v1762
  %v2655 = vpop.f32.mrf.mxu0
  %v2656 = vadd.f32 %v2026, %v2655
  %2657 = vmatmul.f32.gmra.mxu0 %v1764
  %v2658 = vpop.f32.mrf.mxu0
  %v2659 = vadd.f32 %v2026, %v2658
  %2660 = vmatmul.f32.gmra.mxu0 %v1766
  %v2661 = vpop.f32.mrf.mxu0
  %v2662 = vadd.f32 %v2026, %v2661
  %2663 = vmatmul.f32.gmra.mxu0 %v1768
  %v2664 = vpop.f32.mrf.mxu0
  %v2665 = vadd.f32 %v2026, %v2664
  %2666 = vmatmul.f32.gmra.mxu0 %v1770
  %v2667 = vpop.f32.mrf.mxu0
  %v2668 = vadd.f32 %v2026, %v2667
  %2669 = vmatmul.f32.gmra.mxu0 %v1772
  %v2670 = vpop.f32.mrf.mxu0
  %v2671 = vadd.f32 %v2026, %v2670
  %2672 = vmatmul.f32.gmra.mxu0 %v1774
  %v2673 = vpop.f32.mrf.mxu0
  %v2674 = vadd.f32 %v2026, %v2673
  %2675 = vmatmul.f32.gmra.mxu0 %v1776
  %v2676 = vpop.f32.mrf.mxu0
  %v2677 = vadd.f32 %v2026, %v2676
  %2678 = vmatmul.f32.gmra.mxu0 %v1778
  %v2679 = vpop.f32.mrf.mxu0
  %v2680 = vadd.f32 %v2026, %v2679
  %2681 = vmatmul.f32.gmra.mxu0 %v1780
  %v2682 = vpop.f32.mrf.mxu0
  %v2683 = vadd.f32 %v2026, %v2682
  %2684 = vmatmul.f32.gmra.mxu0 %v1782
  %v2685 = vpop.f32.mrf.mxu0
  %v2686 = vadd.f32 %v2026, %v2685
  %2687 = vmatmul.f32.gmra.mxu0 %v1784
  %v2688 = vpop.f32.mrf.mxu0
  %v2689 = vadd.f32 %v2026, %v2688
  %2690 = vmatmul.f32.gmra.mxu0 %v1786
  %v2691 = vpop.f32.mrf.mxu0
  %v2692 = vadd.f32 %v2026, %v2691
  %2693 = vmatmul.f32.gmra.mxu0 %v1788
  %v2694 = vpop.f32.mrf.mxu0
  %v2695 = vadd.f32 %v2026, %v2694
  %2696 = vmatmul.f32.gmra.mxu0 %v1790
  %v2697 = vpop.f32.mrf.mxu0
  %v2698 = vadd.f32 %v2026, %v2697
  %2699 = vmatmul.f32.gmra.mxu0 %v1792
  %v2700 = vpop.f32.mrf.mxu0
  %v2701 = vadd.f32 %v2026, %v2700
  %2702 = vmatmul.f32.gmra.mxu0 %v1794
  %v2703 = vpop.f32.mrf.mxu0
  %v2704 = vadd.f32 %v2026, %v2703
  %2705 = vmatmul.f32.gmra.mxu0 %v1796
  %v2706 = vpop.f32.mrf.mxu0
  %v2707 = vadd.f32 %v2026, %v2706
  %2708 = vmatmul.f32.gmra.mxu0 %v1798
  %v2709 = vpop.f32.mrf.mxu0
  %v2710 = vadd.f32 %v2026, %v2709
  %2711 = vmatmul.f32.gmra.mxu0 %v1800
  %v2712 = vpop.f32.mrf.mxu0
  %v2713 = vadd.f32 %v2026, %v2712
  %2714 = vmatmul.f32.gmra.mxu0 %v1802
  %v2715 = vpop.f32.mrf.mxu0
  %v2716 = vadd.f32 %v2026, %v2715
  %2717 = vmatmul.f32.gmra.mxu0 %v1804
  %v2718 = vpop.f32.mrf.mxu0
  %v2719 = vadd.f32 %v2026, %v2718
  %2720 = vmatmul.f32.gmra.mxu0 %v1806
  %v2721 = vpop.f32.mrf.mxu0
  %v2722 = vadd.f32 %v2026, %v2721
  %2723 = vmatmul.f32.gmra.mxu0 %v1808
  %v2724 = vpop.f32.mrf.mxu0
  %v2725 = vadd.f32 %v2026, %v2724
  %2726 = vmatmul.f32.gmra.mxu0 %v1810
  %v2727 = vpop.f32.mrf.mxu0
  %v2728 = vadd.f32 %v2026, %v2727
  %2729 = vmatmul.f32.gmra.mxu0 %v1812
  %v2730 = vpop.f32.mrf.mxu0
  %v2731 = vadd.f32 %v2026, %v2730
  %2732 = vmatmul.f32.gmra.mxu0 %v1814
  %v2733 = vpop.f32.mrf.mxu0
  %v2734 = vadd.f32 %v2026, %v2733
  %2735 = vmatmul.f32.gmra.mxu0 %v1816
  %v2736 = vpop.f32.mrf.mxu0
  %v2737 = vadd.f32 %v2026, %v2736
  %2738 = vmatmul.f32.gmra.mxu0 %v1818
  %v2739 = vpop.f32.mrf.mxu0
  %v2740 = vadd.f32 %v2026, %v2739
  %2741 = vmatmul.f32.gmra.mxu0 %v1820
  %v2742 = vpop.f32.mrf.mxu0
  %v2743 = vadd.f32 %v2026, %v2742
  %2744 = vmatmul.f32.gmra.mxu0 %v1822
  %v2745 = vpop.f32.mrf.mxu0
  %v2746 = vadd.f32 %v2026, %v2745
  %2747 = vmatmul.f32.gmra.mxu0 %v1824
  %v2748 = vpop.f32.mrf.mxu0
  %v2749 = vadd.f32 %v2026, %v2748
  %2750 = vmatmul.f32.gmra.mxu0 %v1826
  %v2751 = vpop.f32.mrf.mxu0
  %v2752 = vadd.f32 %v2026, %v2751
  %2753 = vmatmul.f32.gmra.mxu0 %v1828
  %v2754 = vpop.f32.mrf.mxu0
  %v2755 = vadd.f32 %v2026, %v2754
  %2756 = vmatmul.f32.gmra.mxu0 %v1830
  %v2757 = vpop.f32.mrf.mxu0
  %v2758 = vadd.f32 %v2026, %v2757
  %2759 = vmatmul.f32.gmra.mxu0 %v1832
  %v2760 = vpop.f32.mrf.mxu0
  %v2761 = vadd.f32 %v2026, %v2760
  %2762 = vmatmul.f32.gmra.mxu0 %v1834
  %v2763 = vpop.f32.mrf.mxu0
  %v2764 = vadd.f32 %v2026, %v2763
  %2765 = vmatmul.f32.gmra.mxu0 %v1836
  %v2766 = vpop.f32.mrf.mxu0
  %v2767 = vadd.f32 %v2026, %v2766
  %2768 = vmatmul.f32.gmra.mxu0 %v1838
  %v2769 = vpop.f32.mrf.mxu0
  %v2770 = vadd.f32 %v2026, %v2769
  %2771 = vmatmul.f32.gmra.mxu0 %v1840
  %v2772 = vpop.f32.mrf.mxu0
  %v2773 = vadd.f32 %v2026, %v2772
  %2774 = vmatmul.f32.gmra.mxu0 %v1842
  %v2775 = vpop.f32.mrf.mxu0
  %v2776 = vadd.f32 %v2026, %v2775
  %2777 = vmatmul.f32.gmra.mxu0 %v1844
  %v2778 = vpop.f32.mrf.mxu0
  %v2779 = vadd.f32 %v2026, %v2778
  %2780 = vmatmul.f32.gmra.mxu0 %v1846
  %v2781 = vpop.f32.mrf.mxu0
  %v2782 = vadd.f32 %v2026, %v2781
  %2783 = vmatmul.f32.gmra.mxu0 %v1848
  %v2784 = vpop.f32.mrf.mxu0
  %v2785 = vadd.f32 %v2026, %v2784
  %2786 = vmatmul.f32.gmra.mxu0 %v1850
  %v2787 = vpop.f32.mrf.mxu0
  %v2788 = vadd.f32 %v2026, %v2787
  %2789 = vmatmul.f32.gmra.mxu0 %v1852
  %v2790 = vpop.f32.mrf.mxu0
  %v2791 = vadd.f32 %v2026, %v2790
  %2792 = vmatmul.f32.gmra.mxu0 %v1854
  %v2793 = vpop.f32.mrf.mxu0
  %v2794 = vadd.f32 %v2026, %v2793
  %2795 = vmatmul.f32.gmra.mxu0 %v1856
  %v2796 = vpop.f32.mrf.mxu0
  %v2797 = vadd.f32 %v2026, %v2796
  %2798 = vmatmul.f32.gmra.mxu0 %v1858
  %v2799 = vpop.f32.mrf.mxu0
  %v2800 = vadd.f32 %v2026, %v2799
  %2801 = vmatmul.f32.gmra.mxu0 %v1860
  %v2802 = vpop.f32.mrf.mxu0
  %v2803 = vadd.f32 %v2026, %v2802
  %2804 = vmatmul.f32.gmra.mxu0 %v1862
  %v2805 = vpop.f32.mrf.mxu0
  %v2806 = vadd.f32 %v2026, %v2805
  %2807 = vmatmul.f32.gmra.mxu0 %v1864
  %v2808 = vpop.f32.mrf.mxu0
  %v2809 = vadd.f32 %v2026, %v2808
  %2810 = vmatmul.f32.gmra.mxu0 %v1866
  %v2811 = vpop.f32.mrf.mxu0
  %v2812 = vadd.f32 %v2026, %v2811
  %2813 = vmatmul.f32.gmra.mxu0 %v1868
  %v2814 = vpop.f32.mrf.mxu0
  %v2815 = vadd.f32 %v2026, %v2814
  %2816 = vmatmul.f32.gmra.mxu0 %v1870
  %v2817 = vpop.f32.mrf.mxu0
  %v2818 = vadd.f32 %v2026, %v2817
  %2819 = vmatmul.f32.gmra.mxu0 %v1872
  %v2820 = vpop.f32.mrf.mxu0
  %v2821 = vadd.f32 %v2026, %v2820
  %2822 = vmatmul.f32.gmra.mxu0 %v1874
  %v2823 = vpop.f32.mrf.mxu0
  %v2824 = vadd.f32 %v2026, %v2823
  %2825 = vmatmul.f32.gmra.mxu0 %v1876
  %v2826 = vpop.f32.mrf.mxu0
  %v2827 = vadd.f32 %v2026, %v2826
  %2828 = vmatmul.f32.gmra.mxu0 %v1878
  %v2829 = vpop.f32.mrf.mxu0
  %v2830 = vadd.f32 %v2026, %v2829
  %2831 = vmatmul.f32.gmra.mxu0 %v1880
  %v2832 = vpop.f32.mrf.mxu0
  %v2833 = vadd.f32 %v2026, %v2832
  %2834 = vmatmul.f32.gmra.mxu0 %v1882
  %v2835 = vpop.f32.mrf.mxu0
  %v2836 = vadd.f32 %v2026, %v2835
  %2837 = vmatmul.f32.gmra.mxu0 %v1884
  %v2838 = vpop.f32.mrf.mxu0
  %v2839 = vadd.f32 %v2026, %v2838
  %2840 = vmatmul.f32.gmra.mxu0 %v1886
  %v2841 = vpop.f32.mrf.mxu0
  %v2842 = vadd.f32 %v2026, %v2841
  %2843 = vmatmul.f32.gmra.mxu0 %v1888
  %v2844 = vpop.f32.mrf.mxu0
  %v2845 = vadd.f32 %v2026, %v2844
  %2846 = vmatmul.f32.gmra.mxu0 %v1890
  %v2847 = vpop.f32.mrf.mxu0
  %v2848 = vadd.f32 %v2026, %v2847
  %2849 = vmatmul.f32.gmra.mxu0 %v1892
  %v2850 = vpop.f32.mrf.mxu0
  %v2851 = vadd.f32 %v2026, %v2850
  %2852 = vmatmul.f32.gmra.mxu0 %v1894
  %v2853 = vpop.f32.mrf.mxu0
  %v2854 = vadd.f32 %v2026, %v2853
  %2855 = vmatmul.f32.gmra.mxu0 %v1896
  %v2856 = vpop.f32.mrf.mxu0
  %v2857 = vadd.f32 %v2026, %v2856
  %2858 = vmatmul.f32.gmra.mxu0 %v1898
  %v2859 = vpop.f32.mrf.mxu0
  %v2860 = vadd.f32 %v2026, %v2859
  %2861 = vmatmul.f32.gmra.mxu0 %v1900
  %v2862 = vpop.f32.mrf.mxu0
  %v2863 = vadd.f32 %v2026, %v2862
  %2864 = vmatmul.f32.gmra.mxu0 %v1902
  %v2865 = vpop.f32.mrf.mxu0
  %v2866 = vadd.f32 %v2026, %v2865
  %2867 = vmatmul.f32.gmra.mxu0 %v1904
  %v2868 = vpop.f32.mrf.mxu0
  %v2869 = vadd.f32 %v2026, %v2868
  %2870 = vmatmul.f32.gmra.mxu0 %v1906
  %v2871 = vpop.f32.mrf.mxu0
  %v2872 = vadd.f32 %v2026, %v2871
  %2873 = vmatmul.f32.gmra.mxu0 %v1908
  %v2874 = vpop.f32.mrf.mxu0
  %v2875 = vadd.f32 %v2026, %v2874
  %2876 = vmatmul.f32.gmra.mxu0 %v1910
  %v2877 = vpop.f32.mrf.mxu0
  %v2878 = vadd.f32 %v2026, %v2877
  %2879 = vmatmul.f32.gmra.mxu0 %v1912
  %v2880 = vpop.f32.mrf.mxu0
  %v2881 = vadd.f32 %v2026, %v2880
  %2882 = vmatmul.f32.gmra.mxu0 %v1914
  %v2883 = vpop.f32.mrf.mxu0
  %v2884 = vadd.f32 %v2026, %v2883
  %2885 = vmatmul.f32.gmra.mxu0 %v1916
  %v2886 = vpop.f32.mrf.mxu0
  %v2887 = vadd.f32 %v2026, %v2886
  %2888 = vmatmul.f32.gmra.mxu0 %v1918
  %v2889 = vpop.f32.mrf.mxu0
  %v2890 = vadd.f32 %v2026, %v2889
  %2891 = vmatmul.f32.gmra.mxu0 %v1920
  %v2892 = vpop.f32.mrf.mxu0
  %v2893 = vadd.f32 %v2026, %v2892
  %2894 = vmatmul.f32.gmra.mxu0 %v1922
  %v2895 = vpop.f32.mrf.mxu0
  %v2896 = vadd.f32 %v2026, %v2895
  %2897 = vmatmul.f32.gmra.mxu0 %v1924
  %v2898 = vpop.f32.mrf.mxu0
  %v2899 = vadd.f32 %v2026, %v2898
  %2900 = vmatmul.f32.gmra.mxu0 %v1926
  %v2901 = vpop.f32.mrf.mxu0
  %v2902 = vadd.f32 %v2026, %v2901
  %2903 = vmatmul.f32.gmra.mxu0 %v1928
  %v2904 = vpop.f32.mrf.mxu0
  %v2905 = vadd.f32 %v2026, %v2904
  %2906 = vmatmul.f32.gmra.mxu0 %v1930
  %v2907 = vpop.f32.mrf.mxu0
  %v2908 = vadd.f32 %v2026, %v2907
  %2909 = vmatmul.f32.gmra.mxu0 %v1932
  %v2910 = vpop.f32.mrf.mxu0
  %v2911 = vadd.f32 %v2026, %v2910
  %2912 = vmatmul.f32.gmra.mxu0 %v1934
  %v2913 = vpop.f32.mrf.mxu0
  %v2914 = vadd.f32 %v2026, %v2913
  %2915 = vmatmul.f32.gmra.mxu0 %v1936
  %v2916 = vpop.f32.mrf.mxu0
  %v2917 = vadd.f32 %v2026, %v2916
  %2918 = vmatmul.f32.gmra.mxu0 %v1938
  %v2919 = vpop.f32.mrf.mxu0
  %v2920 = vadd.f32 %v2026, %v2919
  %2921 = vmatmul.f32.gmra.mxu0 %v1940
  %v2922 = vpop.f32.mrf.mxu0
  %v2923 = vadd.f32 %v2026, %v2922
  %2924 = vmatmul.f32.gmra.mxu0 %v1942
  %v2925 = vpop.f32.mrf.mxu0
  %v2926 = vadd.f32 %v2026, %v2925
  %2927 = vmatmul.f32.gmra.mxu0 %v1944
  %v2928 = vpop.f32.mrf.mxu0
  %v2929 = vadd.f32 %v2026, %v2928
  %2930 = vmatmul.f32.gmra.mxu0 %v1946
  %v2931 = vpop.f32.mrf.mxu0
  %v2932 = vadd.f32 %v2026, %v2931
  %2933 = vmatmul.f32.gmra.mxu0 %v1948
  %v2934 = vpop.f32.mrf.mxu0
  %v2935 = vadd.f32 %v2026, %v2934
  %2936 = vmatmul.f32.gmra.mxu0 %v1950
  %v2937 = vpop.f32.mrf.mxu0
  %v2938 = vadd.f32 %v2026, %v2937
  %2939 = vmatmul.f32.gmra.mxu0 %v1952
  %v2940 = vpop.f32.mrf.mxu0
  %v2941 = vadd.f32 %v2026, %v2940
  %2942 = vmatmul.f32.gmra.mxu0 %v1954
  %v2943 = vpop.f32.mrf.mxu0
  %v2944 = vadd.f32 %v2026, %v2943
  %2945 = vmatmul.f32.gmra.mxu0 %v1956
  %v2946 = vpop.f32.mrf.mxu0
  %v2947 = vadd.f32 %v2026, %v2946
  %2948 = vmatmul.f32.gmra.mxu0 %v1958
  %v2949 = vpop.f32.mrf.mxu0
  %v2950 = vadd.f32 %v2026, %v2949
  %2951 = vmatmul.f32.gmra.mxu0 %v1960
  %v2952 = vpop.f32.mrf.mxu0
  %v2953 = vadd.f32 %v2026, %v2952
  %2954 = vmatmul.f32.gmra.mxu0 %v1962
  %v2955 = vpop.f32.mrf.mxu0
  %v2956 = vadd.f32 %v2026, %v2955
  %2957 = vmatmul.f32.gmra.mxu0 %v1964
  %v2958 = vpop.f32.mrf.mxu0
  %v2959 = vadd.f32 %v2026, %v2958
  %2960 = vmatmul.f32.gmra.mxu0 %v1966
  %v2961 = vpop.f32.mrf.mxu0
  %v2962 = vadd.f32 %v2026, %v2961
  %2963 = vmatmul.f32.gmra.mxu0 %v1968
  %v2964 = vpop.f32.mrf.mxu0
  %v2965 = vadd.f32 %v2026, %v2964
  %2966 = vmatmul.f32.gmra.mxu0 %v1970
  %v2967 = vpop.f32.mrf.mxu0
  %v2968 = vadd.f32 %v2026, %v2967
  %2969 = vmatmul.f32.gmra.mxu0 %v1972
  %v2970 = vpop.f32.mrf.mxu0
  %v2971 = vadd.f32 %v2026, %v2970
  %2972 = vmatmul.f32.gmra.mxu0 %v1974
  %v2973 = vpop.f32.mrf.mxu0
  %v2974 = vadd.f32 %v2026, %v2973
  %2975 = vmatmul.f32.gmra.mxu0 %v1976
  %v2976 = vpop.f32.mrf.mxu0
  %v2977 = vadd.f32 %v2026, %v2976
  %2978 = vmatmul.f32.gmra.mxu0 %v1978
  %v2979 = vpop.f32.mrf.mxu0
  %v2980 = vadd.f32 %v2026, %v2979
  %2981 = vmatmul.f32.gmra.mxu0 %v1980
  %v2982 = vpop.f32.mrf.mxu0
  %v2983 = vadd.f32 %v2026, %v2982
  %2984 = vmatmul.f32.gmra.mxu0 %v1982
  %v2985 = vpop.f32.mrf.mxu0
  %v2986 = vadd.f32 %v2026, %v2985
  %2987 = vmatmul.f32.gmra.mxu0 %v1984
  %v2988 = vpop.f32.mrf.mxu0
  %v2989 = vadd.f32 %v2026, %v2988
  %2990 = vmatmul.f32.gmra.mxu0 %v1986
  %v2991 = vpop.f32.mrf.mxu0
  %v2992 = vadd.f32 %v2026, %v2991
  %2993 = vmatmul.f32.gmra.mxu0 %v1988
  %v2994 = vpop.f32.mrf.mxu0
  %v2995 = vadd.f32 %v2026, %v2994
  %2996 = vmatmul.f32.gmra.mxu0 %v1990
  %v2997 = vpop.f32.mrf.mxu0
  %v2998 = vadd.f32 %v2026, %v2997
  %2999 = vmatmul.f32.gmra.mxu0 %v1992
  %v3000 = vpop.f32.mrf.mxu0
  %v3001 = vadd.f32 %v2026, %v3000
  %3002 = vmatmul.f32.gmra.mxu0 %v1994
  %v3003 = vpop.f32.mrf.mxu0
  %v3004 = vadd.f32 %v2026, %v3003
  %3005 = vdwg.mxu0
  %3006 = vmatpush.msra.mxu0 0.0
  %3007 = vmatpush.msra.mxu0 0.0
  %3008 = vmatpush.msra.mxu0 0.0
  %3009 = vmatpush.msra.mxu0 0.0
  %3010 = vmatpush.msra.mxu0 %v2023
  %3011 = vmatpush.msra.mxu0 %v2022
  %3012 = vmatpush.msra.mxu0 %v2021
  %3013 = vmatpush.msra.mxu0 %v2020
  %3014 = vmatpush.msra.mxu0 %v2019
  %3015 = vmatpush.msra.mxu0 %v2018
  %3016 = vmatpush.msra.mxu0 %v2017
  %3017 = vmatpush.msra.mxu0 %v2016
  %3018 = vmatpush.msra.mxu0 %v2015
  %3019 = vmatpush.msra.mxu0 %v2014
  %3020 = vmatpush.msra.mxu0 %v2013
  %3021 = vmatpush.msra.mxu0 %v2012
  %3022 = vmatmul.f32.gmra.mxu0 %v2030
  %v3023 = vpop.f32.mrf.mxu0
  %v3024 = vadd.f32 %v2527, %v3023
  %3025 = vmatmul.f32.gmra.mxu0 %v2033
  %v3026 = vpop.f32.mrf.mxu0
  %v3027 = vadd.f32 %v2530, %v3026
  %3028 = vmatmul.f32.gmra.mxu0 %v2036
  %v3029 = vpop.f32.mrf.mxu0
  %v3030 = vadd.f32 %v2533, %v3029
  %3031 = vmatmul.f32.gmra.mxu0 %v2039
  %v3032 = vpop.f32.mrf.mxu0
  %v3033 = vadd.f32 %v2536, %v3032
  %3034 = vmatmul.f32.gmra.mxu0 %v2042
  %v3035 = vpop.f32.mrf.mxu0
  %v3036 = vadd.f32 %v2539, %v3035
  %3037 = vmatmul.f32.gmra.mxu0 %v2045
  %v3038 = vpop.f32.mrf.mxu0
  %v3039 = vadd.f32 %v2542, %v3038
  %3040 = vmatmul.f32.gmra.mxu0 %v2048
  %v3041 = vpop.f32.mrf.mxu0
  %v3042 = vadd.f32 %v2545, %v3041
  %3043 = vmatmul.f32.gmra.mxu0 %v2051
  %v3044 = vpop.f32.mrf.mxu0
  %v3045 = vadd.f32 %v2548, %v3044
  %3046 = vmatmul.f32.gmra.mxu0 %v2054
  %v3047 = vpop.f32.mrf.mxu0
  %v3048 = vadd.f32 %v2551, %v3047
  %3049 = vmatmul.f32.gmra.mxu0 %v2057
  %v3050 = vpop.f32.mrf.mxu0
  %v3051 = vadd.f32 %v2554, %v3050
  %3052 = vmatmul.f32.gmra.mxu0 %v2060
  %v3053 = vpop.f32.mrf.mxu0
  %v3054 = vadd.f32 %v2557, %v3053
  %3055 = vmatmul.f32.gmra.mxu0 %v2063
  %v3056 = vpop.f32.mrf.mxu0
  %v3057 = vadd.f32 %v2560, %v3056
  %3058 = vmatmul.f32.gmra.mxu0 %v2066
  %v3059 = vpop.f32.mrf.mxu0
  %v3060 = vadd.f32 %v2563, %v3059
  %3061 = vmatmul.f32.gmra.mxu0 %v2069
  %v3062 = vpop.f32.mrf.mxu0
  %v3063 = vadd.f32 %v2566, %v3062
  %3064 = vmatmul.f32.gmra.mxu0 %v2072
  %v3065 = vpop.f32.mrf.mxu0
  %v3066 = vadd.f32 %v2569, %v3065
  %3067 = vmatmul.f32.gmra.mxu0 %v2075
  %v3068 = vpop.f32.mrf.mxu0
  %v3069 = vadd.f32 %v2572, %v3068
  %3070 = vmatmul.f32.gmra.mxu0 %v2078
  %v3071 = vpop.f32.mrf.mxu0
  %v3072 = vadd.f32 %v2575, %v3071
  %3073 = vmatmul.f32.gmra.mxu0 %v2081
  %v3074 = vpop.f32.mrf.mxu0
  %v3075 = vadd.f32 %v2578, %v3074
  %3076 = vmatmul.f32.gmra.mxu0 %v2084
  %v3077 = vpop.f32.mrf.mxu0
  %v3078 = vadd.f32 %v2581, %v3077
  %3079 = vmatmul.f32.gmra.mxu0 %v2087
  %v3080 = vpop.f32.mrf.mxu0
  %v3081 = vadd.f32 %v2584, %v3080
  %3082 = vmatmul.f32.gmra.mxu0 %v2090
  %v3083 = vpop.f32.mrf.mxu0
  %v3084 = vadd.f32 %v2587, %v3083
  %3085 = vmatmul.f32.gmra.mxu0 %v2093
  %v3086 = vpop.f32.mrf.mxu0
  %v3087 = vadd.f32 %v2590, %v3086
  %3088 = vmatmul.f32.gmra.mxu0 %v2096
  %v3089 = vpop.f32.mrf.mxu0
  %v3090 = vadd.f32 %v2593, %v3089
  %3091 = vmatmul.f32.gmra.mxu0 %v2099
  %v3092 = vpop.f32.mrf.mxu0
  %v3093 = vadd.f32 %v2596, %v3092
  %3094 = vmatmul.f32.gmra.mxu0 %v2102
  %v3095 = vpop.f32.mrf.mxu0
  %v3096 = vadd.f32 %v2599, %v3095
  %3097 = vmatmul.f32.gmra.mxu0 %v2105
  %v3098 = vpop.f32.mrf.mxu0
  %v3099 = vadd.f32 %v2602, %v3098
  %3100 = vmatmul.f32.gmra.mxu0 %v2108
  %v3101 = vpop.f32.mrf.mxu0
  %v3102 = vadd.f32 %v2605, %v3101
  %3103 = vmatmul.f32.gmra.mxu0 %v2111
  %v3104 = vpop.f32.mrf.mxu0
  %v3105 = vadd.f32 %v2608, %v3104
  %3106 = vmatmul.f32.gmra.mxu0 %v2114
  %v3107 = vpop.f32.mrf.mxu0
  %v3108 = vadd.f32 %v2611, %v3107
  %3109 = vmatmul.f32.gmra.mxu0 %v2117
  %v3110 = vpop.f32.mrf.mxu0
  %v3111 = vadd.f32 %v2614, %v3110
  %3112 = vmatmul.f32.gmra.mxu0 %v2120
  %v3113 = vpop.f32.mrf.mxu0
  %v3114 = vadd.f32 %v2617, %v3113
  %3115 = vmatmul.f32.gmra.mxu0 %v2123
  %v3116 = vpop.f32.mrf.mxu0
  %v3117 = vadd.f32 %v2620, %v3116
  %3118 = vmatmul.f32.gmra.mxu0 %v2126
  %v3119 = vpop.f32.mrf.mxu0
  %v3120 = vadd.f32 %v2623, %v3119
  %3121 = vmatmul.f32.gmra.mxu0 %v2129
  %v3122 = vpop.f32.mrf.mxu0
  %v3123 = vadd.f32 %v2626, %v3122
  %3124 = vmatmul.f32.gmra.mxu0 %v2132
  %v3125 = vpop.f32.mrf.mxu0
  %v3126 = vadd.f32 %v2629, %v3125
  %3127 = vmatmul.f32.gmra.mxu0 %v2135
  %v3128 = vpop.f32.mrf.mxu0
  %v3129 = vadd.f32 %v2632, %v3128
  %3130 = vmatmul.f32.gmra.mxu0 %v2138
  %v3131 = vpop.f32.mrf.mxu0
  %v3132 = vadd.f32 %v2635, %v3131
  %3133 = vmatmul.f32.gmra.mxu0 %v2141
  %v3134 = vpop.f32.mrf.mxu0
  %v3135 = vadd.f32 %v2638, %v3134
  %3136 = vmatmul.f32.gmra.mxu0 %v2144
  %v3137 = vpop.f32.mrf.mxu0
  %v3138 = vadd.f32 %v2641, %v3137
  %3139 = vmatmul.f32.gmra.mxu0 %v2147
  %v3140 = vpop.f32.mrf.mxu0
  %v3141 = vadd.f32 %v2644, %v3140
  %3142 = vmatmul.f32.gmra.mxu0 %v2150
  %v3143 = vpop.f32.mrf.mxu0
  %v3144 = vadd.f32 %v2647, %v3143
  %3145 = vmatmul.f32.gmra.mxu0 %v2153
  %v3146 = vpop.f32.mrf.mxu0
  %v3147 = vadd.f32 %v2650, %v3146
  %3148 = vmatmul.f32.gmra.mxu0 %v2156
  %v3149 = vpop.f32.mrf.mxu0
  %v3150 = vadd.f32 %v2653, %v3149
  %3151 = vmatmul.f32.gmra.mxu0 %v2159
  %v3152 = vpop.f32.mrf.mxu0
  %v3153 = vadd.f32 %v2656, %v3152
  %3154 = vmatmul.f32.gmra.mxu0 %v2162
  %v3155 = vpop.f32.mrf.mxu0
  %v3156 = vadd.f32 %v2659, %v3155
  %3157 = vmatmul.f32.gmra.mxu0 %v2165
  %v3158 = vpop.f32.mrf.mxu0
  %v3159 = vadd.f32 %v2662, %v3158
  %3160 = vmatmul.f32.gmra.mxu0 %v2168
  %v3161 = vpop.f32.mrf.mxu0
  %v3162 = vadd.f32 %v2665, %v3161
  %3163 = vmatmul.f32.gmra.mxu0 %v2171
  %v3164 = vpop.f32.mrf.mxu0
  %v3165 = vadd.f32 %v2668, %v3164
  %3166 = vmatmul.f32.gmra.mxu0 %v2174
  %v3167 = vpop.f32.mrf.mxu0
  %v3168 = vadd.f32 %v2671, %v3167
  %3169 = vmatmul.f32.gmra.mxu0 %v2177
  %v3170 = vpop.f32.mrf.mxu0
  %v3171 = vadd.f32 %v2674, %v3170
  %3172 = vmatmul.f32.gmra.mxu0 %v2180
  %v3173 = vpop.f32.mrf.mxu0
  %v3174 = vadd.f32 %v2677, %v3173
  %3175 = vmatmul.f32.gmra.mxu0 %v2183
  %v3176 = vpop.f32.mrf.mxu0
  %v3177 = vadd.f32 %v2680, %v3176
  %3178 = vmatmul.f32.gmra.mxu0 %v2186
  %v3179 = vpop.f32.mrf.mxu0
  %v3180 = vadd.f32 %v2683, %v3179
  %3181 = vmatmul.f32.gmra.mxu0 %v2189
  %v3182 = vpop.f32.mrf.mxu0
  %v3183 = vadd.f32 %v2686, %v3182
  %3184 = vmatmul.f32.gmra.mxu0 %v2192
  %v3185 = vpop.f32.mrf.mxu0
  %v3186 = vadd.f32 %v2689, %v3185
  %3187 = vmatmul.f32.gmra.mxu0 %v2195
  %v3188 = vpop.f32.mrf.mxu0
  %v3189 = vadd.f32 %v2692, %v3188
  %3190 = vmatmul.f32.gmra.mxu0 %v2198
  %v3191 = vpop.f32.mrf.mxu0
  %v3192 = vadd.f32 %v2695, %v3191
  %3193 = vmatmul.f32.gmra.mxu0 %v2201
  %v3194 = vpop.f32.mrf.mxu0
  %v3195 = vadd.f32 %v2698, %v3194
  %3196 = vmatmul.f32.gmra.mxu0 %v2204
  %v3197 = vpop.f32.mrf.mxu0
  %v3198 = vadd.f32 %v2701, %v3197
  %3199 = vmatmul.f32.gmra.mxu0 %v2207
  %v3200 = vpop.f32.mrf.mxu0
  %v3201 = vadd.f32 %v2704, %v3200
  %3202 = vmatmul.f32.gmra.mxu0 %v2210
  %v3203 = vpop.f32.mrf.mxu0
  %v3204 = vadd.f32 %v2707, %v3203
  %3205 = vmatmul.f32.gmra.mxu0 %v2213
  %v3206 = vpop.f32.mrf.mxu0
  %v3207 = vadd.f32 %v2710, %v3206
  %3208 = vmatmul.f32.gmra.mxu0 %v2216
  %v3209 = vpop.f32.mrf.mxu0
  %v3210 = vadd.f32 %v2713, %v3209
  %3211 = vmatmul.f32.gmra.mxu0 %v2219
  %v3212 = vpop.f32.mrf.mxu0
  %v3213 = vadd.f32 %v2716, %v3212
  %3214 = vmatmul.f32.gmra.mxu0 %v2222
  %v3215 = vpop.f32.mrf.mxu0
  %v3216 = vadd.f32 %v2719, %v3215
  %3217 = vmatmul.f32.gmra.mxu0 %v2225
  %v3218 = vpop.f32.mrf.mxu0
  %v3219 = vadd.f32 %v2722, %v3218
  %3220 = vmatmul.f32.gmra.mxu0 %v2228
  %v3221 = vpop.f32.mrf.mxu0
  %v3222 = vadd.f32 %v2725, %v3221
  %3223 = vmatmul.f32.gmra.mxu0 %v2231
  %v3224 = vpop.f32.mrf.mxu0
  %v3225 = vadd.f32 %v2728, %v3224
  %3226 = vmatmul.f32.gmra.mxu0 %v2234
  %v3227 = vpop.f32.mrf.mxu0
  %v3228 = vadd.f32 %v2731, %v3227
  %3229 = vmatmul.f32.gmra.mxu0 %v2237
  %v3230 = vpop.f32.mrf.mxu0
  %v3231 = vadd.f32 %v2734, %v3230
  %3232 = vmatmul.f32.gmra.mxu0 %v2240
  %v3233 = vpop.f32.mrf.mxu0
  %v3234 = vadd.f32 %v2737, %v3233
  %3235 = vmatmul.f32.gmra.mxu0 %v2243
  %v3236 = vpop.f32.mrf.mxu0
  %v3237 = vadd.f32 %v2740, %v3236
  %3238 = vmatmul.f32.gmra.mxu0 %v2246
  %v3239 = vpop.f32.mrf.mxu0
  %v3240 = vadd.f32 %v2743, %v3239
  %3241 = vmatmul.f32.gmra.mxu0 %v2249
  %v3242 = vpop.f32.mrf.mxu0
  %v3243 = vadd.f32 %v2746, %v3242
  %3244 = vmatmul.f32.gmra.mxu0 %v2252
  %v3245 = vpop.f32.mrf.mxu0
  %v3246 = vadd.f32 %v2749, %v3245
  %3247 = vmatmul.f32.gmra.mxu0 %v2255
  %v3248 = vpop.f32.mrf.mxu0
  %v3249 = vadd.f32 %v2752, %v3248
  %3250 = vmatmul.f32.gmra.mxu0 %v2258
  %v3251 = vpop.f32.mrf.mxu0
  %v3252 = vadd.f32 %v2755, %v3251
  %3253 = vmatmul.f32.gmra.mxu0 %v2261
  %v3254 = vpop.f32.mrf.mxu0
  %v3255 = vadd.f32 %v2758, %v3254
  %3256 = vmatmul.f32.gmra.mxu0 %v2264
  %v3257 = vpop.f32.mrf.mxu0
  %v3258 = vadd.f32 %v2761, %v3257
  %3259 = vmatmul.f32.gmra.mxu0 %v2267
  %v3260 = vpop.f32.mrf.mxu0
  %v3261 = vadd.f32 %v2764, %v3260
  %3262 = vmatmul.f32.gmra.mxu0 %v2270
  %v3263 = vpop.f32.mrf.mxu0
  %v3264 = vadd.f32 %v2767, %v3263
  %3265 = vmatmul.f32.gmra.mxu0 %v2273
  %v3266 = vpop.f32.mrf.mxu0
  %v3267 = vadd.f32 %v2770, %v3266
  %3268 = vmatmul.f32.gmra.mxu0 %v2276
  %v3269 = vpop.f32.mrf.mxu0
  %v3270 = vadd.f32 %v2773, %v3269
  %3271 = vmatmul.f32.gmra.mxu0 %v2279
  %v3272 = vpop.f32.mrf.mxu0
  %v3273 = vadd.f32 %v2776, %v3272
  %3274 = vmatmul.f32.gmra.mxu0 %v2282
  %v3275 = vpop.f32.mrf.mxu0
  %v3276 = vadd.f32 %v2779, %v3275
  %3277 = vmatmul.f32.gmra.mxu0 %v2285
  %v3278 = vpop.f32.mrf.mxu0
  %v3279 = vadd.f32 %v2782, %v3278
  %3280 = vmatmul.f32.gmra.mxu0 %v2288
  %v3281 = vpop.f32.mrf.mxu0
  %v3282 = vadd.f32 %v2785, %v3281
  %3283 = vmatmul.f32.gmra.mxu0 %v2291
  %v3284 = vpop.f32.mrf.mxu0
  %v3285 = vadd.f32 %v2788, %v3284
  %3286 = vmatmul.f32.gmra.mxu0 %v2294
  %v3287 = vpop.f32.mrf.mxu0
  %v3288 = vadd.f32 %v2791, %v3287
  %3289 = vmatmul.f32.gmra.mxu0 %v2297
  %v3290 = vpop.f32.mrf.mxu0
  %v3291 = vadd.f32 %v2794, %v3290
  %3292 = vmatmul.f32.gmra.mxu0 %v2300
  %v3293 = vpop.f32.mrf.mxu0
  %v3294 = vadd.f32 %v2797, %v3293
  %3295 = vmatmul.f32.gmra.mxu0 %v2303
  %v3296 = vpop.f32.mrf.mxu0
  %v3297 = vadd.f32 %v2800, %v3296
  %3298 = vmatmul.f32.gmra.mxu0 %v2306
  %v3299 = vpop.f32.mrf.mxu0
  %v3300 = vadd.f32 %v2803, %v3299
  %3301 = vmatmul.f32.gmra.mxu0 %v2309
  %v3302 = vpop.f32.mrf.mxu0
  %v3303 = vadd.f32 %v2806, %v3302
  %3304 = vmatmul.f32.gmra.mxu0 %v2312
  %v3305 = vpop.f32.mrf.mxu0
  %v3306 = vadd.f32 %v2809, %v3305
  %3307 = vmatmul.f32.gmra.mxu0 %v2315
  %v3308 = vpop.f32.mrf.mxu0
  %v3309 = vadd.f32 %v2812, %v3308
  %3310 = vmatmul.f32.gmra.mxu0 %v2318
  %v3311 = vpop.f32.mrf.mxu0
  %v3312 = vadd.f32 %v2815, %v3311
  %3313 = vmatmul.f32.gmra.mxu0 %v2321
  %v3314 = vpop.f32.mrf.mxu0
  %v3315 = vadd.f32 %v2818, %v3314
  %3316 = vmatmul.f32.gmra.mxu0 %v2324
  %v3317 = vpop.f32.mrf.mxu0
  %v3318 = vadd.f32 %v2821, %v3317
  %3319 = vmatmul.f32.gmra.mxu0 %v2327
  %v3320 = vpop.f32.mrf.mxu0
  %v3321 = vadd.f32 %v2824, %v3320
  %3322 = vmatmul.f32.gmra.mxu0 %v2330
  %v3323 = vpop.f32.mrf.mxu0
  %v3324 = vadd.f32 %v2827, %v3323
  %3325 = vmatmul.f32.gmra.mxu0 %v2333
  %v3326 = vpop.f32.mrf.mxu0
  %v3327 = vadd.f32 %v2830, %v3326
  %3328 = vmatmul.f32.gmra.mxu0 %v2336
  %v3329 = vpop.f32.mrf.mxu0
  %v3330 = vadd.f32 %v2833, %v3329
  %3331 = vmatmul.f32.gmra.mxu0 %v2339
  %v3332 = vpop.f32.mrf.mxu0
  %v3333 = vadd.f32 %v2836, %v3332
  %3334 = vmatmul.f32.gmra.mxu0 %v2342
  %v3335 = vpop.f32.mrf.mxu0
  %v3336 = vadd.f32 %v2839, %v3335
  %3337 = vmatmul.f32.gmra.mxu0 %v2345
  %v3338 = vpop.f32.mrf.mxu0
  %v3339 = vadd.f32 %v2842, %v3338
  %3340 = vmatmul.f32.gmra.mxu0 %v2348
  %v3341 = vpop.f32.mrf.mxu0
  %v3342 = vadd.f32 %v2845, %v3341
  %3343 = vmatmul.f32.gmra.mxu0 %v2351
  %v3344 = vpop.f32.mrf.mxu0
  %v3345 = vadd.f32 %v2848, %v3344
  %3346 = vmatmul.f32.gmra.mxu0 %v2354
  %v3347 = vpop.f32.mrf.mxu0
  %v3348 = vadd.f32 %v2851, %v3347
  %3349 = vmatmul.f32.gmra.mxu0 %v2357
  %v3350 = vpop.f32.mrf.mxu0
  %v3351 = vadd.f32 %v2854, %v3350
  %3352 = vmatmul.f32.gmra.mxu0 %v2360
  %v3353 = vpop.f32.mrf.mxu0
  %v3354 = vadd.f32 %v2857, %v3353
  %3355 = vmatmul.f32.gmra.mxu0 %v2363
  %v3356 = vpop.f32.mrf.mxu0
  %v3357 = vadd.f32 %v2860, %v3356
  %3358 = vmatmul.f32.gmra.mxu0 %v2366
  %v3359 = vpop.f32.mrf.mxu0
  %v3360 = vadd.f32 %v2863, %v3359
  %3361 = vmatmul.f32.gmra.mxu0 %v2369
  %v3362 = vpop.f32.mrf.mxu0
  %v3363 = vadd.f32 %v2866, %v3362
  %3364 = vmatmul.f32.gmra.mxu0 %v2372
  %v3365 = vpop.f32.mrf.mxu0
  %v3366 = vadd.f32 %v2869, %v3365
  %3367 = vmatmul.f32.gmra.mxu0 %v2375
  %v3368 = vpop.f32.mrf.mxu0
  %v3369 = vadd.f32 %v2872, %v3368
  %3370 = vmatmul.f32.gmra.mxu0 %v2378
  %v3371 = vpop.f32.mrf.mxu0
  %v3372 = vadd.f32 %v2875, %v3371
  %3373 = vmatmul.f32.gmra.mxu0 %v2381
  %v3374 = vpop.f32.mrf.mxu0
  %v3375 = vadd.f32 %v2878, %v3374
  %3376 = vmatmul.f32.gmra.mxu0 %v2384
  %v3377 = vpop.f32.mrf.mxu0
  %v3378 = vadd.f32 %v2881, %v3377
  %3379 = vmatmul.f32.gmra.mxu0 %v2387
  %v3380 = vpop.f32.mrf.mxu0
  %v3381 = vadd.f32 %v2884, %v3380
  %3382 = vmatmul.f32.gmra.mxu0 %v2390
  %v3383 = vpop.f32.mrf.mxu0
  %v3384 = vadd.f32 %v2887, %v3383
  %3385 = vmatmul.f32.gmra.mxu0 %v2393
  %v3386 = vpop.f32.mrf.mxu0
  %v3387 = vadd.f32 %v2890, %v3386
  %3388 = vmatmul.f32.gmra.mxu0 %v2396
  %v3389 = vpop.f32.mrf.mxu0
  %v3390 = vadd.f32 %v2893, %v3389
  %3391 = vmatmul.f32.gmra.mxu0 %v2399
  %v3392 = vpop.f32.mrf.mxu0
  %v3393 = vadd.f32 %v2896, %v3392
  %3394 = vmatmul.f32.gmra.mxu0 %v2402
  %v3395 = vpop.f32.mrf.mxu0
  %v3396 = vadd.f32 %v2899, %v3395
  %3397 = vmatmul.f32.gmra.mxu0 %v2405
  %v3398 = vpop.f32.mrf.mxu0
  %v3399 = vadd.f32 %v2902, %v3398
  %3400 = vmatmul.f32.gmra.mxu0 %v2408
  %v3401 = vpop.f32.mrf.mxu0
  %v3402 = vadd.f32 %v2905, %v3401
  %3403 = vmatmul.f32.gmra.mxu0 %v2411
  %v3404 = vpop.f32.mrf.mxu0
  %v3405 = vadd.f32 %v2908, %v3404
  %3406 = vmatmul.f32.gmra.mxu0 %v2414
  %v3407 = vpop.f32.mrf.mxu0
  %v3408 = vadd.f32 %v2911, %v3407
  %3409 = vmatmul.f32.gmra.mxu0 %v2417
  %v3410 = vpop.f32.mrf.mxu0
  %v3411 = vadd.f32 %v2914, %v3410
  %3412 = vmatmul.f32.gmra.mxu0 %v2420
  %v3413 = vpop.f32.mrf.mxu0
  %v3414 = vadd.f32 %v2917, %v3413
  %3415 = vmatmul.f32.gmra.mxu0 %v2423
  %v3416 = vpop.f32.mrf.mxu0
  %v3417 = vadd.f32 %v2920, %v3416
  %3418 = vmatmul.f32.gmra.mxu0 %v2426
  %v3419 = vpop.f32.mrf.mxu0
  %v3420 = vadd.f32 %v2923, %v3419
  %3421 = vmatmul.f32.gmra.mxu0 %v2429
  %v3422 = vpop.f32.mrf.mxu0
  %v3423 = vadd.f32 %v2926, %v3422
  %3424 = vmatmul.f32.gmra.mxu0 %v2432
  %v3425 = vpop.f32.mrf.mxu0
  %v3426 = vadd.f32 %v2929, %v3425
  %3427 = vmatmul.f32.gmra.mxu0 %v2435
  %v3428 = vpop.f32.mrf.mxu0
  %v3429 = vadd.f32 %v2932, %v3428
  %3430 = vmatmul.f32.gmra.mxu0 %v2438
  %v3431 = vpop.f32.mrf.mxu0
  %v3432 = vadd.f32 %v2935, %v3431
  %3433 = vmatmul.f32.gmra.mxu0 %v2441
  %v3434 = vpop.f32.mrf.mxu0
  %v3435 = vadd.f32 %v2938, %v3434
  %3436 = vmatmul.f32.gmra.mxu0 %v2444
  %v3437 = vpop.f32.mrf.mxu0
  %v3438 = vadd.f32 %v2941, %v3437
  %3439 = vmatmul.f32.gmra.mxu0 %v2447
  %v3440 = vpop.f32.mrf.mxu0
  %v3441 = vadd.f32 %v2944, %v3440
  %3442 = vmatmul.f32.gmra.mxu0 %v2450
  %v3443 = vpop.f32.mrf.mxu0
  %v3444 = vadd.f32 %v2947, %v3443
  %3445 = vmatmul.f32.gmra.mxu0 %v2453
  %v3446 = vpop.f32.mrf.mxu0
  %v3447 = vadd.f32 %v2950, %v3446
  %3448 = vmatmul.f32.gmra.mxu0 %v2456
  %v3449 = vpop.f32.mrf.mxu0
  %v3450 = vadd.f32 %v2953, %v3449
  %3451 = vmatmul.f32.gmra.mxu0 %v2459
  %v3452 = vpop.f32.mrf.mxu0
  %v3453 = vadd.f32 %v2956, %v3452
  %3454 = vmatmul.f32.gmra.mxu0 %v2462
  %v3455 = vpop.f32.mrf.mxu0
  %v3456 = vadd.f32 %v2959, %v3455
  %3457 = vmatmul.f32.gmra.mxu0 %v2465
  %v3458 = vpop.f32.mrf.mxu0
  %v3459 = vadd.f32 %v2962, %v3458
  %3460 = vmatmul.f32.gmra.mxu0 %v2468
  %v3461 = vpop.f32.mrf.mxu0
  %v3462 = vadd.f32 %v2965, %v3461
  %3463 = vmatmul.f32.gmra.mxu0 %v2471
  %v3464 = vpop.f32.mrf.mxu0
  %v3465 = vadd.f32 %v2968, %v3464
  %3466 = vmatmul.f32.gmra.mxu0 %v2474
  %v3467 = vpop.f32.mrf.mxu0
  %v3468 = vadd.f32 %v2971, %v3467
  %3469 = vmatmul.f32.gmra.mxu0 %v2477
  %v3470 = vpop.f32.mrf.mxu0
  %v3471 = vadd.f32 %v2974, %v3470
  %3472 = vmatmul.f32.gmra.mxu0 %v2480
  %v3473 = vpop.f32.mrf.mxu0
  %v3474 = vadd.f32 %v2977, %v3473
  %3475 = vmatmul.f32.gmra.mxu0 %v2483
  %v3476 = vpop.f32.mrf.mxu0
  %v3477 = vadd.f32 %v2980, %v3476
  %3478 = vmatmul.f32.gmra.mxu0 %v2486
  %v3479 = vpop.f32.mrf.mxu0
  %v3480 = vadd.f32 %v2983, %v3479
  %3481 = vmatmul.f32.gmra.mxu0 %v2489
  %v3482 = vpop.f32.mrf.mxu0
  %v3483 = vadd.f32 %v2986, %v3482
  %3484 = vmatmul.f32.gmra.mxu0 %v2492
  %v3485 = vpop.f32.mrf.mxu0
  %v3486 = vadd.f32 %v2989, %v3485
  %3487 = vmatmul.f32.gmra.mxu0 %v2495
  %v3488 = vpop.f32.mrf.mxu0
  %v3489 = vadd.f32 %v2992, %v3488
  %3490 = vmatmul.f32.gmra.mxu0 %v2498
  %v3491 = vpop.f32.mrf.mxu0
  %v3492 = vadd.f32 %v2995, %v3491
  %3493 = vmatmul.f32.gmra.mxu0 %v2501
  %v3494 = vpop.f32.mrf.mxu0
  %v3495 = vadd.f32 %v2998, %v3494
  %3496 = vmatmul.f32.gmra.mxu0 %v2504
  %v3497 = vpop.f32.mrf.mxu0
  %v3498 = vadd.f32 %v3001, %v3497
  %3499 = vmatmul.f32.gmra.mxu0 %v2507
  %v3500 = vpop.f32.mrf.mxu0
  %v3501 = vadd.f32 %v3004, %v3500
  %3502 = vdwg.mxu0
  %v3503 = vmax.f32 %v3024, 0.0
  %v3504 = vmax.f32 %v3027, 0.0
  %v3505 = vmax.f32 %v3030, 0.0
  %v3506 = vmax.f32 %v3033, 0.0
  %v3507 = vmax.f32 %v3036, 0.0
  %v3508 = vmax.f32 %v3039, 0.0
  %v3509 = vmax.f32 %v3042, 0.0
  %v3510 = vmax.f32 %v3045, 0.0
  %v3511 = vmax.f32 %v3048, 0.0
  %v3512 = vmax.f32 %v3051, 0.0
  %v3513 = vmax.f32 %v3054, 0.0
  %v3514 = vmax.f32 %v3057, 0.0
  %v3515 = vmax.f32 %v3060, 0.0
  %v3516 = vmax.f32 %v3063, 0.0
  %v3517 = vmax.f32 %v3066, 0.0
  %v3518 = vmax.f32 %v3069, 0.0
  %v3519 = vmax.f32 %v3072, 0.0
  %v3520 = vmax.f32 %v3075, 0.0
  %v3521 = vmax.f32 %v3078, 0.0
  %v3522 = vmax.f32 %v3081, 0.0
  %v3523 = vmax.f32 %v3084, 0.0
  %v3524 = vmax.f32 %v3087, 0.0
  %v3525 = vmax.f32 %v3090, 0.0
  %v3526 = vmax.f32 %v3093, 0.0
  %v3527 = vmax.f32 %v3096, 0.0
  %v3528 = vmax.f32 %v3099, 0.0
  %v3529 = vmax.f32 %v3102, 0.0
  %v3530 = vmax.f32 %v3105, 0.0
  %v3531 = vmax.f32 %v3108, 0.0
  %v3532 = vmax.f32 %v3111, 0.0
  %v3533 = vmax.f32 %v3114, 0.0
  %v3534 = vmax.f32 %v3117, 0.0
  %v3535 = vmax.f32 %v3120, 0.0
  %v3536 = vmax.f32 %v3123, 0.0
  %v3537 = vmax.f32 %v3126, 0.0
  %v3538 = vmax.f32 %v3129, 0.0
  %v3539 = vmax.f32 %v3132, 0.0
  %v3540 = vmax.f32 %v3135, 0.0
  %v3541 = vmax.f32 %v3138, 0.0
  %v3542 = vmax.f32 %v3141, 0.0
  %v3543 = vmax.f32 %v3144, 0.0
  %v3544 = vmax.f32 %v3147, 0.0
  %v3545 = vmax.f32 %v3150, 0.0
  %v3546 = vmax.f32 %v3153, 0.0
  %v3547 = vmax.f32 %v3156, 0.0
  %v3548 = vmax.f32 %v3159, 0.0
  %v3549 = vmax.f32 %v3162, 0.0
  %v3550 = vmax.f32 %v3165, 0.0
  %v3551 = vmax.f32 %v3168, 0.0
  %v3552 = vmax.f32 %v3171, 0.0
  %v3553 = vmax.f32 %v3174, 0.0
  %v3554 = vmax.f32 %v3177, 0.0
  %v3555 = vmax.f32 %v3180, 0.0
  %v3556 = vmax.f32 %v3183, 0.0
  %v3557 = vmax.f32 %v3186, 0.0
  %v3558 = vmax.f32 %v3189, 0.0
  %v3559 = vmax.f32 %v3192, 0.0
  %v3560 = vmax.f32 %v3195, 0.0
  %v3561 = vmax.f32 %v3198, 0.0
  %v3562 = vmax.f32 %v3201, 0.0
  %v3563 = vmax.f32 %v3204, 0.0
  %v3564 = vmax.f32 %v3207, 0.0
  %v3565 = vmax.f32 %v3210, 0.0
  %v3566 = vmax.f32 %v3213, 0.0
  %v3567 = vmax.f32 %v3216, 0.0
  %v3568 = vmax.f32 %v3219, 0.0
  %v3569 = vmax.f32 %v3222, 0.0
  %v3570 = vmax.f32 %v3225, 0.0
  %v3571 = vmax.f32 %v3228, 0.0
  %v3572 = vmax.f32 %v3231, 0.0
  %v3573 = vmax.f32 %v3234, 0.0
  %v3574 = vmax.f32 %v3237, 0.0
  %v3575 = vmax.f32 %v3240, 0.0
  %v3576 = vmax.f32 %v3243, 0.0
  %v3577 = vmax.f32 %v3246, 0.0
  %v3578 = vmax.f32 %v3249, 0.0
  %v3579 = vmax.f32 %v3252, 0.0
  %v3580 = vmax.f32 %v3255, 0.0
  %v3581 = vmax.f32 %v3258, 0.0
  %v3582 = vmax.f32 %v3261, 0.0
  %v3583 = vmax.f32 %v3264, 0.0
  %v3584 = vmax.f32 %v3267, 0.0
  %v3585 = vmax.f32 %v3270, 0.0
  %v3586 = vmax.f32 %v3273, 0.0
  %v3587 = vmax.f32 %v3276, 0.0
  %v3588 = vmax.f32 %v3279, 0.0
  %v3589 = vmax.f32 %v3282, 0.0
  %v3590 = vmax.f32 %v3285, 0.0
  %v3591 = vmax.f32 %v3288, 0.0
  %v3592 = vmax.f32 %v3291, 0.0
  %v3593 = vmax.f32 %v3294, 0.0
  %v3594 = vmax.f32 %v3297, 0.0
  %v3595 = vmax.f32 %v3300, 0.0
  %v3596 = vmax.f32 %v3303, 0.0
  %v3597 = vmax.f32 %v3306, 0.0
  %v3598 = vmax.f32 %v3309, 0.0
  %v3599 = vmax.f32 %v3312, 0.0
  %v3600 = vmax.f32 %v3315, 0.0
  %v3601 = vmax.f32 %v3318, 0.0
  %v3602 = vmax.f32 %v3321, 0.0
  %v3603 = vmax.f32 %v3324, 0.0
  %v3604 = vmax.f32 %v3327, 0.0
  %v3605 = vmax.f32 %v3330, 0.0
  %v3606 = vmax.f32 %v3333, 0.0
  %v3607 = vmax.f32 %v3336, 0.0
  %v3608 = vmax.f32 %v3339, 0.0
  %v3609 = vmax.f32 %v3342, 0.0
  %v3610 = vmax.f32 %v3345, 0.0
  %v3611 = vmax.f32 %v3348, 0.0
  %v3612 = vmax.f32 %v3351, 0.0
  %v3613 = vmax.f32 %v3354, 0.0
  %v3614 = vmax.f32 %v3357, 0.0
  %v3615 = vmax.f32 %v3360, 0.0
  %v3616 = vmax.f32 %v3363, 0.0
  %v3617 = vmax.f32 %v3366, 0.0
  %v3618 = vmax.f32 %v3369, 0.0
  %v3619 = vmax.f32 %v3372, 0.0
  %v3620 = vmax.f32 %v3375, 0.0
  %v3621 = vmax.f32 %v3378, 0.0
  %v3622 = vmax.f32 %v3381, 0.0
  %v3623 = vmax.f32 %v3384, 0.0
  %v3624 = vmax.f32 %v3387, 0.0
  %v3625 = vmax.f32 %v3390, 0.0
  %v3626 = vmax.f32 %v3393, 0.0
  %v3627 = vmax.f32 %v3396, 0.0
  %v3628 = vmax.f32 %v3399, 0.0
  %v3629 = vmax.f32 %v3402, 0.0
  %v3630 = vmax.f32 %v3405, 0.0
  %v3631 = vmax.f32 %v3408, 0.0
  %v3632 = vmax.f32 %v3411, 0.0
  %v3633 = vmax.f32 %v3414, 0.0
  %v3634 = vmax.f32 %v3417, 0.0
  %v3635 = vmax.f32 %v3420, 0.0
  %v3636 = vmax.f32 %v3423, 0.0
  %v3637 = vmax.f32 %v3426, 0.0
  %v3638 = vmax.f32 %v3429, 0.0
  %v3639 = vmax.f32 %v3432, 0.0
  %v3640 = vmax.f32 %v3435, 0.0
  %v3641 = vmax.f32 %v3438, 0.0
  %v3642 = vmax.f32 %v3441, 0.0
  %v3643 = vmax.f32 %v3444, 0.0
  %v3644 = vmax.f32 %v3447, 0.0
  %v3645 = vmax.f32 %v3450, 0.0
  %v3646 = vmax.f32 %v3453, 0.0
  %v3647 = vmax.f32 %v3456, 0.0
  %v3648 = vmax.f32 %v3459, 0.0
  %v3649 = vmax.f32 %v3462, 0.0
  %v3650 = vmax.f32 %v3465, 0.0
  %v3651 = vmax.f32 %v3468, 0.0
  %v3652 = vmax.f32 %v3471, 0.0
  %v3653 = vmax.f32 %v3474, 0.0
  %v3654 = vmax.f32 %v3477, 0.0
  %v3655 = vmax.f32 %v3480, 0.0
  %v3656 = vmax.f32 %v3483, 0.0
  %v3657 = vmax.f32 %v3486, 0.0
  %v3658 = vmax.f32 %v3489, 0.0
  %v3659 = vmax.f32 %v3492, 0.0
  %v3660 = vmax.f32 %v3495, 0.0
  %v3661 = vmax.f32 %v3498, 0.0
  %v3662 = vmax.f32 %v3501, 0.0
  %v3663 = vld [vmem:[%s4] sm:$0xff]
  %v3664 = vld [vmem:[%s4 + $0x8] sm:$0xff]
  %v3665 = vld [vmem:[%s4 + $0x10] sm:$0xff]
  %v3666 = vld [vmem:[%s4 + $0x18] sm:$0xff]
  %v3667 = vld [vmem:[%s4 + $0x20] sm:$0xff]
  %v3668 = vld [vmem:[%s4 + $0x28] sm:$0xff]
  %v3669 = vld [vmem:[%s4 + $0x30] sm:$0xff]
  %v3670 = vld [vmem:[%s4 + $0x38] sm:$0xff]
  %v3671 = vld [vmem:[%s4 + $0x40] sm:$0xff]
  %v3672 = vld [vmem:[%s5] sm:$0x1]
  %v3674 = vperm.slane %v3672, 0
  %vm3676 = vcmask 588800
  %v3678 = vsel %vm3676, %v3503, 0
  %v3681 = vsel %vm3676, %v3504, 0
  %v3684 = vsel %vm3676, %v3505, 0
  %v3687 = vsel %vm3676, %v3506, 0
  %v3690 = vsel %vm3676, %v3507, 0
  %v3693 = vsel %vm3676, %v3508, 0
  %v3696 = vsel %vm3676, %v3509, 0
  %v3699 = vsel %vm3676, %v3510, 0
  %v3702 = vsel %vm3676, %v3511, 0
  %v3705 = vsel %vm3676, %v3512, 0
  %v3708 = vsel %vm3676, %v3513, 0
  %v3711 = vsel %vm3676, %v3514, 0
  %v3714 = vsel %vm3676, %v3515, 0
  %v3717 = vsel %vm3676, %v3516, 0
  %v3720 = vsel %vm3676, %v3517, 0
  %v3723 = vsel %vm3676, %v3518, 0
  %v3726 = vsel %vm3676, %v3519, 0
  %v3729 = vsel %vm3676, %v3520, 0
  %v3732 = vsel %vm3676, %v3521, 0
  %v3735 = vsel %vm3676, %v3522, 0
  %v3738 = vsel %vm3676, %v3523, 0
  %v3741 = vsel %vm3676, %v3524, 0
  %v3744 = vsel %vm3676, %v3525, 0
  %v3747 = vsel %vm3676, %v3526, 0
  %v3750 = vsel %vm3676, %v3527, 0
  %v3753 = vsel %vm3676, %v3528, 0
  %v3756 = vsel %vm3676, %v3529, 0
  %v3759 = vsel %vm3676, %v3530, 0
  %v3762 = vsel %vm3676, %v3531, 0
  %v3765 = vsel %vm3676, %v3532, 0
  %v3768 = vsel %vm3676, %v3533, 0
  %v3771 = vsel %vm3676, %v3534, 0
  %v3774 = vsel %vm3676, %v3535, 0
  %v3777 = vsel %vm3676, %v3536, 0
  %v3780 = vsel %vm3676, %v3537, 0
  %v3783 = vsel %vm3676, %v3538, 0
  %v3786 = vsel %vm3676, %v3539, 0
  %v3789 = vsel %vm3676, %v3540, 0
  %v3792 = vsel %vm3676, %v3541, 0
  %v3795 = vsel %vm3676, %v3542, 0
  %v3798 = vsel %vm3676, %v3543, 0
  %v3801 = vsel %vm3676, %v3544, 0
  %v3804 = vsel %vm3676, %v3545, 0
  %v3807 = vsel %vm3676, %v3546, 0
  %v3810 = vsel %vm3676, %v3547, 0
  %v3813 = vsel %vm3676, %v3548, 0
  %v3816 = vsel %vm3676, %v3549, 0
  %v3819 = vsel %vm3676, %v3550, 0
  %v3822 = vsel %vm3676, %v3551, 0
  %v3825 = vsel %vm3676, %v3552, 0
  %v3828 = vsel %vm3676, %v3553, 0
  %v3831 = vsel %vm3676, %v3554, 0
  %v3834 = vsel %vm3676, %v3555, 0
  %v3837 = vsel %vm3676, %v3556, 0
  %v3840 = vsel %vm3676, %v3557, 0
  %v3843 = vsel %vm3676, %v3558, 0
  %v3846 = vsel %vm3676, %v3559, 0
  %v3849 = vsel %vm3676, %v3560, 0
  %v3852 = vsel %vm3676, %v3561, 0
  %v3855 = vsel %vm3676, %v3562, 0
  %v3858 = vsel %vm3676, %v3563, 0
  %v3861 = vsel %vm3676, %v3564, 0
  %v3864 = vsel %vm3676, %v3565, 0
  %v3867 = vsel %vm3676, %v3566, 0
  %v3870 = vsel %vm3676, %v3567, 0
  %v3873 = vsel %vm3676, %v3568, 0
  %v3876 = vsel %vm3676, %v3569, 0
  %v3879 = vsel %vm3676, %v3570, 0
  %v3882 = vsel %vm3676, %v3571, 0
  %v3885 = vsel %vm3676, %v3572, 0
  %v3888 = vsel %vm3676, %v3573, 0
  %v3891 = vsel %vm3676, %v3574, 0
  %v3894 = vsel %vm3676, %v3575, 0
  %v3897 = vsel %vm3676, %v3576, 0
  %v3900 = vsel %vm3676, %v3577, 0
  %v3903 = vsel %vm3676, %v3578, 0
  %v3906 = vsel %vm3676, %v3579, 0
  %v3909 = vsel %vm3676, %v3580, 0
  %v3912 = vsel %vm3676, %v3581, 0
  %v3915 = vsel %vm3676, %v3582, 0
  %v3918 = vsel %vm3676, %v3583, 0
  %v3921 = vsel %vm3676, %v3584, 0
  %v3924 = vsel %vm3676, %v3585, 0
  %v3927 = vsel %vm3676, %v3586, 0
  %v3930 = vsel %vm3676, %v3587, 0
  %v3933 = vsel %vm3676, %v3588, 0
  %v3936 = vsel %vm3676, %v3589, 0
  %v3939 = vsel %vm3676, %v3590, 0
  %v3942 = vsel %vm3676, %v3591, 0
  %v3945 = vsel %vm3676, %v3592, 0
  %v3948 = vsel %vm3676, %v3593, 0
  %v3951 = vsel %vm3676, %v3594, 0
  %v3954 = vsel %vm3676, %v3595, 0
  %v3957 = vsel %vm3676, %v3596, 0
  %v3960 = vsel %vm3676, %v3597, 0
  %v3963 = vsel %vm3676, %v3598, 0
  %v3966 = vsel %vm3676, %v3599, 0
  %v3969 = vsel %vm3676, %v3600, 0
  %v3972 = vsel %vm3676, %v3601, 0
  %v3975 = vsel %vm3676, %v3602, 0
  %v3978 = vsel %vm3676, %v3603, 0
  %v3981 = vsel %vm3676, %v3604, 0
  %v3984 = vsel %vm3676, %v3605, 0
  %v3987 = vsel %vm3676, %v3606, 0
  %v3990 = vsel %vm3676, %v3607, 0
  %v3993 = vsel %vm3676, %v3608, 0
  %v3996 = vsel %vm3676, %v3609, 0
  %v3999 = vsel %vm3676, %v3610, 0
  %v4002 = vsel %vm3676, %v3611, 0
  %v4005 = vsel %vm3676, %v3612, 0
  %v4008 = vsel %vm3676, %v3613, 0
  %v4011 = vsel %vm3676, %v3614, 0
  %v4014 = vsel %vm3676, %v3615, 0
  %v4017 = vsel %vm3676, %v3616, 0
  %v4020 = vsel %vm3676, %v3617, 0
  %v4023 = vsel %vm3676, %v3618, 0
  %v4026 = vsel %vm3676, %v3619, 0
  %v4029 = vsel %vm3676, %v3620, 0
  %v4032 = vsel %vm3676, %v3621, 0
  %v4035 = vsel %vm3676, %v3622, 0
  %v4038 = vsel %vm3676, %v3623, 0
  %v4041 = vsel %vm3676, %v3624, 0
  %v4044 = vsel %vm3676, %v3625, 0
  %v4047 = vsel %vm3676, %v3626, 0
  %v4050 = vsel %vm3676, %v3627, 0
  %v4053 = vsel %vm3676, %v3628, 0
  %v4056 = vsel %vm3676, %v3629, 0
  %v4059 = vsel %vm3676, %v3630, 0
  %v4062 = vsel %vm3676, %v3631, 0
  %v4065 = vsel %vm3676, %v3632, 0
  %v4068 = vsel %vm3676, %v3633, 0
  %v4071 = vsel %vm3676, %v3634, 0
  %v4074 = vsel %vm3676, %v3635, 0
  %v4077 = vsel %vm3676, %v3636, 0
  %v4080 = vsel %vm3676, %v3637, 0
  %v4083 = vsel %vm3676, %v3638, 0
  %v4086 = vsel %vm3676, %v3639, 0
  %v4089 = vsel %vm3676, %v3640, 0
  %v4092 = vsel %vm3676, %v3641, 0
  %v4095 = vsel %vm3676, %v3642, 0
  %v4098 = vsel %vm3676, %v3643, 0
  %v4101 = vsel %vm3676, %v3644, 0
  %v4104 = vsel %vm3676, %v3645, 0
  %v4107 = vsel %vm3676, %v3646, 0
  %v4110 = vsel %vm3676, %v3647, 0
  %v4113 = vsel %vm3676, %v3648, 0
  %v4116 = vsel %vm3676, %v3649, 0
  %v4119 = vsel %vm3676, %v3650, 0
  %v4122 = vsel %vm3676, %v3651, 0
  %v4125 = vsel %vm3676, %v3652, 0
  %v4128 = vsel %vm3676, %v3653, 0
  %v4131 = vsel %vm3676, %v3654, 0
  %v4134 = vsel %vm3676, %v3655, 0
  %v4137 = vsel %vm3676, %v3656, 0
  %v4140 = vsel %vm3676, %v3657, 0
  %v4143 = vsel %vm3676, %v3658, 0
  %v4146 = vsel %vm3676, %v3659, 0
  %v4149 = vsel %vm3676, %v3660, 0
  %v4152 = vsel %vm3676, %v3661, 0
  %v4155 = vsel %vm3676, %v3662, 0
  %4157 = vmatpush.msra.mxu0 0.0
  %4158 = vmatpush.msra.mxu0 0.0
  %4159 = vmatpush.msra.mxu0 0.0
  %4160 = vmatpush.msra.mxu0 0.0
  %4161 = vmatpush.msra.mxu0 0.0
  %4162 = vmatpush.msra.mxu0 0.0
  %4163 = vmatpush.msra.mxu0 0.0
  %4164 = vmatpush.msra.mxu0 %v3671
  %4165 = vmatpush.msra.mxu0 %v3670
  %4166 = vmatpush.msra.mxu0 %v3669
  %4167 = vmatpush.msra.mxu0 %v3668
  %4168 = vmatpush.msra.mxu0 %v3667
  %4169 = vmatpush.msra.mxu0 %v3666
  %4170 = vmatpush.msra.mxu0 %v3665
  %4171 = vmatpush.msra.mxu0 %v3664
  %4172 = vmatpush.msra.mxu0 %v3663
  %4173 = vmatmul.f32.gmra.mxu0 %v3678
  %v4174 = vpop.f32.mrf.mxu0
  %v4175 = vadd.f32 %v3674, %v4174
  %4176 = vmatmul.f32.gmra.mxu0 %v3681
  %v4177 = vpop.f32.mrf.mxu0
  %v4178 = vadd.f32 %v3674, %v4177
  %4179 = vmatmul.f32.gmra.mxu0 %v3684
  %v4180 = vpop.f32.mrf.mxu0
  %v4181 = vadd.f32 %v3674, %v4180
  %4182 = vmatmul.f32.gmra.mxu0 %v3687
  %v4183 = vpop.f32.mrf.mxu0
  %v4184 = vadd.f32 %v3674, %v4183
  %4185 = vmatmul.f32.gmra.mxu0 %v3690
  %v4186 = vpop.f32.mrf.mxu0
  %v4187 = vadd.f32 %v3674, %v4186
  %4188 = vmatmul.f32.gmra.mxu0 %v3693
  %v4189 = vpop.f32.mrf.mxu0
  %v4190 = vadd.f32 %v3674, %v4189
  %4191 = vmatmul.f32.gmra.mxu0 %v3696
  %v4192 = vpop.f32.mrf.mxu0
  %v4193 = vadd.f32 %v3674, %v4192
  %4194 = vmatmul.f32.gmra.mxu0 %v3699
  %v4195 = vpop.f32.mrf.mxu0
  %v4196 = vadd.f32 %v3674, %v4195
  %4197 = vmatmul.f32.gmra.mxu0 %v3702
  %v4198 = vpop.f32.mrf.mxu0
  %v4199 = vadd.f32 %v3674, %v4198
  %4200 = vmatmul.f32.gmra.mxu0 %v3705
  %v4201 = vpop.f32.mrf.mxu0
  %v4202 = vadd.f32 %v3674, %v4201
  %4203 = vmatmul.f32.gmra.mxu0 %v3708
  %v4204 = vpop.f32.mrf.mxu0
  %v4205 = vadd.f32 %v3674, %v4204
  %4206 = vmatmul.f32.gmra.mxu0 %v3711
  %v4207 = vpop.f32.mrf.mxu0
  %v4208 = vadd.f32 %v3674, %v4207
  %4209 = vmatmul.f32.gmra.mxu0 %v3714
  %v4210 = vpop.f32.mrf.mxu0
  %v4211 = vadd.f32 %v3674, %v4210
  %4212 = vmatmul.f32.gmra.mxu0 %v3717
  %v4213 = vpop.f32.mrf.mxu0
  %v4214 = vadd.f32 %v3674, %v4213
  %4215 = vmatmul.f32.gmra.mxu0 %v3720
  %v4216 = vpop.f32.mrf.mxu0
  %v4217 = vadd.f32 %v3674, %v4216
  %4218 = vmatmul.f32.gmra.mxu0 %v3723
  %v4219 = vpop.f32.mrf.mxu0
  %v4220 = vadd.f32 %v3674, %v4219
  %4221 = vmatmul.f32.gmra.mxu0 %v3726
  %v4222 = vpop.f32.mrf.mxu0
  %v4223 = vadd.f32 %v3674, %v4222
  %4224 = vmatmul.f32.gmra.mxu0 %v3729
  %v4225 = vpop.f32.mrf.mxu0
  %v4226 = vadd.f32 %v3674, %v4225
  %4227 = vmatmul.f32.gmra.mxu0 %v3732
  %v4228 = vpop.f32.mrf.mxu0
  %v4229 = vadd.f32 %v3674, %v4228
  %4230 = vmatmul.f32.gmra.mxu0 %v3735
  %v4231 = vpop.f32.mrf.mxu0
  %v4232 = vadd.f32 %v3674, %v4231
  %4233 = vmatmul.f32.gmra.mxu0 %v3738
  %v4234 = vpop.f32.mrf.mxu0
  %v4235 = vadd.f32 %v3674, %v4234
  %4236 = vmatmul.f32.gmra.mxu0 %v3741
  %v4237 = vpop.f32.mrf.mxu0
  %v4238 = vadd.f32 %v3674, %v4237
  %4239 = vmatmul.f32.gmra.mxu0 %v3744
  %v4240 = vpop.f32.mrf.mxu0
  %v4241 = vadd.f32 %v3674, %v4240
  %4242 = vmatmul.f32.gmra.mxu0 %v3747
  %v4243 = vpop.f32.mrf.mxu0
  %v4244 = vadd.f32 %v3674, %v4243
  %4245 = vmatmul.f32.gmra.mxu0 %v3750
  %v4246 = vpop.f32.mrf.mxu0
  %v4247 = vadd.f32 %v3674, %v4246
  %4248 = vmatmul.f32.gmra.mxu0 %v3753
  %v4249 = vpop.f32.mrf.mxu0
  %v4250 = vadd.f32 %v3674, %v4249
  %4251 = vmatmul.f32.gmra.mxu0 %v3756
  %v4252 = vpop.f32.mrf.mxu0
  %v4253 = vadd.f32 %v3674, %v4252
  %4254 = vmatmul.f32.gmra.mxu0 %v3759
  %v4255 = vpop.f32.mrf.mxu0
  %v4256 = vadd.f32 %v3674, %v4255
  %4257 = vmatmul.f32.gmra.mxu0 %v3762
  %v4258 = vpop.f32.mrf.mxu0
  %v4259 = vadd.f32 %v3674, %v4258
  %4260 = vmatmul.f32.gmra.mxu0 %v3765
  %v4261 = vpop.f32.mrf.mxu0
  %v4262 = vadd.f32 %v3674, %v4261
  %4263 = vmatmul.f32.gmra.mxu0 %v3768
  %v4264 = vpop.f32.mrf.mxu0
  %v4265 = vadd.f32 %v3674, %v4264
  %4266 = vmatmul.f32.gmra.mxu0 %v3771
  %v4267 = vpop.f32.mrf.mxu0
  %v4268 = vadd.f32 %v3674, %v4267
  %4269 = vmatmul.f32.gmra.mxu0 %v3774
  %v4270 = vpop.f32.mrf.mxu0
  %v4271 = vadd.f32 %v3674, %v4270
  %4272 = vmatmul.f32.gmra.mxu0 %v3777
  %v4273 = vpop.f32.mrf.mxu0
  %v4274 = vadd.f32 %v3674, %v4273
  %4275 = vmatmul.f32.gmra.mxu0 %v3780
  %v4276 = vpop.f32.mrf.mxu0
  %v4277 = vadd.f32 %v3674, %v4276
  %4278 = vmatmul.f32.gmra.mxu0 %v3783
  %v4279 = vpop.f32.mrf.mxu0
  %v4280 = vadd.f32 %v3674, %v4279
  %4281 = vmatmul.f32.gmra.mxu0 %v3786
  %v4282 = vpop.f32.mrf.mxu0
  %v4283 = vadd.f32 %v3674, %v4282
  %4284 = vmatmul.f32.gmra.mxu0 %v3789
  %v4285 = vpop.f32.mrf.mxu0
  %v4286 = vadd.f32 %v3674, %v4285
  %4287 = vmatmul.f32.gmra.mxu0 %v3792
  %v4288 = vpop.f32.mrf.mxu0
  %v4289 = vadd.f32 %v3674, %v4288
  %4290 = vmatmul.f32.gmra.mxu0 %v3795
  %v4291 = vpop.f32.mrf.mxu0
  %v4292 = vadd.f32 %v3674, %v4291
  %4293 = vmatmul.f32.gmra.mxu0 %v3798
  %v4294 = vpop.f32.mrf.mxu0
  %v4295 = vadd.f32 %v3674, %v4294
  %4296 = vmatmul.f32.gmra.mxu0 %v3801
  %v4297 = vpop.f32.mrf.mxu0
  %v4298 = vadd.f32 %v3674, %v4297
  %4299 = vmatmul.f32.gmra.mxu0 %v3804
  %v4300 = vpop.f32.mrf.mxu0
  %v4301 = vadd.f32 %v3674, %v4300
  %4302 = vmatmul.f32.gmra.mxu0 %v3807
  %v4303 = vpop.f32.mrf.mxu0
  %v4304 = vadd.f32 %v3674, %v4303
  %4305 = vmatmul.f32.gmra.mxu0 %v3810
  %v4306 = vpop.f32.mrf.mxu0
  %v4307 = vadd.f32 %v3674, %v4306
  %4308 = vmatmul.f32.gmra.mxu0 %v3813
  %v4309 = vpop.f32.mrf.mxu0
  %v4310 = vadd.f32 %v3674, %v4309
  %4311 = vmatmul.f32.gmra.mxu0 %v3816
  %v4312 = vpop.f32.mrf.mxu0
  %v4313 = vadd.f32 %v3674, %v4312
  %4314 = vmatmul.f32.gmra.mxu0 %v3819
  %v4315 = vpop.f32.mrf.mxu0
  %v4316 = vadd.f32 %v3674, %v4315
  %4317 = vmatmul.f32.gmra.mxu0 %v3822
  %v4318 = vpop.f32.mrf.mxu0
  %v4319 = vadd.f32 %v3674, %v4318
  %4320 = vmatmul.f32.gmra.mxu0 %v3825
  %v4321 = vpop.f32.mrf.mxu0
  %v4322 = vadd.f32 %v3674, %v4321
  %4323 = vmatmul.f32.gmra.mxu0 %v3828
  %v4324 = vpop.f32.mrf.mxu0
  %v4325 = vadd.f32 %v3674, %v4324
  %4326 = vmatmul.f32.gmra.mxu0 %v3831
  %v4327 = vpop.f32.mrf.mxu0
  %v4328 = vadd.f32 %v3674, %v4327
  %4329 = vmatmul.f32.gmra.mxu0 %v3834
  %v4330 = vpop.f32.mrf.mxu0
  %v4331 = vadd.f32 %v3674, %v4330
  %4332 = vmatmul.f32.gmra.mxu0 %v3837
  %v4333 = vpop.f32.mrf.mxu0
  %v4334 = vadd.f32 %v3674, %v4333
  %4335 = vmatmul.f32.gmra.mxu0 %v3840
  %v4336 = vpop.f32.mrf.mxu0
  %v4337 = vadd.f32 %v3674, %v4336
  %4338 = vmatmul.f32.gmra.mxu0 %v3843
  %v4339 = vpop.f32.mrf.mxu0
  %v4340 = vadd.f32 %v3674, %v4339
  %4341 = vmatmul.f32.gmra.mxu0 %v3846
  %v4342 = vpop.f32.mrf.mxu0
  %v4343 = vadd.f32 %v3674, %v4342
  %4344 = vmatmul.f32.gmra.mxu0 %v3849
  %v4345 = vpop.f32.mrf.mxu0
  %v4346 = vadd.f32 %v3674, %v4345
  %4347 = vmatmul.f32.gmra.mxu0 %v3852
  %v4348 = vpop.f32.mrf.mxu0
  %v4349 = vadd.f32 %v3674, %v4348
  %4350 = vmatmul.f32.gmra.mxu0 %v3855
  %v4351 = vpop.f32.mrf.mxu0
  %v4352 = vadd.f32 %v3674, %v4351
  %4353 = vmatmul.f32.gmra.mxu0 %v3858
  %v4354 = vpop.f32.mrf.mxu0
  %v4355 = vadd.f32 %v3674, %v4354
  %4356 = vmatmul.f32.gmra.mxu0 %v3861
  %v4357 = vpop.f32.mrf.mxu0
  %v4358 = vadd.f32 %v3674, %v4357
  %4359 = vmatmul.f32.gmra.mxu0 %v3864
  %v4360 = vpop.f32.mrf.mxu0
  %v4361 = vadd.f32 %v3674, %v4360
  %4362 = vmatmul.f32.gmra.mxu0 %v3867
  %v4363 = vpop.f32.mrf.mxu0
  %v4364 = vadd.f32 %v3674, %v4363
  %4365 = vmatmul.f32.gmra.mxu0 %v3870
  %v4366 = vpop.f32.mrf.mxu0
  %v4367 = vadd.f32 %v3674, %v4366
  %4368 = vmatmul.f32.gmra.mxu0 %v3873
  %v4369 = vpop.f32.mrf.mxu0
  %v4370 = vadd.f32 %v3674, %v4369
  %4371 = vmatmul.f32.gmra.mxu0 %v3876
  %v4372 = vpop.f32.mrf.mxu0
  %v4373 = vadd.f32 %v3674, %v4372
  %4374 = vmatmul.f32.gmra.mxu0 %v3879
  %v4375 = vpop.f32.mrf.mxu0
  %v4376 = vadd.f32 %v3674, %v4375
  %4377 = vmatmul.f32.gmra.mxu0 %v3882
  %v4378 = vpop.f32.mrf.mxu0
  %v4379 = vadd.f32 %v3674, %v4378
  %4380 = vmatmul.f32.gmra.mxu0 %v3885
  %v4381 = vpop.f32.mrf.mxu0
  %v4382 = vadd.f32 %v3674, %v4381
  %4383 = vmatmul.f32.gmra.mxu0 %v3888
  %v4384 = vpop.f32.mrf.mxu0
  %v4385 = vadd.f32 %v3674, %v4384
  %4386 = vmatmul.f32.gmra.mxu0 %v3891
  %v4387 = vpop.f32.mrf.mxu0
  %v4388 = vadd.f32 %v3674, %v4387
  %4389 = vmatmul.f32.gmra.mxu0 %v3894
  %v4390 = vpop.f32.mrf.mxu0
  %v4391 = vadd.f32 %v3674, %v4390
  %4392 = vmatmul.f32.gmra.mxu0 %v3897
  %v4393 = vpop.f32.mrf.mxu0
  %v4394 = vadd.f32 %v3674, %v4393
  %4395 = vmatmul.f32.gmra.mxu0 %v3900
  %v4396 = vpop.f32.mrf.mxu0
  %v4397 = vadd.f32 %v3674, %v4396
  %4398 = vmatmul.f32.gmra.mxu0 %v3903
  %v4399 = vpop.f32.mrf.mxu0
  %v4400 = vadd.f32 %v3674, %v4399
  %4401 = vmatmul.f32.gmra.mxu0 %v3906
  %v4402 = vpop.f32.mrf.mxu0
  %v4403 = vadd.f32 %v3674, %v4402
  %4404 = vmatmul.f32.gmra.mxu0 %v3909
  %v4405 = vpop.f32.mrf.mxu0
  %v4406 = vadd.f32 %v3674, %v4405
  %4407 = vmatmul.f32.gmra.mxu0 %v3912
  %v4408 = vpop.f32.mrf.mxu0
  %v4409 = vadd.f32 %v3674, %v4408
  %4410 = vmatmul.f32.gmra.mxu0 %v3915
  %v4411 = vpop.f32.mrf.mxu0
  %v4412 = vadd.f32 %v3674, %v4411
  %4413 = vmatmul.f32.gmra.mxu0 %v3918
  %v4414 = vpop.f32.mrf.mxu0
  %v4415 = vadd.f32 %v3674, %v4414
  %4416 = vmatmul.f32.gmra.mxu0 %v3921
  %v4417 = vpop.f32.mrf.mxu0
  %v4418 = vadd.f32 %v3674, %v4417
  %4419 = vmatmul.f32.gmra.mxu0 %v3924
  %v4420 = vpop.f32.mrf.mxu0
  %v4421 = vadd.f32 %v3674, %v4420
  %4422 = vmatmul.f32.gmra.mxu0 %v3927
  %v4423 = vpop.f32.mrf.mxu0
  %v4424 = vadd.f32 %v3674, %v4423
  %4425 = vmatmul.f32.gmra.mxu0 %v3930
  %v4426 = vpop.f32.mrf.mxu0
  %v4427 = vadd.f32 %v3674, %v4426
  %4428 = vmatmul.f32.gmra.mxu0 %v3933
  %v4429 = vpop.f32.mrf.mxu0
  %v4430 = vadd.f32 %v3674, %v4429
  %4431 = vmatmul.f32.gmra.mxu0 %v3936
  %v4432 = vpop.f32.mrf.mxu0
  %v4433 = vadd.f32 %v3674, %v4432
  %4434 = vmatmul.f32.gmra.mxu0 %v3939
  %v4435 = vpop.f32.mrf.mxu0
  %v4436 = vadd.f32 %v3674, %v4435
  %4437 = vmatmul.f32.gmra.mxu0 %v3942
  %v4438 = vpop.f32.mrf.mxu0
  %v4439 = vadd.f32 %v3674, %v4438
  %4440 = vmatmul.f32.gmra.mxu0 %v3945
  %v4441 = vpop.f32.mrf.mxu0
  %v4442 = vadd.f32 %v3674, %v4441
  %4443 = vmatmul.f32.gmra.mxu0 %v3948
  %v4444 = vpop.f32.mrf.mxu0
  %v4445 = vadd.f32 %v3674, %v4444
  %4446 = vmatmul.f32.gmra.mxu0 %v3951
  %v4447 = vpop.f32.mrf.mxu0
  %v4448 = vadd.f32 %v3674, %v4447
  %4449 = vmatmul.f32.gmra.mxu0 %v3954
  %v4450 = vpop.f32.mrf.mxu0
  %v4451 = vadd.f32 %v3674, %v4450
  %4452 = vmatmul.f32.gmra.mxu0 %v3957
  %v4453 = vpop.f32.mrf.mxu0
  %v4454 = vadd.f32 %v3674, %v4453
  %4455 = vmatmul.f32.gmra.mxu0 %v3960
  %v4456 = vpop.f32.mrf.mxu0
  %v4457 = vadd.f32 %v3674, %v4456
  %4458 = vmatmul.f32.gmra.mxu0 %v3963
  %v4459 = vpop.f32.mrf.mxu0
  %v4460 = vadd.f32 %v3674, %v4459
  %4461 = vmatmul.f32.gmra.mxu0 %v3966
  %v4462 = vpop.f32.mrf.mxu0
  %v4463 = vadd.f32 %v3674, %v4462
  %4464 = vmatmul.f32.gmra.mxu0 %v3969
  %v4465 = vpop.f32.mrf.mxu0
  %v4466 = vadd.f32 %v3674, %v4465
  %4467 = vmatmul.f32.gmra.mxu0 %v3972
  %v4468 = vpop.f32.mrf.mxu0
  %v4469 = vadd.f32 %v3674, %v4468
  %4470 = vmatmul.f32.gmra.mxu0 %v3975
  %v4471 = vpop.f32.mrf.mxu0
  %v4472 = vadd.f32 %v3674, %v4471
  %4473 = vmatmul.f32.gmra.mxu0 %v3978
  %v4474 = vpop.f32.mrf.mxu0
  %v4475 = vadd.f32 %v3674, %v4474
  %4476 = vmatmul.f32.gmra.mxu0 %v3981
  %v4477 = vpop.f32.mrf.mxu0
  %v4478 = vadd.f32 %v3674, %v4477
  %4479 = vmatmul.f32.gmra.mxu0 %v3984
  %v4480 = vpop.f32.mrf.mxu0
  %v4481 = vadd.f32 %v3674, %v4480
  %4482 = vmatmul.f32.gmra.mxu0 %v3987
  %v4483 = vpop.f32.mrf.mxu0
  %v4484 = vadd.f32 %v3674, %v4483
  %4485 = vmatmul.f32.gmra.mxu0 %v3990
  %v4486 = vpop.f32.mrf.mxu0
  %v4487 = vadd.f32 %v3674, %v4486
  %4488 = vmatmul.f32.gmra.mxu0 %v3993
  %v4489 = vpop.f32.mrf.mxu0
  %v4490 = vadd.f32 %v3674, %v4489
  %4491 = vmatmul.f32.gmra.mxu0 %v3996
  %v4492 = vpop.f32.mrf.mxu0
  %v4493 = vadd.f32 %v3674, %v4492
  %4494 = vmatmul.f32.gmra.mxu0 %v3999
  %v4495 = vpop.f32.mrf.mxu0
  %v4496 = vadd.f32 %v3674, %v4495
  %4497 = vmatmul.f32.gmra.mxu0 %v4002
  %v4498 = vpop.f32.mrf.mxu0
  %v4499 = vadd.f32 %v3674, %v4498
  %4500 = vmatmul.f32.gmra.mxu0 %v4005
  %v4501 = vpop.f32.mrf.mxu0
  %v4502 = vadd.f32 %v3674, %v4501
  %4503 = vmatmul.f32.gmra.mxu0 %v4008
  %v4504 = vpop.f32.mrf.mxu0
  %v4505 = vadd.f32 %v3674, %v4504
  %4506 = vmatmul.f32.gmra.mxu0 %v4011
  %v4507 = vpop.f32.mrf.mxu0
  %v4508 = vadd.f32 %v3674, %v4507
  %4509 = vmatmul.f32.gmra.mxu0 %v4014
  %v4510 = vpop.f32.mrf.mxu0
  %v4511 = vadd.f32 %v3674, %v4510
  %4512 = vmatmul.f32.gmra.mxu0 %v4017
  %v4513 = vpop.f32.mrf.mxu0
  %v4514 = vadd.f32 %v3674, %v4513
  %4515 = vmatmul.f32.gmra.mxu0 %v4020
  %v4516 = vpop.f32.mrf.mxu0
  %v4517 = vadd.f32 %v3674, %v4516
  %4518 = vmatmul.f32.gmra.mxu0 %v4023
  %v4519 = vpop.f32.mrf.mxu0
  %v4520 = vadd.f32 %v3674, %v4519
  %4521 = vmatmul.f32.gmra.mxu0 %v4026
  %v4522 = vpop.f32.mrf.mxu0
  %v4523 = vadd.f32 %v3674, %v4522
  %4524 = vmatmul.f32.gmra.mxu0 %v4029
  %v4525 = vpop.f32.mrf.mxu0
  %v4526 = vadd.f32 %v3674, %v4525
  %4527 = vmatmul.f32.gmra.mxu0 %v4032
  %v4528 = vpop.f32.mrf.mxu0
  %v4529 = vadd.f32 %v3674, %v4528
  %4530 = vmatmul.f32.gmra.mxu0 %v4035
  %v4531 = vpop.f32.mrf.mxu0
  %v4532 = vadd.f32 %v3674, %v4531
  %4533 = vmatmul.f32.gmra.mxu0 %v4038
  %v4534 = vpop.f32.mrf.mxu0
  %v4535 = vadd.f32 %v3674, %v4534
  %4536 = vmatmul.f32.gmra.mxu0 %v4041
  %v4537 = vpop.f32.mrf.mxu0
  %v4538 = vadd.f32 %v3674, %v4537
  %4539 = vmatmul.f32.gmra.mxu0 %v4044
  %v4540 = vpop.f32.mrf.mxu0
  %v4541 = vadd.f32 %v3674, %v4540
  %4542 = vmatmul.f32.gmra.mxu0 %v4047
  %v4543 = vpop.f32.mrf.mxu0
  %v4544 = vadd.f32 %v3674, %v4543
  %4545 = vmatmul.f32.gmra.mxu0 %v4050
  %v4546 = vpop.f32.mrf.mxu0
  %v4547 = vadd.f32 %v3674, %v4546
  %4548 = vmatmul.f32.gmra.mxu0 %v4053
  %v4549 = vpop.f32.mrf.mxu0
  %v4550 = vadd.f32 %v3674, %v4549
  %4551 = vmatmul.f32.gmra.mxu0 %v4056
  %v4552 = vpop.f32.mrf.mxu0
  %v4553 = vadd.f32 %v3674, %v4552
  %4554 = vmatmul.f32.gmra.mxu0 %v4059
  %v4555 = vpop.f32.mrf.mxu0
  %v4556 = vadd.f32 %v3674, %v4555
  %4557 = vmatmul.f32.gmra.mxu0 %v4062
  %v4558 = vpop.f32.mrf.mxu0
  %v4559 = vadd.f32 %v3674, %v4558
  %4560 = vmatmul.f32.gmra.mxu0 %v4065
  %v4561 = vpop.f32.mrf.mxu0
  %v4562 = vadd.f32 %v3674, %v4561
  %4563 = vmatmul.f32.gmra.mxu0 %v4068
  %v4564 = vpop.f32.mrf.mxu0
  %v4565 = vadd.f32 %v3674, %v4564
  %4566 = vmatmul.f32.gmra.mxu0 %v4071
  %v4567 = vpop.f32.mrf.mxu0
  %v4568 = vadd.f32 %v3674, %v4567
  %4569 = vmatmul.f32.gmra.mxu0 %v4074
  %v4570 = vpop.f32.mrf.mxu0
  %v4571 = vadd.f32 %v3674, %v4570
  %4572 = vmatmul.f32.gmra.mxu0 %v4077
  %v4573 = vpop.f32.mrf.mxu0
  %v4574 = vadd.f32 %v3674, %v4573
  %4575 = vmatmul.f32.gmra.mxu0 %v4080
  %v4576 = vpop.f32.mrf.mxu0
  %v4577 = vadd.f32 %v3674, %v4576
  %4578 = vmatmul.f32.gmra.mxu0 %v4083
  %v4579 = vpop.f32.mrf.mxu0
  %v4580 = vadd.f32 %v3674, %v4579
  %4581 = vmatmul.f32.gmra.mxu0 %v4086
  %v4582 = vpop.f32.mrf.mxu0
  %v4583 = vadd.f32 %v3674, %v4582
  %4584 = vmatmul.f32.gmra.mxu0 %v4089
  %v4585 = vpop.f32.mrf.mxu0
  %v4586 = vadd.f32 %v3674, %v4585
  %4587 = vmatmul.f32.gmra.mxu0 %v4092
  %v4588 = vpop.f32.mrf.mxu0
  %v4589 = vadd.f32 %v3674, %v4588
  %4590 = vmatmul.f32.gmra.mxu0 %v4095
  %v4591 = vpop.f32.mrf.mxu0
  %v4592 = vadd.f32 %v3674, %v4591
  %4593 = vmatmul.f32.gmra.mxu0 %v4098
  %v4594 = vpop.f32.mrf.mxu0
  %v4595 = vadd.f32 %v3674, %v4594
  %4596 = vmatmul.f32.gmra.mxu0 %v4101
  %v4597 = vpop.f32.mrf.mxu0
  %v4598 = vadd.f32 %v3674, %v4597
  %4599 = vmatmul.f32.gmra.mxu0 %v4104
  %v4600 = vpop.f32.mrf.mxu0
  %v4601 = vadd.f32 %v3674, %v4600
  %4602 = vmatmul.f32.gmra.mxu0 %v4107
  %v4603 = vpop.f32.mrf.mxu0
  %v4604 = vadd.f32 %v3674, %v4603
  %4605 = vmatmul.f32.gmra.mxu0 %v4110
  %v4606 = vpop.f32.mrf.mxu0
  %v4607 = vadd.f32 %v3674, %v4606
  %4608 = vmatmul.f32.gmra.mxu0 %v4113
  %v4609 = vpop.f32.mrf.mxu0
  %v4610 = vadd.f32 %v3674, %v4609
  %4611 = vmatmul.f32.gmra.mxu0 %v4116
  %v4612 = vpop.f32.mrf.mxu0
  %v4613 = vadd.f32 %v3674, %v4612
  %4614 = vmatmul.f32.gmra.mxu0 %v4119
  %v4615 = vpop.f32.mrf.mxu0
  %v4616 = vadd.f32 %v3674, %v4615
  %4617 = vmatmul.f32.gmra.mxu0 %v4122
  %v4618 = vpop.f32.mrf.mxu0
  %v4619 = vadd.f32 %v3674, %v4618
  %4620 = vmatmul.f32.gmra.mxu0 %v4125
  %v4621 = vpop.f32.mrf.mxu0
  %v4622 = vadd.f32 %v3674, %v4621
  %4623 = vmatmul.f32.gmra.mxu0 %v4128
  %v4624 = vpop.f32.mrf.mxu0
  %v4625 = vadd.f32 %v3674, %v4624
  %4626 = vmatmul.f32.gmra.mxu0 %v4131
  %v4627 = vpop.f32.mrf.mxu0
  %v4628 = vadd.f32 %v3674, %v4627
  %4629 = vmatmul.f32.gmra.mxu0 %v4134
  %v4630 = vpop.f32.mrf.mxu0
  %v4631 = vadd.f32 %v3674, %v4630
  %4632 = vmatmul.f32.gmra.mxu0 %v4137
  %v4633 = vpop.f32.mrf.mxu0
  %v4634 = vadd.f32 %v3674, %v4633
  %4635 = vmatmul.f32.gmra.mxu0 %v4140
  %v4636 = vpop.f32.mrf.mxu0
  %v4637 = vadd.f32 %v3674, %v4636
  %4638 = vmatmul.f32.gmra.mxu0 %v4143
  %v4639 = vpop.f32.mrf.mxu0
  %v4640 = vadd.f32 %v3674, %v4639
  %4641 = vmatmul.f32.gmra.mxu0 %v4146
  %v4642 = vpop.f32.mrf.mxu0
  %v4643 = vadd.f32 %v3674, %v4642
  %4644 = vmatmul.f32.gmra.mxu0 %v4149
  %v4645 = vpop.f32.mrf.mxu0
  %v4646 = vadd.f32 %v3674, %v4645
  %4647 = vmatmul.f32.gmra.mxu0 %v4152
  %v4648 = vpop.f32.mrf.mxu0
  %v4649 = vadd.f32 %v3674, %v4648
  %4650 = vmatmul.f32.gmra.mxu0 %v4155
  %v4651 = vpop.f32.mrf.mxu0
  %v4652 = vadd.f32 %v3674, %v4651
  %4653 = vdwg.mxu0
  %v4654 = vmax.f32 %v4175, 0.0
  %v4655 = vmax.f32 %v4178, 0.0
  %v4656 = vmax.f32 %v4181, 0.0
  %v4657 = vmax.f32 %v4184, 0.0
  %v4658 = vmax.f32 %v4187, 0.0
  %v4659 = vmax.f32 %v4190, 0.0
  %v4660 = vmax.f32 %v4193, 0.0
  %v4661 = vmax.f32 %v4196, 0.0
  %v4662 = vmax.f32 %v4199, 0.0
  %v4663 = vmax.f32 %v4202, 0.0
  %v4664 = vmax.f32 %v4205, 0.0
  %v4665 = vmax.f32 %v4208, 0.0
  %v4666 = vmax.f32 %v4211, 0.0
  %v4667 = vmax.f32 %v4214, 0.0
  %v4668 = vmax.f32 %v4217, 0.0
  %v4669 = vmax.f32 %v4220, 0.0
  %v4670 = vmax.f32 %v4223, 0.0
  %v4671 = vmax.f32 %v4226, 0.0
  %v4672 = vmax.f32 %v4229, 0.0
  %v4673 = vmax.f32 %v4232, 0.0
  %v4674 = vmax.f32 %v4235, 0.0
  %v4675 = vmax.f32 %v4238, 0.0
  %v4676 = vmax.f32 %v4241, 0.0
  %v4677 = vmax.f32 %v4244, 0.0
  %v4678 = vmax.f32 %v4247, 0.0
  %v4679 = vmax.f32 %v4250, 0.0
  %v4680 = vmax.f32 %v4253, 0.0
  %v4681 = vmax.f32 %v4256, 0.0
  %v4682 = vmax.f32 %v4259, 0.0
  %v4683 = vmax.f32 %v4262, 0.0
  %v4684 = vmax.f32 %v4265, 0.0
  %v4685 = vmax.f32 %v4268, 0.0
  %v4686 = vmax.f32 %v4271, 0.0
  %v4687 = vmax.f32 %v4274, 0.0
  %v4688 = vmax.f32 %v4277, 0.0
  %v4689 = vmax.f32 %v4280, 0.0
  %v4690 = vmax.f32 %v4283, 0.0
  %v4691 = vmax.f32 %v4286, 0.0
  %v4692 = vmax.f32 %v4289, 0.0
  %v4693 = vmax.f32 %v4292, 0.0
  %v4694 = vmax.f32 %v4295, 0.0
  %v4695 = vmax.f32 %v4298, 0.0
  %v4696 = vmax.f32 %v4301, 0.0
  %v4697 = vmax.f32 %v4304, 0.0
  %v4698 = vmax.f32 %v4307, 0.0
  %v4699 = vmax.f32 %v4310, 0.0
  %v4700 = vmax.f32 %v4313, 0.0
  %v4701 = vmax.f32 %v4316, 0.0
  %v4702 = vmax.f32 %v4319, 0.0
  %v4703 = vmax.f32 %v4322, 0.0
  %v4704 = vmax.f32 %v4325, 0.0
  %v4705 = vmax.f32 %v4328, 0.0
  %v4706 = vmax.f32 %v4331, 0.0
  %v4707 = vmax.f32 %v4334, 0.0
  %v4708 = vmax.f32 %v4337, 0.0
  %v4709 = vmax.f32 %v4340, 0.0
  %v4710 = vmax.f32 %v4343, 0.0
  %v4711 = vmax.f32 %v4346, 0.0
  %v4712 = vmax.f32 %v4349, 0.0
  %v4713 = vmax.f32 %v4352, 0.0
  %v4714 = vmax.f32 %v4355, 0.0
  %v4715 = vmax.f32 %v4358, 0.0
  %v4716 = vmax.f32 %v4361, 0.0
  %v4717 = vmax.f32 %v4364, 0.0
  %v4718 = vmax.f32 %v4367, 0.0
  %v4719 = vmax.f32 %v4370, 0.0
  %v4720 = vmax.f32 %v4373, 0.0
  %v4721 = vmax.f32 %v4376, 0.0
  %v4722 = vmax.f32 %v4379, 0.0
  %v4723 = vmax.f32 %v4382, 0.0
  %v4724 = vmax.f32 %v4385, 0.0
  %v4725 = vmax.f32 %v4388, 0.0
  %v4726 = vmax.f32 %v4391, 0.0
  %v4727 = vmax.f32 %v4394, 0.0
  %v4728 = vmax.f32 %v4397, 0.0
  %v4729 = vmax.f32 %v4400, 0.0
  %v4730 = vmax.f32 %v4403, 0.0
  %v4731 = vmax.f32 %v4406, 0.0
  %v4732 = vmax.f32 %v4409, 0.0
  %v4733 = vmax.f32 %v4412, 0.0
  %v4734 = vmax.f32 %v4415, 0.0
  %v4735 = vmax.f32 %v4418, 0.0
  %v4736 = vmax.f32 %v4421, 0.0
  %v4737 = vmax.f32 %v4424, 0.0
  %v4738 = vmax.f32 %v4427, 0.0
  %v4739 = vmax.f32 %v4430, 0.0
  %v4740 = vmax.f32 %v4433, 0.0
  %v4741 = vmax.f32 %v4436, 0.0
  %v4742 = vmax.f32 %v4439, 0.0
  %v4743 = vmax.f32 %v4442, 0.0
  %v4744 = vmax.f32 %v4445, 0.0
  %v4745 = vmax.f32 %v4448, 0.0
  %v4746 = vmax.f32 %v4451, 0.0
  %v4747 = vmax.f32 %v4454, 0.0
  %v4748 = vmax.f32 %v4457, 0.0
  %v4749 = vmax.f32 %v4460, 0.0
  %v4750 = vmax.f32 %v4463, 0.0
  %v4751 = vmax.f32 %v4466, 0.0
  %v4752 = vmax.f32 %v4469, 0.0
  %v4753 = vmax.f32 %v4472, 0.0
  %v4754 = vmax.f32 %v4475, 0.0
  %v4755 = vmax.f32 %v4478, 0.0
  %v4756 = vmax.f32 %v4481, 0.0
  %v4757 = vmax.f32 %v4484, 0.0
  %v4758 = vmax.f32 %v4487, 0.0
  %v4759 = vmax.f32 %v4490, 0.0
  %v4760 = vmax.f32 %v4493, 0.0
  %v4761 = vmax.f32 %v4496, 0.0
  %v4762 = vmax.f32 %v4499, 0.0
  %v4763 = vmax.f32 %v4502, 0.0
  %v4764 = vmax.f32 %v4505, 0.0
  %v4765 = vmax.f32 %v4508, 0.0
  %v4766 = vmax.f32 %v4511, 0.0
  %v4767 = vmax.f32 %v4514, 0.0
  %v4768 = vmax.f32 %v4517, 0.0
  %v4769 = vmax.f32 %v4520, 0.0
  %v4770 = vmax.f32 %v4523, 0.0
  %v4771 = vmax.f32 %v4526, 0.0
  %v4772 = vmax.f32 %v4529, 0.0
  %v4773 = vmax.f32 %v4532, 0.0
  %v4774 = vmax.f32 %v4535, 0.0
  %v4775 = vmax.f32 %v4538, 0.0
  %v4776 = vmax.f32 %v4541, 0.0
  %v4777 = vmax.f32 %v4544, 0.0
  %v4778 = vmax.f32 %v4547, 0.0
  %v4779 = vmax.f32 %v4550, 0.0
  %v4780 = vmax.f32 %v4553, 0.0
  %v4781 = vmax.f32 %v4556, 0.0
  %v4782 = vmax.f32 %v4559, 0.0
  %v4783 = vmax.f32 %v4562, 0.0
  %v4784 = vmax.f32 %v4565, 0.0
  %v4785 = vmax.f32 %v4568, 0.0
  %v4786 = vmax.f32 %v4571, 0.0
  %v4787 = vmax.f32 %v4574, 0.0
  %v4788 = vmax.f32 %v4577, 0.0
  %v4789 = vmax.f32 %v4580, 0.0
  %v4790 = vmax.f32 %v4583, 0.0
  %v4791 = vmax.f32 %v4586, 0.0
  %v4792 = vmax.f32 %v4589, 0.0
  %v4793 = vmax.f32 %v4592, 0.0
  %v4794 = vmax.f32 %v4595, 0.0
  %v4795 = vmax.f32 %v4598, 0.0
  %v4796 = vmax.f32 %v4601, 0.0
  %v4797 = vmax.f32 %v4604, 0.0
  %v4798 = vmax.f32 %v4607, 0.0
  %v4799 = vmax.f32 %v4610, 0.0
  %v4800 = vmax.f32 %v4613, 0.0
  %v4801 = vmax.f32 %v4616, 0.0
  %v4802 = vmax.f32 %v4619, 0.0
  %v4803 = vmax.f32 %v4622, 0.0
  %v4804 = vmax.f32 %v4625, 0.0
  %v4805 = vmax.f32 %v4628, 0.0
  %v4806 = vmax.f32 %v4631, 0.0
  %v4807 = vmax.f32 %v4634, 0.0
  %v4808 = vmax.f32 %v4637, 0.0
  %v4809 = vmax.f32 %v4640, 0.0
  %v4810 = vmax.f32 %v4643, 0.0
  %v4811 = vmax.f32 %v4646, 0.0
  %v4812 = vmax.f32 %v4649, 0.0
  %v4813 = vmax.f32 %v4652, 0.0
  %v4814 = vld [vmem:[%s6] sm:$0xff]
  %v4815 = vld [vmem:[%s6 + $0x8] sm:$0xff]
  %v4816 = vld [vmem:[%s6 + $0x10] sm:$0xff]
  %v4817 = vld [vmem:[%s6 + $0x18] sm:$0xff]
  %v4818 = vld [vmem:[%s6 + $0x20] sm:$0xff]
  %v4819 = vld [vmem:[%s6 + $0x28] sm:$0xff]
  %v4820 = vld [vmem:[%s6 + $0x30] sm:$0xff]
  %v4821 = vld [vmem:[%s6 + $0x38] sm:$0xff]
  %v4822 = vld [vmem:[%s6 + $0x40] sm:$0xff]
  %v4823 = vld [vmem:[%s6 + $0x48] sm:$0xff]
  %v4824 = vld [vmem:[%s6 + $0x50] sm:$0xff]
  %v4825 = vld [vmem:[%s6 + $0x58] sm:$0xff]
  %v4826 = vld [vmem:[%s6 + $0x60] sm:$0xff]
  %v4827 = vld [vmem:[%s6 + $0x68] sm:$0xff]
  %v4828 = vld [vmem:[%s6 + $0x70] sm:$0xff]
  %v4829 = vld [vmem:[%s6 + $0x78] sm:$0xff]
  %v4830 = vld [vmem:[%s6 + $0x80] sm:$0xff]
  %v4831 = vld [vmem:[%s6 + $0x88] sm:$0xff]
  %v4832 = vld [vmem:[%s6 + $0x90] sm:$0xff]
  %v4833 = vld [vmem:[%s6 + $0x98] sm:$0xff]
  %v4834 = vld [vmem:[%s6 + $0xa0] sm:$0xff]
  %v4835 = vld [vmem:[%s6 + $0xa8] sm:$0xff]
  %v4836 = vld [vmem:[%s6 + $0xb0] sm:$0xff]
  %v4837 = vld [vmem:[%s6 + $0xb8] sm:$0xff]
  %v4838 = vld [vmem:[%s6 + $0xc0] sm:$0xff]
  %v4839 = vld [vmem:[%s6 + $0xc8] sm:$0xff]
  %v4840 = vld [vmem:[%s6 + $0xd0] sm:$0xff]
  %v4841 = vld [vmem:[%s6 + $0xd8] sm:$0xff]
  %v4842 = vld [vmem:[%s6 + $0xe0] sm:$0xff]
  %v4843 = vld [vmem:[%s6 + $0xe8] sm:$0xff]
  %v4844 = vld [vmem:[%s6 + $0xf0] sm:$0xff]
  %v4845 = vld [vmem:[%s6 + $0xf8] sm:$0xff]
  %v4846 = vld [vmem:[%s6 + $0x100] sm:$0xff]
  %v4847 = vld [vmem:[%s6 + $0x108] sm:$0xff]
  %v4848 = vld [vmem:[%s6 + $0x110] sm:$0xff]
  %v4849 = vld [vmem:[%s6 + $0x118] sm:$0xff]
  %v4850 = vld [vmem:[%s6 + $0x120] sm:$0xff]
  %v4851 = vld [vmem:[%s6 + $0x128] sm:$0xff]
  %v4852 = vld [vmem:[%s6 + $0x130] sm:$0xff]
  %v4853 = vld [vmem:[%s6 + $0x138] sm:$0xff]
  %v4854 = vld [vmem:[%s6 + $0x140] sm:$0xff]
  %v4855 = vld [vmem:[%s6 + $0x148] sm:$0xff]
  %v4856 = vld [vmem:[%s6 + $0x150] sm:$0xff]
  %v4857 = vld [vmem:[%s6 + $0x158] sm:$0xff]
  %v4858 = vld [vmem:[%s6 + $0x160] sm:$0xff]
  %v4859 = vld [vmem:[%s6 + $0x168] sm:$0xff]
  %v4860 = vld [vmem:[%s6 + $0x170] sm:$0xff]
  %v4861 = vld [vmem:[%s6 + $0x178] sm:$0xff]
  %v4862 = vld [vmem:[%s6 + $0x180] sm:$0xff]
  %v4863 = vld [vmem:[%s6 + $0x188] sm:$0xff]
  %v4864 = vld [vmem:[%s6 + $0x190] sm:$0xff]
  %v4865 = vld [vmem:[%s6 + $0x198] sm:$0xff]
  %v4866 = vld [vmem:[%s6 + $0x1a0] sm:$0xff]
  %v4867 = vld [vmem:[%s6 + $0x1a8] sm:$0xff]
  %v4868 = vld [vmem:[%s6 + $0x1b0] sm:$0xff]
  %v4869 = vld [vmem:[%s6 + $0x1b8] sm:$0xff]
  %v4870 = vld [vmem:[%s6 + $0x1c0] sm:$0xff]
  %v4871 = vld [vmem:[%s6 + $0x1c8] sm:$0xff]
  %v4872 = vld [vmem:[%s6 + $0x1d0] sm:$0xff]
  %v4873 = vld [vmem:[%s6 + $0x1d8] sm:$0xff]
  %v4874 = vld [vmem:[%s6 + $0x1e0] sm:$0xff]
  %v4875 = vld [vmem:[%s6 + $0x1e8] sm:$0xff]
  %v4876 = vld [vmem:[%s6 + $0x1f0] sm:$0xff]
  %v4877 = vld [vmem:[%s6 + $0x1f8] sm:$0xff]
  %v4878 = vld [vmem:[%s6 + $0x200] sm:$0xff]
  %v4879 = vld [vmem:[%s6 + $0x208] sm:$0xff]
  %v4880 = vld [vmem:[%s6 + $0x210] sm:$0xff]
  %v4881 = vld [vmem:[%s6 + $0x218] sm:$0xff]
  %v4882 = vld [vmem:[%s6 + $0x220] sm:$0xff]
  %v4883 = vld [vmem:[%s6 + $0x228] sm:$0xff]
  %v4884 = vld [vmem:[%s6 + $0x230] sm:$0xff]
  %v4885 = vld [vmem:[%s6 + $0x238] sm:$0xff]
  %v4886 = vld [vmem:[%s6 + $0x240] sm:$0xff]
  %v4887 = vld [vmem:[%s6 + $0x248] sm:$0xff]
  %v4888 = vld [vmem:[%s6 + $0x250] sm:$0xff]
  %v4889 = vld [vmem:[%s6 + $0x258] sm:$0xff]
  %v4890 = vld [vmem:[%s6 + $0x260] sm:$0xff]
  %v4891 = vld [vmem:[%s6 + $0x268] sm:$0xff]
  %v4892 = vld [vmem:[%s6 + $0x270] sm:$0xff]
  %v4893 = vld [vmem:[%s6 + $0x278] sm:$0xff]
  %v4894 = vld [vmem:[%s6 + $0x280] sm:$0xff]
  %v4895 = vld [vmem:[%s6 + $0x288] sm:$0xff]
  %v4896 = vld [vmem:[%s6 + $0x290] sm:$0xff]
  %v4897 = vld [vmem:[%s6 + $0x298] sm:$0xff]
  %v4898 = vld [vmem:[%s6 + $0x2a0] sm:$0xff]
  %v4899 = vld [vmem:[%s6 + $0x2a8] sm:$0xff]
  %v4900 = vld [vmem:[%s6 + $0x2b0] sm:$0xff]
  %v4901 = vld [vmem:[%s6 + $0x2b8] sm:$0xff]
  %v4902 = vld [vmem:[%s6 + $0x2c0] sm:$0xff]
  %v4903 = vld [vmem:[%s6 + $0x2c8] sm:$0xff]
  %v4904 = vld [vmem:[%s6 + $0x2d0] sm:$0xff]
  %v4905 = vld [vmem:[%s6 + $0x2d8] sm:$0xff]
  %v4906 = vld [vmem:[%s6 + $0x2e0] sm:$0xff]
  %v4907 = vld [vmem:[%s6 + $0x2e8] sm:$0xff]
  %v4908 = vld [vmem:[%s6 + $0x2f0] sm:$0xff]
  %v4909 = vld [vmem:[%s6 + $0x2f8] sm:$0xff]
  %v4910 = vld [vmem:[%s6 + $0x300] sm:$0xff]
  %v4911 = vld [vmem:[%s6 + $0x308] sm:$0xff]
  %v4912 = vld [vmem:[%s6 + $0x310] sm:$0xff]
  %v4913 = vld [vmem:[%s6 + $0x318] sm:$0xff]
  %v4914 = vld [vmem:[%s6 + $0x320] sm:$0xff]
  %v4915 = vld [vmem:[%s6 + $0x328] sm:$0xff]
  %v4916 = vld [vmem:[%s6 + $0x330] sm:$0xff]
  %v4917 = vld [vmem:[%s6 + $0x338] sm:$0xff]
  %v4918 = vld [vmem:[%s6 + $0x340] sm:$0xff]
  %v4919 = vld [vmem:[%s6 + $0x348] sm:$0xff]
  %v4920 = vld [vmem:[%s6 + $0x350] sm:$0xff]
  %v4921 = vld [vmem:[%s6 + $0x358] sm:$0xff]
  %v4922 = vld [vmem:[%s6 + $0x360] sm:$0xff]
  %v4923 = vld [vmem:[%s6 + $0x368] sm:$0xff]
  %v4924 = vld [vmem:[%s6 + $0x370] sm:$0xff]
  %v4925 = vld [vmem:[%s6 + $0x378] sm:$0xff]
  %v4926 = vld [vmem:[%s6 + $0x380] sm:$0xff]
  %v4927 = vld [vmem:[%s6 + $0x388] sm:$0xff]
  %v4928 = vld [vmem:[%s6 + $0x390] sm:$0xff]
  %v4929 = vld [vmem:[%s6 + $0x398] sm:$0xff]
  %v4930 = vld [vmem:[%s6 + $0x3a0] sm:$0xff]
  %v4931 = vld [vmem:[%s6 + $0x3a8] sm:$0xff]
  %v4932 = vld [vmem:[%s6 + $0x3b0] sm:$0xff]
  %v4933 = vld [vmem:[%s6 + $0x3b8] sm:$0xff]
  %v4934 = vld [vmem:[%s6 + $0x3c0] sm:$0xff]
  %v4935 = vld [vmem:[%s6 + $0x3c8] sm:$0xff]
  %v4936 = vld [vmem:[%s6 + $0x3d0] sm:$0xff]
  %v4937 = vld [vmem:[%s6 + $0x3d8] sm:$0xff]
  %v4938 = vld [vmem:[%s6 + $0x3e0] sm:$0xff]
  %v4939 = vld [vmem:[%s6 + $0x3e8] sm:$0xff]
  %v4940 = vld [vmem:[%s6 + $0x3f0] sm:$0xff]
  %v4941 = vld [vmem:[%s6 + $0x3f8] sm:$0xff]
  %v4942 = vld [vmem:[%s6 + $0x400] sm:$0xff]
  %v4943 = vld [vmem:[%s6 + $0x408] sm:$0xff]
  %v4944 = vld [vmem:[%s6 + $0x410] sm:$0xff]
  %v4945 = vld [vmem:[%s6 + $0x418] sm:$0xff]
  %v4946 = vld [vmem:[%s6 + $0x420] sm:$0xff]
  %v4947 = vld [vmem:[%s6 + $0x428] sm:$0xff]
  %v4948 = vld [vmem:[%s6 + $0x430] sm:$0xff]
  %v4949 = vld [vmem:[%s6 + $0x438] sm:$0xff]
  %v4950 = vld [vmem:[%s6 + $0x440] sm:$0xff]
  %v4951 = vld [vmem:[%s6 + $0x448] sm:$0xff]
  %v4952 = vld [vmem:[%s6 + $0x450] sm:$0xff]
  %v4953 = vld [vmem:[%s6 + $0x458] sm:$0xff]
  %v4954 = vld [vmem:[%s6 + $0x460] sm:$0xff]
  %v4955 = vld [vmem:[%s6 + $0x468] sm:$0xff]
  %v4956 = vld [vmem:[%s6 + $0x470] sm:$0xff]
  %v4957 = vld [vmem:[%s6 + $0x478] sm:$0xff]
  %v4958 = vld [vmem:[%s6 + $0x480] sm:$0xff]
  %v4959 = vld [vmem:[%s6 + $0x488] sm:$0xff]
  %v4960 = vld [vmem:[%s6 + $0x490] sm:$0xff]
  %v4961 = vld [vmem:[%s6 + $0x498] sm:$0xff]
  %v4962 = vld [vmem:[%s6 + $0x4a0] sm:$0xff]
  %v4963 = vld [vmem:[%s6 + $0x4a8] sm:$0xff]
  %v4964 = vld [vmem:[%s6 + $0x4b0] sm:$0xff]
  %v4965 = vld [vmem:[%s6 + $0x4b8] sm:$0xff]
  %v4966 = vld [vmem:[%s6 + $0x4c0] sm:$0xff]
  %v4967 = vld [vmem:[%s6 + $0x4c8] sm:$0xff]
  %v4968 = vld [vmem:[%s6 + $0x4d0] sm:$0xff]
  %v4969 = vld [vmem:[%s6 + $0x4d8] sm:$0xff]
  %v4970 = vld [vmem:[%s6 + $0x4e0] sm:$0xff]
  %v4971 = vld [vmem:[%s6 + $0x4e8] sm:$0xff]
  %v4972 = vld [vmem:[%s6 + $0x4f0] sm:$0xff]
  %v4973 = vld [vmem:[%s6 + $0x4f8] sm:$0xff]
  %v4974 = vld [vmem:[%s6 + $0x500] sm:$0xff]
  %v4975 = vld [vmem:[%s6 + $0x508] sm:$0xff]
  %v4976 = vld [vmem:[%s6 + $0x510] sm:$0xff]
  %v4977 = vld [vmem:[%s6 + $0x518] sm:$0xff]
  %v4978 = vld [vmem:[%s6 + $0x520] sm:$0xff]
  %v4979 = vld [vmem:[%s6 + $0x528] sm:$0xff]
  %v4980 = vld [vmem:[%s6 + $0x530] sm:$0xff]
  %v4981 = vld [vmem:[%s6 + $0x538] sm:$0xff]
  %v4982 = vld [vmem:[%s6 + $0x540] sm:$0xff]
  %v4983 = vld [vmem:[%s6 + $0x548] sm:$0xff]
  %v4984 = vld [vmem:[%s6 + $0x550] sm:$0xff]
  %v4985 = vld [vmem:[%s6 + $0x558] sm:$0xff]
  %v4986 = vld [vmem:[%s6 + $0x560] sm:$0xff]
  %v4987 = vld [vmem:[%s6 + $0x568] sm:$0xff]
  %v4988 = vld [vmem:[%s6 + $0x570] sm:$0xff]
  %v4989 = vld [vmem:[%s6 + $0x578] sm:$0xff]
  %v4990 = vld [vmem:[%s6 + $0x580] sm:$0xff]
  %v4991 = vld [vmem:[%s6 + $0x588] sm:$0xff]
  %v4992 = vld [vmem:[%s6 + $0x590] sm:$0xff]
  %v4993 = vld [vmem:[%s6 + $0x598] sm:$0xff]
  %v4994 = vld [vmem:[%s6 + $0x5a0] sm:$0xff]
  %v4995 = vld [vmem:[%s6 + $0x5a8] sm:$0xff]
  %v4996 = vld [vmem:[%s6 + $0x5b0] sm:$0xff]
  %v4997 = vld [vmem:[%s6 + $0x5b8] sm:$0xff]
  %v4998 = vld [vmem:[%s6 + $0x5c0] sm:$0xff]
  %v4999 = vld [vmem:[%s6 + $0x5c8] sm:$0xff]
  %v5000 = vld [vmem:[%s6 + $0x5d0] sm:$0xff]
  %v5001 = vld [vmem:[%s6 + $0x5d8] sm:$0xff]
  %v5002 = vld [vmem:[%s6 + $0x5e0] sm:$0xff]
  %v5003 = vld [vmem:[%s6 + $0x5e8] sm:$0xff]
  %v5004 = vld [vmem:[%s6 + $0x5f0] sm:$0xff]
  %v5005 = vld [vmem:[%s6 + $0x5f8] sm:$0xff]
  %v5006 = vld [vmem:[%s6 + $0x600] sm:$0xff]
  %v5007 = vld [vmem:[%s6 + $0x608] sm:$0xff]
  %v5008 = vld [vmem:[%s6 + $0x610] sm:$0xff]
  %v5009 = vld [vmem:[%s6 + $0x618] sm:$0xff]
  %v5010 = vld [vmem:[%s6 + $0x620] sm:$0xff]
  %v5011 = vld [vmem:[%s6 + $0x628] sm:$0xff]
  %v5012 = vld [vmem:[%s6 + $0x630] sm:$0xff]
  %v5013 = vld [vmem:[%s6 + $0x638] sm:$0xff]
  %v5014 = vld [vmem:[%s6 + $0x640] sm:$0xff]
  %v5015 = vld [vmem:[%s6 + $0x648] sm:$0xff]
  %v5016 = vld [vmem:[%s6 + $0x650] sm:$0xff]
  %v5017 = vld [vmem:[%s6 + $0x658] sm:$0xff]
  %v5018 = vld [vmem:[%s6 + $0x660] sm:$0xff]
  %v5019 = vld [vmem:[%s6 + $0x668] sm:$0xff]
  %v5020 = vld [vmem:[%s6 + $0x670] sm:$0xff]
  %v5021 = vld [vmem:[%s6 + $0x678] sm:$0xff]
  %v5022 = vld [vmem:[%s6 + $0x680] sm:$0xff]
  %v5023 = vld [vmem:[%s6 + $0x688] sm:$0xff]
  %v5024 = vld [vmem:[%s6 + $0x690] sm:$0xff]
  %v5025 = vld [vmem:[%s6 + $0x698] sm:$0xff]
  %v5026 = vld [vmem:[%s6 + $0x6a0] sm:$0xff]
  %v5027 = vld [vmem:[%s6 + $0x6a8] sm:$0xff]
  %v5028 = vld [vmem:[%s6 + $0x6b0] sm:$0xff]
  %v5029 = vld [vmem:[%s6 + $0x6b8] sm:$0xff]
  %v5030 = vld [vmem:[%s6 + $0x6c0] sm:$0xff]
  %v5031 = vld [vmem:[%s6 + $0x6c8] sm:$0xff]
  %v5032 = vld [vmem:[%s6 + $0x6d0] sm:$0xff]
  %v5033 = vld [vmem:[%s6 + $0x6d8] sm:$0xff]
  %v5034 = vld [vmem:[%s6 + $0x6e0] sm:$0xff]
  %v5035 = vld [vmem:[%s6 + $0x6e8] sm:$0xff]
  %v5036 = vld [vmem:[%s6 + $0x6f0] sm:$0xff]
  %v5037 = vld [vmem:[%s6 + $0x6f8] sm:$0xff]
  %v5038 = vld [vmem:[%s6 + $0x700] sm:$0xff]
  %v5039 = vld [vmem:[%s6 + $0x708] sm:$0xff]
  %v5040 = vld [vmem:[%s6 + $0x710] sm:$0xff]
  %v5041 = vld [vmem:[%s6 + $0x718] sm:$0xff]
  %v5042 = vld [vmem:[%s6 + $0x720] sm:$0xff]
  %v5043 = vld [vmem:[%s6 + $0x728] sm:$0xff]
  %v5044 = vld [vmem:[%s6 + $0x730] sm:$0xff]
  %v5045 = vld [vmem:[%s6 + $0x738] sm:$0xff]
  %v5046 = vld [vmem:[%s6 + $0x740] sm:$0xff]
  %v5047 = vld [vmem:[%s6 + $0x748] sm:$0xff]
  %v5048 = vld [vmem:[%s6 + $0x750] sm:$0xff]
  %v5049 = vld [vmem:[%s6 + $0x758] sm:$0xff]
  %v5050 = vld [vmem:[%s6 + $0x760] sm:$0xff]
  %v5051 = vld [vmem:[%s6 + $0x768] sm:$0xff]
  %v5052 = vld [vmem:[%s6 + $0x770] sm:$0xff]
  %v5053 = vld [vmem:[%s6 + $0x778] sm:$0xff]
  %v5054 = vld [vmem:[%s6 + $0x780] sm:$0xff]
  %v5055 = vld [vmem:[%s6 + $0x788] sm:$0xff]
  %v5056 = vld [vmem:[%s6 + $0x790] sm:$0xff]
  %v5057 = vld [vmem:[%s6 + $0x798] sm:$0xff]
  %v5058 = vld [vmem:[%s6 + $0x7a0] sm:$0xff]
  %v5059 = vld [vmem:[%s6 + $0x7a8] sm:$0xff]
  %v5060 = vld [vmem:[%s6 + $0x7b0] sm:$0xff]
  %v5061 = vld [vmem:[%s6 + $0x7b8] sm:$0xff]
  %v5062 = vld [vmem:[%s6 + $0x7c0] sm:$0xff]
  %v5063 = vld [vmem:[%s6 + $0x7c8] sm:$0xff]
  %v5064 = vld [vmem:[%s6 + $0x7d0] sm:$0xff]
  %v5065 = vld [vmem:[%s6 + $0x7d8] sm:$0xff]
  %v5066 = vld [vmem:[%s6 + $0x7e0] sm:$0xff]
  %v5067 = vld [vmem:[%s6 + $0x7e8] sm:$0xff]
  %v5068 = vld [vmem:[%s6 + $0x7f0] sm:$0xff]
  %v5069 = vld [vmem:[%s6 + $0x7f8] sm:$0xff]
  %v5070 = vld [vmem:[%s6 + $0x800] sm:$0xff]
  %v5071 = vld [vmem:[%s6 + $0x808] sm:$0xff]
  %v5072 = vld [vmem:[%s6 + $0x810] sm:$0xff]
  %v5073 = vld [vmem:[%s6 + $0x818] sm:$0xff]
  %v5074 = vld [vmem:[%s6 + $0x820] sm:$0xff]
  %v5075 = vld [vmem:[%s6 + $0x828] sm:$0xff]
  %v5076 = vld [vmem:[%s6 + $0x830] sm:$0xff]
  %v5077 = vld [vmem:[%s6 + $0x838] sm:$0xff]
  %v5078 = vld [vmem:[%s6 + $0x840] sm:$0xff]
  %v5079 = vld [vmem:[%s6 + $0x848] sm:$0xff]
  %v5080 = vld [vmem:[%s6 + $0x850] sm:$0xff]
  %v5081 = vld [vmem:[%s6 + $0x858] sm:$0xff]
  %v5082 = vld [vmem:[%s6 + $0x860] sm:$0xff]
  %v5083 = vld [vmem:[%s6 + $0x868] sm:$0xff]
  %v5084 = vld [vmem:[%s6 + $0x870] sm:$0xff]
  %v5085 = vld [vmem:[%s6 + $0x878] sm:$0xff]
  %v5086 = vld [vmem:[%s6 + $0x880] sm:$0xff]
  %v5087 = vld [vmem:[%s6 + $0x888] sm:$0xff]
  %v5088 = vld [vmem:[%s6 + $0x890] sm:$0xff]
  %v5089 = vld [vmem:[%s6 + $0x898] sm:$0xff]
  %v5090 = vld [vmem:[%s6 + $0x8a0] sm:$0xff]
  %v5091 = vld [vmem:[%s6 + $0x8a8] sm:$0xff]
  %v5092 = vld [vmem:[%s6 + $0x8b0] sm:$0xff]
  %v5093 = vld [vmem:[%s6 + $0x8b8] sm:$0xff]
  %v5094 = vld [vmem:[%s6 + $0x8c0] sm:$0xff]
  %v5095 = vld [vmem:[%s6 + $0x8c8] sm:$0xff]
  %v5096 = vld [vmem:[%s6 + $0x8d0] sm:$0xff]
  %v5097 = vld [vmem:[%s6 + $0x8d8] sm:$0xff]
  %v5098 = vld [vmem:[%s6 + $0x8e0] sm:$0xff]
  %v5099 = vld [vmem:[%s6 + $0x8e8] sm:$0xff]
  %v5100 = vld [vmem:[%s6 + $0x8f0] sm:$0xff]
  %v5101 = vld [vmem:[%s6 + $0x8f8] sm:$0xff]
  %v5102 = vld [vmem:[%s6 + $0x900] sm:$0xff]
  %v5103 = vld [vmem:[%s6 + $0x908] sm:$0xff]
  %v5104 = vld [vmem:[%s6 + $0x910] sm:$0xff]
  %v5105 = vld [vmem:[%s6 + $0x918] sm:$0xff]
  %v5106 = vld [vmem:[%s6 + $0x920] sm:$0xff]
  %v5107 = vld [vmem:[%s6 + $0x928] sm:$0xff]
  %v5108 = vld [vmem:[%s6 + $0x930] sm:$0xff]
  %v5109 = vld [vmem:[%s6 + $0x938] sm:$0xff]
  %v5110 = vld [vmem:[%s6 + $0x940] sm:$0xff]
  %v5111 = vld [vmem:[%s6 + $0x948] sm:$0xff]
  %v5112 = vld [vmem:[%s6 + $0x950] sm:$0xff]
  %v5113 = vld [vmem:[%s6 + $0x958] sm:$0xff]
  %v5114 = vld [vmem:[%s6 + $0x960] sm:$0xff]
  %v5115 = vld [vmem:[%s6 + $0x968] sm:$0xff]
  %v5116 = vld [vmem:[%s6 + $0x970] sm:$0xff]
  %v5117 = vld [vmem:[%s6 + $0x978] sm:$0xff]
  %v5118 = vld [vmem:[%s6 + $0x980] sm:$0xff]
  %v5119 = vld [vmem:[%s6 + $0x988] sm:$0xff]
  %v5120 = vld [vmem:[%s6 + $0x990] sm:$0xff]
  %v5121 = vld [vmem:[%s6 + $0x998] sm:$0xff]
  %v5122 = vld [vmem:[%s6 + $0x9a0] sm:$0xff]
  %v5123 = vld [vmem:[%s6 + $0x9a8] sm:$0xff]
  %v5124 = vld [vmem:[%s6 + $0x9b0] sm:$0xff]
  %v5125 = vld [vmem:[%s6 + $0x9b8] sm:$0xff]
  %v5126 = vld [vmem:[%s6 + $0x9c0] sm:$0xff]
  %v5127 = vld [vmem:[%s6 + $0x9c8] sm:$0xff]
  %v5128 = vld [vmem:[%s6 + $0x9d0] sm:$0xff]
  %v5129 = vld [vmem:[%s6 + $0x9d8] sm:$0xff]
  %v5130 = vld [vmem:[%s6 + $0x9e0] sm:$0xff]
  %v5131 = vld [vmem:[%s6 + $0x9e8] sm:$0xff]
  %v5132 = vld [vmem:[%s6 + $0x9f0] sm:$0xff]
  %v5133 = vld [vmem:[%s6 + $0x9f8] sm:$0xff]
  %vm5134 = vcmask 130048
  %v5136 = vsel %vm5134, %v4654, 0
  %5138 = vmatpush.msra.mxu0 0.0
  %5139 = vmatpush.msra.mxu0 0.0
  %5140 = vmatpush.msra.mxu0 0.0
  %5141 = vmatpush.msra.mxu0 0.0
  %5142 = vmatpush.msra.mxu0 0.0
  %5143 = vmatpush.msra.mxu0 0.0
  %5144 = vmatpush.msra.mxu0 0.0
  %5145 = vmatpush.msra.mxu0 0.0
  %5146 = vmatpush.msra.mxu0 0.0
  %5147 = vmatpush.msra.mxu0 0.0
  %5148 = vmatpush.msra.mxu0 0.0
  %5149 = vmatpush.msra.mxu0 0.0
  %5150 = vmatpush.msra.mxu0 0.0
  %5151 = vmatpush.msra.mxu0 0.0
  %5152 = vmatpush.msra.mxu0 %v4815
  %5153 = vmatpush.msra.mxu0 %v4814
  %5154 = vmatmul.f32.gmra.mxu0 %v5136
  %v5155 = vpop.f32.mrf.mxu0
  %v5156 = vadd.f32 0.0, %v5155
  %5157 = vdwg.mxu0
  %v5159 = vsel %vm5134, %v4655, 0
  %5161 = vmatpush.msra.mxu0 0.0
  %5162 = vmatpush.msra.mxu0 0.0
  %5163 = vmatpush.msra.mxu0 0.0
  %5164 = vmatpush.msra.mxu0 0.0
  %5165 = vmatpush.msra.mxu0 0.0
  %5166 = vmatpush.msra.mxu0 0.0
  %5167 = vmatpush.msra.mxu0 0.0
  %5168 = vmatpush.msra.mxu0 0.0
  %5169 = vmatpush.msra.mxu0 0.0
  %5170 = vmatpush.msra.mxu0 0.0
  %5171 = vmatpush.msra.mxu0 0.0
  %5172 = vmatpush.msra.mxu0 0.0
  %5173 = vmatpush.msra.mxu0 0.0
  %5174 = vmatpush.msra.mxu0 0.0
  %5175 = vmatpush.msra.mxu0 %v4817
  %5176 = vmatpush.msra.mxu0 %v4816
  %5177 = vmatmul.f32.gmra.mxu0 %v5159
  %v5178 = vpop.f32.mrf.mxu0
  %v5179 = vadd.f32 0.0, %v5178
  %5180 = vdwg.mxu0
  %v5182 = vsel %vm5134, %v4656, 0
  %5184 = vmatpush.msra.mxu0 0.0
  %5185 = vmatpush.msra.mxu0 0.0
  %5186 = vmatpush.msra.mxu0 0.0
  %5187 = vmatpush.msra.mxu0 0.0
  %5188 = vmatpush.msra.mxu0 0.0
  %5189 = vmatpush.msra.mxu0 0.0
  %5190 = vmatpush.msra.mxu0 0.0
  %5191 = vmatpush.msra.mxu0 0.0
  %5192 = vmatpush.msra.mxu0 0.0
  %5193 = vmatpush.msra.mxu0 0.0
  %5194 = vmatpush.msra.mxu0 0.0
  %5195 = vmatpush.msra.mxu0 0.0
  %5196 = vmatpush.msra.mxu0 0.0
  %5197 = vmatpush.msra.mxu0 0.0
  %5198 = vmatpush.msra.mxu0 %v4819
  %5199 = vmatpush.msra.mxu0 %v4818
  %5200 = vmatmul.f32.gmra.mxu0 %v5182
  %v5201 = vpop.f32.mrf.mxu0
  %v5202 = vadd.f32 0.0, %v5201
  %5203 = vdwg.mxu0
  %v5205 = vsel %vm5134, %v4657, 0
  %5207 = vmatpush.msra.mxu0 0.0
  %5208 = vmatpush.msra.mxu0 0.0
  %5209 = vmatpush.msra.mxu0 0.0
  %5210 = vmatpush.msra.mxu0 0.0
  %5211 = vmatpush.msra.mxu0 0.0
  %5212 = vmatpush.msra.mxu0 0.0
  %5213 = vmatpush.msra.mxu0 0.0
  %5214 = vmatpush.msra.mxu0 0.0
  %5215 = vmatpush.msra.mxu0 0.0
  %5216 = vmatpush.msra.mxu0 0.0
  %5217 = vmatpush.msra.mxu0 0.0
  %5218 = vmatpush.msra.mxu0 0.0
  %5219 = vmatpush.msra.mxu0 0.0
  %5220 = vmatpush.msra.mxu0 0.0
  %5221 = vmatpush.msra.mxu0 %v4821
  %5222 = vmatpush.msra.mxu0 %v4820
  %5223 = vmatmul.f32.gmra.mxu0 %v5205
  %v5224 = vpop.f32.mrf.mxu0
  %v5225 = vadd.f32 0.0, %v5224
  %5226 = vdwg.mxu0
  %v5228 = vsel %vm5134, %v4658, 0
  %5230 = vmatpush.msra.mxu0 0.0
  %5231 = vmatpush.msra.mxu0 0.0
  %5232 = vmatpush.msra.mxu0 0.0
  %5233 = vmatpush.msra.mxu0 0.0
  %5234 = vmatpush.msra.mxu0 0.0
  %5235 = vmatpush.msra.mxu0 0.0
  %5236 = vmatpush.msra.mxu0 0.0
  %5237 = vmatpush.msra.mxu0 0.0
  %5238 = vmatpush.msra.mxu0 0.0
  %5239 = vmatpush.msra.mxu0 0.0
  %5240 = vmatpush.msra.mxu0 0.0
  %5241 = vmatpush.msra.mxu0 0.0
  %5242 = vmatpush.msra.mxu0 0.0
  %5243 = vmatpush.msra.mxu0 0.0
  %5244 = vmatpush.msra.mxu0 %v4823
  %5245 = vmatpush.msra.mxu0 %v4822
  %5246 = vmatmul.f32.gmra.mxu0 %v5228
  %v5247 = vpop.f32.mrf.mxu0
  %v5248 = vadd.f32 0.0, %v5247
  %5249 = vdwg.mxu0
  %v5251 = vsel %vm5134, %v4659, 0
  %5253 = vmatpush.msra.mxu0 0.0
  %5254 = vmatpush.msra.mxu0 0.0
  %5255 = vmatpush.msra.mxu0 0.0
  %5256 = vmatpush.msra.mxu0 0.0
  %5257 = vmatpush.msra.mxu0 0.0
  %5258 = vmatpush.msra.mxu0 0.0
  %5259 = vmatpush.msra.mxu0 0.0
  %5260 = vmatpush.msra.mxu0 0.0
  %5261 = vmatpush.msra.mxu0 0.0
  %5262 = vmatpush.msra.mxu0 0.0
  %5263 = vmatpush.msra.mxu0 0.0
  %5264 = vmatpush.msra.mxu0 0.0
  %5265 = vmatpush.msra.mxu0 0.0
  %5266 = vmatpush.msra.mxu0 0.0
  %5267 = vmatpush.msra.mxu0 %v4825
  %5268 = vmatpush.msra.mxu0 %v4824
  %5269 = vmatmul.f32.gmra.mxu0 %v5251
  %v5270 = vpop.f32.mrf.mxu0
  %v5271 = vadd.f32 0.0, %v5270
  %5272 = vdwg.mxu0
  %v5274 = vsel %vm5134, %v4660, 0
  %5276 = vmatpush.msra.mxu0 0.0
  %5277 = vmatpush.msra.mxu0 0.0
  %5278 = vmatpush.msra.mxu0 0.0
  %5279 = vmatpush.msra.mxu0 0.0
  %5280 = vmatpush.msra.mxu0 0.0
  %5281 = vmatpush.msra.mxu0 0.0
  %5282 = vmatpush.msra.mxu0 0.0
  %5283 = vmatpush.msra.mxu0 0.0
  %5284 = vmatpush.msra.mxu0 0.0
  %5285 = vmatpush.msra.mxu0 0.0
  %5286 = vmatpush.msra.mxu0 0.0
  %5287 = vmatpush.msra.mxu0 0.0
  %5288 = vmatpush.msra.mxu0 0.0
  %5289 = vmatpush.msra.mxu0 0.0
  %5290 = vmatpush.msra.mxu0 %v4827
  %5291 = vmatpush.msra.mxu0 %v4826
  %5292 = vmatmul.f32.gmra.mxu0 %v5274
  %v5293 = vpop.f32.mrf.mxu0
  %v5294 = vadd.f32 0.0, %v5293
  %5295 = vdwg.mxu0
  %v5297 = vsel %vm5134, %v4661, 0
  %5299 = vmatpush.msra.mxu0 0.0
  %5300 = vmatpush.msra.mxu0 0.0
  %5301 = vmatpush.msra.mxu0 0.0
  %5302 = vmatpush.msra.mxu0 0.0
  %5303 = vmatpush.msra.mxu0 0.0
  %5304 = vmatpush.msra.mxu0 0.0
  %5305 = vmatpush.msra.mxu0 0.0
  %5306 = vmatpush.msra.mxu0 0.0
  %5307 = vmatpush.msra.mxu0 0.0
  %5308 = vmatpush.msra.mxu0 0.0
  %5309 = vmatpush.msra.mxu0 0.0
  %5310 = vmatpush.msra.mxu0 0.0
  %5311 = vmatpush.msra.mxu0 0.0
  %5312 = vmatpush.msra.mxu0 0.0
  %5313 = vmatpush.msra.mxu0 %v4829
  %5314 = vmatpush.msra.mxu0 %v4828
  %5315 = vmatmul.f32.gmra.mxu0 %v5297
  %v5316 = vpop.f32.mrf.mxu0
  %v5317 = vadd.f32 0.0, %v5316
  %5318 = vdwg.mxu0
  %v5320 = vsel %vm5134, %v4662, 0
  %5322 = vmatpush.msra.mxu0 0.0
  %5323 = vmatpush.msra.mxu0 0.0
  %5324 = vmatpush.msra.mxu0 0.0
  %5325 = vmatpush.msra.mxu0 0.0
  %5326 = vmatpush.msra.mxu0 0.0
  %5327 = vmatpush.msra.mxu0 0.0
  %5328 = vmatpush.msra.mxu0 0.0
  %5329 = vmatpush.msra.mxu0 0.0
  %5330 = vmatpush.msra.mxu0 0.0
  %5331 = vmatpush.msra.mxu0 0.0
  %5332 = vmatpush.msra.mxu0 0.0
  %5333 = vmatpush.msra.mxu0 0.0
  %5334 = vmatpush.msra.mxu0 0.0
  %5335 = vmatpush.msra.mxu0 0.0
  %5336 = vmatpush.msra.mxu0 %v4831
  %5337 = vmatpush.msra.mxu0 %v4830
  %5338 = vmatmul.f32.gmra.mxu0 %v5320
  %v5339 = vpop.f32.mrf.mxu0
  %v5340 = vadd.f32 0.0, %v5339
  %5341 = vdwg.mxu0
  %v5343 = vsel %vm5134, %v4663, 0
  %5345 = vmatpush.msra.mxu0 0.0
  %5346 = vmatpush.msra.mxu0 0.0
  %5347 = vmatpush.msra.mxu0 0.0
  %5348 = vmatpush.msra.mxu0 0.0
  %5349 = vmatpush.msra.mxu0 0.0
  %5350 = vmatpush.msra.mxu0 0.0
  %5351 = vmatpush.msra.mxu0 0.0
  %5352 = vmatpush.msra.mxu0 0.0
  %5353 = vmatpush.msra.mxu0 0.0
  %5354 = vmatpush.msra.mxu0 0.0
  %5355 = vmatpush.msra.mxu0 0.0
  %5356 = vmatpush.msra.mxu0 0.0
  %5357 = vmatpush.msra.mxu0 0.0
  %5358 = vmatpush.msra.mxu0 0.0
  %5359 = vmatpush.msra.mxu0 %v4833
  %5360 = vmatpush.msra.mxu0 %v4832
  %5361 = vmatmul.f32.gmra.mxu0 %v5343
  %v5362 = vpop.f32.mrf.mxu0
  %v5363 = vadd.f32 0.0, %v5362
  %5364 = vdwg.mxu0
  %v5366 = vsel %vm5134, %v4664, 0
  %5368 = vmatpush.msra.mxu0 0.0
  %5369 = vmatpush.msra.mxu0 0.0
  %5370 = vmatpush.msra.mxu0 0.0
  %5371 = vmatpush.msra.mxu0 0.0
  %5372 = vmatpush.msra.mxu0 0.0
  %5373 = vmatpush.msra.mxu0 0.0
  %5374 = vmatpush.msra.mxu0 0.0
  %5375 = vmatpush.msra.mxu0 0.0
  %5376 = vmatpush.msra.mxu0 0.0
  %5377 = vmatpush.msra.mxu0 0.0
  %5378 = vmatpush.msra.mxu0 0.0
  %5379 = vmatpush.msra.mxu0 0.0
  %5380 = vmatpush.msra.mxu0 0.0
  %5381 = vmatpush.msra.mxu0 0.0
  %5382 = vmatpush.msra.mxu0 %v4835
  %5383 = vmatpush.msra.mxu0 %v4834
  %5384 = vmatmul.f32.gmra.mxu0 %v5366
  %v5385 = vpop.f32.mrf.mxu0
  %v5386 = vadd.f32 0.0, %v5385
  %5387 = vdwg.mxu0
  %v5389 = vsel %vm5134, %v4665, 0
  %5391 = vmatpush.msra.mxu0 0.0
  %5392 = vmatpush.msra.mxu0 0.0
  %5393 = vmatpush.msra.mxu0 0.0
  %5394 = vmatpush.msra.mxu0 0.0
  %5395 = vmatpush.msra.mxu0 0.0
  %5396 = vmatpush.msra.mxu0 0.0
  %5397 = vmatpush.msra.mxu0 0.0
  %5398 = vmatpush.msra.mxu0 0.0
  %5399 = vmatpush.msra.mxu0 0.0
  %5400 = vmatpush.msra.mxu0 0.0
  %5401 = vmatpush.msra.mxu0 0.0
  %5402 = vmatpush.msra.mxu0 0.0
  %5403 = vmatpush.msra.mxu0 0.0
  %5404 = vmatpush.msra.mxu0 0.0
  %5405 = vmatpush.msra.mxu0 %v4837
  %5406 = vmatpush.msra.mxu0 %v4836
  %5407 = vmatmul.f32.gmra.mxu0 %v5389
  %v5408 = vpop.f32.mrf.mxu0
  %v5409 = vadd.f32 0.0, %v5408
  %5410 = vdwg.mxu0
  %v5412 = vsel %vm5134, %v4666, 0
  %5414 = vmatpush.msra.mxu0 0.0
  %5415 = vmatpush.msra.mxu0 0.0
  %5416 = vmatpush.msra.mxu0 0.0
  %5417 = vmatpush.msra.mxu0 0.0
  %5418 = vmatpush.msra.mxu0 0.0
  %5419 = vmatpush.msra.mxu0 0.0
  %5420 = vmatpush.msra.mxu0 0.0
  %5421 = vmatpush.msra.mxu0 0.0
  %5422 = vmatpush.msra.mxu0 0.0
  %5423 = vmatpush.msra.mxu0 0.0
  %5424 = vmatpush.msra.mxu0 0.0
  %5425 = vmatpush.msra.mxu0 0.0
  %5426 = vmatpush.msra.mxu0 0.0
  %5427 = vmatpush.msra.mxu0 0.0
  %5428 = vmatpush.msra.mxu0 %v4839
  %5429 = vmatpush.msra.mxu0 %v4838
  %5430 = vmatmul.f32.gmra.mxu0 %v5412
  %v5431 = vpop.f32.mrf.mxu0
  %v5432 = vadd.f32 0.0, %v5431
  %5433 = vdwg.mxu0
  %v5435 = vsel %vm5134, %v4667, 0
  %5437 = vmatpush.msra.mxu0 0.0
  %5438 = vmatpush.msra.mxu0 0.0
  %5439 = vmatpush.msra.mxu0 0.0
  %5440 = vmatpush.msra.mxu0 0.0
  %5441 = vmatpush.msra.mxu0 0.0
  %5442 = vmatpush.msra.mxu0 0.0
  %5443 = vmatpush.msra.mxu0 0.0
  %5444 = vmatpush.msra.mxu0 0.0
  %5445 = vmatpush.msra.mxu0 0.0
  %5446 = vmatpush.msra.mxu0 0.0
  %5447 = vmatpush.msra.mxu0 0.0
  %5448 = vmatpush.msra.mxu0 0.0
  %5449 = vmatpush.msra.mxu0 0.0
  %5450 = vmatpush.msra.mxu0 0.0
  %5451 = vmatpush.msra.mxu0 %v4841
  %5452 = vmatpush.msra.mxu0 %v4840
  %5453 = vmatmul.f32.gmra.mxu0 %v5435
  %v5454 = vpop.f32.mrf.mxu0
  %v5455 = vadd.f32 0.0, %v5454
  %5456 = vdwg.mxu0
  %v5458 = vsel %vm5134, %v4668, 0
  %5460 = vmatpush.msra.mxu0 0.0
  %5461 = vmatpush.msra.mxu0 0.0
  %5462 = vmatpush.msra.mxu0 0.0
  %5463 = vmatpush.msra.mxu0 0.0
  %5464 = vmatpush.msra.mxu0 0.0
  %5465 = vmatpush.msra.mxu0 0.0
  %5466 = vmatpush.msra.mxu0 0.0
  %5467 = vmatpush.msra.mxu0 0.0
  %5468 = vmatpush.msra.mxu0 0.0
  %5469 = vmatpush.msra.mxu0 0.0
  %5470 = vmatpush.msra.mxu0 0.0
  %5471 = vmatpush.msra.mxu0 0.0
  %5472 = vmatpush.msra.mxu0 0.0
  %5473 = vmatpush.msra.mxu0 0.0
  %5474 = vmatpush.msra.mxu0 %v4843
  %5475 = vmatpush.msra.mxu0 %v4842
  %5476 = vmatmul.f32.gmra.mxu0 %v5458
  %v5477 = vpop.f32.mrf.mxu0
  %v5478 = vadd.f32 0.0, %v5477
  %5479 = vdwg.mxu0
  %v5481 = vsel %vm5134, %v4669, 0
  %5483 = vmatpush.msra.mxu0 0.0
  %5484 = vmatpush.msra.mxu0 0.0
  %5485 = vmatpush.msra.mxu0 0.0
  %5486 = vmatpush.msra.mxu0 0.0
  %5487 = vmatpush.msra.mxu0 0.0
  %5488 = vmatpush.msra.mxu0 0.0
  %5489 = vmatpush.msra.mxu0 0.0
  %5490 = vmatpush.msra.mxu0 0.0
  %5491 = vmatpush.msra.mxu0 0.0
  %5492 = vmatpush.msra.mxu0 0.0
  %5493 = vmatpush.msra.mxu0 0.0
  %5494 = vmatpush.msra.mxu0 0.0
  %5495 = vmatpush.msra.mxu0 0.0
  %5496 = vmatpush.msra.mxu0 0.0
  %5497 = vmatpush.msra.mxu0 %v4845
  %5498 = vmatpush.msra.mxu0 %v4844
  %5499 = vmatmul.f32.gmra.mxu0 %v5481
  %v5500 = vpop.f32.mrf.mxu0
  %v5501 = vadd.f32 0.0, %v5500
  %5502 = vdwg.mxu0
  %v5504 = vsel %vm5134, %v4670, 0
  %5506 = vmatpush.msra.mxu0 0.0
  %5507 = vmatpush.msra.mxu0 0.0
  %5508 = vmatpush.msra.mxu0 0.0
  %5509 = vmatpush.msra.mxu0 0.0
  %5510 = vmatpush.msra.mxu0 0.0
  %5511 = vmatpush.msra.mxu0 0.0
  %5512 = vmatpush.msra.mxu0 0.0
  %5513 = vmatpush.msra.mxu0 0.0
  %5514 = vmatpush.msra.mxu0 0.0
  %5515 = vmatpush.msra.mxu0 0.0
  %5516 = vmatpush.msra.mxu0 0.0
  %5517 = vmatpush.msra.mxu0 0.0
  %5518 = vmatpush.msra.mxu0 0.0
  %5519 = vmatpush.msra.mxu0 0.0
  %5520 = vmatpush.msra.mxu0 %v4847
  %5521 = vmatpush.msra.mxu0 %v4846
  %5522 = vmatmul.f32.gmra.mxu0 %v5504
  %v5523 = vpop.f32.mrf.mxu0
  %v5524 = vadd.f32 0.0, %v5523
  %5525 = vdwg.mxu0
  %v5527 = vsel %vm5134, %v4671, 0
  %5529 = vmatpush.msra.mxu0 0.0
  %5530 = vmatpush.msra.mxu0 0.0
  %5531 = vmatpush.msra.mxu0 0.0
  %5532 = vmatpush.msra.mxu0 0.0
  %5533 = vmatpush.msra.mxu0 0.0
  %5534 = vmatpush.msra.mxu0 0.0
  %5535 = vmatpush.msra.mxu0 0.0
  %5536 = vmatpush.msra.mxu0 0.0
  %5537 = vmatpush.msra.mxu0 0.0
  %5538 = vmatpush.msra.mxu0 0.0
  %5539 = vmatpush.msra.mxu0 0.0
  %5540 = vmatpush.msra.mxu0 0.0
  %5541 = vmatpush.msra.mxu0 0.0
  %5542 = vmatpush.msra.mxu0 0.0
  %5543 = vmatpush.msra.mxu0 %v4849
  %5544 = vmatpush.msra.mxu0 %v4848
  %5545 = vmatmul.f32.gmra.mxu0 %v5527
  %v5546 = vpop.f32.mrf.mxu0
  %v5547 = vadd.f32 0.0, %v5546
  %5548 = vdwg.mxu0
  %v5550 = vsel %vm5134, %v4672, 0
  %5552 = vmatpush.msra.mxu0 0.0
  %5553 = vmatpush.msra.mxu0 0.0
  %5554 = vmatpush.msra.mxu0 0.0
  %5555 = vmatpush.msra.mxu0 0.0
  %5556 = vmatpush.msra.mxu0 0.0
  %5557 = vmatpush.msra.mxu0 0.0
  %5558 = vmatpush.msra.mxu0 0.0
  %5559 = vmatpush.msra.mxu0 0.0
  %5560 = vmatpush.msra.mxu0 0.0
  %5561 = vmatpush.msra.mxu0 0.0
  %5562 = vmatpush.msra.mxu0 0.0
  %5563 = vmatpush.msra.mxu0 0.0
  %5564 = vmatpush.msra.mxu0 0.0
  %5565 = vmatpush.msra.mxu0 0.0
  %5566 = vmatpush.msra.mxu0 %v4851
  %5567 = vmatpush.msra.mxu0 %v4850
  %5568 = vmatmul.f32.gmra.mxu0 %v5550
  %v5569 = vpop.f32.mrf.mxu0
  %v5570 = vadd.f32 0.0, %v5569
  %5571 = vdwg.mxu0
  %v5573 = vsel %vm5134, %v4673, 0
  %5575 = vmatpush.msra.mxu0 0.0
  %5576 = vmatpush.msra.mxu0 0.0
  %5577 = vmatpush.msra.mxu0 0.0
  %5578 = vmatpush.msra.mxu0 0.0
  %5579 = vmatpush.msra.mxu0 0.0
  %5580 = vmatpush.msra.mxu0 0.0
  %5581 = vmatpush.msra.mxu0 0.0
  %5582 = vmatpush.msra.mxu0 0.0
  %5583 = vmatpush.msra.mxu0 0.0
  %5584 = vmatpush.msra.mxu0 0.0
  %5585 = vmatpush.msra.mxu0 0.0
  %5586 = vmatpush.msra.mxu0 0.0
  %5587 = vmatpush.msra.mxu0 0.0
  %5588 = vmatpush.msra.mxu0 0.0
  %5589 = vmatpush.msra.mxu0 %v4853
  %5590 = vmatpush.msra.mxu0 %v4852
  %5591 = vmatmul.f32.gmra.mxu0 %v5573
  %v5592 = vpop.f32.mrf.mxu0
  %v5593 = vadd.f32 0.0, %v5592
  %5594 = vdwg.mxu0
  %v5596 = vsel %vm5134, %v4674, 0
  %5598 = vmatpush.msra.mxu0 0.0
  %5599 = vmatpush.msra.mxu0 0.0
  %5600 = vmatpush.msra.mxu0 0.0
  %5601 = vmatpush.msra.mxu0 0.0
  %5602 = vmatpush.msra.mxu0 0.0
  %5603 = vmatpush.msra.mxu0 0.0
  %5604 = vmatpush.msra.mxu0 0.0
  %5605 = vmatpush.msra.mxu0 0.0
  %5606 = vmatpush.msra.mxu0 0.0
  %5607 = vmatpush.msra.mxu0 0.0
  %5608 = vmatpush.msra.mxu0 0.0
  %5609 = vmatpush.msra.mxu0 0.0
  %5610 = vmatpush.msra.mxu0 0.0
  %5611 = vmatpush.msra.mxu0 0.0
  %5612 = vmatpush.msra.mxu0 %v4855
  %5613 = vmatpush.msra.mxu0 %v4854
  %5614 = vmatmul.f32.gmra.mxu0 %v5596
  %v5615 = vpop.f32.mrf.mxu0
  %v5616 = vadd.f32 0.0, %v5615
  %5617 = vdwg.mxu0
  %v5619 = vsel %vm5134, %v4675, 0
  %5621 = vmatpush.msra.mxu0 0.0
  %5622 = vmatpush.msra.mxu0 0.0
  %5623 = vmatpush.msra.mxu0 0.0
  %5624 = vmatpush.msra.mxu0 0.0
  %5625 = vmatpush.msra.mxu0 0.0
  %5626 = vmatpush.msra.mxu0 0.0
  %5627 = vmatpush.msra.mxu0 0.0
  %5628 = vmatpush.msra.mxu0 0.0
  %5629 = vmatpush.msra.mxu0 0.0
  %5630 = vmatpush.msra.mxu0 0.0
  %5631 = vmatpush.msra.mxu0 0.0
  %5632 = vmatpush.msra.mxu0 0.0
  %5633 = vmatpush.msra.mxu0 0.0
  %5634 = vmatpush.msra.mxu0 0.0
  %5635 = vmatpush.msra.mxu0 %v4857
  %5636 = vmatpush.msra.mxu0 %v4856
  %5637 = vmatmul.f32.gmra.mxu0 %v5619
  %v5638 = vpop.f32.mrf.mxu0
  %v5639 = vadd.f32 0.0, %v5638
  %5640 = vdwg.mxu0
  %v5642 = vsel %vm5134, %v4676, 0
  %5644 = vmatpush.msra.mxu0 0.0
  %5645 = vmatpush.msra.mxu0 0.0
  %5646 = vmatpush.msra.mxu0 0.0
  %5647 = vmatpush.msra.mxu0 0.0
  %5648 = vmatpush.msra.mxu0 0.0
  %5649 = vmatpush.msra.mxu0 0.0
  %5650 = vmatpush.msra.mxu0 0.0
  %5651 = vmatpush.msra.mxu0 0.0
  %5652 = vmatpush.msra.mxu0 0.0
  %5653 = vmatpush.msra.mxu0 0.0
  %5654 = vmatpush.msra.mxu0 0.0
  %5655 = vmatpush.msra.mxu0 0.0
  %5656 = vmatpush.msra.mxu0 0.0
  %5657 = vmatpush.msra.mxu0 0.0
  %5658 = vmatpush.msra.mxu0 %v4859
  %5659 = vmatpush.msra.mxu0 %v4858
  %5660 = vmatmul.f32.gmra.mxu0 %v5642
  %v5661 = vpop.f32.mrf.mxu0
  %v5662 = vadd.f32 0.0, %v5661
  %5663 = vdwg.mxu0
  %v5665 = vsel %vm5134, %v4677, 0
  %5667 = vmatpush.msra.mxu0 0.0
  %5668 = vmatpush.msra.mxu0 0.0
  %5669 = vmatpush.msra.mxu0 0.0
  %5670 = vmatpush.msra.mxu0 0.0
  %5671 = vmatpush.msra.mxu0 0.0
  %5672 = vmatpush.msra.mxu0 0.0
  %5673 = vmatpush.msra.mxu0 0.0
  %5674 = vmatpush.msra.mxu0 0.0
  %5675 = vmatpush.msra.mxu0 0.0
  %5676 = vmatpush.msra.mxu0 0.0
  %5677 = vmatpush.msra.mxu0 0.0
  %5678 = vmatpush.msra.mxu0 0.0
  %5679 = vmatpush.msra.mxu0 0.0
  %5680 = vmatpush.msra.mxu0 0.0
  %5681 = vmatpush.msra.mxu0 %v4861
  %5682 = vmatpush.msra.mxu0 %v4860
  %5683 = vmatmul.f32.gmra.mxu0 %v5665
  %v5684 = vpop.f32.mrf.mxu0
  %v5685 = vadd.f32 0.0, %v5684
  %5686 = vdwg.mxu0
  %v5688 = vsel %vm5134, %v4678, 0
  %5690 = vmatpush.msra.mxu0 0.0
  %5691 = vmatpush.msra.mxu0 0.0
  %5692 = vmatpush.msra.mxu0 0.0
  %5693 = vmatpush.msra.mxu0 0.0
  %5694 = vmatpush.msra.mxu0 0.0
  %5695 = vmatpush.msra.mxu0 0.0
  %5696 = vmatpush.msra.mxu0 0.0
  %5697 = vmatpush.msra.mxu0 0.0
  %5698 = vmatpush.msra.mxu0 0.0
  %5699 = vmatpush.msra.mxu0 0.0
  %5700 = vmatpush.msra.mxu0 0.0
  %5701 = vmatpush.msra.mxu0 0.0
  %5702 = vmatpush.msra.mxu0 0.0
  %5703 = vmatpush.msra.mxu0 0.0
  %5704 = vmatpush.msra.mxu0 %v4863
  %5705 = vmatpush.msra.mxu0 %v4862
  %5706 = vmatmul.f32.gmra.mxu0 %v5688
  %v5707 = vpop.f32.mrf.mxu0
  %v5708 = vadd.f32 0.0, %v5707
  %5709 = vdwg.mxu0
  %v5711 = vsel %vm5134, %v4679, 0
  %5713 = vmatpush.msra.mxu0 0.0
  %5714 = vmatpush.msra.mxu0 0.0
  %5715 = vmatpush.msra.mxu0 0.0
  %5716 = vmatpush.msra.mxu0 0.0
  %5717 = vmatpush.msra.mxu0 0.0
  %5718 = vmatpush.msra.mxu0 0.0
  %5719 = vmatpush.msra.mxu0 0.0
  %5720 = vmatpush.msra.mxu0 0.0
  %5721 = vmatpush.msra.mxu0 0.0
  %5722 = vmatpush.msra.mxu0 0.0
  %5723 = vmatpush.msra.mxu0 0.0
  %5724 = vmatpush.msra.mxu0 0.0
  %5725 = vmatpush.msra.mxu0 0.0
  %5726 = vmatpush.msra.mxu0 0.0
  %5727 = vmatpush.msra.mxu0 %v4865
  %5728 = vmatpush.msra.mxu0 %v4864
  %5729 = vmatmul.f32.gmra.mxu0 %v5711
  %v5730 = vpop.f32.mrf.mxu0
  %v5731 = vadd.f32 0.0, %v5730
  %5732 = vdwg.mxu0
  %v5734 = vsel %vm5134, %v4680, 0
  %5736 = vmatpush.msra.mxu0 0.0
  %5737 = vmatpush.msra.mxu0 0.0
  %5738 = vmatpush.msra.mxu0 0.0
  %5739 = vmatpush.msra.mxu0 0.0
  %5740 = vmatpush.msra.mxu0 0.0
  %5741 = vmatpush.msra.mxu0 0.0
  %5742 = vmatpush.msra.mxu0 0.0
  %5743 = vmatpush.msra.mxu0 0.0
  %5744 = vmatpush.msra.mxu0 0.0
  %5745 = vmatpush.msra.mxu0 0.0
  %5746 = vmatpush.msra.mxu0 0.0
  %5747 = vmatpush.msra.mxu0 0.0
  %5748 = vmatpush.msra.mxu0 0.0
  %5749 = vmatpush.msra.mxu0 0.0
  %5750 = vmatpush.msra.mxu0 %v4867
  %5751 = vmatpush.msra.mxu0 %v4866
  %5752 = vmatmul.f32.gmra.mxu0 %v5734
  %v5753 = vpop.f32.mrf.mxu0
  %v5754 = vadd.f32 0.0, %v5753
  %5755 = vdwg.mxu0
  %v5757 = vsel %vm5134, %v4681, 0
  %5759 = vmatpush.msra.mxu0 0.0
  %5760 = vmatpush.msra.mxu0 0.0
  %5761 = vmatpush.msra.mxu0 0.0
  %5762 = vmatpush.msra.mxu0 0.0
  %5763 = vmatpush.msra.mxu0 0.0
  %5764 = vmatpush.msra.mxu0 0.0
  %5765 = vmatpush.msra.mxu0 0.0
  %5766 = vmatpush.msra.mxu0 0.0
  %5767 = vmatpush.msra.mxu0 0.0
  %5768 = vmatpush.msra.mxu0 0.0
  %5769 = vmatpush.msra.mxu0 0.0
  %5770 = vmatpush.msra.mxu0 0.0
  %5771 = vmatpush.msra.mxu0 0.0
  %5772 = vmatpush.msra.mxu0 0.0
  %5773 = vmatpush.msra.mxu0 %v4869
  %5774 = vmatpush.msra.mxu0 %v4868
  %5775 = vmatmul.f32.gmra.mxu0 %v5757
  %v5776 = vpop.f32.mrf.mxu0
  %v5777 = vadd.f32 0.0, %v5776
  %5778 = vdwg.mxu0
  %v5780 = vsel %vm5134, %v4682, 0
  %5782 = vmatpush.msra.mxu0 0.0
  %5783 = vmatpush.msra.mxu0 0.0
  %5784 = vmatpush.msra.mxu0 0.0
  %5785 = vmatpush.msra.mxu0 0.0
  %5786 = vmatpush.msra.mxu0 0.0
  %5787 = vmatpush.msra.mxu0 0.0
  %5788 = vmatpush.msra.mxu0 0.0
  %5789 = vmatpush.msra.mxu0 0.0
  %5790 = vmatpush.msra.mxu0 0.0
  %5791 = vmatpush.msra.mxu0 0.0
  %5792 = vmatpush.msra.mxu0 0.0
  %5793 = vmatpush.msra.mxu0 0.0
  %5794 = vmatpush.msra.mxu0 0.0
  %5795 = vmatpush.msra.mxu0 0.0
  %5796 = vmatpush.msra.mxu0 %v4871
  %5797 = vmatpush.msra.mxu0 %v4870
  %5798 = vmatmul.f32.gmra.mxu0 %v5780
  %v5799 = vpop.f32.mrf.mxu0
  %v5800 = vadd.f32 0.0, %v5799
  %5801 = vdwg.mxu0
  %v5803 = vsel %vm5134, %v4683, 0
  %5805 = vmatpush.msra.mxu0 0.0
  %5806 = vmatpush.msra.mxu0 0.0
  %5807 = vmatpush.msra.mxu0 0.0
  %5808 = vmatpush.msra.mxu0 0.0
  %5809 = vmatpush.msra.mxu0 0.0
  %5810 = vmatpush.msra.mxu0 0.0
  %5811 = vmatpush.msra.mxu0 0.0
  %5812 = vmatpush.msra.mxu0 0.0
  %5813 = vmatpush.msra.mxu0 0.0
  %5814 = vmatpush.msra.mxu0 0.0
  %5815 = vmatpush.msra.mxu0 0.0
  %5816 = vmatpush.msra.mxu0 0.0
  %5817 = vmatpush.msra.mxu0 0.0
  %5818 = vmatpush.msra.mxu0 0.0
  %5819 = vmatpush.msra.mxu0 %v4873
  %5820 = vmatpush.msra.mxu0 %v4872
  %5821 = vmatmul.f32.gmra.mxu0 %v5803
  %v5822 = vpop.f32.mrf.mxu0
  %v5823 = vadd.f32 0.0, %v5822
  %5824 = vdwg.mxu0
  %v5826 = vsel %vm5134, %v4684, 0
  %5828 = vmatpush.msra.mxu0 0.0
  %5829 = vmatpush.msra.mxu0 0.0
  %5830 = vmatpush.msra.mxu0 0.0
  %5831 = vmatpush.msra.mxu0 0.0
  %5832 = vmatpush.msra.mxu0 0.0
  %5833 = vmatpush.msra.mxu0 0.0
  %5834 = vmatpush.msra.mxu0 0.0
  %5835 = vmatpush.msra.mxu0 0.0
  %5836 = vmatpush.msra.mxu0 0.0
  %5837 = vmatpush.msra.mxu0 0.0
  %5838 = vmatpush.msra.mxu0 0.0
  %5839 = vmatpush.msra.mxu0 0.0
  %5840 = vmatpush.msra.mxu0 0.0
  %5841 = vmatpush.msra.mxu0 0.0
  %5842 = vmatpush.msra.mxu0 %v4875
  %5843 = vmatpush.msra.mxu0 %v4874
  %5844 = vmatmul.f32.gmra.mxu0 %v5826
  %v5845 = vpop.f32.mrf.mxu0
  %v5846 = vadd.f32 0.0, %v5845
  %5847 = vdwg.mxu0
  %v5849 = vsel %vm5134, %v4685, 0
  %5851 = vmatpush.msra.mxu0 0.0
  %5852 = vmatpush.msra.mxu0 0.0
  %5853 = vmatpush.msra.mxu0 0.0
  %5854 = vmatpush.msra.mxu0 0.0
  %5855 = vmatpush.msra.mxu0 0.0
  %5856 = vmatpush.msra.mxu0 0.0
  %5857 = vmatpush.msra.mxu0 0.0
  %5858 = vmatpush.msra.mxu0 0.0
  %5859 = vmatpush.msra.mxu0 0.0
  %5860 = vmatpush.msra.mxu0 0.0
  %5861 = vmatpush.msra.mxu0 0.0
  %5862 = vmatpush.msra.mxu0 0.0
  %5863 = vmatpush.msra.mxu0 0.0
  %5864 = vmatpush.msra.mxu0 0.0
  %5865 = vmatpush.msra.mxu0 %v4877
  %5866 = vmatpush.msra.mxu0 %v4876
  %5867 = vmatmul.f32.gmra.mxu0 %v5849
  %v5868 = vpop.f32.mrf.mxu0
  %v5869 = vadd.f32 0.0, %v5868
  %5870 = vdwg.mxu0
  %v5872 = vsel %vm5134, %v4686, 0
  %5874 = vmatpush.msra.mxu0 0.0
  %5875 = vmatpush.msra.mxu0 0.0
  %5876 = vmatpush.msra.mxu0 0.0
  %5877 = vmatpush.msra.mxu0 0.0
  %5878 = vmatpush.msra.mxu0 0.0
  %5879 = vmatpush.msra.mxu0 0.0
  %5880 = vmatpush.msra.mxu0 0.0
  %5881 = vmatpush.msra.mxu0 0.0
  %5882 = vmatpush.msra.mxu0 0.0
  %5883 = vmatpush.msra.mxu0 0.0
  %5884 = vmatpush.msra.mxu0 0.0
  %5885 = vmatpush.msra.mxu0 0.0
  %5886 = vmatpush.msra.mxu0 0.0
  %5887 = vmatpush.msra.mxu0 0.0
  %5888 = vmatpush.msra.mxu0 %v4879
  %5889 = vmatpush.msra.mxu0 %v4878
  %5890 = vmatmul.f32.gmra.mxu0 %v5872
  %v5891 = vpop.f32.mrf.mxu0
  %v5892 = vadd.f32 0.0, %v5891
  %5893 = vdwg.mxu0
  %v5895 = vsel %vm5134, %v4687, 0
  %5897 = vmatpush.msra.mxu0 0.0
  %5898 = vmatpush.msra.mxu0 0.0
  %5899 = vmatpush.msra.mxu0 0.0
  %5900 = vmatpush.msra.mxu0 0.0
  %5901 = vmatpush.msra.mxu0 0.0
  %5902 = vmatpush.msra.mxu0 0.0
  %5903 = vmatpush.msra.mxu0 0.0
  %5904 = vmatpush.msra.mxu0 0.0
  %5905 = vmatpush.msra.mxu0 0.0
  %5906 = vmatpush.msra.mxu0 0.0
  %5907 = vmatpush.msra.mxu0 0.0
  %5908 = vmatpush.msra.mxu0 0.0
  %5909 = vmatpush.msra.mxu0 0.0
  %5910 = vmatpush.msra.mxu0 0.0
  %5911 = vmatpush.msra.mxu0 %v4881
  %5912 = vmatpush.msra.mxu0 %v4880
  %5913 = vmatmul.f32.gmra.mxu0 %v5895
  %v5914 = vpop.f32.mrf.mxu0
  %v5915 = vadd.f32 0.0, %v5914
  %5916 = vdwg.mxu0
  %v5918 = vsel %vm5134, %v4688, 0
  %5920 = vmatpush.msra.mxu0 0.0
  %5921 = vmatpush.msra.mxu0 0.0
  %5922 = vmatpush.msra.mxu0 0.0
  %5923 = vmatpush.msra.mxu0 0.0
  %5924 = vmatpush.msra.mxu0 0.0
  %5925 = vmatpush.msra.mxu0 0.0
  %5926 = vmatpush.msra.mxu0 0.0
  %5927 = vmatpush.msra.mxu0 0.0
  %5928 = vmatpush.msra.mxu0 0.0
  %5929 = vmatpush.msra.mxu0 0.0
  %5930 = vmatpush.msra.mxu0 0.0
  %5931 = vmatpush.msra.mxu0 0.0
  %5932 = vmatpush.msra.mxu0 0.0
  %5933 = vmatpush.msra.mxu0 0.0
  %5934 = vmatpush.msra.mxu0 %v4883
  %5935 = vmatpush.msra.mxu0 %v4882
  %5936 = vmatmul.f32.gmra.mxu0 %v5918
  %v5937 = vpop.f32.mrf.mxu0
  %v5938 = vadd.f32 0.0, %v5937
  %5939 = vdwg.mxu0
  %v5941 = vsel %vm5134, %v4689, 0
  %5943 = vmatpush.msra.mxu0 0.0
  %5944 = vmatpush.msra.mxu0 0.0
  %5945 = vmatpush.msra.mxu0 0.0
  %5946 = vmatpush.msra.mxu0 0.0
  %5947 = vmatpush.msra.mxu0 0.0
  %5948 = vmatpush.msra.mxu0 0.0
  %5949 = vmatpush.msra.mxu0 0.0
  %5950 = vmatpush.msra.mxu0 0.0
  %5951 = vmatpush.msra.mxu0 0.0
  %5952 = vmatpush.msra.mxu0 0.0
  %5953 = vmatpush.msra.mxu0 0.0
  %5954 = vmatpush.msra.mxu0 0.0
  %5955 = vmatpush.msra.mxu0 0.0
  %5956 = vmatpush.msra.mxu0 0.0
  %5957 = vmatpush.msra.mxu0 %v4885
  %5958 = vmatpush.msra.mxu0 %v4884
  %5959 = vmatmul.f32.gmra.mxu0 %v5941
  %v5960 = vpop.f32.mrf.mxu0
  %v5961 = vadd.f32 0.0, %v5960
  %5962 = vdwg.mxu0
  %v5964 = vsel %vm5134, %v4690, 0
  %5966 = vmatpush.msra.mxu0 0.0
  %5967 = vmatpush.msra.mxu0 0.0
  %5968 = vmatpush.msra.mxu0 0.0
  %5969 = vmatpush.msra.mxu0 0.0
  %5970 = vmatpush.msra.mxu0 0.0
  %5971 = vmatpush.msra.mxu0 0.0
  %5972 = vmatpush.msra.mxu0 0.0
  %5973 = vmatpush.msra.mxu0 0.0
  %5974 = vmatpush.msra.mxu0 0.0
  %5975 = vmatpush.msra.mxu0 0.0
  %5976 = vmatpush.msra.mxu0 0.0
  %5977 = vmatpush.msra.mxu0 0.0
  %5978 = vmatpush.msra.mxu0 0.0
  %5979 = vmatpush.msra.mxu0 0.0
  %5980 = vmatpush.msra.mxu0 %v4887
  %5981 = vmatpush.msra.mxu0 %v4886
  %5982 = vmatmul.f32.gmra.mxu0 %v5964
  %v5983 = vpop.f32.mrf.mxu0
  %v5984 = vadd.f32 0.0, %v5983
  %5985 = vdwg.mxu0
  %v5987 = vsel %vm5134, %v4691, 0
  %5989 = vmatpush.msra.mxu0 0.0
  %5990 = vmatpush.msra.mxu0 0.0
  %5991 = vmatpush.msra.mxu0 0.0
  %5992 = vmatpush.msra.mxu0 0.0
  %5993 = vmatpush.msra.mxu0 0.0
  %5994 = vmatpush.msra.mxu0 0.0
  %5995 = vmatpush.msra.mxu0 0.0
  %5996 = vmatpush.msra.mxu0 0.0
  %5997 = vmatpush.msra.mxu0 0.0
  %5998 = vmatpush.msra.mxu0 0.0
  %5999 = vmatpush.msra.mxu0 0.0
  %6000 = vmatpush.msra.mxu0 0.0
  %6001 = vmatpush.msra.mxu0 0.0
  %6002 = vmatpush.msra.mxu0 0.0
  %6003 = vmatpush.msra.mxu0 %v4889
  %6004 = vmatpush.msra.mxu0 %v4888
  %6005 = vmatmul.f32.gmra.mxu0 %v5987
  %v6006 = vpop.f32.mrf.mxu0
  %v6007 = vadd.f32 0.0, %v6006
  %6008 = vdwg.mxu0
  %v6010 = vsel %vm5134, %v4692, 0
  %6012 = vmatpush.msra.mxu0 0.0
  %6013 = vmatpush.msra.mxu0 0.0
  %6014 = vmatpush.msra.mxu0 0.0
  %6015 = vmatpush.msra.mxu0 0.0
  %6016 = vmatpush.msra.mxu0 0.0
  %6017 = vmatpush.msra.mxu0 0.0
  %6018 = vmatpush.msra.mxu0 0.0
  %6019 = vmatpush.msra.mxu0 0.0
  %6020 = vmatpush.msra.mxu0 0.0
  %6021 = vmatpush.msra.mxu0 0.0
  %6022 = vmatpush.msra.mxu0 0.0
  %6023 = vmatpush.msra.mxu0 0.0
  %6024 = vmatpush.msra.mxu0 0.0
  %6025 = vmatpush.msra.mxu0 0.0
  %6026 = vmatpush.msra.mxu0 %v4891
  %6027 = vmatpush.msra.mxu0 %v4890
  %6028 = vmatmul.f32.gmra.mxu0 %v6010
  %v6029 = vpop.f32.mrf.mxu0
  %v6030 = vadd.f32 0.0, %v6029
  %6031 = vdwg.mxu0
  %v6033 = vsel %vm5134, %v4693, 0
  %6035 = vmatpush.msra.mxu0 0.0
  %6036 = vmatpush.msra.mxu0 0.0
  %6037 = vmatpush.msra.mxu0 0.0
  %6038 = vmatpush.msra.mxu0 0.0
  %6039 = vmatpush.msra.mxu0 0.0
  %6040 = vmatpush.msra.mxu0 0.0
  %6041 = vmatpush.msra.mxu0 0.0
  %6042 = vmatpush.msra.mxu0 0.0
  %6043 = vmatpush.msra.mxu0 0.0
  %6044 = vmatpush.msra.mxu0 0.0
  %6045 = vmatpush.msra.mxu0 0.0
  %6046 = vmatpush.msra.mxu0 0.0
  %6047 = vmatpush.msra.mxu0 0.0
  %6048 = vmatpush.msra.mxu0 0.0
  %6049 = vmatpush.msra.mxu0 %v4893
  %6050 = vmatpush.msra.mxu0 %v4892
  %6051 = vmatmul.f32.gmra.mxu0 %v6033
  %v6052 = vpop.f32.mrf.mxu0
  %v6053 = vadd.f32 0.0, %v6052
  %6054 = vdwg.mxu0
  %v6056 = vsel %vm5134, %v4694, 0
  %6058 = vmatpush.msra.mxu0 0.0
  %6059 = vmatpush.msra.mxu0 0.0
  %6060 = vmatpush.msra.mxu0 0.0
  %6061 = vmatpush.msra.mxu0 0.0
  %6062 = vmatpush.msra.mxu0 0.0
  %6063 = vmatpush.msra.mxu0 0.0
  %6064 = vmatpush.msra.mxu0 0.0
  %6065 = vmatpush.msra.mxu0 0.0
  %6066 = vmatpush.msra.mxu0 0.0
  %6067 = vmatpush.msra.mxu0 0.0
  %6068 = vmatpush.msra.mxu0 0.0
  %6069 = vmatpush.msra.mxu0 0.0
  %6070 = vmatpush.msra.mxu0 0.0
  %6071 = vmatpush.msra.mxu0 0.0
  %6072 = vmatpush.msra.mxu0 %v4895
  %6073 = vmatpush.msra.mxu0 %v4894
  %6074 = vmatmul.f32.gmra.mxu0 %v6056
  %v6075 = vpop.f32.mrf.mxu0
  %v6076 = vadd.f32 0.0, %v6075
  %6077 = vdwg.mxu0
  %v6079 = vsel %vm5134, %v4695, 0
  %6081 = vmatpush.msra.mxu0 0.0
  %6082 = vmatpush.msra.mxu0 0.0
  %6083 = vmatpush.msra.mxu0 0.0
  %6084 = vmatpush.msra.mxu0 0.0
  %6085 = vmatpush.msra.mxu0 0.0
  %6086 = vmatpush.msra.mxu0 0.0
  %6087 = vmatpush.msra.mxu0 0.0
  %6088 = vmatpush.msra.mxu0 0.0
  %6089 = vmatpush.msra.mxu0 0.0
  %6090 = vmatpush.msra.mxu0 0.0
  %6091 = vmatpush.msra.mxu0 0.0
  %6092 = vmatpush.msra.mxu0 0.0
  %6093 = vmatpush.msra.mxu0 0.0
  %6094 = vmatpush.msra.mxu0 0.0
  %6095 = vmatpush.msra.mxu0 %v4897
  %6096 = vmatpush.msra.mxu0 %v4896
  %6097 = vmatmul.f32.gmra.mxu0 %v6079
  %v6098 = vpop.f32.mrf.mxu0
  %v6099 = vadd.f32 0.0, %v6098
  %6100 = vdwg.mxu0
  %v6102 = vsel %vm5134, %v4696, 0
  %6104 = vmatpush.msra.mxu0 0.0
  %6105 = vmatpush.msra.mxu0 0.0
  %6106 = vmatpush.msra.mxu0 0.0
  %6107 = vmatpush.msra.mxu0 0.0
  %6108 = vmatpush.msra.mxu0 0.0
  %6109 = vmatpush.msra.mxu0 0.0
  %6110 = vmatpush.msra.mxu0 0.0
  %6111 = vmatpush.msra.mxu0 0.0
  %6112 = vmatpush.msra.mxu0 0.0
  %6113 = vmatpush.msra.mxu0 0.0
  %6114 = vmatpush.msra.mxu0 0.0
  %6115 = vmatpush.msra.mxu0 0.0
  %6116 = vmatpush.msra.mxu0 0.0
  %6117 = vmatpush.msra.mxu0 0.0
  %6118 = vmatpush.msra.mxu0 %v4899
  %6119 = vmatpush.msra.mxu0 %v4898
  %6120 = vmatmul.f32.gmra.mxu0 %v6102
  %v6121 = vpop.f32.mrf.mxu0
  %v6122 = vadd.f32 0.0, %v6121
  %6123 = vdwg.mxu0
  %v6125 = vsel %vm5134, %v4697, 0
  %6127 = vmatpush.msra.mxu0 0.0
  %6128 = vmatpush.msra.mxu0 0.0
  %6129 = vmatpush.msra.mxu0 0.0
  %6130 = vmatpush.msra.mxu0 0.0
  %6131 = vmatpush.msra.mxu0 0.0
  %6132 = vmatpush.msra.mxu0 0.0
  %6133 = vmatpush.msra.mxu0 0.0
  %6134 = vmatpush.msra.mxu0 0.0
  %6135 = vmatpush.msra.mxu0 0.0
  %6136 = vmatpush.msra.mxu0 0.0
  %6137 = vmatpush.msra.mxu0 0.0
  %6138 = vmatpush.msra.mxu0 0.0
  %6139 = vmatpush.msra.mxu0 0.0
  %6140 = vmatpush.msra.mxu0 0.0
  %6141 = vmatpush.msra.mxu0 %v4901
  %6142 = vmatpush.msra.mxu0 %v4900
  %6143 = vmatmul.f32.gmra.mxu0 %v6125
  %v6144 = vpop.f32.mrf.mxu0
  %v6145 = vadd.f32 0.0, %v6144
  %6146 = vdwg.mxu0
  %v6148 = vsel %vm5134, %v4698, 0
  %6150 = vmatpush.msra.mxu0 0.0
  %6151 = vmatpush.msra.mxu0 0.0
  %6152 = vmatpush.msra.mxu0 0.0
  %6153 = vmatpush.msra.mxu0 0.0
  %6154 = vmatpush.msra.mxu0 0.0
  %6155 = vmatpush.msra.mxu0 0.0
  %6156 = vmatpush.msra.mxu0 0.0
  %6157 = vmatpush.msra.mxu0 0.0
  %6158 = vmatpush.msra.mxu0 0.0
  %6159 = vmatpush.msra.mxu0 0.0
  %6160 = vmatpush.msra.mxu0 0.0
  %6161 = vmatpush.msra.mxu0 0.0
  %6162 = vmatpush.msra.mxu0 0.0
  %6163 = vmatpush.msra.mxu0 0.0
  %6164 = vmatpush.msra.mxu0 %v4903
  %6165 = vmatpush.msra.mxu0 %v4902
  %6166 = vmatmul.f32.gmra.mxu0 %v6148
  %v6167 = vpop.f32.mrf.mxu0
  %v6168 = vadd.f32 0.0, %v6167
  %6169 = vdwg.mxu0
  %v6171 = vsel %vm5134, %v4699, 0
  %6173 = vmatpush.msra.mxu0 0.0
  %6174 = vmatpush.msra.mxu0 0.0
  %6175 = vmatpush.msra.mxu0 0.0
  %6176 = vmatpush.msra.mxu0 0.0
  %6177 = vmatpush.msra.mxu0 0.0
  %6178 = vmatpush.msra.mxu0 0.0
  %6179 = vmatpush.msra.mxu0 0.0
  %6180 = vmatpush.msra.mxu0 0.0
  %6181 = vmatpush.msra.mxu0 0.0
  %6182 = vmatpush.msra.mxu0 0.0
  %6183 = vmatpush.msra.mxu0 0.0
  %6184 = vmatpush.msra.mxu0 0.0
  %6185 = vmatpush.msra.mxu0 0.0
  %6186 = vmatpush.msra.mxu0 0.0
  %6187 = vmatpush.msra.mxu0 %v4905
  %6188 = vmatpush.msra.mxu0 %v4904
  %6189 = vmatmul.f32.gmra.mxu0 %v6171
  %v6190 = vpop.f32.mrf.mxu0
  %v6191 = vadd.f32 0.0, %v6190
  %6192 = vdwg.mxu0
  %v6194 = vsel %vm5134, %v4700, 0
  %6196 = vmatpush.msra.mxu0 0.0
  %6197 = vmatpush.msra.mxu0 0.0
  %6198 = vmatpush.msra.mxu0 0.0
  %6199 = vmatpush.msra.mxu0 0.0
  %6200 = vmatpush.msra.mxu0 0.0
  %6201 = vmatpush.msra.mxu0 0.0
  %6202 = vmatpush.msra.mxu0 0.0
  %6203 = vmatpush.msra.mxu0 0.0
  %6204 = vmatpush.msra.mxu0 0.0
  %6205 = vmatpush.msra.mxu0 0.0
  %6206 = vmatpush.msra.mxu0 0.0
  %6207 = vmatpush.msra.mxu0 0.0
  %6208 = vmatpush.msra.mxu0 0.0
  %6209 = vmatpush.msra.mxu0 0.0
  %6210 = vmatpush.msra.mxu0 %v4907
  %6211 = vmatpush.msra.mxu0 %v4906
  %6212 = vmatmul.f32.gmra.mxu0 %v6194
  %v6213 = vpop.f32.mrf.mxu0
  %v6214 = vadd.f32 0.0, %v6213
  %6215 = vdwg.mxu0
  %v6217 = vsel %vm5134, %v4701, 0
  %6219 = vmatpush.msra.mxu0 0.0
  %6220 = vmatpush.msra.mxu0 0.0
  %6221 = vmatpush.msra.mxu0 0.0
  %6222 = vmatpush.msra.mxu0 0.0
  %6223 = vmatpush.msra.mxu0 0.0
  %6224 = vmatpush.msra.mxu0 0.0
  %6225 = vmatpush.msra.mxu0 0.0
  %6226 = vmatpush.msra.mxu0 0.0
  %6227 = vmatpush.msra.mxu0 0.0
  %6228 = vmatpush.msra.mxu0 0.0
  %6229 = vmatpush.msra.mxu0 0.0
  %6230 = vmatpush.msra.mxu0 0.0
  %6231 = vmatpush.msra.mxu0 0.0
  %6232 = vmatpush.msra.mxu0 0.0
  %6233 = vmatpush.msra.mxu0 %v4909
  %6234 = vmatpush.msra.mxu0 %v4908
  %6235 = vmatmul.f32.gmra.mxu0 %v6217
  %v6236 = vpop.f32.mrf.mxu0
  %v6237 = vadd.f32 0.0, %v6236
  %6238 = vdwg.mxu0
  %v6240 = vsel %vm5134, %v4702, 0
  %6242 = vmatpush.msra.mxu0 0.0
  %6243 = vmatpush.msra.mxu0 0.0
  %6244 = vmatpush.msra.mxu0 0.0
  %6245 = vmatpush.msra.mxu0 0.0
  %6246 = vmatpush.msra.mxu0 0.0
  %6247 = vmatpush.msra.mxu0 0.0
  %6248 = vmatpush.msra.mxu0 0.0
  %6249 = vmatpush.msra.mxu0 0.0
  %6250 = vmatpush.msra.mxu0 0.0
  %6251 = vmatpush.msra.mxu0 0.0
  %6252 = vmatpush.msra.mxu0 0.0
  %6253 = vmatpush.msra.mxu0 0.0
  %6254 = vmatpush.msra.mxu0 0.0
  %6255 = vmatpush.msra.mxu0 0.0
  %6256 = vmatpush.msra.mxu0 %v4911
  %6257 = vmatpush.msra.mxu0 %v4910
  %6258 = vmatmul.f32.gmra.mxu0 %v6240
  %v6259 = vpop.f32.mrf.mxu0
  %v6260 = vadd.f32 0.0, %v6259
  %6261 = vdwg.mxu0
  %v6263 = vsel %vm5134, %v4703, 0
  %6265 = vmatpush.msra.mxu0 0.0
  %6266 = vmatpush.msra.mxu0 0.0
  %6267 = vmatpush.msra.mxu0 0.0
  %6268 = vmatpush.msra.mxu0 0.0
  %6269 = vmatpush.msra.mxu0 0.0
  %6270 = vmatpush.msra.mxu0 0.0
  %6271 = vmatpush.msra.mxu0 0.0
  %6272 = vmatpush.msra.mxu0 0.0
  %6273 = vmatpush.msra.mxu0 0.0
  %6274 = vmatpush.msra.mxu0 0.0
  %6275 = vmatpush.msra.mxu0 0.0
  %6276 = vmatpush.msra.mxu0 0.0
  %6277 = vmatpush.msra.mxu0 0.0
  %6278 = vmatpush.msra.mxu0 0.0
  %6279 = vmatpush.msra.mxu0 %v4913
  %6280 = vmatpush.msra.mxu0 %v4912
  %6281 = vmatmul.f32.gmra.mxu0 %v6263
  %v6282 = vpop.f32.mrf.mxu0
  %v6283 = vadd.f32 0.0, %v6282
  %6284 = vdwg.mxu0
  %v6286 = vsel %vm5134, %v4704, 0
  %6288 = vmatpush.msra.mxu0 0.0
  %6289 = vmatpush.msra.mxu0 0.0
  %6290 = vmatpush.msra.mxu0 0.0
  %6291 = vmatpush.msra.mxu0 0.0
  %6292 = vmatpush.msra.mxu0 0.0
  %6293 = vmatpush.msra.mxu0 0.0
  %6294 = vmatpush.msra.mxu0 0.0
  %6295 = vmatpush.msra.mxu0 0.0
  %6296 = vmatpush.msra.mxu0 0.0
  %6297 = vmatpush.msra.mxu0 0.0
  %6298 = vmatpush.msra.mxu0 0.0
  %6299 = vmatpush.msra.mxu0 0.0
  %6300 = vmatpush.msra.mxu0 0.0
  %6301 = vmatpush.msra.mxu0 0.0
  %6302 = vmatpush.msra.mxu0 %v4915
  %6303 = vmatpush.msra.mxu0 %v4914
  %6304 = vmatmul.f32.gmra.mxu0 %v6286
  %v6305 = vpop.f32.mrf.mxu0
  %v6306 = vadd.f32 0.0, %v6305
  %6307 = vdwg.mxu0
  %v6309 = vsel %vm5134, %v4705, 0
  %6311 = vmatpush.msra.mxu0 0.0
  %6312 = vmatpush.msra.mxu0 0.0
  %6313 = vmatpush.msra.mxu0 0.0
  %6314 = vmatpush.msra.mxu0 0.0
  %6315 = vmatpush.msra.mxu0 0.0
  %6316 = vmatpush.msra.mxu0 0.0
  %6317 = vmatpush.msra.mxu0 0.0
  %6318 = vmatpush.msra.mxu0 0.0
  %6319 = vmatpush.msra.mxu0 0.0
  %6320 = vmatpush.msra.mxu0 0.0
  %6321 = vmatpush.msra.mxu0 0.0
  %6322 = vmatpush.msra.mxu0 0.0
  %6323 = vmatpush.msra.mxu0 0.0
  %6324 = vmatpush.msra.mxu0 0.0
  %6325 = vmatpush.msra.mxu0 %v4917
  %6326 = vmatpush.msra.mxu0 %v4916
  %6327 = vmatmul.f32.gmra.mxu0 %v6309
  %v6328 = vpop.f32.mrf.mxu0
  %v6329 = vadd.f32 0.0, %v6328
  %6330 = vdwg.mxu0
  %v6332 = vsel %vm5134, %v4706, 0
  %6334 = vmatpush.msra.mxu0 0.0
  %6335 = vmatpush.msra.mxu0 0.0
  %6336 = vmatpush.msra.mxu0 0.0
  %6337 = vmatpush.msra.mxu0 0.0
  %6338 = vmatpush.msra.mxu0 0.0
  %6339 = vmatpush.msra.mxu0 0.0
  %6340 = vmatpush.msra.mxu0 0.0
  %6341 = vmatpush.msra.mxu0 0.0
  %6342 = vmatpush.msra.mxu0 0.0
  %6343 = vmatpush.msra.mxu0 0.0
  %6344 = vmatpush.msra.mxu0 0.0
  %6345 = vmatpush.msra.mxu0 0.0
  %6346 = vmatpush.msra.mxu0 0.0
  %6347 = vmatpush.msra.mxu0 0.0
  %6348 = vmatpush.msra.mxu0 %v4919
  %6349 = vmatpush.msra.mxu0 %v4918
  %6350 = vmatmul.f32.gmra.mxu0 %v6332
  %v6351 = vpop.f32.mrf.mxu0
  %v6352 = vadd.f32 0.0, %v6351
  %6353 = vdwg.mxu0
  %v6355 = vsel %vm5134, %v4707, 0
  %6357 = vmatpush.msra.mxu0 0.0
  %6358 = vmatpush.msra.mxu0 0.0
  %6359 = vmatpush.msra.mxu0 0.0
  %6360 = vmatpush.msra.mxu0 0.0
  %6361 = vmatpush.msra.mxu0 0.0
  %6362 = vmatpush.msra.mxu0 0.0
  %6363 = vmatpush.msra.mxu0 0.0
  %6364 = vmatpush.msra.mxu0 0.0
  %6365 = vmatpush.msra.mxu0 0.0
  %6366 = vmatpush.msra.mxu0 0.0
  %6367 = vmatpush.msra.mxu0 0.0
  %6368 = vmatpush.msra.mxu0 0.0
  %6369 = vmatpush.msra.mxu0 0.0
  %6370 = vmatpush.msra.mxu0 0.0
  %6371 = vmatpush.msra.mxu0 %v4921
  %6372 = vmatpush.msra.mxu0 %v4920
  %6373 = vmatmul.f32.gmra.mxu0 %v6355
  %v6374 = vpop.f32.mrf.mxu0
  %v6375 = vadd.f32 0.0, %v6374
  %6376 = vdwg.mxu0
  %v6378 = vsel %vm5134, %v4708, 0
  %6380 = vmatpush.msra.mxu0 0.0
  %6381 = vmatpush.msra.mxu0 0.0
  %6382 = vmatpush.msra.mxu0 0.0
  %6383 = vmatpush.msra.mxu0 0.0
  %6384 = vmatpush.msra.mxu0 0.0
  %6385 = vmatpush.msra.mxu0 0.0
  %6386 = vmatpush.msra.mxu0 0.0
  %6387 = vmatpush.msra.mxu0 0.0
  %6388 = vmatpush.msra.mxu0 0.0
  %6389 = vmatpush.msra.mxu0 0.0
  %6390 = vmatpush.msra.mxu0 0.0
  %6391 = vmatpush.msra.mxu0 0.0
  %6392 = vmatpush.msra.mxu0 0.0
  %6393 = vmatpush.msra.mxu0 0.0
  %6394 = vmatpush.msra.mxu0 %v4923
  %6395 = vmatpush.msra.mxu0 %v4922
  %6396 = vmatmul.f32.gmra.mxu0 %v6378
  %v6397 = vpop.f32.mrf.mxu0
  %v6398 = vadd.f32 0.0, %v6397
  %6399 = vdwg.mxu0
  %v6401 = vsel %vm5134, %v4709, 0
  %6403 = vmatpush.msra.mxu0 0.0
  %6404 = vmatpush.msra.mxu0 0.0
  %6405 = vmatpush.msra.mxu0 0.0
  %6406 = vmatpush.msra.mxu0 0.0
  %6407 = vmatpush.msra.mxu0 0.0
  %6408 = vmatpush.msra.mxu0 0.0
  %6409 = vmatpush.msra.mxu0 0.0
  %6410 = vmatpush.msra.mxu0 0.0
  %6411 = vmatpush.msra.mxu0 0.0
  %6412 = vmatpush.msra.mxu0 0.0
  %6413 = vmatpush.msra.mxu0 0.0
  %6414 = vmatpush.msra.mxu0 0.0
  %6415 = vmatpush.msra.mxu0 0.0
  %6416 = vmatpush.msra.mxu0 0.0
  %6417 = vmatpush.msra.mxu0 %v4925
  %6418 = vmatpush.msra.mxu0 %v4924
  %6419 = vmatmul.f32.gmra.mxu0 %v6401
  %v6420 = vpop.f32.mrf.mxu0
  %v6421 = vadd.f32 0.0, %v6420
  %6422 = vdwg.mxu0
  %v6424 = vsel %vm5134, %v4710, 0
  %6426 = vmatpush.msra.mxu0 0.0
  %6427 = vmatpush.msra.mxu0 0.0
  %6428 = vmatpush.msra.mxu0 0.0
  %6429 = vmatpush.msra.mxu0 0.0
  %6430 = vmatpush.msra.mxu0 0.0
  %6431 = vmatpush.msra.mxu0 0.0
  %6432 = vmatpush.msra.mxu0 0.0
  %6433 = vmatpush.msra.mxu0 0.0
  %6434 = vmatpush.msra.mxu0 0.0
  %6435 = vmatpush.msra.mxu0 0.0
  %6436 = vmatpush.msra.mxu0 0.0
  %6437 = vmatpush.msra.mxu0 0.0
  %6438 = vmatpush.msra.mxu0 0.0
  %6439 = vmatpush.msra.mxu0 0.0
  %6440 = vmatpush.msra.mxu0 %v4927
  %6441 = vmatpush.msra.mxu0 %v4926
  %6442 = vmatmul.f32.gmra.mxu0 %v6424
  %v6443 = vpop.f32.mrf.mxu0
  %v6444 = vadd.f32 0.0, %v6443
  %6445 = vdwg.mxu0
  %v6447 = vsel %vm5134, %v4711, 0
  %6449 = vmatpush.msra.mxu0 0.0
  %6450 = vmatpush.msra.mxu0 0.0
  %6451 = vmatpush.msra.mxu0 0.0
  %6452 = vmatpush.msra.mxu0 0.0
  %6453 = vmatpush.msra.mxu0 0.0
  %6454 = vmatpush.msra.mxu0 0.0
  %6455 = vmatpush.msra.mxu0 0.0
  %6456 = vmatpush.msra.mxu0 0.0
  %6457 = vmatpush.msra.mxu0 0.0
  %6458 = vmatpush.msra.mxu0 0.0
  %6459 = vmatpush.msra.mxu0 0.0
  %6460 = vmatpush.msra.mxu0 0.0
  %6461 = vmatpush.msra.mxu0 0.0
  %6462 = vmatpush.msra.mxu0 0.0
  %6463 = vmatpush.msra.mxu0 %v4929
  %6464 = vmatpush.msra.mxu0 %v4928
  %6465 = vmatmul.f32.gmra.mxu0 %v6447
  %v6466 = vpop.f32.mrf.mxu0
  %v6467 = vadd.f32 0.0, %v6466
  %6468 = vdwg.mxu0
  %v6470 = vsel %vm5134, %v4712, 0
  %6472 = vmatpush.msra.mxu0 0.0
  %6473 = vmatpush.msra.mxu0 0.0
  %6474 = vmatpush.msra.mxu0 0.0
  %6475 = vmatpush.msra.mxu0 0.0
  %6476 = vmatpush.msra.mxu0 0.0
  %6477 = vmatpush.msra.mxu0 0.0
  %6478 = vmatpush.msra.mxu0 0.0
  %6479 = vmatpush.msra.mxu0 0.0
  %6480 = vmatpush.msra.mxu0 0.0
  %6481 = vmatpush.msra.mxu0 0.0
  %6482 = vmatpush.msra.mxu0 0.0
  %6483 = vmatpush.msra.mxu0 0.0
  %6484 = vmatpush.msra.mxu0 0.0
  %6485 = vmatpush.msra.mxu0 0.0
  %6486 = vmatpush.msra.mxu0 %v4931
  %6487 = vmatpush.msra.mxu0 %v4930
  %6488 = vmatmul.f32.gmra.mxu0 %v6470
  %v6489 = vpop.f32.mrf.mxu0
  %v6490 = vadd.f32 0.0, %v6489
  %6491 = vdwg.mxu0
  %v6493 = vsel %vm5134, %v4713, 0
  %6495 = vmatpush.msra.mxu0 0.0
  %6496 = vmatpush.msra.mxu0 0.0
  %6497 = vmatpush.msra.mxu0 0.0
  %6498 = vmatpush.msra.mxu0 0.0
  %6499 = vmatpush.msra.mxu0 0.0
  %6500 = vmatpush.msra.mxu0 0.0
  %6501 = vmatpush.msra.mxu0 0.0
  %6502 = vmatpush.msra.mxu0 0.0
  %6503 = vmatpush.msra.mxu0 0.0
  %6504 = vmatpush.msra.mxu0 0.0
  %6505 = vmatpush.msra.mxu0 0.0
  %6506 = vmatpush.msra.mxu0 0.0
  %6507 = vmatpush.msra.mxu0 0.0
  %6508 = vmatpush.msra.mxu0 0.0
  %6509 = vmatpush.msra.mxu0 %v4933
  %6510 = vmatpush.msra.mxu0 %v4932
  %6511 = vmatmul.f32.gmra.mxu0 %v6493
  %v6512 = vpop.f32.mrf.mxu0
  %v6513 = vadd.f32 0.0, %v6512
  %6514 = vdwg.mxu0
  %v6516 = vsel %vm5134, %v4714, 0
  %6518 = vmatpush.msra.mxu0 0.0
  %6519 = vmatpush.msra.mxu0 0.0
  %6520 = vmatpush.msra.mxu0 0.0
  %6521 = vmatpush.msra.mxu0 0.0
  %6522 = vmatpush.msra.mxu0 0.0
  %6523 = vmatpush.msra.mxu0 0.0
  %6524 = vmatpush.msra.mxu0 0.0
  %6525 = vmatpush.msra.mxu0 0.0
  %6526 = vmatpush.msra.mxu0 0.0
  %6527 = vmatpush.msra.mxu0 0.0
  %6528 = vmatpush.msra.mxu0 0.0
  %6529 = vmatpush.msra.mxu0 0.0
  %6530 = vmatpush.msra.mxu0 0.0
  %6531 = vmatpush.msra.mxu0 0.0
  %6532 = vmatpush.msra.mxu0 %v4935
  %6533 = vmatpush.msra.mxu0 %v4934
  %6534 = vmatmul.f32.gmra.mxu0 %v6516
  %v6535 = vpop.f32.mrf.mxu0
  %v6536 = vadd.f32 0.0, %v6535
  %6537 = vdwg.mxu0
  %v6539 = vsel %vm5134, %v4715, 0
  %6541 = vmatpush.msra.mxu0 0.0
  %6542 = vmatpush.msra.mxu0 0.0
  %6543 = vmatpush.msra.mxu0 0.0
  %6544 = vmatpush.msra.mxu0 0.0
  %6545 = vmatpush.msra.mxu0 0.0
  %6546 = vmatpush.msra.mxu0 0.0
  %6547 = vmatpush.msra.mxu0 0.0
  %6548 = vmatpush.msra.mxu0 0.0
  %6549 = vmatpush.msra.mxu0 0.0
  %6550 = vmatpush.msra.mxu0 0.0
  %6551 = vmatpush.msra.mxu0 0.0
  %6552 = vmatpush.msra.mxu0 0.0
  %6553 = vmatpush.msra.mxu0 0.0
  %6554 = vmatpush.msra.mxu0 0.0
  %6555 = vmatpush.msra.mxu0 %v4937
  %6556 = vmatpush.msra.mxu0 %v4936
  %6557 = vmatmul.f32.gmra.mxu0 %v6539
  %v6558 = vpop.f32.mrf.mxu0
  %v6559 = vadd.f32 0.0, %v6558
  %6560 = vdwg.mxu0
  %v6562 = vsel %vm5134, %v4716, 0
  %6564 = vmatpush.msra.mxu0 0.0
  %6565 = vmatpush.msra.mxu0 0.0
  %6566 = vmatpush.msra.mxu0 0.0
  %6567 = vmatpush.msra.mxu0 0.0
  %6568 = vmatpush.msra.mxu0 0.0
  %6569 = vmatpush.msra.mxu0 0.0
  %6570 = vmatpush.msra.mxu0 0.0
  %6571 = vmatpush.msra.mxu0 0.0
  %6572 = vmatpush.msra.mxu0 0.0
  %6573 = vmatpush.msra.mxu0 0.0
  %6574 = vmatpush.msra.mxu0 0.0
  %6575 = vmatpush.msra.mxu0 0.0
  %6576 = vmatpush.msra.mxu0 0.0
  %6577 = vmatpush.msra.mxu0 0.0
  %6578 = vmatpush.msra.mxu0 %v4939
  %6579 = vmatpush.msra.mxu0 %v4938
  %6580 = vmatmul.f32.gmra.mxu0 %v6562
  %v6581 = vpop.f32.mrf.mxu0
  %v6582 = vadd.f32 0.0, %v6581
  %6583 = vdwg.mxu0
  %v6585 = vsel %vm5134, %v4717, 0
  %6587 = vmatpush.msra.mxu0 0.0
  %6588 = vmatpush.msra.mxu0 0.0
  %6589 = vmatpush.msra.mxu0 0.0
  %6590 = vmatpush.msra.mxu0 0.0
  %6591 = vmatpush.msra.mxu0 0.0
  %6592 = vmatpush.msra.mxu0 0.0
  %6593 = vmatpush.msra.mxu0 0.0
  %6594 = vmatpush.msra.mxu0 0.0
  %6595 = vmatpush.msra.mxu0 0.0
  %6596 = vmatpush.msra.mxu0 0.0
  %6597 = vmatpush.msra.mxu0 0.0
  %6598 = vmatpush.msra.mxu0 0.0
  %6599 = vmatpush.msra.mxu0 0.0
  %6600 = vmatpush.msra.mxu0 0.0
  %6601 = vmatpush.msra.mxu0 %v4941
  %6602 = vmatpush.msra.mxu0 %v4940
  %6603 = vmatmul.f32.gmra.mxu0 %v6585
  %v6604 = vpop.f32.mrf.mxu0
  %v6605 = vadd.f32 0.0, %v6604
  %6606 = vdwg.mxu0
  %v6608 = vsel %vm5134, %v4718, 0
  %6610 = vmatpush.msra.mxu0 0.0
  %6611 = vmatpush.msra.mxu0 0.0
  %6612 = vmatpush.msra.mxu0 0.0
  %6613 = vmatpush.msra.mxu0 0.0
  %6614 = vmatpush.msra.mxu0 0.0
  %6615 = vmatpush.msra.mxu0 0.0
  %6616 = vmatpush.msra.mxu0 0.0
  %6617 = vmatpush.msra.mxu0 0.0
  %6618 = vmatpush.msra.mxu0 0.0
  %6619 = vmatpush.msra.mxu0 0.0
  %6620 = vmatpush.msra.mxu0 0.0
  %6621 = vmatpush.msra.mxu0 0.0
  %6622 = vmatpush.msra.mxu0 0.0
  %6623 = vmatpush.msra.mxu0 0.0
  %6624 = vmatpush.msra.mxu0 %v4943
  %6625 = vmatpush.msra.mxu0 %v4942
  %6626 = vmatmul.f32.gmra.mxu0 %v6608
  %v6627 = vpop.f32.mrf.mxu0
  %v6628 = vadd.f32 0.0, %v6627
  %6629 = vdwg.mxu0
  %v6631 = vsel %vm5134, %v4719, 0
  %6633 = vmatpush.msra.mxu0 0.0
  %6634 = vmatpush.msra.mxu0 0.0
  %6635 = vmatpush.msra.mxu0 0.0
  %6636 = vmatpush.msra.mxu0 0.0
  %6637 = vmatpush.msra.mxu0 0.0
  %6638 = vmatpush.msra.mxu0 0.0
  %6639 = vmatpush.msra.mxu0 0.0
  %6640 = vmatpush.msra.mxu0 0.0
  %6641 = vmatpush.msra.mxu0 0.0
  %6642 = vmatpush.msra.mxu0 0.0
  %6643 = vmatpush.msra.mxu0 0.0
  %6644 = vmatpush.msra.mxu0 0.0
  %6645 = vmatpush.msra.mxu0 0.0
  %6646 = vmatpush.msra.mxu0 0.0
  %6647 = vmatpush.msra.mxu0 %v4945
  %6648 = vmatpush.msra.mxu0 %v4944
  %6649 = vmatmul.f32.gmra.mxu0 %v6631
  %v6650 = vpop.f32.mrf.mxu0
  %v6651 = vadd.f32 0.0, %v6650
  %6652 = vdwg.mxu0
  %v6654 = vsel %vm5134, %v4720, 0
  %6656 = vmatpush.msra.mxu0 0.0
  %6657 = vmatpush.msra.mxu0 0.0
  %6658 = vmatpush.msra.mxu0 0.0
  %6659 = vmatpush.msra.mxu0 0.0
  %6660 = vmatpush.msra.mxu0 0.0
  %6661 = vmatpush.msra.mxu0 0.0
  %6662 = vmatpush.msra.mxu0 0.0
  %6663 = vmatpush.msra.mxu0 0.0
  %6664 = vmatpush.msra.mxu0 0.0
  %6665 = vmatpush.msra.mxu0 0.0
  %6666 = vmatpush.msra.mxu0 0.0
  %6667 = vmatpush.msra.mxu0 0.0
  %6668 = vmatpush.msra.mxu0 0.0
  %6669 = vmatpush.msra.mxu0 0.0
  %6670 = vmatpush.msra.mxu0 %v4947
  %6671 = vmatpush.msra.mxu0 %v4946
  %6672 = vmatmul.f32.gmra.mxu0 %v6654
  %v6673 = vpop.f32.mrf.mxu0
  %v6674 = vadd.f32 0.0, %v6673
  %6675 = vdwg.mxu0
  %v6677 = vsel %vm5134, %v4721, 0
  %6679 = vmatpush.msra.mxu0 0.0
  %6680 = vmatpush.msra.mxu0 0.0
  %6681 = vmatpush.msra.mxu0 0.0
  %6682 = vmatpush.msra.mxu0 0.0
  %6683 = vmatpush.msra.mxu0 0.0
  %6684 = vmatpush.msra.mxu0 0.0
  %6685 = vmatpush.msra.mxu0 0.0
  %6686 = vmatpush.msra.mxu0 0.0
  %6687 = vmatpush.msra.mxu0 0.0
  %6688 = vmatpush.msra.mxu0 0.0
  %6689 = vmatpush.msra.mxu0 0.0
  %6690 = vmatpush.msra.mxu0 0.0
  %6691 = vmatpush.msra.mxu0 0.0
  %6692 = vmatpush.msra.mxu0 0.0
  %6693 = vmatpush.msra.mxu0 %v4949
  %6694 = vmatpush.msra.mxu0 %v4948
  %6695 = vmatmul.f32.gmra.mxu0 %v6677
  %v6696 = vpop.f32.mrf.mxu0
  %v6697 = vadd.f32 0.0, %v6696
  %6698 = vdwg.mxu0
  %v6700 = vsel %vm5134, %v4722, 0
  %6702 = vmatpush.msra.mxu0 0.0
  %6703 = vmatpush.msra.mxu0 0.0
  %6704 = vmatpush.msra.mxu0 0.0
  %6705 = vmatpush.msra.mxu0 0.0
  %6706 = vmatpush.msra.mxu0 0.0
  %6707 = vmatpush.msra.mxu0 0.0
  %6708 = vmatpush.msra.mxu0 0.0
  %6709 = vmatpush.msra.mxu0 0.0
  %6710 = vmatpush.msra.mxu0 0.0
  %6711 = vmatpush.msra.mxu0 0.0
  %6712 = vmatpush.msra.mxu0 0.0
  %6713 = vmatpush.msra.mxu0 0.0
  %6714 = vmatpush.msra.mxu0 0.0
  %6715 = vmatpush.msra.mxu0 0.0
  %6716 = vmatpush.msra.mxu0 %v4951
  %6717 = vmatpush.msra.mxu0 %v4950
  %6718 = vmatmul.f32.gmra.mxu0 %v6700
  %v6719 = vpop.f32.mrf.mxu0
  %v6720 = vadd.f32 0.0, %v6719
  %6721 = vdwg.mxu0
  %v6723 = vsel %vm5134, %v4723, 0
  %6725 = vmatpush.msra.mxu0 0.0
  %6726 = vmatpush.msra.mxu0 0.0
  %6727 = vmatpush.msra.mxu0 0.0
  %6728 = vmatpush.msra.mxu0 0.0
  %6729 = vmatpush.msra.mxu0 0.0
  %6730 = vmatpush.msra.mxu0 0.0
  %6731 = vmatpush.msra.mxu0 0.0
  %6732 = vmatpush.msra.mxu0 0.0
  %6733 = vmatpush.msra.mxu0 0.0
  %6734 = vmatpush.msra.mxu0 0.0
  %6735 = vmatpush.msra.mxu0 0.0
  %6736 = vmatpush.msra.mxu0 0.0
  %6737 = vmatpush.msra.mxu0 0.0
  %6738 = vmatpush.msra.mxu0 0.0
  %6739 = vmatpush.msra.mxu0 %v4953
  %6740 = vmatpush.msra.mxu0 %v4952
  %6741 = vmatmul.f32.gmra.mxu0 %v6723
  %v6742 = vpop.f32.mrf.mxu0
  %v6743 = vadd.f32 0.0, %v6742
  %6744 = vdwg.mxu0
  %v6746 = vsel %vm5134, %v4724, 0
  %6748 = vmatpush.msra.mxu0 0.0
  %6749 = vmatpush.msra.mxu0 0.0
  %6750 = vmatpush.msra.mxu0 0.0
  %6751 = vmatpush.msra.mxu0 0.0
  %6752 = vmatpush.msra.mxu0 0.0
  %6753 = vmatpush.msra.mxu0 0.0
  %6754 = vmatpush.msra.mxu0 0.0
  %6755 = vmatpush.msra.mxu0 0.0
  %6756 = vmatpush.msra.mxu0 0.0
  %6757 = vmatpush.msra.mxu0 0.0
  %6758 = vmatpush.msra.mxu0 0.0
  %6759 = vmatpush.msra.mxu0 0.0
  %6760 = vmatpush.msra.mxu0 0.0
  %6761 = vmatpush.msra.mxu0 0.0
  %6762 = vmatpush.msra.mxu0 %v4955
  %6763 = vmatpush.msra.mxu0 %v4954
  %6764 = vmatmul.f32.gmra.mxu0 %v6746
  %v6765 = vpop.f32.mrf.mxu0
  %v6766 = vadd.f32 0.0, %v6765
  %6767 = vdwg.mxu0
  %v6769 = vsel %vm5134, %v4725, 0
  %6771 = vmatpush.msra.mxu0 0.0
  %6772 = vmatpush.msra.mxu0 0.0
  %6773 = vmatpush.msra.mxu0 0.0
  %6774 = vmatpush.msra.mxu0 0.0
  %6775 = vmatpush.msra.mxu0 0.0
  %6776 = vmatpush.msra.mxu0 0.0
  %6777 = vmatpush.msra.mxu0 0.0
  %6778 = vmatpush.msra.mxu0 0.0
  %6779 = vmatpush.msra.mxu0 0.0
  %6780 = vmatpush.msra.mxu0 0.0
  %6781 = vmatpush.msra.mxu0 0.0
  %6782 = vmatpush.msra.mxu0 0.0
  %6783 = vmatpush.msra.mxu0 0.0
  %6784 = vmatpush.msra.mxu0 0.0
  %6785 = vmatpush.msra.mxu0 %v4957
  %6786 = vmatpush.msra.mxu0 %v4956
  %6787 = vmatmul.f32.gmra.mxu0 %v6769
  %v6788 = vpop.f32.mrf.mxu0
  %v6789 = vadd.f32 0.0, %v6788
  %6790 = vdwg.mxu0
  %v6792 = vsel %vm5134, %v4726, 0
  %6794 = vmatpush.msra.mxu0 0.0
  %6795 = vmatpush.msra.mxu0 0.0
  %6796 = vmatpush.msra.mxu0 0.0
  %6797 = vmatpush.msra.mxu0 0.0
  %6798 = vmatpush.msra.mxu0 0.0
  %6799 = vmatpush.msra.mxu0 0.0
  %6800 = vmatpush.msra.mxu0 0.0
  %6801 = vmatpush.msra.mxu0 0.0
  %6802 = vmatpush.msra.mxu0 0.0
  %6803 = vmatpush.msra.mxu0 0.0
  %6804 = vmatpush.msra.mxu0 0.0
  %6805 = vmatpush.msra.mxu0 0.0
  %6806 = vmatpush.msra.mxu0 0.0
  %6807 = vmatpush.msra.mxu0 0.0
  %6808 = vmatpush.msra.mxu0 %v4959
  %6809 = vmatpush.msra.mxu0 %v4958
  %6810 = vmatmul.f32.gmra.mxu0 %v6792
  %v6811 = vpop.f32.mrf.mxu0
  %v6812 = vadd.f32 0.0, %v6811
  %6813 = vdwg.mxu0
  %v6815 = vsel %vm5134, %v4727, 0
  %6817 = vmatpush.msra.mxu0 0.0
  %6818 = vmatpush.msra.mxu0 0.0
  %6819 = vmatpush.msra.mxu0 0.0
  %6820 = vmatpush.msra.mxu0 0.0
  %6821 = vmatpush.msra.mxu0 0.0
  %6822 = vmatpush.msra.mxu0 0.0
  %6823 = vmatpush.msra.mxu0 0.0
  %6824 = vmatpush.msra.mxu0 0.0
  %6825 = vmatpush.msra.mxu0 0.0
  %6826 = vmatpush.msra.mxu0 0.0
  %6827 = vmatpush.msra.mxu0 0.0
  %6828 = vmatpush.msra.mxu0 0.0
  %6829 = vmatpush.msra.mxu0 0.0
  %6830 = vmatpush.msra.mxu0 0.0
  %6831 = vmatpush.msra.mxu0 %v4961
  %6832 = vmatpush.msra.mxu0 %v4960
  %6833 = vmatmul.f32.gmra.mxu0 %v6815
  %v6834 = vpop.f32.mrf.mxu0
  %v6835 = vadd.f32 0.0, %v6834
  %6836 = vdwg.mxu0
  %v6838 = vsel %vm5134, %v4728, 0
  %6840 = vmatpush.msra.mxu0 0.0
  %6841 = vmatpush.msra.mxu0 0.0
  %6842 = vmatpush.msra.mxu0 0.0
  %6843 = vmatpush.msra.mxu0 0.0
  %6844 = vmatpush.msra.mxu0 0.0
  %6845 = vmatpush.msra.mxu0 0.0
  %6846 = vmatpush.msra.mxu0 0.0
  %6847 = vmatpush.msra.mxu0 0.0
  %6848 = vmatpush.msra.mxu0 0.0
  %6849 = vmatpush.msra.mxu0 0.0
  %6850 = vmatpush.msra.mxu0 0.0
  %6851 = vmatpush.msra.mxu0 0.0
  %6852 = vmatpush.msra.mxu0 0.0
  %6853 = vmatpush.msra.mxu0 0.0
  %6854 = vmatpush.msra.mxu0 %v4963
  %6855 = vmatpush.msra.mxu0 %v4962
  %6856 = vmatmul.f32.gmra.mxu0 %v6838
  %v6857 = vpop.f32.mrf.mxu0
  %v6858 = vadd.f32 0.0, %v6857
  %6859 = vdwg.mxu0
  %v6861 = vsel %vm5134, %v4729, 0
  %6863 = vmatpush.msra.mxu0 0.0
  %6864 = vmatpush.msra.mxu0 0.0
  %6865 = vmatpush.msra.mxu0 0.0
  %6866 = vmatpush.msra.mxu0 0.0
  %6867 = vmatpush.msra.mxu0 0.0
  %6868 = vmatpush.msra.mxu0 0.0
  %6869 = vmatpush.msra.mxu0 0.0
  %6870 = vmatpush.msra.mxu0 0.0
  %6871 = vmatpush.msra.mxu0 0.0
  %6872 = vmatpush.msra.mxu0 0.0
  %6873 = vmatpush.msra.mxu0 0.0
  %6874 = vmatpush.msra.mxu0 0.0
  %6875 = vmatpush.msra.mxu0 0.0
  %6876 = vmatpush.msra.mxu0 0.0
  %6877 = vmatpush.msra.mxu0 %v4965
  %6878 = vmatpush.msra.mxu0 %v4964
  %6879 = vmatmul.f32.gmra.mxu0 %v6861
  %v6880 = vpop.f32.mrf.mxu0
  %v6881 = vadd.f32 0.0, %v6880
  %6882 = vdwg.mxu0
  %v6884 = vsel %vm5134, %v4730, 0
  %6886 = vmatpush.msra.mxu0 0.0
  %6887 = vmatpush.msra.mxu0 0.0
  %6888 = vmatpush.msra.mxu0 0.0
  %6889 = vmatpush.msra.mxu0 0.0
  %6890 = vmatpush.msra.mxu0 0.0
  %6891 = vmatpush.msra.mxu0 0.0
  %6892 = vmatpush.msra.mxu0 0.0
  %6893 = vmatpush.msra.mxu0 0.0
  %6894 = vmatpush.msra.mxu0 0.0
  %6895 = vmatpush.msra.mxu0 0.0
  %6896 = vmatpush.msra.mxu0 0.0
  %6897 = vmatpush.msra.mxu0 0.0
  %6898 = vmatpush.msra.mxu0 0.0
  %6899 = vmatpush.msra.mxu0 0.0
  %6900 = vmatpush.msra.mxu0 %v4967
  %6901 = vmatpush.msra.mxu0 %v4966
  %6902 = vmatmul.f32.gmra.mxu0 %v6884
  %v6903 = vpop.f32.mrf.mxu0
  %v6904 = vadd.f32 0.0, %v6903
  %6905 = vdwg.mxu0
  %v6907 = vsel %vm5134, %v4731, 0
  %6909 = vmatpush.msra.mxu0 0.0
  %6910 = vmatpush.msra.mxu0 0.0
  %6911 = vmatpush.msra.mxu0 0.0
  %6912 = vmatpush.msra.mxu0 0.0
  %6913 = vmatpush.msra.mxu0 0.0
  %6914 = vmatpush.msra.mxu0 0.0
  %6915 = vmatpush.msra.mxu0 0.0
  %6916 = vmatpush.msra.mxu0 0.0
  %6917 = vmatpush.msra.mxu0 0.0
  %6918 = vmatpush.msra.mxu0 0.0
  %6919 = vmatpush.msra.mxu0 0.0
  %6920 = vmatpush.msra.mxu0 0.0
  %6921 = vmatpush.msra.mxu0 0.0
  %6922 = vmatpush.msra.mxu0 0.0
  %6923 = vmatpush.msra.mxu0 %v4969
  %6924 = vmatpush.msra.mxu0 %v4968
  %6925 = vmatmul.f32.gmra.mxu0 %v6907
  %v6926 = vpop.f32.mrf.mxu0
  %v6927 = vadd.f32 0.0, %v6926
  %6928 = vdwg.mxu0
  %v6930 = vsel %vm5134, %v4732, 0
  %6932 = vmatpush.msra.mxu0 0.0
  %6933 = vmatpush.msra.mxu0 0.0
  %6934 = vmatpush.msra.mxu0 0.0
  %6935 = vmatpush.msra.mxu0 0.0
  %6936 = vmatpush.msra.mxu0 0.0
  %6937 = vmatpush.msra.mxu0 0.0
  %6938 = vmatpush.msra.mxu0 0.0
  %6939 = vmatpush.msra.mxu0 0.0
  %6940 = vmatpush.msra.mxu0 0.0
  %6941 = vmatpush.msra.mxu0 0.0
  %6942 = vmatpush.msra.mxu0 0.0
  %6943 = vmatpush.msra.mxu0 0.0
  %6944 = vmatpush.msra.mxu0 0.0
  %6945 = vmatpush.msra.mxu0 0.0
  %6946 = vmatpush.msra.mxu0 %v4971
  %6947 = vmatpush.msra.mxu0 %v4970
  %6948 = vmatmul.f32.gmra.mxu0 %v6930
  %v6949 = vpop.f32.mrf.mxu0
  %v6950 = vadd.f32 0.0, %v6949
  %6951 = vdwg.mxu0
  %v6953 = vsel %vm5134, %v4733, 0
  %6955 = vmatpush.msra.mxu0 0.0
  %6956 = vmatpush.msra.mxu0 0.0
  %6957 = vmatpush.msra.mxu0 0.0
  %6958 = vmatpush.msra.mxu0 0.0
  %6959 = vmatpush.msra.mxu0 0.0
  %6960 = vmatpush.msra.mxu0 0.0
  %6961 = vmatpush.msra.mxu0 0.0
  %6962 = vmatpush.msra.mxu0 0.0
  %6963 = vmatpush.msra.mxu0 0.0
  %6964 = vmatpush.msra.mxu0 0.0
  %6965 = vmatpush.msra.mxu0 0.0
  %6966 = vmatpush.msra.mxu0 0.0
  %6967 = vmatpush.msra.mxu0 0.0
  %6968 = vmatpush.msra.mxu0 0.0
  %6969 = vmatpush.msra.mxu0 %v4973
  %6970 = vmatpush.msra.mxu0 %v4972
  %6971 = vmatmul.f32.gmra.mxu0 %v6953
  %v6972 = vpop.f32.mrf.mxu0
  %v6973 = vadd.f32 0.0, %v6972
  %6974 = vdwg.mxu0
  %v6976 = vsel %vm5134, %v4734, 0
  %6978 = vmatpush.msra.mxu0 0.0
  %6979 = vmatpush.msra.mxu0 0.0
  %6980 = vmatpush.msra.mxu0 0.0
  %6981 = vmatpush.msra.mxu0 0.0
  %6982 = vmatpush.msra.mxu0 0.0
  %6983 = vmatpush.msra.mxu0 0.0
  %6984 = vmatpush.msra.mxu0 0.0
  %6985 = vmatpush.msra.mxu0 0.0
  %6986 = vmatpush.msra.mxu0 0.0
  %6987 = vmatpush.msra.mxu0 0.0
  %6988 = vmatpush.msra.mxu0 0.0
  %6989 = vmatpush.msra.mxu0 0.0
  %6990 = vmatpush.msra.mxu0 0.0
  %6991 = vmatpush.msra.mxu0 0.0
  %6992 = vmatpush.msra.mxu0 %v4975
  %6993 = vmatpush.msra.mxu0 %v4974
  %6994 = vmatmul.f32.gmra.mxu0 %v6976
  %v6995 = vpop.f32.mrf.mxu0
  %v6996 = vadd.f32 0.0, %v6995
  %6997 = vdwg.mxu0
  %v6999 = vsel %vm5134, %v4735, 0
  %7001 = vmatpush.msra.mxu0 0.0
  %7002 = vmatpush.msra.mxu0 0.0
  %7003 = vmatpush.msra.mxu0 0.0
  %7004 = vmatpush.msra.mxu0 0.0
  %7005 = vmatpush.msra.mxu0 0.0
  %7006 = vmatpush.msra.mxu0 0.0
  %7007 = vmatpush.msra.mxu0 0.0
  %7008 = vmatpush.msra.mxu0 0.0
  %7009 = vmatpush.msra.mxu0 0.0
  %7010 = vmatpush.msra.mxu0 0.0
  %7011 = vmatpush.msra.mxu0 0.0
  %7012 = vmatpush.msra.mxu0 0.0
  %7013 = vmatpush.msra.mxu0 0.0
  %7014 = vmatpush.msra.mxu0 0.0
  %7015 = vmatpush.msra.mxu0 %v4977
  %7016 = vmatpush.msra.mxu0 %v4976
  %7017 = vmatmul.f32.gmra.mxu0 %v6999
  %v7018 = vpop.f32.mrf.mxu0
  %v7019 = vadd.f32 0.0, %v7018
  %7020 = vdwg.mxu0
  %v7022 = vsel %vm5134, %v4736, 0
  %7024 = vmatpush.msra.mxu0 0.0
  %7025 = vmatpush.msra.mxu0 0.0
  %7026 = vmatpush.msra.mxu0 0.0
  %7027 = vmatpush.msra.mxu0 0.0
  %7028 = vmatpush.msra.mxu0 0.0
  %7029 = vmatpush.msra.mxu0 0.0
  %7030 = vmatpush.msra.mxu0 0.0
  %7031 = vmatpush.msra.mxu0 0.0
  %7032 = vmatpush.msra.mxu0 0.0
  %7033 = vmatpush.msra.mxu0 0.0
  %7034 = vmatpush.msra.mxu0 0.0
  %7035 = vmatpush.msra.mxu0 0.0
  %7036 = vmatpush.msra.mxu0 0.0
  %7037 = vmatpush.msra.mxu0 0.0
  %7038 = vmatpush.msra.mxu0 %v4979
  %7039 = vmatpush.msra.mxu0 %v4978
  %7040 = vmatmul.f32.gmra.mxu0 %v7022
  %v7041 = vpop.f32.mrf.mxu0
  %v7042 = vadd.f32 0.0, %v7041
  %7043 = vdwg.mxu0
  %v7045 = vsel %vm5134, %v4737, 0
  %7047 = vmatpush.msra.mxu0 0.0
  %7048 = vmatpush.msra.mxu0 0.0
  %7049 = vmatpush.msra.mxu0 0.0
  %7050 = vmatpush.msra.mxu0 0.0
  %7051 = vmatpush.msra.mxu0 0.0
  %7052 = vmatpush.msra.mxu0 0.0
  %7053 = vmatpush.msra.mxu0 0.0
  %7054 = vmatpush.msra.mxu0 0.0
  %7055 = vmatpush.msra.mxu0 0.0
  %7056 = vmatpush.msra.mxu0 0.0
  %7057 = vmatpush.msra.mxu0 0.0
  %7058 = vmatpush.msra.mxu0 0.0
  %7059 = vmatpush.msra.mxu0 0.0
  %7060 = vmatpush.msra.mxu0 0.0
  %7061 = vmatpush.msra.mxu0 %v4981
  %7062 = vmatpush.msra.mxu0 %v4980
  %7063 = vmatmul.f32.gmra.mxu0 %v7045
  %v7064 = vpop.f32.mrf.mxu0
  %v7065 = vadd.f32 0.0, %v7064
  %7066 = vdwg.mxu0
  %v7068 = vsel %vm5134, %v4738, 0
  %7070 = vmatpush.msra.mxu0 0.0
  %7071 = vmatpush.msra.mxu0 0.0
  %7072 = vmatpush.msra.mxu0 0.0
  %7073 = vmatpush.msra.mxu0 0.0
  %7074 = vmatpush.msra.mxu0 0.0
  %7075 = vmatpush.msra.mxu0 0.0
  %7076 = vmatpush.msra.mxu0 0.0
  %7077 = vmatpush.msra.mxu0 0.0
  %7078 = vmatpush.msra.mxu0 0.0
  %7079 = vmatpush.msra.mxu0 0.0
  %7080 = vmatpush.msra.mxu0 0.0
  %7081 = vmatpush.msra.mxu0 0.0
  %7082 = vmatpush.msra.mxu0 0.0
  %7083 = vmatpush.msra.mxu0 0.0
  %7084 = vmatpush.msra.mxu0 %v4983
  %7085 = vmatpush.msra.mxu0 %v4982
  %7086 = vmatmul.f32.gmra.mxu0 %v7068
  %v7087 = vpop.f32.mrf.mxu0
  %v7088 = vadd.f32 0.0, %v7087
  %7089 = vdwg.mxu0
  %v7091 = vsel %vm5134, %v4739, 0
  %7093 = vmatpush.msra.mxu0 0.0
  %7094 = vmatpush.msra.mxu0 0.0
  %7095 = vmatpush.msra.mxu0 0.0
  %7096 = vmatpush.msra.mxu0 0.0
  %7097 = vmatpush.msra.mxu0 0.0
  %7098 = vmatpush.msra.mxu0 0.0
  %7099 = vmatpush.msra.mxu0 0.0
  %7100 = vmatpush.msra.mxu0 0.0
  %7101 = vmatpush.msra.mxu0 0.0
  %7102 = vmatpush.msra.mxu0 0.0
  %7103 = vmatpush.msra.mxu0 0.0
  %7104 = vmatpush.msra.mxu0 0.0
  %7105 = vmatpush.msra.mxu0 0.0
  %7106 = vmatpush.msra.mxu0 0.0
  %7107 = vmatpush.msra.mxu0 %v4985
  %7108 = vmatpush.msra.mxu0 %v4984
  %7109 = vmatmul.f32.gmra.mxu0 %v7091
  %v7110 = vpop.f32.mrf.mxu0
  %v7111 = vadd.f32 0.0, %v7110
  %7112 = vdwg.mxu0
  %v7114 = vsel %vm5134, %v4740, 0
  %7116 = vmatpush.msra.mxu0 0.0
  %7117 = vmatpush.msra.mxu0 0.0
  %7118 = vmatpush.msra.mxu0 0.0
  %7119 = vmatpush.msra.mxu0 0.0
  %7120 = vmatpush.msra.mxu0 0.0
  %7121 = vmatpush.msra.mxu0 0.0
  %7122 = vmatpush.msra.mxu0 0.0
  %7123 = vmatpush.msra.mxu0 0.0
  %7124 = vmatpush.msra.mxu0 0.0
  %7125 = vmatpush.msra.mxu0 0.0
  %7126 = vmatpush.msra.mxu0 0.0
  %7127 = vmatpush.msra.mxu0 0.0
  %7128 = vmatpush.msra.mxu0 0.0
  %7129 = vmatpush.msra.mxu0 0.0
  %7130 = vmatpush.msra.mxu0 %v4987
  %7131 = vmatpush.msra.mxu0 %v4986
  %7132 = vmatmul.f32.gmra.mxu0 %v7114
  %v7133 = vpop.f32.mrf.mxu0
  %v7134 = vadd.f32 0.0, %v7133
  %7135 = vdwg.mxu0
  %v7137 = vsel %vm5134, %v4741, 0
  %7139 = vmatpush.msra.mxu0 0.0
  %7140 = vmatpush.msra.mxu0 0.0
  %7141 = vmatpush.msra.mxu0 0.0
  %7142 = vmatpush.msra.mxu0 0.0
  %7143 = vmatpush.msra.mxu0 0.0
  %7144 = vmatpush.msra.mxu0 0.0
  %7145 = vmatpush.msra.mxu0 0.0
  %7146 = vmatpush.msra.mxu0 0.0
  %7147 = vmatpush.msra.mxu0 0.0
  %7148 = vmatpush.msra.mxu0 0.0
  %7149 = vmatpush.msra.mxu0 0.0
  %7150 = vmatpush.msra.mxu0 0.0
  %7151 = vmatpush.msra.mxu0 0.0
  %7152 = vmatpush.msra.mxu0 0.0
  %7153 = vmatpush.msra.mxu0 %v4989
  %7154 = vmatpush.msra.mxu0 %v4988
  %7155 = vmatmul.f32.gmra.mxu0 %v7137
  %v7156 = vpop.f32.mrf.mxu0
  %v7157 = vadd.f32 0.0, %v7156
  %7158 = vdwg.mxu0
  %v7160 = vsel %vm5134, %v4742, 0
  %7162 = vmatpush.msra.mxu0 0.0
  %7163 = vmatpush.msra.mxu0 0.0
  %7164 = vmatpush.msra.mxu0 0.0
  %7165 = vmatpush.msra.mxu0 0.0
  %7166 = vmatpush.msra.mxu0 0.0
  %7167 = vmatpush.msra.mxu0 0.0
  %7168 = vmatpush.msra.mxu0 0.0
  %7169 = vmatpush.msra.mxu0 0.0
  %7170 = vmatpush.msra.mxu0 0.0
  %7171 = vmatpush.msra.mxu0 0.0
  %7172 = vmatpush.msra.mxu0 0.0
  %7173 = vmatpush.msra.mxu0 0.0
  %7174 = vmatpush.msra.mxu0 0.0
  %7175 = vmatpush.msra.mxu0 0.0
  %7176 = vmatpush.msra.mxu0 %v4991
  %7177 = vmatpush.msra.mxu0 %v4990
  %7178 = vmatmul.f32.gmra.mxu0 %v7160
  %v7179 = vpop.f32.mrf.mxu0
  %v7180 = vadd.f32 0.0, %v7179
  %7181 = vdwg.mxu0
  %v7183 = vsel %vm5134, %v4743, 0
  %7185 = vmatpush.msra.mxu0 0.0
  %7186 = vmatpush.msra.mxu0 0.0
  %7187 = vmatpush.msra.mxu0 0.0
  %7188 = vmatpush.msra.mxu0 0.0
  %7189 = vmatpush.msra.mxu0 0.0
  %7190 = vmatpush.msra.mxu0 0.0
  %7191 = vmatpush.msra.mxu0 0.0
  %7192 = vmatpush.msra.mxu0 0.0
  %7193 = vmatpush.msra.mxu0 0.0
  %7194 = vmatpush.msra.mxu0 0.0
  %7195 = vmatpush.msra.mxu0 0.0
  %7196 = vmatpush.msra.mxu0 0.0
  %7197 = vmatpush.msra.mxu0 0.0
  %7198 = vmatpush.msra.mxu0 0.0
  %7199 = vmatpush.msra.mxu0 %v4993
  %7200 = vmatpush.msra.mxu0 %v4992
  %7201 = vmatmul.f32.gmra.mxu0 %v7183
  %v7202 = vpop.f32.mrf.mxu0
  %v7203 = vadd.f32 0.0, %v7202
  %7204 = vdwg.mxu0
  %v7206 = vsel %vm5134, %v4744, 0
  %7208 = vmatpush.msra.mxu0 0.0
  %7209 = vmatpush.msra.mxu0 0.0
  %7210 = vmatpush.msra.mxu0 0.0
  %7211 = vmatpush.msra.mxu0 0.0
  %7212 = vmatpush.msra.mxu0 0.0
  %7213 = vmatpush.msra.mxu0 0.0
  %7214 = vmatpush.msra.mxu0 0.0
  %7215 = vmatpush.msra.mxu0 0.0
  %7216 = vmatpush.msra.mxu0 0.0
  %7217 = vmatpush.msra.mxu0 0.0
  %7218 = vmatpush.msra.mxu0 0.0
  %7219 = vmatpush.msra.mxu0 0.0
  %7220 = vmatpush.msra.mxu0 0.0
  %7221 = vmatpush.msra.mxu0 0.0
  %7222 = vmatpush.msra.mxu0 %v4995
  %7223 = vmatpush.msra.mxu0 %v4994
  %7224 = vmatmul.f32.gmra.mxu0 %v7206
  %v7225 = vpop.f32.mrf.mxu0
  %v7226 = vadd.f32 0.0, %v7225
  %7227 = vdwg.mxu0
  %v7229 = vsel %vm5134, %v4745, 0
  %7231 = vmatpush.msra.mxu0 0.0
  %7232 = vmatpush.msra.mxu0 0.0
  %7233 = vmatpush.msra.mxu0 0.0
  %7234 = vmatpush.msra.mxu0 0.0
  %7235 = vmatpush.msra.mxu0 0.0
  %7236 = vmatpush.msra.mxu0 0.0
  %7237 = vmatpush.msra.mxu0 0.0
  %7238 = vmatpush.msra.mxu0 0.0
  %7239 = vmatpush.msra.mxu0 0.0
  %7240 = vmatpush.msra.mxu0 0.0
  %7241 = vmatpush.msra.mxu0 0.0
  %7242 = vmatpush.msra.mxu0 0.0
  %7243 = vmatpush.msra.mxu0 0.0
  %7244 = vmatpush.msra.mxu0 0.0
  %7245 = vmatpush.msra.mxu0 %v4997
  %7246 = vmatpush.msra.mxu0 %v4996
  %7247 = vmatmul.f32.gmra.mxu0 %v7229
  %v7248 = vpop.f32.mrf.mxu0
  %v7249 = vadd.f32 0.0, %v7248
  %7250 = vdwg.mxu0
  %v7252 = vsel %vm5134, %v4746, 0
  %7254 = vmatpush.msra.mxu0 0.0
  %7255 = vmatpush.msra.mxu0 0.0
  %7256 = vmatpush.msra.mxu0 0.0
  %7257 = vmatpush.msra.mxu0 0.0
  %7258 = vmatpush.msra.mxu0 0.0
  %7259 = vmatpush.msra.mxu0 0.0
  %7260 = vmatpush.msra.mxu0 0.0
  %7261 = vmatpush.msra.mxu0 0.0
  %7262 = vmatpush.msra.mxu0 0.0
  %7263 = vmatpush.msra.mxu0 0.0
  %7264 = vmatpush.msra.mxu0 0.0
  %7265 = vmatpush.msra.mxu0 0.0
  %7266 = vmatpush.msra.mxu0 0.0
  %7267 = vmatpush.msra.mxu0 0.0
  %7268 = vmatpush.msra.mxu0 %v4999
  %7269 = vmatpush.msra.mxu0 %v4998
  %7270 = vmatmul.f32.gmra.mxu0 %v7252
  %v7271 = vpop.f32.mrf.mxu0
  %v7272 = vadd.f32 0.0, %v7271
  %7273 = vdwg.mxu0
  %v7275 = vsel %vm5134, %v4747, 0
  %7277 = vmatpush.msra.mxu0 0.0
  %7278 = vmatpush.msra.mxu0 0.0
  %7279 = vmatpush.msra.mxu0 0.0
  %7280 = vmatpush.msra.mxu0 0.0
  %7281 = vmatpush.msra.mxu0 0.0
  %7282 = vmatpush.msra.mxu0 0.0
  %7283 = vmatpush.msra.mxu0 0.0
  %7284 = vmatpush.msra.mxu0 0.0
  %7285 = vmatpush.msra.mxu0 0.0
  %7286 = vmatpush.msra.mxu0 0.0
  %7287 = vmatpush.msra.mxu0 0.0
  %7288 = vmatpush.msra.mxu0 0.0
  %7289 = vmatpush.msra.mxu0 0.0
  %7290 = vmatpush.msra.mxu0 0.0
  %7291 = vmatpush.msra.mxu0 %v5001
  %7292 = vmatpush.msra.mxu0 %v5000
  %7293 = vmatmul.f32.gmra.mxu0 %v7275
  %v7294 = vpop.f32.mrf.mxu0
  %v7295 = vadd.f32 0.0, %v7294
  %7296 = vdwg.mxu0
  %v7298 = vsel %vm5134, %v4748, 0
  %7300 = vmatpush.msra.mxu0 0.0
  %7301 = vmatpush.msra.mxu0 0.0
  %7302 = vmatpush.msra.mxu0 0.0
  %7303 = vmatpush.msra.mxu0 0.0
  %7304 = vmatpush.msra.mxu0 0.0
  %7305 = vmatpush.msra.mxu0 0.0
  %7306 = vmatpush.msra.mxu0 0.0
  %7307 = vmatpush.msra.mxu0 0.0
  %7308 = vmatpush.msra.mxu0 0.0
  %7309 = vmatpush.msra.mxu0 0.0
  %7310 = vmatpush.msra.mxu0 0.0
  %7311 = vmatpush.msra.mxu0 0.0
  %7312 = vmatpush.msra.mxu0 0.0
  %7313 = vmatpush.msra.mxu0 0.0
  %7314 = vmatpush.msra.mxu0 %v5003
  %7315 = vmatpush.msra.mxu0 %v5002
  %7316 = vmatmul.f32.gmra.mxu0 %v7298
  %v7317 = vpop.f32.mrf.mxu0
  %v7318 = vadd.f32 0.0, %v7317
  %7319 = vdwg.mxu0
  %v7321 = vsel %vm5134, %v4749, 0
  %7323 = vmatpush.msra.mxu0 0.0
  %7324 = vmatpush.msra.mxu0 0.0
  %7325 = vmatpush.msra.mxu0 0.0
  %7326 = vmatpush.msra.mxu0 0.0
  %7327 = vmatpush.msra.mxu0 0.0
  %7328 = vmatpush.msra.mxu0 0.0
  %7329 = vmatpush.msra.mxu0 0.0
  %7330 = vmatpush.msra.mxu0 0.0
  %7331 = vmatpush.msra.mxu0 0.0
  %7332 = vmatpush.msra.mxu0 0.0
  %7333 = vmatpush.msra.mxu0 0.0
  %7334 = vmatpush.msra.mxu0 0.0
  %7335 = vmatpush.msra.mxu0 0.0
  %7336 = vmatpush.msra.mxu0 0.0
  %7337 = vmatpush.msra.mxu0 %v5005
  %7338 = vmatpush.msra.mxu0 %v5004
  %7339 = vmatmul.f32.gmra.mxu0 %v7321
  %v7340 = vpop.f32.mrf.mxu0
  %v7341 = vadd.f32 0.0, %v7340
  %7342 = vdwg.mxu0
  %v7344 = vsel %vm5134, %v4750, 0
  %7346 = vmatpush.msra.mxu0 0.0
  %7347 = vmatpush.msra.mxu0 0.0
  %7348 = vmatpush.msra.mxu0 0.0
  %7349 = vmatpush.msra.mxu0 0.0
  %7350 = vmatpush.msra.mxu0 0.0
  %7351 = vmatpush.msra.mxu0 0.0
  %7352 = vmatpush.msra.mxu0 0.0
  %7353 = vmatpush.msra.mxu0 0.0
  %7354 = vmatpush.msra.mxu0 0.0
  %7355 = vmatpush.msra.mxu0 0.0
  %7356 = vmatpush.msra.mxu0 0.0
  %7357 = vmatpush.msra.mxu0 0.0
  %7358 = vmatpush.msra.mxu0 0.0
  %7359 = vmatpush.msra.mxu0 0.0
  %7360 = vmatpush.msra.mxu0 %v5007
  %7361 = vmatpush.msra.mxu0 %v5006
  %7362 = vmatmul.f32.gmra.mxu0 %v7344
  %v7363 = vpop.f32.mrf.mxu0
  %v7364 = vadd.f32 0.0, %v7363
  %7365 = vdwg.mxu0
  %v7367 = vsel %vm5134, %v4751, 0
  %7369 = vmatpush.msra.mxu0 0.0
  %7370 = vmatpush.msra.mxu0 0.0
  %7371 = vmatpush.msra.mxu0 0.0
  %7372 = vmatpush.msra.mxu0 0.0
  %7373 = vmatpush.msra.mxu0 0.0
  %7374 = vmatpush.msra.mxu0 0.0
  %7375 = vmatpush.msra.mxu0 0.0
  %7376 = vmatpush.msra.mxu0 0.0
  %7377 = vmatpush.msra.mxu0 0.0
  %7378 = vmatpush.msra.mxu0 0.0
  %7379 = vmatpush.msra.mxu0 0.0
  %7380 = vmatpush.msra.mxu0 0.0
  %7381 = vmatpush.msra.mxu0 0.0
  %7382 = vmatpush.msra.mxu0 0.0
  %7383 = vmatpush.msra.mxu0 %v5009
  %7384 = vmatpush.msra.mxu0 %v5008
  %7385 = vmatmul.f32.gmra.mxu0 %v7367
  %v7386 = vpop.f32.mrf.mxu0
  %v7387 = vadd.f32 0.0, %v7386
  %7388 = vdwg.mxu0
  %v7390 = vsel %vm5134, %v4752, 0
  %7392 = vmatpush.msra.mxu0 0.0
  %7393 = vmatpush.msra.mxu0 0.0
  %7394 = vmatpush.msra.mxu0 0.0
  %7395 = vmatpush.msra.mxu0 0.0
  %7396 = vmatpush.msra.mxu0 0.0
  %7397 = vmatpush.msra.mxu0 0.0
  %7398 = vmatpush.msra.mxu0 0.0
  %7399 = vmatpush.msra.mxu0 0.0
  %7400 = vmatpush.msra.mxu0 0.0
  %7401 = vmatpush.msra.mxu0 0.0
  %7402 = vmatpush.msra.mxu0 0.0
  %7403 = vmatpush.msra.mxu0 0.0
  %7404 = vmatpush.msra.mxu0 0.0
  %7405 = vmatpush.msra.mxu0 0.0
  %7406 = vmatpush.msra.mxu0 %v5011
  %7407 = vmatpush.msra.mxu0 %v5010
  %7408 = vmatmul.f32.gmra.mxu0 %v7390
  %v7409 = vpop.f32.mrf.mxu0
  %v7410 = vadd.f32 0.0, %v7409
  %7411 = vdwg.mxu0
  %v7413 = vsel %vm5134, %v4753, 0
  %7415 = vmatpush.msra.mxu0 0.0
  %7416 = vmatpush.msra.mxu0 0.0
  %7417 = vmatpush.msra.mxu0 0.0
  %7418 = vmatpush.msra.mxu0 0.0
  %7419 = vmatpush.msra.mxu0 0.0
  %7420 = vmatpush.msra.mxu0 0.0
  %7421 = vmatpush.msra.mxu0 0.0
  %7422 = vmatpush.msra.mxu0 0.0
  %7423 = vmatpush.msra.mxu0 0.0
  %7424 = vmatpush.msra.mxu0 0.0
  %7425 = vmatpush.msra.mxu0 0.0
  %7426 = vmatpush.msra.mxu0 0.0
  %7427 = vmatpush.msra.mxu0 0.0
  %7428 = vmatpush.msra.mxu0 0.0
  %7429 = vmatpush.msra.mxu0 %v5013
  %7430 = vmatpush.msra.mxu0 %v5012
  %7431 = vmatmul.f32.gmra.mxu0 %v7413
  %v7432 = vpop.f32.mrf.mxu0
  %v7433 = vadd.f32 0.0, %v7432
  %7434 = vdwg.mxu0
  %v7436 = vsel %vm5134, %v4754, 0
  %7438 = vmatpush.msra.mxu0 0.0
  %7439 = vmatpush.msra.mxu0 0.0
  %7440 = vmatpush.msra.mxu0 0.0
  %7441 = vmatpush.msra.mxu0 0.0
  %7442 = vmatpush.msra.mxu0 0.0
  %7443 = vmatpush.msra.mxu0 0.0
  %7444 = vmatpush.msra.mxu0 0.0
  %7445 = vmatpush.msra.mxu0 0.0
  %7446 = vmatpush.msra.mxu0 0.0
  %7447 = vmatpush.msra.mxu0 0.0
  %7448 = vmatpush.msra.mxu0 0.0
  %7449 = vmatpush.msra.mxu0 0.0
  %7450 = vmatpush.msra.mxu0 0.0
  %7451 = vmatpush.msra.mxu0 0.0
  %7452 = vmatpush.msra.mxu0 %v5015
  %7453 = vmatpush.msra.mxu0 %v5014
  %7454 = vmatmul.f32.gmra.mxu0 %v7436
  %v7455 = vpop.f32.mrf.mxu0
  %v7456 = vadd.f32 0.0, %v7455
  %7457 = vdwg.mxu0
  %v7459 = vsel %vm5134, %v4755, 0
  %7461 = vmatpush.msra.mxu0 0.0
  %7462 = vmatpush.msra.mxu0 0.0
  %7463 = vmatpush.msra.mxu0 0.0
  %7464 = vmatpush.msra.mxu0 0.0
  %7465 = vmatpush.msra.mxu0 0.0
  %7466 = vmatpush.msra.mxu0 0.0
  %7467 = vmatpush.msra.mxu0 0.0
  %7468 = vmatpush.msra.mxu0 0.0
  %7469 = vmatpush.msra.mxu0 0.0
  %7470 = vmatpush.msra.mxu0 0.0
  %7471 = vmatpush.msra.mxu0 0.0
  %7472 = vmatpush.msra.mxu0 0.0
  %7473 = vmatpush.msra.mxu0 0.0
  %7474 = vmatpush.msra.mxu0 0.0
  %7475 = vmatpush.msra.mxu0 %v5017
  %7476 = vmatpush.msra.mxu0 %v5016
  %7477 = vmatmul.f32.gmra.mxu0 %v7459
  %v7478 = vpop.f32.mrf.mxu0
  %v7479 = vadd.f32 0.0, %v7478
  %7480 = vdwg.mxu0
  %v7482 = vsel %vm5134, %v4756, 0
  %7484 = vmatpush.msra.mxu0 0.0
  %7485 = vmatpush.msra.mxu0 0.0
  %7486 = vmatpush.msra.mxu0 0.0
  %7487 = vmatpush.msra.mxu0 0.0
  %7488 = vmatpush.msra.mxu0 0.0
  %7489 = vmatpush.msra.mxu0 0.0
  %7490 = vmatpush.msra.mxu0 0.0
  %7491 = vmatpush.msra.mxu0 0.0
  %7492 = vmatpush.msra.mxu0 0.0
  %7493 = vmatpush.msra.mxu0 0.0
  %7494 = vmatpush.msra.mxu0 0.0
  %7495 = vmatpush.msra.mxu0 0.0
  %7496 = vmatpush.msra.mxu0 0.0
  %7497 = vmatpush.msra.mxu0 0.0
  %7498 = vmatpush.msra.mxu0 %v5019
  %7499 = vmatpush.msra.mxu0 %v5018
  %7500 = vmatmul.f32.gmra.mxu0 %v7482
  %v7501 = vpop.f32.mrf.mxu0
  %v7502 = vadd.f32 0.0, %v7501
  %7503 = vdwg.mxu0
  %v7505 = vsel %vm5134, %v4757, 0
  %7507 = vmatpush.msra.mxu0 0.0
  %7508 = vmatpush.msra.mxu0 0.0
  %7509 = vmatpush.msra.mxu0 0.0
  %7510 = vmatpush.msra.mxu0 0.0
  %7511 = vmatpush.msra.mxu0 0.0
  %7512 = vmatpush.msra.mxu0 0.0
  %7513 = vmatpush.msra.mxu0 0.0
  %7514 = vmatpush.msra.mxu0 0.0
  %7515 = vmatpush.msra.mxu0 0.0
  %7516 = vmatpush.msra.mxu0 0.0
  %7517 = vmatpush.msra.mxu0 0.0
  %7518 = vmatpush.msra.mxu0 0.0
  %7519 = vmatpush.msra.mxu0 0.0
  %7520 = vmatpush.msra.mxu0 0.0
  %7521 = vmatpush.msra.mxu0 %v5021
  %7522 = vmatpush.msra.mxu0 %v5020
  %7523 = vmatmul.f32.gmra.mxu0 %v7505
  %v7524 = vpop.f32.mrf.mxu0
  %v7525 = vadd.f32 0.0, %v7524
  %7526 = vdwg.mxu0
  %v7528 = vsel %vm5134, %v4758, 0
  %7530 = vmatpush.msra.mxu0 0.0
  %7531 = vmatpush.msra.mxu0 0.0
  %7532 = vmatpush.msra.mxu0 0.0
  %7533 = vmatpush.msra.mxu0 0.0
  %7534 = vmatpush.msra.mxu0 0.0
  %7535 = vmatpush.msra.mxu0 0.0
  %7536 = vmatpush.msra.mxu0 0.0
  %7537 = vmatpush.msra.mxu0 0.0
  %7538 = vmatpush.msra.mxu0 0.0
  %7539 = vmatpush.msra.mxu0 0.0
  %7540 = vmatpush.msra.mxu0 0.0
  %7541 = vmatpush.msra.mxu0 0.0
  %7542 = vmatpush.msra.mxu0 0.0
  %7543 = vmatpush.msra.mxu0 0.0
  %7544 = vmatpush.msra.mxu0 %v5023
  %7545 = vmatpush.msra.mxu0 %v5022
  %7546 = vmatmul.f32.gmra.mxu0 %v7528
  %v7547 = vpop.f32.mrf.mxu0
  %v7548 = vadd.f32 0.0, %v7547
  %7549 = vdwg.mxu0
  %v7551 = vsel %vm5134, %v4759, 0
  %7553 = vmatpush.msra.mxu0 0.0
  %7554 = vmatpush.msra.mxu0 0.0
  %7555 = vmatpush.msra.mxu0 0.0
  %7556 = vmatpush.msra.mxu0 0.0
  %7557 = vmatpush.msra.mxu0 0.0
  %7558 = vmatpush.msra.mxu0 0.0
  %7559 = vmatpush.msra.mxu0 0.0
  %7560 = vmatpush.msra.mxu0 0.0
  %7561 = vmatpush.msra.mxu0 0.0
  %7562 = vmatpush.msra.mxu0 0.0
  %7563 = vmatpush.msra.mxu0 0.0
  %7564 = vmatpush.msra.mxu0 0.0
  %7565 = vmatpush.msra.mxu0 0.0
  %7566 = vmatpush.msra.mxu0 0.0
  %7567 = vmatpush.msra.mxu0 %v5025
  %7568 = vmatpush.msra.mxu0 %v5024
  %7569 = vmatmul.f32.gmra.mxu0 %v7551
  %v7570 = vpop.f32.mrf.mxu0
  %v7571 = vadd.f32 0.0, %v7570
  %7572 = vdwg.mxu0
  %v7574 = vsel %vm5134, %v4760, 0
  %7576 = vmatpush.msra.mxu0 0.0
  %7577 = vmatpush.msra.mxu0 0.0
  %7578 = vmatpush.msra.mxu0 0.0
  %7579 = vmatpush.msra.mxu0 0.0
  %7580 = vmatpush.msra.mxu0 0.0
  %7581 = vmatpush.msra.mxu0 0.0
  %7582 = vmatpush.msra.mxu0 0.0
  %7583 = vmatpush.msra.mxu0 0.0
  %7584 = vmatpush.msra.mxu0 0.0
  %7585 = vmatpush.msra.mxu0 0.0
  %7586 = vmatpush.msra.mxu0 0.0
  %7587 = vmatpush.msra.mxu0 0.0
  %7588 = vmatpush.msra.mxu0 0.0
  %7589 = vmatpush.msra.mxu0 0.0
  %7590 = vmatpush.msra.mxu0 %v5027
  %7591 = vmatpush.msra.mxu0 %v5026
  %7592 = vmatmul.f32.gmra.mxu0 %v7574
  %v7593 = vpop.f32.mrf.mxu0
  %v7594 = vadd.f32 0.0, %v7593
  %7595 = vdwg.mxu0
  %v7597 = vsel %vm5134, %v4761, 0
  %7599 = vmatpush.msra.mxu0 0.0
  %7600 = vmatpush.msra.mxu0 0.0
  %7601 = vmatpush.msra.mxu0 0.0
  %7602 = vmatpush.msra.mxu0 0.0
  %7603 = vmatpush.msra.mxu0 0.0
  %7604 = vmatpush.msra.mxu0 0.0
  %7605 = vmatpush.msra.mxu0 0.0
  %7606 = vmatpush.msra.mxu0 0.0
  %7607 = vmatpush.msra.mxu0 0.0
  %7608 = vmatpush.msra.mxu0 0.0
  %7609 = vmatpush.msra.mxu0 0.0
  %7610 = vmatpush.msra.mxu0 0.0
  %7611 = vmatpush.msra.mxu0 0.0
  %7612 = vmatpush.msra.mxu0 0.0
  %7613 = vmatpush.msra.mxu0 %v5029
  %7614 = vmatpush.msra.mxu0 %v5028
  %7615 = vmatmul.f32.gmra.mxu0 %v7597
  %v7616 = vpop.f32.mrf.mxu0
  %v7617 = vadd.f32 0.0, %v7616
  %7618 = vdwg.mxu0
  %v7620 = vsel %vm5134, %v4762, 0
  %7622 = vmatpush.msra.mxu0 0.0
  %7623 = vmatpush.msra.mxu0 0.0
  %7624 = vmatpush.msra.mxu0 0.0
  %7625 = vmatpush.msra.mxu0 0.0
  %7626 = vmatpush.msra.mxu0 0.0
  %7627 = vmatpush.msra.mxu0 0.0
  %7628 = vmatpush.msra.mxu0 0.0
  %7629 = vmatpush.msra.mxu0 0.0
  %7630 = vmatpush.msra.mxu0 0.0
  %7631 = vmatpush.msra.mxu0 0.0
  %7632 = vmatpush.msra.mxu0 0.0
  %7633 = vmatpush.msra.mxu0 0.0
  %7634 = vmatpush.msra.mxu0 0.0
  %7635 = vmatpush.msra.mxu0 0.0
  %7636 = vmatpush.msra.mxu0 %v5031
  %7637 = vmatpush.msra.mxu0 %v5030
  %7638 = vmatmul.f32.gmra.mxu0 %v7620
  %v7639 = vpop.f32.mrf.mxu0
  %v7640 = vadd.f32 0.0, %v7639
  %7641 = vdwg.mxu0
  %v7643 = vsel %vm5134, %v4763, 0
  %7645 = vmatpush.msra.mxu0 0.0
  %7646 = vmatpush.msra.mxu0 0.0
  %7647 = vmatpush.msra.mxu0 0.0
  %7648 = vmatpush.msra.mxu0 0.0
  %7649 = vmatpush.msra.mxu0 0.0
  %7650 = vmatpush.msra.mxu0 0.0
  %7651 = vmatpush.msra.mxu0 0.0
  %7652 = vmatpush.msra.mxu0 0.0
  %7653 = vmatpush.msra.mxu0 0.0
  %7654 = vmatpush.msra.mxu0 0.0
  %7655 = vmatpush.msra.mxu0 0.0
  %7656 = vmatpush.msra.mxu0 0.0
  %7657 = vmatpush.msra.mxu0 0.0
  %7658 = vmatpush.msra.mxu0 0.0
  %7659 = vmatpush.msra.mxu0 %v5033
  %7660 = vmatpush.msra.mxu0 %v5032
  %7661 = vmatmul.f32.gmra.mxu0 %v7643
  %v7662 = vpop.f32.mrf.mxu0
  %v7663 = vadd.f32 0.0, %v7662
  %7664 = vdwg.mxu0
  %v7666 = vsel %vm5134, %v4764, 0
  %7668 = vmatpush.msra.mxu0 0.0
  %7669 = vmatpush.msra.mxu0 0.0
  %7670 = vmatpush.msra.mxu0 0.0
  %7671 = vmatpush.msra.mxu0 0.0
  %7672 = vmatpush.msra.mxu0 0.0
  %7673 = vmatpush.msra.mxu0 0.0
  %7674 = vmatpush.msra.mxu0 0.0
  %7675 = vmatpush.msra.mxu0 0.0
  %7676 = vmatpush.msra.mxu0 0.0
  %7677 = vmatpush.msra.mxu0 0.0
  %7678 = vmatpush.msra.mxu0 0.0
  %7679 = vmatpush.msra.mxu0 0.0
  %7680 = vmatpush.msra.mxu0 0.0
  %7681 = vmatpush.msra.mxu0 0.0
  %7682 = vmatpush.msra.mxu0 %v5035
  %7683 = vmatpush.msra.mxu0 %v5034
  %7684 = vmatmul.f32.gmra.mxu0 %v7666
  %v7685 = vpop.f32.mrf.mxu0
  %v7686 = vadd.f32 0.0, %v7685
  %7687 = vdwg.mxu0
  %v7689 = vsel %vm5134, %v4765, 0
  %7691 = vmatpush.msra.mxu0 0.0
  %7692 = vmatpush.msra.mxu0 0.0
  %7693 = vmatpush.msra.mxu0 0.0
  %7694 = vmatpush.msra.mxu0 0.0
  %7695 = vmatpush.msra.mxu0 0.0
  %7696 = vmatpush.msra.mxu0 0.0
  %7697 = vmatpush.msra.mxu0 0.0
  %7698 = vmatpush.msra.mxu0 0.0
  %7699 = vmatpush.msra.mxu0 0.0
  %7700 = vmatpush.msra.mxu0 0.0
  %7701 = vmatpush.msra.mxu0 0.0
  %7702 = vmatpush.msra.mxu0 0.0
  %7703 = vmatpush.msra.mxu0 0.0
  %7704 = vmatpush.msra.mxu0 0.0
  %7705 = vmatpush.msra.mxu0 %v5037
  %7706 = vmatpush.msra.mxu0 %v5036
  %7707 = vmatmul.f32.gmra.mxu0 %v7689
  %v7708 = vpop.f32.mrf.mxu0
  %v7709 = vadd.f32 0.0, %v7708
  %7710 = vdwg.mxu0
  %v7712 = vsel %vm5134, %v4766, 0
  %7714 = vmatpush.msra.mxu0 0.0
  %7715 = vmatpush.msra.mxu0 0.0
  %7716 = vmatpush.msra.mxu0 0.0
  %7717 = vmatpush.msra.mxu0 0.0
  %7718 = vmatpush.msra.mxu0 0.0
  %7719 = vmatpush.msra.mxu0 0.0
  %7720 = vmatpush.msra.mxu0 0.0
  %7721 = vmatpush.msra.mxu0 0.0
  %7722 = vmatpush.msra.mxu0 0.0
  %7723 = vmatpush.msra.mxu0 0.0
  %7724 = vmatpush.msra.mxu0 0.0
  %7725 = vmatpush.msra.mxu0 0.0
  %7726 = vmatpush.msra.mxu0 0.0
  %7727 = vmatpush.msra.mxu0 0.0
  %7728 = vmatpush.msra.mxu0 %v5039
  %7729 = vmatpush.msra.mxu0 %v5038
  %7730 = vmatmul.f32.gmra.mxu0 %v7712
  %v7731 = vpop.f32.mrf.mxu0
  %v7732 = vadd.f32 0.0, %v7731
  %7733 = vdwg.mxu0
  %v7735 = vsel %vm5134, %v4767, 0
  %7737 = vmatpush.msra.mxu0 0.0
  %7738 = vmatpush.msra.mxu0 0.0
  %7739 = vmatpush.msra.mxu0 0.0
  %7740 = vmatpush.msra.mxu0 0.0
  %7741 = vmatpush.msra.mxu0 0.0
  %7742 = vmatpush.msra.mxu0 0.0
  %7743 = vmatpush.msra.mxu0 0.0
  %7744 = vmatpush.msra.mxu0 0.0
  %7745 = vmatpush.msra.mxu0 0.0
  %7746 = vmatpush.msra.mxu0 0.0
  %7747 = vmatpush.msra.mxu0 0.0
  %7748 = vmatpush.msra.mxu0 0.0
  %7749 = vmatpush.msra.mxu0 0.0
  %7750 = vmatpush.msra.mxu0 0.0
  %7751 = vmatpush.msra.mxu0 %v5041
  %7752 = vmatpush.msra.mxu0 %v5040
  %7753 = vmatmul.f32.gmra.mxu0 %v7735
  %v7754 = vpop.f32.mrf.mxu0
  %v7755 = vadd.f32 0.0, %v7754
  %7756 = vdwg.mxu0
  %v7758 = vsel %vm5134, %v4768, 0
  %7760 = vmatpush.msra.mxu0 0.0
  %7761 = vmatpush.msra.mxu0 0.0
  %7762 = vmatpush.msra.mxu0 0.0
  %7763 = vmatpush.msra.mxu0 0.0
  %7764 = vmatpush.msra.mxu0 0.0
  %7765 = vmatpush.msra.mxu0 0.0
  %7766 = vmatpush.msra.mxu0 0.0
  %7767 = vmatpush.msra.mxu0 0.0
  %7768 = vmatpush.msra.mxu0 0.0
  %7769 = vmatpush.msra.mxu0 0.0
  %7770 = vmatpush.msra.mxu0 0.0
  %7771 = vmatpush.msra.mxu0 0.0
  %7772 = vmatpush.msra.mxu0 0.0
  %7773 = vmatpush.msra.mxu0 0.0
  %7774 = vmatpush.msra.mxu0 %v5043
  %7775 = vmatpush.msra.mxu0 %v5042
  %7776 = vmatmul.f32.gmra.mxu0 %v7758
  %v7777 = vpop.f32.mrf.mxu0
  %v7778 = vadd.f32 0.0, %v7777
  %7779 = vdwg.mxu0
  %v7781 = vsel %vm5134, %v4769, 0
  %7783 = vmatpush.msra.mxu0 0.0
  %7784 = vmatpush.msra.mxu0 0.0
  %7785 = vmatpush.msra.mxu0 0.0
  %7786 = vmatpush.msra.mxu0 0.0
  %7787 = vmatpush.msra.mxu0 0.0
  %7788 = vmatpush.msra.mxu0 0.0
  %7789 = vmatpush.msra.mxu0 0.0
  %7790 = vmatpush.msra.mxu0 0.0
  %7791 = vmatpush.msra.mxu0 0.0
  %7792 = vmatpush.msra.mxu0 0.0
  %7793 = vmatpush.msra.mxu0 0.0
  %7794 = vmatpush.msra.mxu0 0.0
  %7795 = vmatpush.msra.mxu0 0.0
  %7796 = vmatpush.msra.mxu0 0.0
  %7797 = vmatpush.msra.mxu0 %v5045
  %7798 = vmatpush.msra.mxu0 %v5044
  %7799 = vmatmul.f32.gmra.mxu0 %v7781
  %v7800 = vpop.f32.mrf.mxu0
  %v7801 = vadd.f32 0.0, %v7800
  %7802 = vdwg.mxu0
  %v7804 = vsel %vm5134, %v4770, 0
  %7806 = vmatpush.msra.mxu0 0.0
  %7807 = vmatpush.msra.mxu0 0.0
  %7808 = vmatpush.msra.mxu0 0.0
  %7809 = vmatpush.msra.mxu0 0.0
  %7810 = vmatpush.msra.mxu0 0.0
  %7811 = vmatpush.msra.mxu0 0.0
  %7812 = vmatpush.msra.mxu0 0.0
  %7813 = vmatpush.msra.mxu0 0.0
  %7814 = vmatpush.msra.mxu0 0.0
  %7815 = vmatpush.msra.mxu0 0.0
  %7816 = vmatpush.msra.mxu0 0.0
  %7817 = vmatpush.msra.mxu0 0.0
  %7818 = vmatpush.msra.mxu0 0.0
  %7819 = vmatpush.msra.mxu0 0.0
  %7820 = vmatpush.msra.mxu0 %v5047
  %7821 = vmatpush.msra.mxu0 %v5046
  %7822 = vmatmul.f32.gmra.mxu0 %v7804
  %v7823 = vpop.f32.mrf.mxu0
  %v7824 = vadd.f32 0.0, %v7823
  %7825 = vdwg.mxu0
  %v7827 = vsel %vm5134, %v4771, 0
  %7829 = vmatpush.msra.mxu0 0.0
  %7830 = vmatpush.msra.mxu0 0.0
  %7831 = vmatpush.msra.mxu0 0.0
  %7832 = vmatpush.msra.mxu0 0.0
  %7833 = vmatpush.msra.mxu0 0.0
  %7834 = vmatpush.msra.mxu0 0.0
  %7835 = vmatpush.msra.mxu0 0.0
  %7836 = vmatpush.msra.mxu0 0.0
  %7837 = vmatpush.msra.mxu0 0.0
  %7838 = vmatpush.msra.mxu0 0.0
  %7839 = vmatpush.msra.mxu0 0.0
  %7840 = vmatpush.msra.mxu0 0.0
  %7841 = vmatpush.msra.mxu0 0.0
  %7842 = vmatpush.msra.mxu0 0.0
  %7843 = vmatpush.msra.mxu0 %v5049
  %7844 = vmatpush.msra.mxu0 %v5048
  %7845 = vmatmul.f32.gmra.mxu0 %v7827
  %v7846 = vpop.f32.mrf.mxu0
  %v7847 = vadd.f32 0.0, %v7846
  %7848 = vdwg.mxu0
  %v7850 = vsel %vm5134, %v4772, 0
  %7852 = vmatpush.msra.mxu0 0.0
  %7853 = vmatpush.msra.mxu0 0.0
  %7854 = vmatpush.msra.mxu0 0.0
  %7855 = vmatpush.msra.mxu0 0.0
  %7856 = vmatpush.msra.mxu0 0.0
  %7857 = vmatpush.msra.mxu0 0.0
  %7858 = vmatpush.msra.mxu0 0.0
  %7859 = vmatpush.msra.mxu0 0.0
  %7860 = vmatpush.msra.mxu0 0.0
  %7861 = vmatpush.msra.mxu0 0.0
  %7862 = vmatpush.msra.mxu0 0.0
  %7863 = vmatpush.msra.mxu0 0.0
  %7864 = vmatpush.msra.mxu0 0.0
  %7865 = vmatpush.msra.mxu0 0.0
  %7866 = vmatpush.msra.mxu0 %v5051
  %7867 = vmatpush.msra.mxu0 %v5050
  %7868 = vmatmul.f32.gmra.mxu0 %v7850
  %v7869 = vpop.f32.mrf.mxu0
  %v7870 = vadd.f32 0.0, %v7869
  %7871 = vdwg.mxu0
  %v7873 = vsel %vm5134, %v4773, 0
  %7875 = vmatpush.msra.mxu0 0.0
  %7876 = vmatpush.msra.mxu0 0.0
  %7877 = vmatpush.msra.mxu0 0.0
  %7878 = vmatpush.msra.mxu0 0.0
  %7879 = vmatpush.msra.mxu0 0.0
  %7880 = vmatpush.msra.mxu0 0.0
  %7881 = vmatpush.msra.mxu0 0.0
  %7882 = vmatpush.msra.mxu0 0.0
  %7883 = vmatpush.msra.mxu0 0.0
  %7884 = vmatpush.msra.mxu0 0.0
  %7885 = vmatpush.msra.mxu0 0.0
  %7886 = vmatpush.msra.mxu0 0.0
  %7887 = vmatpush.msra.mxu0 0.0
  %7888 = vmatpush.msra.mxu0 0.0
  %7889 = vmatpush.msra.mxu0 %v5053
  %7890 = vmatpush.msra.mxu0 %v5052
  %7891 = vmatmul.f32.gmra.mxu0 %v7873
  %v7892 = vpop.f32.mrf.mxu0
  %v7893 = vadd.f32 0.0, %v7892
  %7894 = vdwg.mxu0
  %v7896 = vsel %vm5134, %v4774, 0
  %7898 = vmatpush.msra.mxu0 0.0
  %7899 = vmatpush.msra.mxu0 0.0
  %7900 = vmatpush.msra.mxu0 0.0
  %7901 = vmatpush.msra.mxu0 0.0
  %7902 = vmatpush.msra.mxu0 0.0
  %7903 = vmatpush.msra.mxu0 0.0
  %7904 = vmatpush.msra.mxu0 0.0
  %7905 = vmatpush.msra.mxu0 0.0
  %7906 = vmatpush.msra.mxu0 0.0
  %7907 = vmatpush.msra.mxu0 0.0
  %7908 = vmatpush.msra.mxu0 0.0
  %7909 = vmatpush.msra.mxu0 0.0
  %7910 = vmatpush.msra.mxu0 0.0
  %7911 = vmatpush.msra.mxu0 0.0
  %7912 = vmatpush.msra.mxu0 %v5055
  %7913 = vmatpush.msra.mxu0 %v5054
  %7914 = vmatmul.f32.gmra.mxu0 %v7896
  %v7915 = vpop.f32.mrf.mxu0
  %v7916 = vadd.f32 0.0, %v7915
  %7917 = vdwg.mxu0
  %v7919 = vsel %vm5134, %v4775, 0
  %7921 = vmatpush.msra.mxu0 0.0
  %7922 = vmatpush.msra.mxu0 0.0
  %7923 = vmatpush.msra.mxu0 0.0
  %7924 = vmatpush.msra.mxu0 0.0
  %7925 = vmatpush.msra.mxu0 0.0
  %7926 = vmatpush.msra.mxu0 0.0
  %7927 = vmatpush.msra.mxu0 0.0
  %7928 = vmatpush.msra.mxu0 0.0
  %7929 = vmatpush.msra.mxu0 0.0
  %7930 = vmatpush.msra.mxu0 0.0
  %7931 = vmatpush.msra.mxu0 0.0
  %7932 = vmatpush.msra.mxu0 0.0
  %7933 = vmatpush.msra.mxu0 0.0
  %7934 = vmatpush.msra.mxu0 0.0
  %7935 = vmatpush.msra.mxu0 %v5057
  %7936 = vmatpush.msra.mxu0 %v5056
  %7937 = vmatmul.f32.gmra.mxu0 %v7919
  %v7938 = vpop.f32.mrf.mxu0
  %v7939 = vadd.f32 0.0, %v7938
  %7940 = vdwg.mxu0
  %v7942 = vsel %vm5134, %v4776, 0
  %7944 = vmatpush.msra.mxu0 0.0
  %7945 = vmatpush.msra.mxu0 0.0
  %7946 = vmatpush.msra.mxu0 0.0
  %7947 = vmatpush.msra.mxu0 0.0
  %7948 = vmatpush.msra.mxu0 0.0
  %7949 = vmatpush.msra.mxu0 0.0
  %7950 = vmatpush.msra.mxu0 0.0
  %7951 = vmatpush.msra.mxu0 0.0
  %7952 = vmatpush.msra.mxu0 0.0
  %7953 = vmatpush.msra.mxu0 0.0
  %7954 = vmatpush.msra.mxu0 0.0
  %7955 = vmatpush.msra.mxu0 0.0
  %7956 = vmatpush.msra.mxu0 0.0
  %7957 = vmatpush.msra.mxu0 0.0
  %7958 = vmatpush.msra.mxu0 %v5059
  %7959 = vmatpush.msra.mxu0 %v5058
  %7960 = vmatmul.f32.gmra.mxu0 %v7942
  %v7961 = vpop.f32.mrf.mxu0
  %v7962 = vadd.f32 0.0, %v7961
  %7963 = vdwg.mxu0
  %v7965 = vsel %vm5134, %v4777, 0
  %7967 = vmatpush.msra.mxu0 0.0
  %7968 = vmatpush.msra.mxu0 0.0
  %7969 = vmatpush.msra.mxu0 0.0
  %7970 = vmatpush.msra.mxu0 0.0
  %7971 = vmatpush.msra.mxu0 0.0
  %7972 = vmatpush.msra.mxu0 0.0
  %7973 = vmatpush.msra.mxu0 0.0
  %7974 = vmatpush.msra.mxu0 0.0
  %7975 = vmatpush.msra.mxu0 0.0
  %7976 = vmatpush.msra.mxu0 0.0
  %7977 = vmatpush.msra.mxu0 0.0
  %7978 = vmatpush.msra.mxu0 0.0
  %7979 = vmatpush.msra.mxu0 0.0
  %7980 = vmatpush.msra.mxu0 0.0
  %7981 = vmatpush.msra.mxu0 %v5061
  %7982 = vmatpush.msra.mxu0 %v5060
  %7983 = vmatmul.f32.gmra.mxu0 %v7965
  %v7984 = vpop.f32.mrf.mxu0
  %v7985 = vadd.f32 0.0, %v7984
  %7986 = vdwg.mxu0
  %v7988 = vsel %vm5134, %v4778, 0
  %7990 = vmatpush.msra.mxu0 0.0
  %7991 = vmatpush.msra.mxu0 0.0
  %7992 = vmatpush.msra.mxu0 0.0
  %7993 = vmatpush.msra.mxu0 0.0
  %7994 = vmatpush.msra.mxu0 0.0
  %7995 = vmatpush.msra.mxu0 0.0
  %7996 = vmatpush.msra.mxu0 0.0
  %7997 = vmatpush.msra.mxu0 0.0
  %7998 = vmatpush.msra.mxu0 0.0
  %7999 = vmatpush.msra.mxu0 0.0
  %8000 = vmatpush.msra.mxu0 0.0
  %8001 = vmatpush.msra.mxu0 0.0
  %8002 = vmatpush.msra.mxu0 0.0
  %8003 = vmatpush.msra.mxu0 0.0
  %8004 = vmatpush.msra.mxu0 %v5063
  %8005 = vmatpush.msra.mxu0 %v5062
  %8006 = vmatmul.f32.gmra.mxu0 %v7988
  %v8007 = vpop.f32.mrf.mxu0
  %v8008 = vadd.f32 0.0, %v8007
  %8009 = vdwg.mxu0
  %v8011 = vsel %vm5134, %v4779, 0
  %8013 = vmatpush.msra.mxu0 0.0
  %8014 = vmatpush.msra.mxu0 0.0
  %8015 = vmatpush.msra.mxu0 0.0
  %8016 = vmatpush.msra.mxu0 0.0
  %8017 = vmatpush.msra.mxu0 0.0
  %8018 = vmatpush.msra.mxu0 0.0
  %8019 = vmatpush.msra.mxu0 0.0
  %8020 = vmatpush.msra.mxu0 0.0
  %8021 = vmatpush.msra.mxu0 0.0
  %8022 = vmatpush.msra.mxu0 0.0
  %8023 = vmatpush.msra.mxu0 0.0
  %8024 = vmatpush.msra.mxu0 0.0
  %8025 = vmatpush.msra.mxu0 0.0
  %8026 = vmatpush.msra.mxu0 0.0
  %8027 = vmatpush.msra.mxu0 %v5065
  %8028 = vmatpush.msra.mxu0 %v5064
  %8029 = vmatmul.f32.gmra.mxu0 %v8011
  %v8030 = vpop.f32.mrf.mxu0
  %v8031 = vadd.f32 0.0, %v8030
  %8032 = vdwg.mxu0
  %v8034 = vsel %vm5134, %v4780, 0
  %8036 = vmatpush.msra.mxu0 0.0
  %8037 = vmatpush.msra.mxu0 0.0
  %8038 = vmatpush.msra.mxu0 0.0
  %8039 = vmatpush.msra.mxu0 0.0
  %8040 = vmatpush.msra.mxu0 0.0
  %8041 = vmatpush.msra.mxu0 0.0
  %8042 = vmatpush.msra.mxu0 0.0
  %8043 = vmatpush.msra.mxu0 0.0
  %8044 = vmatpush.msra.mxu0 0.0
  %8045 = vmatpush.msra.mxu0 0.0
  %8046 = vmatpush.msra.mxu0 0.0
  %8047 = vmatpush.msra.mxu0 0.0
  %8048 = vmatpush.msra.mxu0 0.0
  %8049 = vmatpush.msra.mxu0 0.0
  %8050 = vmatpush.msra.mxu0 %v5067
  %8051 = vmatpush.msra.mxu0 %v5066
  %8052 = vmatmul.f32.gmra.mxu0 %v8034
  %v8053 = vpop.f32.mrf.mxu0
  %v8054 = vadd.f32 0.0, %v8053
  %8055 = vdwg.mxu0
  %v8057 = vsel %vm5134, %v4781, 0
  %8059 = vmatpush.msra.mxu0 0.0
  %8060 = vmatpush.msra.mxu0 0.0
  %8061 = vmatpush.msra.mxu0 0.0
  %8062 = vmatpush.msra.mxu0 0.0
  %8063 = vmatpush.msra.mxu0 0.0
  %8064 = vmatpush.msra.mxu0 0.0
  %8065 = vmatpush.msra.mxu0 0.0
  %8066 = vmatpush.msra.mxu0 0.0
  %8067 = vmatpush.msra.mxu0 0.0
  %8068 = vmatpush.msra.mxu0 0.0
  %8069 = vmatpush.msra.mxu0 0.0
  %8070 = vmatpush.msra.mxu0 0.0
  %8071 = vmatpush.msra.mxu0 0.0
  %8072 = vmatpush.msra.mxu0 0.0
  %8073 = vmatpush.msra.mxu0 %v5069
  %8074 = vmatpush.msra.mxu0 %v5068
  %8075 = vmatmul.f32.gmra.mxu0 %v8057
  %v8076 = vpop.f32.mrf.mxu0
  %v8077 = vadd.f32 0.0, %v8076
  %8078 = vdwg.mxu0
  %v8080 = vsel %vm5134, %v4782, 0
  %8082 = vmatpush.msra.mxu0 0.0
  %8083 = vmatpush.msra.mxu0 0.0
  %8084 = vmatpush.msra.mxu0 0.0
  %8085 = vmatpush.msra.mxu0 0.0
  %8086 = vmatpush.msra.mxu0 0.0
  %8087 = vmatpush.msra.mxu0 0.0
  %8088 = vmatpush.msra.mxu0 0.0
  %8089 = vmatpush.msra.mxu0 0.0
  %8090 = vmatpush.msra.mxu0 0.0
  %8091 = vmatpush.msra.mxu0 0.0
  %8092 = vmatpush.msra.mxu0 0.0
  %8093 = vmatpush.msra.mxu0 0.0
  %8094 = vmatpush.msra.mxu0 0.0
  %8095 = vmatpush.msra.mxu0 0.0
  %8096 = vmatpush.msra.mxu0 %v5071
  %8097 = vmatpush.msra.mxu0 %v5070
  %8098 = vmatmul.f32.gmra.mxu0 %v8080
  %v8099 = vpop.f32.mrf.mxu0
  %v8100 = vadd.f32 0.0, %v8099
  %8101 = vdwg.mxu0
  %v8103 = vsel %vm5134, %v4783, 0
  %8105 = vmatpush.msra.mxu0 0.0
  %8106 = vmatpush.msra.mxu0 0.0
  %8107 = vmatpush.msra.mxu0 0.0
  %8108 = vmatpush.msra.mxu0 0.0
  %8109 = vmatpush.msra.mxu0 0.0
  %8110 = vmatpush.msra.mxu0 0.0
  %8111 = vmatpush.msra.mxu0 0.0
  %8112 = vmatpush.msra.mxu0 0.0
  %8113 = vmatpush.msra.mxu0 0.0
  %8114 = vmatpush.msra.mxu0 0.0
  %8115 = vmatpush.msra.mxu0 0.0
  %8116 = vmatpush.msra.mxu0 0.0
  %8117 = vmatpush.msra.mxu0 0.0
  %8118 = vmatpush.msra.mxu0 0.0
  %8119 = vmatpush.msra.mxu0 %v5073
  %8120 = vmatpush.msra.mxu0 %v5072
  %8121 = vmatmul.f32.gmra.mxu0 %v8103
  %v8122 = vpop.f32.mrf.mxu0
  %v8123 = vadd.f32 0.0, %v8122
  %8124 = vdwg.mxu0
  %v8126 = vsel %vm5134, %v4784, 0
  %8128 = vmatpush.msra.mxu0 0.0
  %8129 = vmatpush.msra.mxu0 0.0
  %8130 = vmatpush.msra.mxu0 0.0
  %8131 = vmatpush.msra.mxu0 0.0
  %8132 = vmatpush.msra.mxu0 0.0
  %8133 = vmatpush.msra.mxu0 0.0
  %8134 = vmatpush.msra.mxu0 0.0
  %8135 = vmatpush.msra.mxu0 0.0
  %8136 = vmatpush.msra.mxu0 0.0
  %8137 = vmatpush.msra.mxu0 0.0
  %8138 = vmatpush.msra.mxu0 0.0
  %8139 = vmatpush.msra.mxu0 0.0
  %8140 = vmatpush.msra.mxu0 0.0
  %8141 = vmatpush.msra.mxu0 0.0
  %8142 = vmatpush.msra.mxu0 %v5075
  %8143 = vmatpush.msra.mxu0 %v5074
  %8144 = vmatmul.f32.gmra.mxu0 %v8126
  %v8145 = vpop.f32.mrf.mxu0
  %v8146 = vadd.f32 0.0, %v8145
  %8147 = vdwg.mxu0
  %v8149 = vsel %vm5134, %v4785, 0
  %8151 = vmatpush.msra.mxu0 0.0
  %8152 = vmatpush.msra.mxu0 0.0
  %8153 = vmatpush.msra.mxu0 0.0
  %8154 = vmatpush.msra.mxu0 0.0
  %8155 = vmatpush.msra.mxu0 0.0
  %8156 = vmatpush.msra.mxu0 0.0
  %8157 = vmatpush.msra.mxu0 0.0
  %8158 = vmatpush.msra.mxu0 0.0
  %8159 = vmatpush.msra.mxu0 0.0
  %8160 = vmatpush.msra.mxu0 0.0
  %8161 = vmatpush.msra.mxu0 0.0
  %8162 = vmatpush.msra.mxu0 0.0
  %8163 = vmatpush.msra.mxu0 0.0
  %8164 = vmatpush.msra.mxu0 0.0
  %8165 = vmatpush.msra.mxu0 %v5077
  %8166 = vmatpush.msra.mxu0 %v5076
  %8167 = vmatmul.f32.gmra.mxu0 %v8149
  %v8168 = vpop.f32.mrf.mxu0
  %v8169 = vadd.f32 0.0, %v8168
  %8170 = vdwg.mxu0
  %v8172 = vsel %vm5134, %v4786, 0
  %8174 = vmatpush.msra.mxu0 0.0
  %8175 = vmatpush.msra.mxu0 0.0
  %8176 = vmatpush.msra.mxu0 0.0
  %8177 = vmatpush.msra.mxu0 0.0
  %8178 = vmatpush.msra.mxu0 0.0
  %8179 = vmatpush.msra.mxu0 0.0
  %8180 = vmatpush.msra.mxu0 0.0
  %8181 = vmatpush.msra.mxu0 0.0
  %8182 = vmatpush.msra.mxu0 0.0
  %8183 = vmatpush.msra.mxu0 0.0
  %8184 = vmatpush.msra.mxu0 0.0
  %8185 = vmatpush.msra.mxu0 0.0
  %8186 = vmatpush.msra.mxu0 0.0
  %8187 = vmatpush.msra.mxu0 0.0
  %8188 = vmatpush.msra.mxu0 %v5079
  %8189 = vmatpush.msra.mxu0 %v5078
  %8190 = vmatmul.f32.gmra.mxu0 %v8172
  %v8191 = vpop.f32.mrf.mxu0
  %v8192 = vadd.f32 0.0, %v8191
  %8193 = vdwg.mxu0
  %v8195 = vsel %vm5134, %v4787, 0
  %8197 = vmatpush.msra.mxu0 0.0
  %8198 = vmatpush.msra.mxu0 0.0
  %8199 = vmatpush.msra.mxu0 0.0
  %8200 = vmatpush.msra.mxu0 0.0
  %8201 = vmatpush.msra.mxu0 0.0
  %8202 = vmatpush.msra.mxu0 0.0
  %8203 = vmatpush.msra.mxu0 0.0
  %8204 = vmatpush.msra.mxu0 0.0
  %8205 = vmatpush.msra.mxu0 0.0
  %8206 = vmatpush.msra.mxu0 0.0
  %8207 = vmatpush.msra.mxu0 0.0
  %8208 = vmatpush.msra.mxu0 0.0
  %8209 = vmatpush.msra.mxu0 0.0
  %8210 = vmatpush.msra.mxu0 0.0
  %8211 = vmatpush.msra.mxu0 %v5081
  %8212 = vmatpush.msra.mxu0 %v5080
  %8213 = vmatmul.f32.gmra.mxu0 %v8195
  %v8214 = vpop.f32.mrf.mxu0
  %v8215 = vadd.f32 0.0, %v8214
  %8216 = vdwg.mxu0
  %v8218 = vsel %vm5134, %v4788, 0
  %8220 = vmatpush.msra.mxu0 0.0
  %8221 = vmatpush.msra.mxu0 0.0
  %8222 = vmatpush.msra.mxu0 0.0
  %8223 = vmatpush.msra.mxu0 0.0
  %8224 = vmatpush.msra.mxu0 0.0
  %8225 = vmatpush.msra.mxu0 0.0
  %8226 = vmatpush.msra.mxu0 0.0
  %8227 = vmatpush.msra.mxu0 0.0
  %8228 = vmatpush.msra.mxu0 0.0
  %8229 = vmatpush.msra.mxu0 0.0
  %8230 = vmatpush.msra.mxu0 0.0
  %8231 = vmatpush.msra.mxu0 0.0
  %8232 = vmatpush.msra.mxu0 0.0
  %8233 = vmatpush.msra.mxu0 0.0
  %8234 = vmatpush.msra.mxu0 %v5083
  %8235 = vmatpush.msra.mxu0 %v5082
  %8236 = vmatmul.f32.gmra.mxu0 %v8218
  %v8237 = vpop.f32.mrf.mxu0
  %v8238 = vadd.f32 0.0, %v8237
  %8239 = vdwg.mxu0
  %v8241 = vsel %vm5134, %v4789, 0
  %8243 = vmatpush.msra.mxu0 0.0
  %8244 = vmatpush.msra.mxu0 0.0
  %8245 = vmatpush.msra.mxu0 0.0
  %8246 = vmatpush.msra.mxu0 0.0
  %8247 = vmatpush.msra.mxu0 0.0
  %8248 = vmatpush.msra.mxu0 0.0
  %8249 = vmatpush.msra.mxu0 0.0
  %8250 = vmatpush.msra.mxu0 0.0
  %8251 = vmatpush.msra.mxu0 0.0
  %8252 = vmatpush.msra.mxu0 0.0
  %8253 = vmatpush.msra.mxu0 0.0
  %8254 = vmatpush.msra.mxu0 0.0
  %8255 = vmatpush.msra.mxu0 0.0
  %8256 = vmatpush.msra.mxu0 0.0
  %8257 = vmatpush.msra.mxu0 %v5085
  %8258 = vmatpush.msra.mxu0 %v5084
  %8259 = vmatmul.f32.gmra.mxu0 %v8241
  %v8260 = vpop.f32.mrf.mxu0
  %v8261 = vadd.f32 0.0, %v8260
  %8262 = vdwg.mxu0
  %v8264 = vsel %vm5134, %v4790, 0
  %8266 = vmatpush.msra.mxu0 0.0
  %8267 = vmatpush.msra.mxu0 0.0
  %8268 = vmatpush.msra.mxu0 0.0
  %8269 = vmatpush.msra.mxu0 0.0
  %8270 = vmatpush.msra.mxu0 0.0
  %8271 = vmatpush.msra.mxu0 0.0
  %8272 = vmatpush.msra.mxu0 0.0
  %8273 = vmatpush.msra.mxu0 0.0
  %8274 = vmatpush.msra.mxu0 0.0
  %8275 = vmatpush.msra.mxu0 0.0
  %8276 = vmatpush.msra.mxu0 0.0
  %8277 = vmatpush.msra.mxu0 0.0
  %8278 = vmatpush.msra.mxu0 0.0
  %8279 = vmatpush.msra.mxu0 0.0
  %8280 = vmatpush.msra.mxu0 %v5087
  %8281 = vmatpush.msra.mxu0 %v5086
  %8282 = vmatmul.f32.gmra.mxu0 %v8264
  %v8283 = vpop.f32.mrf.mxu0
  %v8284 = vadd.f32 0.0, %v8283
  %8285 = vdwg.mxu0
  %v8287 = vsel %vm5134, %v4791, 0
  %8289 = vmatpush.msra.mxu0 0.0
  %8290 = vmatpush.msra.mxu0 0.0
  %8291 = vmatpush.msra.mxu0 0.0
  %8292 = vmatpush.msra.mxu0 0.0
  %8293 = vmatpush.msra.mxu0 0.0
  %8294 = vmatpush.msra.mxu0 0.0
  %8295 = vmatpush.msra.mxu0 0.0
  %8296 = vmatpush.msra.mxu0 0.0
  %8297 = vmatpush.msra.mxu0 0.0
  %8298 = vmatpush.msra.mxu0 0.0
  %8299 = vmatpush.msra.mxu0 0.0
  %8300 = vmatpush.msra.mxu0 0.0
  %8301 = vmatpush.msra.mxu0 0.0
  %8302 = vmatpush.msra.mxu0 0.0
  %8303 = vmatpush.msra.mxu0 %v5089
  %8304 = vmatpush.msra.mxu0 %v5088
  %8305 = vmatmul.f32.gmra.mxu0 %v8287
  %v8306 = vpop.f32.mrf.mxu0
  %v8307 = vadd.f32 0.0, %v8306
  %8308 = vdwg.mxu0
  %v8310 = vsel %vm5134, %v4792, 0
  %8312 = vmatpush.msra.mxu0 0.0
  %8313 = vmatpush.msra.mxu0 0.0
  %8314 = vmatpush.msra.mxu0 0.0
  %8315 = vmatpush.msra.mxu0 0.0
  %8316 = vmatpush.msra.mxu0 0.0
  %8317 = vmatpush.msra.mxu0 0.0
  %8318 = vmatpush.msra.mxu0 0.0
  %8319 = vmatpush.msra.mxu0 0.0
  %8320 = vmatpush.msra.mxu0 0.0
  %8321 = vmatpush.msra.mxu0 0.0
  %8322 = vmatpush.msra.mxu0 0.0
  %8323 = vmatpush.msra.mxu0 0.0
  %8324 = vmatpush.msra.mxu0 0.0
  %8325 = vmatpush.msra.mxu0 0.0
  %8326 = vmatpush.msra.mxu0 %v5091
  %8327 = vmatpush.msra.mxu0 %v5090
  %8328 = vmatmul.f32.gmra.mxu0 %v8310
  %v8329 = vpop.f32.mrf.mxu0
  %v8330 = vadd.f32 0.0, %v8329
  %8331 = vdwg.mxu0
  %v8333 = vsel %vm5134, %v4793, 0
  %8335 = vmatpush.msra.mxu0 0.0
  %8336 = vmatpush.msra.mxu0 0.0
  %8337 = vmatpush.msra.mxu0 0.0
  %8338 = vmatpush.msra.mxu0 0.0
  %8339 = vmatpush.msra.mxu0 0.0
  %8340 = vmatpush.msra.mxu0 0.0
  %8341 = vmatpush.msra.mxu0 0.0
  %8342 = vmatpush.msra.mxu0 0.0
  %8343 = vmatpush.msra.mxu0 0.0
  %8344 = vmatpush.msra.mxu0 0.0
  %8345 = vmatpush.msra.mxu0 0.0
  %8346 = vmatpush.msra.mxu0 0.0
  %8347 = vmatpush.msra.mxu0 0.0
  %8348 = vmatpush.msra.mxu0 0.0
  %8349 = vmatpush.msra.mxu0 %v5093
  %8350 = vmatpush.msra.mxu0 %v5092
  %8351 = vmatmul.f32.gmra.mxu0 %v8333
  %v8352 = vpop.f32.mrf.mxu0
  %v8353 = vadd.f32 0.0, %v8352
  %8354 = vdwg.mxu0
  %v8356 = vsel %vm5134, %v4794, 0
  %8358 = vmatpush.msra.mxu0 0.0
  %8359 = vmatpush.msra.mxu0 0.0
  %8360 = vmatpush.msra.mxu0 0.0
  %8361 = vmatpush.msra.mxu0 0.0
  %8362 = vmatpush.msra.mxu0 0.0
  %8363 = vmatpush.msra.mxu0 0.0
  %8364 = vmatpush.msra.mxu0 0.0
  %8365 = vmatpush.msra.mxu0 0.0
  %8366 = vmatpush.msra.mxu0 0.0
  %8367 = vmatpush.msra.mxu0 0.0
  %8368 = vmatpush.msra.mxu0 0.0
  %8369 = vmatpush.msra.mxu0 0.0
  %8370 = vmatpush.msra.mxu0 0.0
  %8371 = vmatpush.msra.mxu0 0.0
  %8372 = vmatpush.msra.mxu0 %v5095
  %8373 = vmatpush.msra.mxu0 %v5094
  %8374 = vmatmul.f32.gmra.mxu0 %v8356
  %v8375 = vpop.f32.mrf.mxu0
  %v8376 = vadd.f32 0.0, %v8375
  %8377 = vdwg.mxu0
  %v8379 = vsel %vm5134, %v4795, 0
  %8381 = vmatpush.msra.mxu0 0.0
  %8382 = vmatpush.msra.mxu0 0.0
  %8383 = vmatpush.msra.mxu0 0.0
  %8384 = vmatpush.msra.mxu0 0.0
  %8385 = vmatpush.msra.mxu0 0.0
  %8386 = vmatpush.msra.mxu0 0.0
  %8387 = vmatpush.msra.mxu0 0.0
  %8388 = vmatpush.msra.mxu0 0.0
  %8389 = vmatpush.msra.mxu0 0.0
  %8390 = vmatpush.msra.mxu0 0.0
  %8391 = vmatpush.msra.mxu0 0.0
  %8392 = vmatpush.msra.mxu0 0.0
  %8393 = vmatpush.msra.mxu0 0.0
  %8394 = vmatpush.msra.mxu0 0.0
  %8395 = vmatpush.msra.mxu0 %v5097
  %8396 = vmatpush.msra.mxu0 %v5096
  %8397 = vmatmul.f32.gmra.mxu0 %v8379
  %v8398 = vpop.f32.mrf.mxu0
  %v8399 = vadd.f32 0.0, %v8398
  %8400 = vdwg.mxu0
  %v8402 = vsel %vm5134, %v4796, 0
  %8404 = vmatpush.msra.mxu0 0.0
  %8405 = vmatpush.msra.mxu0 0.0
  %8406 = vmatpush.msra.mxu0 0.0
  %8407 = vmatpush.msra.mxu0 0.0
  %8408 = vmatpush.msra.mxu0 0.0
  %8409 = vmatpush.msra.mxu0 0.0
  %8410 = vmatpush.msra.mxu0 0.0
  %8411 = vmatpush.msra.mxu0 0.0
  %8412 = vmatpush.msra.mxu0 0.0
  %8413 = vmatpush.msra.mxu0 0.0
  %8414 = vmatpush.msra.mxu0 0.0
  %8415 = vmatpush.msra.mxu0 0.0
  %8416 = vmatpush.msra.mxu0 0.0
  %8417 = vmatpush.msra.mxu0 0.0
  %8418 = vmatpush.msra.mxu0 %v5099
  %8419 = vmatpush.msra.mxu0 %v5098
  %8420 = vmatmul.f32.gmra.mxu0 %v8402
  %v8421 = vpop.f32.mrf.mxu0
  %v8422 = vadd.f32 0.0, %v8421
  %8423 = vdwg.mxu0
  %v8425 = vsel %vm5134, %v4797, 0
  %8427 = vmatpush.msra.mxu0 0.0
  %8428 = vmatpush.msra.mxu0 0.0
  %8429 = vmatpush.msra.mxu0 0.0
  %8430 = vmatpush.msra.mxu0 0.0
  %8431 = vmatpush.msra.mxu0 0.0
  %8432 = vmatpush.msra.mxu0 0.0
  %8433 = vmatpush.msra.mxu0 0.0
  %8434 = vmatpush.msra.mxu0 0.0
  %8435 = vmatpush.msra.mxu0 0.0
  %8436 = vmatpush.msra.mxu0 0.0
  %8437 = vmatpush.msra.mxu0 0.0
  %8438 = vmatpush.msra.mxu0 0.0
  %8439 = vmatpush.msra.mxu0 0.0
  %8440 = vmatpush.msra.mxu0 0.0
  %8441 = vmatpush.msra.mxu0 %v5101
  %8442 = vmatpush.msra.mxu0 %v5100
  %8443 = vmatmul.f32.gmra.mxu0 %v8425
  %v8444 = vpop.f32.mrf.mxu0
  %v8445 = vadd.f32 0.0, %v8444
  %8446 = vdwg.mxu0
  %v8448 = vsel %vm5134, %v4798, 0
  %8450 = vmatpush.msra.mxu0 0.0
  %8451 = vmatpush.msra.mxu0 0.0
  %8452 = vmatpush.msra.mxu0 0.0
  %8453 = vmatpush.msra.mxu0 0.0
  %8454 = vmatpush.msra.mxu0 0.0
  %8455 = vmatpush.msra.mxu0 0.0
  %8456 = vmatpush.msra.mxu0 0.0
  %8457 = vmatpush.msra.mxu0 0.0
  %8458 = vmatpush.msra.mxu0 0.0
  %8459 = vmatpush.msra.mxu0 0.0
  %8460 = vmatpush.msra.mxu0 0.0
  %8461 = vmatpush.msra.mxu0 0.0
  %8462 = vmatpush.msra.mxu0 0.0
  %8463 = vmatpush.msra.mxu0 0.0
  %8464 = vmatpush.msra.mxu0 %v5103
  %8465 = vmatpush.msra.mxu0 %v5102
  %8466 = vmatmul.f32.gmra.mxu0 %v8448
  %v8467 = vpop.f32.mrf.mxu0
  %v8468 = vadd.f32 0.0, %v8467
  %8469 = vdwg.mxu0
  %v8471 = vsel %vm5134, %v4799, 0
  %8473 = vmatpush.msra.mxu0 0.0
  %8474 = vmatpush.msra.mxu0 0.0
  %8475 = vmatpush.msra.mxu0 0.0
  %8476 = vmatpush.msra.mxu0 0.0
  %8477 = vmatpush.msra.mxu0 0.0
  %8478 = vmatpush.msra.mxu0 0.0
  %8479 = vmatpush.msra.mxu0 0.0
  %8480 = vmatpush.msra.mxu0 0.0
  %8481 = vmatpush.msra.mxu0 0.0
  %8482 = vmatpush.msra.mxu0 0.0
  %8483 = vmatpush.msra.mxu0 0.0
  %8484 = vmatpush.msra.mxu0 0.0
  %8485 = vmatpush.msra.mxu0 0.0
  %8486 = vmatpush.msra.mxu0 0.0
  %8487 = vmatpush.msra.mxu0 %v5105
  %8488 = vmatpush.msra.mxu0 %v5104
  %8489 = vmatmul.f32.gmra.mxu0 %v8471
  %v8490 = vpop.f32.mrf.mxu0
  %v8491 = vadd.f32 0.0, %v8490
  %8492 = vdwg.mxu0
  %v8494 = vsel %vm5134, %v4800, 0
  %8496 = vmatpush.msra.mxu0 0.0
  %8497 = vmatpush.msra.mxu0 0.0
  %8498 = vmatpush.msra.mxu0 0.0
  %8499 = vmatpush.msra.mxu0 0.0
  %8500 = vmatpush.msra.mxu0 0.0
  %8501 = vmatpush.msra.mxu0 0.0
  %8502 = vmatpush.msra.mxu0 0.0
  %8503 = vmatpush.msra.mxu0 0.0
  %8504 = vmatpush.msra.mxu0 0.0
  %8505 = vmatpush.msra.mxu0 0.0
  %8506 = vmatpush.msra.mxu0 0.0
  %8507 = vmatpush.msra.mxu0 0.0
  %8508 = vmatpush.msra.mxu0 0.0
  %8509 = vmatpush.msra.mxu0 0.0
  %8510 = vmatpush.msra.mxu0 %v5107
  %8511 = vmatpush.msra.mxu0 %v5106
  %8512 = vmatmul.f32.gmra.mxu0 %v8494
  %v8513 = vpop.f32.mrf.mxu0
  %v8514 = vadd.f32 0.0, %v8513
  %8515 = vdwg.mxu0
  %v8517 = vsel %vm5134, %v4801, 0
  %8519 = vmatpush.msra.mxu0 0.0
  %8520 = vmatpush.msra.mxu0 0.0
  %8521 = vmatpush.msra.mxu0 0.0
  %8522 = vmatpush.msra.mxu0 0.0
  %8523 = vmatpush.msra.mxu0 0.0
  %8524 = vmatpush.msra.mxu0 0.0
  %8525 = vmatpush.msra.mxu0 0.0
  %8526 = vmatpush.msra.mxu0 0.0
  %8527 = vmatpush.msra.mxu0 0.0
  %8528 = vmatpush.msra.mxu0 0.0
  %8529 = vmatpush.msra.mxu0 0.0
  %8530 = vmatpush.msra.mxu0 0.0
  %8531 = vmatpush.msra.mxu0 0.0
  %8532 = vmatpush.msra.mxu0 0.0
  %8533 = vmatpush.msra.mxu0 %v5109
  %8534 = vmatpush.msra.mxu0 %v5108
  %8535 = vmatmul.f32.gmra.mxu0 %v8517
  %v8536 = vpop.f32.mrf.mxu0
  %v8537 = vadd.f32 0.0, %v8536
  %8538 = vdwg.mxu0
  %v8540 = vsel %vm5134, %v4802, 0
  %8542 = vmatpush.msra.mxu0 0.0
  %8543 = vmatpush.msra.mxu0 0.0
  %8544 = vmatpush.msra.mxu0 0.0
  %8545 = vmatpush.msra.mxu0 0.0
  %8546 = vmatpush.msra.mxu0 0.0
  %8547 = vmatpush.msra.mxu0 0.0
  %8548 = vmatpush.msra.mxu0 0.0
  %8549 = vmatpush.msra.mxu0 0.0
  %8550 = vmatpush.msra.mxu0 0.0
  %8551 = vmatpush.msra.mxu0 0.0
  %8552 = vmatpush.msra.mxu0 0.0
  %8553 = vmatpush.msra.mxu0 0.0
  %8554 = vmatpush.msra.mxu0 0.0
  %8555 = vmatpush.msra.mxu0 0.0
  %8556 = vmatpush.msra.mxu0 %v5111
  %8557 = vmatpush.msra.mxu0 %v5110
  %8558 = vmatmul.f32.gmra.mxu0 %v8540
  %v8559 = vpop.f32.mrf.mxu0
  %v8560 = vadd.f32 0.0, %v8559
  %8561 = vdwg.mxu0
  %v8563 = vsel %vm5134, %v4803, 0
  %8565 = vmatpush.msra.mxu0 0.0
  %8566 = vmatpush.msra.mxu0 0.0
  %8567 = vmatpush.msra.mxu0 0.0
  %8568 = vmatpush.msra.mxu0 0.0
  %8569 = vmatpush.msra.mxu0 0.0
  %8570 = vmatpush.msra.mxu0 0.0
  %8571 = vmatpush.msra.mxu0 0.0
  %8572 = vmatpush.msra.mxu0 0.0
  %8573 = vmatpush.msra.mxu0 0.0
  %8574 = vmatpush.msra.mxu0 0.0
  %8575 = vmatpush.msra.mxu0 0.0
  %8576 = vmatpush.msra.mxu0 0.0
  %8577 = vmatpush.msra.mxu0 0.0
  %8578 = vmatpush.msra.mxu0 0.0
  %8579 = vmatpush.msra.mxu0 %v5113
  %8580 = vmatpush.msra.mxu0 %v5112
  %8581 = vmatmul.f32.gmra.mxu0 %v8563
  %v8582 = vpop.f32.mrf.mxu0
  %v8583 = vadd.f32 0.0, %v8582
  %8584 = vdwg.mxu0
  %v8586 = vsel %vm5134, %v4804, 0
  %8588 = vmatpush.msra.mxu0 0.0
  %8589 = vmatpush.msra.mxu0 0.0
  %8590 = vmatpush.msra.mxu0 0.0
  %8591 = vmatpush.msra.mxu0 0.0
  %8592 = vmatpush.msra.mxu0 0.0
  %8593 = vmatpush.msra.mxu0 0.0
  %8594 = vmatpush.msra.mxu0 0.0
  %8595 = vmatpush.msra.mxu0 0.0
  %8596 = vmatpush.msra.mxu0 0.0
  %8597 = vmatpush.msra.mxu0 0.0
  %8598 = vmatpush.msra.mxu0 0.0
  %8599 = vmatpush.msra.mxu0 0.0
  %8600 = vmatpush.msra.mxu0 0.0
  %8601 = vmatpush.msra.mxu0 0.0
  %8602 = vmatpush.msra.mxu0 %v5115
  %8603 = vmatpush.msra.mxu0 %v5114
  %8604 = vmatmul.f32.gmra.mxu0 %v8586
  %v8605 = vpop.f32.mrf.mxu0
  %v8606 = vadd.f32 0.0, %v8605
  %8607 = vdwg.mxu0
  %v8609 = vsel %vm5134, %v4805, 0
  %8611 = vmatpush.msra.mxu0 0.0
  %8612 = vmatpush.msra.mxu0 0.0
  %8613 = vmatpush.msra.mxu0 0.0
  %8614 = vmatpush.msra.mxu0 0.0
  %8615 = vmatpush.msra.mxu0 0.0
  %8616 = vmatpush.msra.mxu0 0.0
  %8617 = vmatpush.msra.mxu0 0.0
  %8618 = vmatpush.msra.mxu0 0.0
  %8619 = vmatpush.msra.mxu0 0.0
  %8620 = vmatpush.msra.mxu0 0.0
  %8621 = vmatpush.msra.mxu0 0.0
  %8622 = vmatpush.msra.mxu0 0.0
  %8623 = vmatpush.msra.mxu0 0.0
  %8624 = vmatpush.msra.mxu0 0.0
  %8625 = vmatpush.msra.mxu0 %v5117
  %8626 = vmatpush.msra.mxu0 %v5116
  %8627 = vmatmul.f32.gmra.mxu0 %v8609
  %v8628 = vpop.f32.mrf.mxu0
  %v8629 = vadd.f32 0.0, %v8628
  %8630 = vdwg.mxu0
  %v8632 = vsel %vm5134, %v4806, 0
  %8634 = vmatpush.msra.mxu0 0.0
  %8635 = vmatpush.msra.mxu0 0.0
  %8636 = vmatpush.msra.mxu0 0.0
  %8637 = vmatpush.msra.mxu0 0.0
  %8638 = vmatpush.msra.mxu0 0.0
  %8639 = vmatpush.msra.mxu0 0.0
  %8640 = vmatpush.msra.mxu0 0.0
  %8641 = vmatpush.msra.mxu0 0.0
  %8642 = vmatpush.msra.mxu0 0.0
  %8643 = vmatpush.msra.mxu0 0.0
  %8644 = vmatpush.msra.mxu0 0.0
  %8645 = vmatpush.msra.mxu0 0.0
  %8646 = vmatpush.msra.mxu0 0.0
  %8647 = vmatpush.msra.mxu0 0.0
  %8648 = vmatpush.msra.mxu0 %v5119
  %8649 = vmatpush.msra.mxu0 %v5118
  %8650 = vmatmul.f32.gmra.mxu0 %v8632
  %v8651 = vpop.f32.mrf.mxu0
  %v8652 = vadd.f32 0.0, %v8651
  %8653 = vdwg.mxu0
  %v8655 = vsel %vm5134, %v4807, 0
  %8657 = vmatpush.msra.mxu0 0.0
  %8658 = vmatpush.msra.mxu0 0.0
  %8659 = vmatpush.msra.mxu0 0.0
  %8660 = vmatpush.msra.mxu0 0.0
  %8661 = vmatpush.msra.mxu0 0.0
  %8662 = vmatpush.msra.mxu0 0.0
  %8663 = vmatpush.msra.mxu0 0.0
  %8664 = vmatpush.msra.mxu0 0.0
  %8665 = vmatpush.msra.mxu0 0.0
  %8666 = vmatpush.msra.mxu0 0.0
  %8667 = vmatpush.msra.mxu0 0.0
  %8668 = vmatpush.msra.mxu0 0.0
  %8669 = vmatpush.msra.mxu0 0.0
  %8670 = vmatpush.msra.mxu0 0.0
  %8671 = vmatpush.msra.mxu0 %v5121
  %8672 = vmatpush.msra.mxu0 %v5120
  %8673 = vmatmul.f32.gmra.mxu0 %v8655
  %v8674 = vpop.f32.mrf.mxu0
  %v8675 = vadd.f32 0.0, %v8674
  %8676 = vdwg.mxu0
  %v8678 = vsel %vm5134, %v4808, 0
  %8680 = vmatpush.msra.mxu0 0.0
  %8681 = vmatpush.msra.mxu0 0.0
  %8682 = vmatpush.msra.mxu0 0.0
  %8683 = vmatpush.msra.mxu0 0.0
  %8684 = vmatpush.msra.mxu0 0.0
  %8685 = vmatpush.msra.mxu0 0.0
  %8686 = vmatpush.msra.mxu0 0.0
  %8687 = vmatpush.msra.mxu0 0.0
  %8688 = vmatpush.msra.mxu0 0.0
  %8689 = vmatpush.msra.mxu0 0.0
  %8690 = vmatpush.msra.mxu0 0.0
  %8691 = vmatpush.msra.mxu0 0.0
  %8692 = vmatpush.msra.mxu0 0.0
  %8693 = vmatpush.msra.mxu0 0.0
  %8694 = vmatpush.msra.mxu0 %v5123
  %8695 = vmatpush.msra.mxu0 %v5122
  %8696 = vmatmul.f32.gmra.mxu0 %v8678
  %v8697 = vpop.f32.mrf.mxu0
  %v8698 = vadd.f32 0.0, %v8697
  %8699 = vdwg.mxu0
  %v8701 = vsel %vm5134, %v4809, 0
  %8703 = vmatpush.msra.mxu0 0.0
  %8704 = vmatpush.msra.mxu0 0.0
  %8705 = vmatpush.msra.mxu0 0.0
  %8706 = vmatpush.msra.mxu0 0.0
  %8707 = vmatpush.msra.mxu0 0.0
  %8708 = vmatpush.msra.mxu0 0.0
  %8709 = vmatpush.msra.mxu0 0.0
  %8710 = vmatpush.msra.mxu0 0.0
  %8711 = vmatpush.msra.mxu0 0.0
  %8712 = vmatpush.msra.mxu0 0.0
  %8713 = vmatpush.msra.mxu0 0.0
  %8714 = vmatpush.msra.mxu0 0.0
  %8715 = vmatpush.msra.mxu0 0.0
  %8716 = vmatpush.msra.mxu0 0.0
  %8717 = vmatpush.msra.mxu0 %v5125
  %8718 = vmatpush.msra.mxu0 %v5124
  %8719 = vmatmul.f32.gmra.mxu0 %v8701
  %v8720 = vpop.f32.mrf.mxu0
  %v8721 = vadd.f32 0.0, %v8720
  %8722 = vdwg.mxu0
  %v8724 = vsel %vm5134, %v4810, 0
  %8726 = vmatpush.msra.mxu0 0.0
  %8727 = vmatpush.msra.mxu0 0.0
  %8728 = vmatpush.msra.mxu0 0.0
  %8729 = vmatpush.msra.mxu0 0.0
  %8730 = vmatpush.msra.mxu0 0.0
  %8731 = vmatpush.msra.mxu0 0.0
  %8732 = vmatpush.msra.mxu0 0.0
  %8733 = vmatpush.msra.mxu0 0.0
  %8734 = vmatpush.msra.mxu0 0.0
  %8735 = vmatpush.msra.mxu0 0.0
  %8736 = vmatpush.msra.mxu0 0.0
  %8737 = vmatpush.msra.mxu0 0.0
  %8738 = vmatpush.msra.mxu0 0.0
  %8739 = vmatpush.msra.mxu0 0.0
  %8740 = vmatpush.msra.mxu0 %v5127
  %8741 = vmatpush.msra.mxu0 %v5126
  %8742 = vmatmul.f32.gmra.mxu0 %v8724
  %v8743 = vpop.f32.mrf.mxu0
  %v8744 = vadd.f32 0.0, %v8743
  %8745 = vdwg.mxu0
  %v8747 = vsel %vm5134, %v4811, 0
  %8749 = vmatpush.msra.mxu0 0.0
  %8750 = vmatpush.msra.mxu0 0.0
  %8751 = vmatpush.msra.mxu0 0.0
  %8752 = vmatpush.msra.mxu0 0.0
  %8753 = vmatpush.msra.mxu0 0.0
  %8754 = vmatpush.msra.mxu0 0.0
  %8755 = vmatpush.msra.mxu0 0.0
  %8756 = vmatpush.msra.mxu0 0.0
  %8757 = vmatpush.msra.mxu0 0.0
  %8758 = vmatpush.msra.mxu0 0.0
  %8759 = vmatpush.msra.mxu0 0.0
  %8760 = vmatpush.msra.mxu0 0.0
  %8761 = vmatpush.msra.mxu0 0.0
  %8762 = vmatpush.msra.mxu0 0.0
  %8763 = vmatpush.msra.mxu0 %v5129
  %8764 = vmatpush.msra.mxu0 %v5128
  %8765 = vmatmul.f32.gmra.mxu0 %v8747
  %v8766 = vpop.f32.mrf.mxu0
  %v8767 = vadd.f32 0.0, %v8766
  %8768 = vdwg.mxu0
  %v8770 = vsel %vm5134, %v4812, 0
  %8772 = vmatpush.msra.mxu0 0.0
  %8773 = vmatpush.msra.mxu0 0.0
  %8774 = vmatpush.msra.mxu0 0.0
  %8775 = vmatpush.msra.mxu0 0.0
  %8776 = vmatpush.msra.mxu0 0.0
  %8777 = vmatpush.msra.mxu0 0.0
  %8778 = vmatpush.msra.mxu0 0.0
  %8779 = vmatpush.msra.mxu0 0.0
  %8780 = vmatpush.msra.mxu0 0.0
  %8781 = vmatpush.msra.mxu0 0.0
  %8782 = vmatpush.msra.mxu0 0.0
  %8783 = vmatpush.msra.mxu0 0.0
  %8784 = vmatpush.msra.mxu0 0.0
  %8785 = vmatpush.msra.mxu0 0.0
  %8786 = vmatpush.msra.mxu0 %v5131
  %8787 = vmatpush.msra.mxu0 %v5130
  %8788 = vmatmul.f32.gmra.mxu0 %v8770
  %v8789 = vpop.f32.mrf.mxu0
  %v8790 = vadd.f32 0.0, %v8789
  %8791 = vdwg.mxu0
  %v8793 = vsel %vm5134, %v4813, 0
  %8795 = vmatpush.msra.mxu0 0.0
  %8796 = vmatpush.msra.mxu0 0.0
  %8797 = vmatpush.msra.mxu0 0.0
  %8798 = vmatpush.msra.mxu0 0.0
  %8799 = vmatpush.msra.mxu0 0.0
  %8800 = vmatpush.msra.mxu0 0.0
  %8801 = vmatpush.msra.mxu0 0.0
  %8802 = vmatpush.msra.mxu0 0.0
  %8803 = vmatpush.msra.mxu0 0.0
  %8804 = vmatpush.msra.mxu0 0.0
  %8805 = vmatpush.msra.mxu0 0.0
  %8806 = vmatpush.msra.mxu0 0.0
  %8807 = vmatpush.msra.mxu0 0.0
  %8808 = vmatpush.msra.mxu0 0.0
  %8809 = vmatpush.msra.mxu0 %v5133
  %8810 = vmatpush.msra.mxu0 %v5132
  %8811 = vmatmul.f32.gmra.mxu0 %v8793
  %v8812 = vpop.f32.mrf.mxu0
  %v8813 = vadd.f32 0.0, %v8812
  %8814 = vdwg.mxu0
  %vm8815 = vcmask 162816
  %v8816 = vsel %vm8815, %v5156, 0.0
  %v8817 = vsel %vm8815, %v5179, 0.0
  %v8818 = vadd.f32 %v8816, %v8817
  %v8819 = vsel %vm8815, %v5202, 0.0
  %v8820 = vadd.f32 %v8818, %v8819
  %v8821 = vsel %vm8815, %v5225, 0.0
  %v8822 = vadd.f32 %v8820, %v8821
  %v8823 = vsel %vm8815, %v5248, 0.0
  %v8824 = vadd.f32 %v8822, %v8823
  %v8825 = vsel %vm8815, %v5271, 0.0
  %v8826 = vadd.f32 %v8824, %v8825
  %v8827 = vsel %vm8815, %v5294, 0.0
  %v8828 = vadd.f32 %v8826, %v8827
  %v8829 = vsel %vm8815, %v5317, 0.0
  %v8830 = vadd.f32 %v8828, %v8829
  %v8831 = vsel %vm8815, %v5340, 0.0
  %v8832 = vadd.f32 %v8830, %v8831
  %v8833 = vsel %vm8815, %v5363, 0.0
  %v8834 = vadd.f32 %v8832, %v8833
  %v8835 = vsel %vm8815, %v5386, 0.0
  %v8836 = vadd.f32 %v8834, %v8835
  %v8837 = vsel %vm8815, %v5409, 0.0
  %v8838 = vadd.f32 %v8836, %v8837
  %v8839 = vsel %vm8815, %v5432, 0.0
  %v8840 = vadd.f32 %v8838, %v8839
  %v8841 = vsel %vm8815, %v5455, 0.0
  %v8842 = vadd.f32 %v8840, %v8841
  %v8843 = vsel %vm8815, %v5478, 0.0
  %v8844 = vadd.f32 %v8842, %v8843
  %v8845 = vsel %vm8815, %v5501, 0.0
  %v8846 = vadd.f32 %v8844, %v8845
  %v8847 = vsel %vm8815, %v5524, 0.0
  %v8848 = vadd.f32 %v8846, %v8847
  %v8849 = vsel %vm8815, %v5547, 0.0
  %v8850 = vadd.f32 %v8848, %v8849
  %v8851 = vsel %vm8815, %v5570, 0.0
  %v8852 = vadd.f32 %v8850, %v8851
  %v8853 = vsel %vm8815, %v5593, 0.0
  %v8854 = vadd.f32 %v8852, %v8853
  %v8855 = vsel %vm8815, %v5616, 0.0
  %v8856 = vadd.f32 %v8854, %v8855
  %v8857 = vsel %vm8815, %v5639, 0.0
  %v8858 = vadd.f32 %v8856, %v8857
  %v8859 = vsel %vm8815, %v5662, 0.0
  %v8860 = vadd.f32 %v8858, %v8859
  %v8861 = vsel %vm8815, %v5685, 0.0
  %v8862 = vadd.f32 %v8860, %v8861
  %v8863 = vsel %vm8815, %v5708, 0.0
  %v8864 = vadd.f32 %v8862, %v8863
  %v8865 = vsel %vm8815, %v5731, 0.0
  %v8866 = vadd.f32 %v8864, %v8865
  %v8867 = vsel %vm8815, %v5754, 0.0
  %v8868 = vadd.f32 %v8866, %v8867
  %v8869 = vsel %vm8815, %v5777, 0.0
  %v8870 = vadd.f32 %v8868, %v8869
  %v8871 = vsel %vm8815, %v5800, 0.0
  %v8872 = vadd.f32 %v8870, %v8871
  %v8873 = vsel %vm8815, %v5823, 0.0
  %v8874 = vadd.f32 %v8872, %v8873
  %v8875 = vsel %vm8815, %v5846, 0.0
  %v8876 = vadd.f32 %v8874, %v8875
  %v8877 = vsel %vm8815, %v5869, 0.0
  %v8878 = vadd.f32 %v8876, %v8877
  %v8879 = vsel %vm8815, %v5892, 0.0
  %v8880 = vadd.f32 %v8878, %v8879
  %v8881 = vsel %vm8815, %v5915, 0.0
  %v8882 = vadd.f32 %v8880, %v8881
  %v8883 = vsel %vm8815, %v5938, 0.0
  %v8884 = vadd.f32 %v8882, %v8883
  %v8885 = vsel %vm8815, %v5961, 0.0
  %v8886 = vadd.f32 %v8884, %v8885
  %v8887 = vsel %vm8815, %v5984, 0.0
  %v8888 = vadd.f32 %v8886, %v8887
  %v8889 = vsel %vm8815, %v6007, 0.0
  %v8890 = vadd.f32 %v8888, %v8889
  %v8891 = vsel %vm8815, %v6030, 0.0
  %v8892 = vadd.f32 %v8890, %v8891
  %v8893 = vsel %vm8815, %v6053, 0.0
  %v8894 = vadd.f32 %v8892, %v8893
  %v8895 = vsel %vm8815, %v6076, 0.0
  %v8896 = vadd.f32 %v8894, %v8895
  %v8897 = vsel %vm8815, %v6099, 0.0
  %v8898 = vadd.f32 %v8896, %v8897
  %v8899 = vsel %vm8815, %v6122, 0.0
  %v8900 = vadd.f32 %v8898, %v8899
  %v8901 = vsel %vm8815, %v6145, 0.0
  %v8902 = vadd.f32 %v8900, %v8901
  %v8903 = vsel %vm8815, %v6168, 0.0
  %v8904 = vadd.f32 %v8902, %v8903
  %v8905 = vsel %vm8815, %v6191, 0.0
  %v8906 = vadd.f32 %v8904, %v8905
  %v8907 = vsel %vm8815, %v6214, 0.0
  %v8908 = vadd.f32 %v8906, %v8907
  %v8909 = vsel %vm8815, %v6237, 0.0
  %v8910 = vadd.f32 %v8908, %v8909
  %v8911 = vsel %vm8815, %v6260, 0.0
  %v8912 = vadd.f32 %v8910, %v8911
  %v8913 = vsel %vm8815, %v6283, 0.0
  %v8914 = vadd.f32 %v8912, %v8913
  %v8915 = vsel %vm8815, %v6306, 0.0
  %v8916 = vadd.f32 %v8914, %v8915
  %v8917 = vsel %vm8815, %v6329, 0.0
  %v8918 = vadd.f32 %v8916, %v8917
  %v8919 = vsel %vm8815, %v6352, 0.0
  %v8920 = vadd.f32 %v8918, %v8919
  %v8921 = vsel %vm8815, %v6375, 0.0
  %v8922 = vadd.f32 %v8920, %v8921
  %v8923 = vsel %vm8815, %v6398, 0.0
  %v8924 = vadd.f32 %v8922, %v8923
  %v8925 = vsel %vm8815, %v6421, 0.0
  %v8926 = vadd.f32 %v8924, %v8925
  %v8927 = vsel %vm8815, %v6444, 0.0
  %v8928 = vadd.f32 %v8926, %v8927
  %v8929 = vsel %vm8815, %v6467, 0.0
  %v8930 = vadd.f32 %v8928, %v8929
  %v8931 = vsel %vm8815, %v6490, 0.0
  %v8932 = vadd.f32 %v8930, %v8931
  %v8933 = vsel %vm8815, %v6513, 0.0
  %v8934 = vadd.f32 %v8932, %v8933
  %v8935 = vsel %vm8815, %v6536, 0.0
  %v8936 = vadd.f32 %v8934, %v8935
  %v8937 = vsel %vm8815, %v6559, 0.0
  %v8938 = vadd.f32 %v8936, %v8937
  %v8939 = vsel %vm8815, %v6582, 0.0
  %v8940 = vadd.f32 %v8938, %v8939
  %v8941 = vsel %vm8815, %v6605, 0.0
  %v8942 = vadd.f32 %v8940, %v8941
  %v8943 = vsel %vm8815, %v6628, 0.0
  %v8944 = vadd.f32 %v8942, %v8943
  %v8945 = vsel %vm8815, %v6651, 0.0
  %v8946 = vadd.f32 %v8944, %v8945
  %v8947 = vsel %vm8815, %v6674, 0.0
  %v8948 = vadd.f32 %v8946, %v8947
  %v8949 = vsel %vm8815, %v6697, 0.0
  %v8950 = vadd.f32 %v8948, %v8949
  %v8951 = vsel %vm8815, %v6720, 0.0
  %v8952 = vadd.f32 %v8950, %v8951
  %v8953 = vsel %vm8815, %v6743, 0.0
  %v8954 = vadd.f32 %v8952, %v8953
  %v8955 = vsel %vm8815, %v6766, 0.0
  %v8956 = vadd.f32 %v8954, %v8955
  %v8957 = vsel %vm8815, %v6789, 0.0
  %v8958 = vadd.f32 %v8956, %v8957
  %v8959 = vsel %vm8815, %v6812, 0.0
  %v8960 = vadd.f32 %v8958, %v8959
  %v8961 = vsel %vm8815, %v6835, 0.0
  %v8962 = vadd.f32 %v8960, %v8961
  %v8963 = vsel %vm8815, %v6858, 0.0
  %v8964 = vadd.f32 %v8962, %v8963
  %v8965 = vsel %vm8815, %v6881, 0.0
  %v8966 = vadd.f32 %v8964, %v8965
  %v8967 = vsel %vm8815, %v6904, 0.0
  %v8968 = vadd.f32 %v8966, %v8967
  %v8969 = vsel %vm8815, %v6927, 0.0
  %v8970 = vadd.f32 %v8968, %v8969
  %v8971 = vsel %vm8815, %v6950, 0.0
  %v8972 = vadd.f32 %v8970, %v8971
  %v8973 = vsel %vm8815, %v6973, 0.0
  %v8974 = vadd.f32 %v8972, %v8973
  %v8975 = vsel %vm8815, %v6996, 0.0
  %v8976 = vadd.f32 %v8974, %v8975
  %v8977 = vsel %vm8815, %v7019, 0.0
  %v8978 = vadd.f32 %v8976, %v8977
  %v8979 = vsel %vm8815, %v7042, 0.0
  %v8980 = vadd.f32 %v8978, %v8979
  %v8981 = vsel %vm8815, %v7065, 0.0
  %v8982 = vadd.f32 %v8980, %v8981
  %v8983 = vsel %vm8815, %v7088, 0.0
  %v8984 = vadd.f32 %v8982, %v8983
  %v8985 = vsel %vm8815, %v7111, 0.0
  %v8986 = vadd.f32 %v8984, %v8985
  %v8987 = vsel %vm8815, %v7134, 0.0
  %v8988 = vadd.f32 %v8986, %v8987
  %v8989 = vsel %vm8815, %v7157, 0.0
  %v8990 = vadd.f32 %v8988, %v8989
  %v8991 = vsel %vm8815, %v7180, 0.0
  %v8992 = vadd.f32 %v8990, %v8991
  %v8993 = vsel %vm8815, %v7203, 0.0
  %v8994 = vadd.f32 %v8992, %v8993
  %v8995 = vsel %vm8815, %v7226, 0.0
  %v8996 = vadd.f32 %v8994, %v8995
  %v8997 = vsel %vm8815, %v7249, 0.0
  %v8998 = vadd.f32 %v8996, %v8997
  %v8999 = vsel %vm8815, %v7272, 0.0
  %v9000 = vadd.f32 %v8998, %v8999
  %v9001 = vsel %vm8815, %v7295, 0.0
  %v9002 = vadd.f32 %v9000, %v9001
  %v9003 = vsel %vm8815, %v7318, 0.0
  %v9004 = vadd.f32 %v9002, %v9003
  %v9005 = vsel %vm8815, %v7341, 0.0
  %v9006 = vadd.f32 %v9004, %v9005
  %v9007 = vsel %vm8815, %v7364, 0.0
  %v9008 = vadd.f32 %v9006, %v9007
  %v9009 = vsel %vm8815, %v7387, 0.0
  %v9010 = vadd.f32 %v9008, %v9009
  %v9011 = vsel %vm8815, %v7410, 0.0
  %v9012 = vadd.f32 %v9010, %v9011
  %v9013 = vsel %vm8815, %v7433, 0.0
  %v9014 = vadd.f32 %v9012, %v9013
  %v9015 = vsel %vm8815, %v7456, 0.0
  %v9016 = vadd.f32 %v9014, %v9015
  %v9017 = vsel %vm8815, %v7479, 0.0
  %v9018 = vadd.f32 %v9016, %v9017
  %v9019 = vsel %vm8815, %v7502, 0.0
  %v9020 = vadd.f32 %v9018, %v9019
  %v9021 = vsel %vm8815, %v7525, 0.0
  %v9022 = vadd.f32 %v9020, %v9021
  %v9023 = vsel %vm8815, %v7548, 0.0
  %v9024 = vadd.f32 %v9022, %v9023
  %v9025 = vsel %vm8815, %v7571, 0.0
  %v9026 = vadd.f32 %v9024, %v9025
  %v9027 = vsel %vm8815, %v7594, 0.0
  %v9028 = vadd.f32 %v9026, %v9027
  %v9029 = vsel %vm8815, %v7617, 0.0
  %v9030 = vadd.f32 %v9028, %v9029
  %v9031 = vsel %vm8815, %v7640, 0.0
  %v9032 = vadd.f32 %v9030, %v9031
  %v9033 = vsel %vm8815, %v7663, 0.0
  %v9034 = vadd.f32 %v9032, %v9033
  %v9035 = vsel %vm8815, %v7686, 0.0
  %v9036 = vadd.f32 %v9034, %v9035
  %v9037 = vsel %vm8815, %v7709, 0.0
  %v9038 = vadd.f32 %v9036, %v9037
  %v9039 = vsel %vm8815, %v7732, 0.0
  %v9040 = vadd.f32 %v9038, %v9039
  %v9041 = vsel %vm8815, %v7755, 0.0
  %v9042 = vadd.f32 %v9040, %v9041
  %v9043 = vsel %vm8815, %v7778, 0.0
  %v9044 = vadd.f32 %v9042, %v9043
  %v9045 = vsel %vm8815, %v7801, 0.0
  %v9046 = vadd.f32 %v9044, %v9045
  %v9047 = vsel %vm8815, %v7824, 0.0
  %v9048 = vadd.f32 %v9046, %v9047
  %v9049 = vsel %vm8815, %v7847, 0.0
  %v9050 = vadd.f32 %v9048, %v9049
  %v9051 = vsel %vm8815, %v7870, 0.0
  %v9052 = vadd.f32 %v9050, %v9051
  %v9053 = vsel %vm8815, %v7893, 0.0
  %v9054 = vadd.f32 %v9052, %v9053
  %v9055 = vsel %vm8815, %v7916, 0.0
  %v9056 = vadd.f32 %v9054, %v9055
  %v9057 = vsel %vm8815, %v7939, 0.0
  %v9058 = vadd.f32 %v9056, %v9057
  %v9059 = vsel %vm8815, %v7962, 0.0
  %v9060 = vadd.f32 %v9058, %v9059
  %v9061 = vsel %vm8815, %v7985, 0.0
  %v9062 = vadd.f32 %v9060, %v9061
  %v9063 = vsel %vm8815, %v8008, 0.0
  %v9064 = vadd.f32 %v9062, %v9063
  %v9065 = vsel %vm8815, %v8031, 0.0
  %v9066 = vadd.f32 %v9064, %v9065
  %v9067 = vsel %vm8815, %v8054, 0.0
  %v9068 = vadd.f32 %v9066, %v9067
  %v9069 = vsel %vm8815, %v8077, 0.0
  %v9070 = vadd.f32 %v9068, %v9069
  %v9071 = vsel %vm8815, %v8100, 0.0
  %v9072 = vadd.f32 %v9070, %v9071
  %v9073 = vsel %vm8815, %v8123, 0.0
  %v9074 = vadd.f32 %v9072, %v9073
  %v9075 = vsel %vm8815, %v8146, 0.0
  %v9076 = vadd.f32 %v9074, %v9075
  %v9077 = vsel %vm8815, %v8169, 0.0
  %v9078 = vadd.f32 %v9076, %v9077
  %v9079 = vsel %vm8815, %v8192, 0.0
  %v9080 = vadd.f32 %v9078, %v9079
  %v9081 = vsel %vm8815, %v8215, 0.0
  %v9082 = vadd.f32 %v9080, %v9081
  %v9083 = vsel %vm8815, %v8238, 0.0
  %v9084 = vadd.f32 %v9082, %v9083
  %v9085 = vsel %vm8815, %v8261, 0.0
  %v9086 = vadd.f32 %v9084, %v9085
  %v9087 = vsel %vm8815, %v8284, 0.0
  %v9088 = vadd.f32 %v9086, %v9087
  %v9089 = vsel %vm8815, %v8307, 0.0
  %v9090 = vadd.f32 %v9088, %v9089
  %v9091 = vsel %vm8815, %v8330, 0.0
  %v9092 = vadd.f32 %v9090, %v9091
  %v9093 = vsel %vm8815, %v8353, 0.0
  %v9094 = vadd.f32 %v9092, %v9093
  %v9095 = vsel %vm8815, %v8376, 0.0
  %v9096 = vadd.f32 %v9094, %v9095
  %v9097 = vsel %vm8815, %v8399, 0.0
  %v9098 = vadd.f32 %v9096, %v9097
  %v9099 = vsel %vm8815, %v8422, 0.0
  %v9100 = vadd.f32 %v9098, %v9099
  %v9101 = vsel %vm8815, %v8445, 0.0
  %v9102 = vadd.f32 %v9100, %v9101
  %v9103 = vsel %vm8815, %v8468, 0.0
  %v9104 = vadd.f32 %v9102, %v9103
  %v9105 = vsel %vm8815, %v8491, 0.0
  %v9106 = vadd.f32 %v9104, %v9105
  %v9107 = vsel %vm8815, %v8514, 0.0
  %v9108 = vadd.f32 %v9106, %v9107
  %v9109 = vsel %vm8815, %v8537, 0.0
  %v9110 = vadd.f32 %v9108, %v9109
  %v9111 = vsel %vm8815, %v8560, 0.0
  %v9112 = vadd.f32 %v9110, %v9111
  %v9113 = vsel %vm8815, %v8583, 0.0
  %v9114 = vadd.f32 %v9112, %v9113
  %v9115 = vsel %vm8815, %v8606, 0.0
  %v9116 = vadd.f32 %v9114, %v9115
  %v9117 = vsel %vm8815, %v8629, 0.0
  %v9118 = vadd.f32 %v9116, %v9117
  %v9119 = vsel %vm8815, %v8652, 0.0
  %v9120 = vadd.f32 %v9118, %v9119
  %v9121 = vsel %vm8815, %v8675, 0.0
  %v9122 = vadd.f32 %v9120, %v9121
  %v9123 = vsel %vm8815, %v8698, 0.0
  %v9124 = vadd.f32 %v9122, %v9123
  %v9125 = vsel %vm8815, %v8721, 0.0
  %v9126 = vadd.f32 %v9124, %v9125
  %v9127 = vsel %vm8815, %v8744, 0.0
  %v9128 = vadd.f32 %v9126, %v9127
  %v9129 = vsel %vm8815, %v8767, 0.0
  %v9130 = vadd.f32 %v9128, %v9129
  %v9131 = vsel %vm8815, %v8790, 0.0
  %v9132 = vadd.f32 %v9130, %v9131
  %v9133 = vsel %vm8815, %v8813, 0.0
  %v9134 = vadd.f32 %v9132, %v9133
  %v9135 = vld [vmem:[%s7] sm:$0x1]
  %v9137 = vperm.slane %v9135, 0
  %v9139 = vadd.f32 %v9134, %v9137
  %v9140 = vmax.f32 %v9139, 0.0
  %v9141 = vld [vmem:[%s8] sm:$0xff]
  %v9142 = vld [vmem:[%s8 + $0x8] sm:$0xff]
  %v9143 = vld [vmem:[%s8 + $0x10] sm:$0xf]
  %v9144 = vld [vmem:[%s9] sm:$0x1]
  %v9146 = vperm.slane %v9144, 0
  %v9149 = vsel %vm8815, %v9140, 0
  %vm9151 = vcmask 1043456
  %v9153 = vsel %vm9151, %v9143, 0
  %9155 = vmatpush.msra.mxu0 0.0
  %9156 = vmatpush.msra.mxu0 0.0
  %9157 = vmatpush.msra.mxu0 0.0
  %9158 = vmatpush.msra.mxu0 0.0
  %9159 = vmatpush.msra.mxu0 0.0
  %9160 = vmatpush.msra.mxu0 0.0
  %9161 = vmatpush.msra.mxu0 0.0
  %9162 = vmatpush.msra.mxu0 0.0
  %9163 = vmatpush.msra.mxu0 0.0
  %9164 = vmatpush.msra.mxu0 0.0
  %9165 = vmatpush.msra.mxu0 0.0
  %9166 = vmatpush.msra.mxu0 0.0
  %9167 = vmatpush.msra.mxu0 0.0
  %9168 = vmatpush.msra.mxu0 %v9153
  %9169 = vmatpush.msra.mxu0 %v9142
  %9170 = vmatpush.msra.mxu0 %v9141
  %9171 = vmatmul.f32.gmra.mxu0 %v9149
  %v9172 = vpop.f32.mrf.mxu0
  %v9173 = vadd.f32 %v9146, %v9172
  %9174 = vdwg.mxu0
  %vm9175 = vcmask 15360
  %9176 = vst.msk [vmem:[%s10] sm:$0xff] %vm9175, %v9173
  // Predicated region
  $region42: #{convnet_forward.1} parent=0 // pred_check
    _
  $region43: #{convnet_forward.1} parent=0 // pred_check_branch
    %9178 = sbr.rel (0) target = $region45
  $region44: #{convnet_forward.1} parent=0 // pred_region
    _
  $region45: #{convnet_forward.1} parent=0 // pred_fallthru
    _
  // Predicated region
  $region46: #{convnet_forward.1} parent=0 // pred_check
    _
  $region47: #{convnet_forward.1} parent=0 // pred_check_branch
    %9180 = sbr.rel (0) target = $region49
  $region48: #{convnet_forward.1} parent=0 // pred_region
    _
  $region49: #{convnet_forward.1} parent=0 // pred_fallthru
    _

</llo_original>
